<compile_context>
chip_gen: v6e
topology: v6e:2x2x1
jax: 0.10.0
libtpu: 0.0.40
codegen_flags: <defaults>
</compile_context>

<pallas_src>
import functools

import numpy as np

import jax
import jax.numpy as jnp
from jax import lax
from jax.experimental import pallas as pl
from jax.experimental.pallas import tpu as pltpu


def _round_up(x, m):
    return ((x + m - 1) // m) * m


# ----------------------------------------------------------------------------
# Pallas kernel: one bidirectional GRU layer (both directions fused), grid over
# time chunks.  In-kernel chunk-level input projection + one fused recurrent
# matmul per direction per step.
# ----------------------------------------------------------------------------
def _bigru_layer_kernel(*refs, n_streams, chunk_t, num_chunks, t_real, t_pad,
                        hp, unroll):
    xs_f = refs[0:n_streams]                          # input chunks, fwd (block c)
    xs_b = refs[n_streams:2 * n_streams]              # input chunks, bwd (block nc-1-c)
    (wih_f_ref, wih_b_ref, whh_ref, bi_ref, bh_ref) = refs[2 * n_streams:2 * n_streams + 5]
    out_f_ref, out_b_ref, hlast_ref = refs[2 * n_streams + 5:2 * n_streams + 8]
    gi_f_scr, gi_b_scr, h_scr = refs[2 * n_streams + 8:]

    c = pl.program_id(0)
    b_pad = out_f_ref.shape[1]

    @pl.when(c == 0)
    def _init():
        h_scr[...] = jnp.zeros_like(h_scr)

    # ---- Chunk-level input projection (off the serial critical path):
    #      gi[t, b, :] = sum_s x_s[t, b, :] @ W_ih_s + b_ih   (f32 accumulate).
    def project(x_refs, wih_ref, bias, gi_scr):
        acc = None
        for s in range(n_streams):
            xs = x_refs[s][...]                                    # (chunk_t, B_pad, in_s)
            x2d = xs.reshape(chunk_t * b_pad, xs.shape[-1])        # layout-trivial collapse
            part = jnp.dot(x2d, wih_ref[s], preferred_element_type=jnp.float32)
            acc = part if acc is None else acc + part
        gi_scr[...] = (acc + bias).reshape(chunk_t, b_pad, 3 * hp)

    project(xs_f, wih_f_ref, bi_ref[0], gi_f_scr)
    project(xs_b, wih_b_ref, bi_ref[1], gi_b_scr)

    # Hoisted once per grid step (small, VMEM resident).
    w_f = whh_ref[0]                 # (Hp, 3*Hp) fused r|z|n recurrent weights, fwd
    w_b = whh_ref[1]
    bh_f = bh_ref[0]                 # (1, 3*Hp) f32
    bh_b = bh_ref[1]
    wdt = w_f.dtype

    def cell(h, gi, w, bhh):
        # Single fused (B_pad, Hp) @ (Hp, 3*Hp) matmul for all three gates; r/z/n are
        # 128-aligned lane slices.  Gate elementwise math stays in f32.
        gh = jnp.dot(h.astype(wdt), w, preferred_element_type=jnp.float32) + bhh
        r = jax.nn.sigmoid(gi[:, 0:hp] + gh[:, 0:hp])
        z = jax.nn.sigmoid(gi[:, hp:2 * hp] + gh[:, hp:2 * hp])
        n = jnp.tanh(gi[:, 2 * hp:3 * hp] + r * gh[:, 2 * hp:3 * hp])
        return (1.0 - z) * n + z * h

    t0_f = c * chunk_t                       # global start time of the fwd chunk
    t0_b = (num_chunks - 1 - c) * chunk_t    # global start time of the bwd chunk

    def make_step(mask_fwd, mask_bwd):
        def step(i, carry):
            h_f, h_b = carry
            j = chunk_t - 1 - i
            hf_new = cell(h_f, gi_f_scr[i], w_f, bh_f)
            if mask_fwd:
                hf_new = jnp.where(t0_f + i < t_real, hf_new, h_f)
            out_f_ref[i] = hf_new.astype(out_f_ref.dtype)
            hb_new = cell(h_b, gi_b_scr[j], w_b, bh_b)
            if mask_bwd:
                hb_new = jnp.where(t0_b + j < t_real, hb_new, h_b)
            out_b_ref[j] = hb_new.astype(out_b_ref.dtype)
            return hf_new, hb_new
        return step

    def run_chunk(mask_fwd, mask_bwd):
        step = make_step(mask_fwd, mask_bwd)
        carry = (h_scr[0], h_scr[1])
        if unroll is True or (unroll is not True and unroll >= chunk_t):
            carry = lax.fori_loop(0, chunk_t, step, carry, unroll=True)
        else:
            n_un = int(unroll)              # divisor of chunk_t by construction

            def outer(o, cy):
                for k in range(n_un):
                    cy = step(o * n_un + k, cy)
                return cy

            carry = lax.fori_loop(0, chunk_t // n_un, outer, carry)
        h_f, h_b = carry
        h_scr[0] = h_f
        h_scr[1] = h_b

    if t_pad == t_real:
        # No time padding: no per-step masks anywhere.
        run_chunk(False, False)
    elif num_chunks == 1:
        run_chunk(True, True)
    else:
        # Padded timesteps live only in the last *time* chunk: mask the fwd direction
        # only on the final grid step and the bwd direction only on the first one.
        @pl.when(c == 0)
        def _first():
            run_chunk(False, True)

        @pl.when(c == num_chunks - 1)
        def _last():
            run_chunk(True, False)

        @pl.when(jnp.logical_and(c > 0, c < num_chunks - 1))
        def _mid():
            run_chunk(False, False)

    @pl.when(c == num_chunks - 1)
    def _finalize():
        hlast_ref[...] = h_scr[...]


def _pick_unroll(chunk_t, b_pad, hp):
    # ~10 live (B_pad, Hp) f32 tiles per unrolled step; keep the unrolled window inside
    # the 64-entry vreg file and make the factor divide chunk_t.
    tile_vregs = max(1, (b_pad * hp * 4) // 4096)
    live_per_step = 10 * tile_vregs
    if chunk_t * live_per_step <= 64:
        return True
    budget = max(1, 64 // live_per_step)
    best = 1
    for k in range(1, chunk_t + 1):
        if chunk_t % k == 0 and k <= budget:
            best = k
    return best


def _const_spec(shape):
    """Whole-array block, constant index map (weights).  Single-buffered when the
    pipeline_mode API is available (constant index => double-buffering is waste)."""
    nd = len(shape)
    idx = lambda c: (0,) * nd
    try:
        return pl.BlockSpec(shape, idx, pipeline_mode=pl.Buffered(1))
    except (TypeError, AttributeError):
        return pl.BlockSpec(shape, idx)


def _vmem_limit_bytes(streams, weights, chunk_t, b_pad, hp, out_dtype):
    act_bytes = jnp.dtype(streams[0].dtype).itemsize
    out_bytes = jnp.dtype(out_dtype).itemsize
    x_bytes = sum(2 * 2 * chunk_t * b_pad * s.shape[2] * act_bytes for s in streams)
    w_bytes = sum(int(a.size) * jnp.dtype(a.dtype).itemsize for a in weights)
    o_bytes = 2 * 2 * chunk_t * b_pad * hp * out_bytes + 2 * 2 * b_pad * hp * 4
    s_bytes = 2 * chunk_t * b_pad * 3 * hp * 4 + 2 * b_pad * hp * 4
    total = x_bytes + w_bytes + o_bytes + s_bytes
    return int(min(96 * 1024 * 1024, max(32 * 1024 * 1024, int(1.5 * total) + (2 << 20))))


def _bigru_layer(streams, wih_f, wih_b, whh, bi, bh, *, t_real, t_pad, chunk_t,
                 hid_pad, out_dtype):
    """One fused bidirectional GRU layer.

    streams: tuple of (T_pad, B_pad, dim_s) layer inputs (1 stream for layer 0,
             2 streams [prev_fwd, prev_bwd] for deeper layers).
    Returns out_f, out_b: (T_pad, B_pad, Hp) and hlast: (2, B_pad, Hp) f32.
    """
    n_streams = len(streams)
    b_pad = streams[0].shape[1]
    num_chunks = t_pad // chunk_t
    hp = hid_pad
    unroll = _pick_unroll(chunk_t, b_pad, hp)

    kernel = functools.partial(
        _bigru_layer_kernel, n_streams=n_streams, chunk_t=chunk_t,
        num_chunks=num_chunks, t_real=t_real, t_pad=t_pad, hp=hp, unroll=unroll)

    stream_specs_f = [pl.BlockSpec((chunk_t, b_pad, s.shape[2]), lambda c: (c, 0, 0))
                      for s in streams]
    stream_specs_b = [pl.BlockSpec((chunk_t, b_pad, s.shape[2]),
                                   lambda c: (num_chunks - 1 - c, 0, 0))
                      for s in streams]

    grid_spec = pltpu.PrefetchScalarGridSpec(
        num_scalar_prefetch=0,
        grid=(num_chunks,),
        in_specs=(stream_specs_f + stream_specs_b +
                  [_const_spec(wih_f.shape), _const_spec(wih_b.shape),
                   _const_spec(whh.shape), _const_spec(bi.shape),
                   _const_spec(bh.shape)]),
        out_specs=(
            pl.BlockSpec((chunk_t, b_pad, hp), lambda c: (c, 0, 0)),
            pl.BlockSpec((chunk_t, b_pad, hp), lambda c: (num_chunks - 1 - c, 0, 0)),
            pl.BlockSpec((2, b_pad, hp), lambda c: (0, 0, 0)),
        ),
        scratch_shapes=[
            pltpu.VMEM((chunk_t, b_pad, 3 * hp), jnp.float32),   # gi fwd (f32)
            pltpu.VMEM((chunk_t, b_pad, 3 * hp), jnp.float32),   # gi bwd (f32)
            pltpu.VMEM((2, b_pad, hp), jnp.float32),             # carried (h_f, h_b)
        ],
    )

    vmem_limit = _vmem_limit_bytes(streams, (wih_f, wih_b, whh, bi, bh),
                                   chunk_t, b_pad, hp, out_dtype)

    out_f, out_b, hlast = pl.pallas_call(
        kernel,
        out_shape=(
            jax.ShapeDtypeStruct((t_pad, b_pad, hp), out_dtype),
            jax.ShapeDtypeStruct((t_pad, b_pad, hp), out_dtype),
            jax.ShapeDtypeStruct((2, b_pad, hp), jnp.float32),
        ),
        grid_spec=grid_spec,
        compiler_params=pltpu.CompilerParams(
            dimension_semantics=("arbitrary",),      # sequential recurrence over T
            vmem_limit_bytes=vmem_limit,
        ),
    )(*streams, *streams, wih_f, wih_b, whh, bi, bh)
    return out_f, out_b, hlast


# ----------------------------------------------------------------------------
# One-time parameter preprocessing (hoisted out of the jitted forward): gate-major,
# lane-padded, bf16 (or f32) weight re-layout.  torch gate order is r|z|n.
# ----------------------------------------------------------------------------
def _pack_w_ih(w_ih, hid_dim, hid_pad, in_splits, dtype):
    w = w_ih.reshape(3, hid_dim, w_ih.shape[1])
    w = jnp.transpose(w, (2, 0, 1))                       # (in_total, gate, H)
    out = []
    for off, real, padded in in_splits:
        blk = jnp.zeros((padded, 3, hid_pad), jnp.float32)
        blk = blk.at[:real, :, :hid_dim].set(w[off:off + real])
        out.append(blk.reshape(padded, 3 * hid_pad))
    return jnp.stack(out, axis=0).astype(dtype)           # (n_streams, rows, 3*Hp)


def _pack_w_hh(w_hh, hid_dim, hid_pad, dtype):
    w = w_hh.reshape(3, hid_dim, hid_dim)
    w = jnp.transpose(w, (2, 0, 1))                       # (h_in, gate, h_out)
    blk = jnp.zeros((hid_pad, 3, hid_pad), jnp.float32)
    blk = blk.at[:hid_dim, :, :hid_dim].set(w)
    return blk.reshape(hid_pad, 3 * hid_pad).astype(dtype)


def _pack_bias(b, hid_dim, hid_pad):
    bb = jnp.zeros((3, hid_pad), jnp.float32).at[:, :hid_dim].set(b.reshape(3, hid_dim))
    return bb.reshape(1, 3 * hid_pad)                     # keep biases in f32


def preprocess_params(params, *, emb_dim, hid_dim, n_layers,
                      compute_dtype=jnp.bfloat16):
    H, Hp = hid_dim, _round_up(hid_dim, 128)
    layers = []
    for layer in range(n_layers):
        splits = [(0, emb_dim, emb_dim)] if layer == 0 else [(0, H, Hp), (H, H, Hp)]
        layers.append(dict(
            wih_f=_pack_w_ih(params[f"w_ih_l{layer}"], H, Hp, splits, compute_dtype),
            wih_b=_pack_w_ih(params[f"w_ih_l{layer}_rev"], H, Hp, splits, compute_dtype),
            whh=jnp.stack([_pack_w_hh(params[f"w_hh_l{layer}"], H, Hp, compute_dtype),
                           _pack_w_hh(params[f"w_hh_l{layer}_rev"], H, Hp, compute_dtype)],
                          axis=0),
            bi=jnp.stack([_pack_bias(params[f"b_ih_l{layer}"], H, Hp),
                          _pack_bias(params[f"b_ih_l{layer}_rev"], H, Hp)], axis=0),
            bh=jnp.stack([_pack_bias(params[f"b_hh_l{layer}"], H, Hp),
                          _pack_bias(params[f"b_hh_l{layer}_rev"], H, Hp)], axis=0),
        ))
    return {"embedding": params["embedding"].astype(compute_dtype), "layers": layers}


# ----------------------------------------------------------------------------
# Encoder forward (jit-able): embedding gather + per-layer fused biGRU kernels.
# ----------------------------------------------------------------------------
def encoder_forward(tokens, prep, *, n_layers, hid_dim, max_chunk_t=64,
                    vmem_budget_bytes=24 * 1024 * 1024):
    B, T = tokens.shape
    H = hid_dim
    Hp = _round_up(H, 128)
    emb_tab = prep["embedding"]
    act_dtype = emb_tab.dtype
    act_bytes = jnp.dtype(act_dtype).itemsize
    pack = 16 if act_bytes == 2 else 8            # sublane packing of the act dtype
    b_pad = _round_up(B, pack)
    E = emb_tab.shape[1]

    # chunk_t derived from a VMEM budget (double-buffered streams/outputs + gi scratch),
    # sized for the widest layer (layer > 0: two Hp-wide input streams per direction).
    per_t = (2 * 2 * b_pad * max(E, 2 * Hp) * act_bytes
             + 2 * 2 * b_pad * Hp * 4
             + 2 * b_pad * 3 * Hp * 4)
    cap = max(1, vmem_budget_bytes // per_t)
    chunk_t = max(1, min(max_chunk_t, T, cap))
    num_chunks = pl.cdiv(T, chunk_t)
    t_pad = num_chunks * chunk_t

    # Embedding gather directly in time-major layout.
    emb = jnp.take(emb_tab, jnp.transpose(tokens), axis=0)          # (T, B, E)
    # TODO(synk): dropout on the embedding / between GRU layers is identity (eval mode).
    x0 = jnp.pad(emb, ((0, t_pad - T), (0, b_pad - B), (0, 0)))

    streams = (x0,)
    hiddens = []
    for layer in range(n_layers):
        lp = prep["layers"][layer]
        out_dtype = jnp.float32 if layer == n_layers - 1 else act_dtype
        out_f, out_b, hlast = _bigru_layer(
            streams, lp["wih_f"], lp["wih_b"], lp["whh"], lp["bi"], lp["bh"],
            t_real=T, t_pad=t_pad, chunk_t=chunk_t, hid_pad=Hp, out_dtype=out_dtype)
        streams = (out_f, out_b)
        hiddens.append(hlast[:, :B, :H])                            # (2, B, H): [fwd, bwd]

    out_f, out_b = streams
    outputs = jnp.concatenate([out_f[:T, :B, :H], out_b[:T, :B, :H]], axis=-1)
    outputs = jnp.transpose(outputs, (1, 0, 2)).astype(jnp.float32)  # (B, T, 2H)
    hidden = jnp.concatenate(hiddens, axis=0).astype(jnp.float32)    # (2*n_layers, B, H)
    return outputs, hidden


# ----------------------------------------------------------------------------
# Pure-JAX reference (torch.nn.GRU semantics, f32) for validation.
# ----------------------------------------------------------------------------
def _reference_encoder(tokens, params, *, n_layers, hid_dim):
    H = hid_dim
    x = params["embedding"][tokens]                                 # (B, T, E)
    hiddens = []
    for layer in range(n_layers):
        outs = []
        for suffix, reverse in (("", False), ("_rev", True)):
            w_ih = params[f"w_ih_l{layer}{suffix}"]
            w_hh = params[f"w_hh_l{layer}{suffix}"]
            b_ih = params[f"b_ih_l{layer}{suffix}"]
            b_hh = params[f"b_hh_l{layer}{suffix}"]

            def cell(h, xt):
                gi = xt @ w_ih.T + b_ih
                gh = h @ w_hh.T + b_hh
                r = jax.nn.sigmoid(gi[:, :H] + gh[:, :H])
                z = jax.nn.sigmoid(gi[:, H:2 * H] + gh[:, H:2 * H])
                n = jnp.tanh(gi[:, 2 * H:] + r * gh[:, 2 * H:])
                h_new = (1.0 - z) * n + z * h
                return h_new, h_new

            xt = jnp.swapaxes(x, 0, 1)
            if reverse:
                xt = xt[::-1]
            h0 = jnp.zeros((x.shape[0], H), jnp.float32)
            h_last, ys = lax.scan(cell, h0, xt)
            ys = jnp.swapaxes(ys, 0, 1)
            if reverse:
                ys = ys[:, ::-1]
            outs.append(ys)
            hiddens.append(h_last)
        x = jnp.concatenate(outs, axis=-1)
    return x, jnp.stack(hiddens, axis=0)


# ----------------------------------------------------------------------------
# Deterministic parameter initialization (torch.nn.GRU / nn.Embedding shapes; r|z|n).
# ----------------------------------------------------------------------------
def init_params(key, en_vocab_size, emb_dim, hid_dim, n_layers):
    params = {}
    k_emb, key = jax.random.split(key)
    params["embedding"] = jax.random.normal(k_emb, (en_vocab_size, emb_dim),
                                            dtype=jnp.float32)
    bound = 1.0 / float(np.sqrt(hid_dim))
    for layer in range(n_layers):
        in_dim = emb_dim if layer == 0 else 2 * hid_dim
        for suffix in ("", "_rev"):
            for name, shape in (
                (f"w_ih_l{layer}{suffix}", (3 * hid_dim, in_dim)),
                (f"w_hh_l{layer}{suffix}", (3 * hid_dim, hid_dim)),
                (f"b_ih_l{layer}{suffix}", (3 * hid_dim,)),
                (f"b_hh_l{layer}{suffix}", (3 * hid_dim,)),
            ):
                k, key = jax.random.split(key)
                params[name] = jax.random.uniform(k, shape, dtype=jnp.float32,
                                                  minval=-bound, maxval=bound)
    return params


if __name__ == "__main__":
    EN_VOCAB_SIZE = 50
    EMB_DIM = 32
    HID_DIM = 32
    N_LAYERS = 2
    BATCH = 2
    SEQ = 8

    key = jax.random.PRNGKey(0)
    k_tok, k_tok2, k_par = jax.random.split(key, 3)
    tokens = jax.random.randint(k_tok, (BATCH, SEQ), 0, EN_VOCAB_SIZE, dtype=jnp.int32)
    params = init_params(k_par, EN_VOCAB_SIZE, EMB_DIM, HID_DIM, N_LAYERS)

    ref_out, ref_hid = _reference_encoder(tokens, params, n_layers=N_LAYERS,
                                          hid_dim=HID_DIM)

    # 1) f32 path, single time chunk.
    prep32 = preprocess_params(params, emb_dim=EMB_DIM, hid_dim=HID_DIM,
                               n_layers=N_LAYERS, compute_dtype=jnp.float32)
    fwd32 = jax.jit(functools.partial(encoder_forward, n_layers=N_LAYERS,
                                      hid_dim=HID_DIM, max_chunk_t=64))
    out, hid = fwd32(tokens, prep32)
    jax.block_until_ready((out, hid))
    assert out.shape == (BATCH, SEQ, 2 * HID_DIM), out.shape
    assert hid.shape == (2 * N_LAYERS, BATCH, HID_DIM), hid.shape
    np.testing.assert_allclose(np.asarray(out), np.asarray(ref_out), atol=3e-2, rtol=3e-2)
    np.testing.assert_allclose(np.asarray(hid), np.asarray(ref_hid), atol=3e-2, rtol=3e-2)

    # 2) f32 path, multi-chunk grid with T padding (exercises boundary-chunk masks and
    #    the hidden-state carry across grid steps).
    SEQ2 = 13
    tokens2 = jax.random.randint(k_tok2, (BATCH, SEQ2), 0, EN_VOCAB_SIZE, dtype=jnp.int32)
    ref_out2, ref_hid2 = _reference_encoder(tokens2, params, n_layers=N_LAYERS,
                                            hid_dim=HID_DIM)
    fwd_chunked = jax.jit(functools.partial(encoder_forward, n_layers=N_LAYERS,
                                            hid_dim=HID_DIM, max_chunk_t=4))
    out2, hid2 = fwd_chunked(tokens2, prep32)
    jax.block_until_ready((out2, hid2))
    np.testing.assert_allclose(np.asarray(out2), np.asarray(ref_out2), atol=3e-2, rtol=3e-2)
    np.testing.assert_allclose(np.asarray(hid2), np.asarray(ref_hid2), atol=3e-2, rtol=3e-2)

    # 3) bf16 streamed activations / weights (f32 accumulation + f32 gate math).
    prep16 = preprocess_params(params, emb_dim=EMB_DIM, hid_dim=HID_DIM,
                               n_layers=N_LAYERS, compute_dtype=jnp.bfloat16)
    out3, hid3 = fwd_chunked(tokens2, prep16)
    jax.block_until_ready((out3, hid3))
    np.testing.assert_allclose(np.asarray(out3), np.asarray(ref_out2), atol=1e-1, rtol=1e-1)
    np.testing.assert_allclose(np.asarray(hid3), np.asarray(ref_hid2), atol=1e-1, rtol=1e-1)

    print("KERNEL_OK")
</pallas_src>

<mosaic_0001>
module attributes {stable_mosaic.version = 11 : i64} {
  func.func @_bigru_layer_kernel(%arg0: i32, %arg1: memref<8x8x32xf32, #tpu.memory_space<vmem>>, %arg2: memref<8x8x32xf32, #tpu.memory_space<vmem>>, %arg3: memref<1x32x384xf32, #tpu.memory_space<vmem>>, %arg4: memref<1x32x384xf32, #tpu.memory_space<vmem>>, %arg5: memref<2x128x384xf32, #tpu.memory_space<vmem>>, %arg6: memref<2x1x384xf32, #tpu.memory_space<vmem>>, %arg7: memref<2x1x384xf32, #tpu.memory_space<vmem>>, %arg8: memref<8x8x128xf32, #tpu.memory_space<vmem>>, %arg9: memref<8x8x128xf32, #tpu.memory_space<vmem>>, %arg10: memref<2x8x128xf32, #tpu.memory_space<vmem>>, %arg11: memref<8x8x384xf32, #tpu.memory_space<vmem>>, %arg12: memref<8x8x384xf32, #tpu.memory_space<vmem>>, %arg13: memref<2x8x128xf32, #tpu.memory_space<vmem>>) attributes {dimension_semantics = [#tpu.dimension_semantics<arbitrary>], iteration_bounds = array<i64: 1>, scalar_prefetch = 0 : i64, scratch_operands = 3 : i64, tpu.core_type = #tpu.core_type<tc>, window_params = [{transform_indices = @transform_0, window_bounds = array<i64: 8, 8, 32>}, {transform_indices = @transform_1, window_bounds = array<i64: 8, 8, 32>}, {pipeline_mode = #tpu.pipeline_mode<synchronous>, transform_indices = @transform_2, window_bounds = array<i64: 1, 32, 384>}, {pipeline_mode = #tpu.pipeline_mode<synchronous>, transform_indices = @transform_3, window_bounds = array<i64: 1, 32, 384>}, {pipeline_mode = #tpu.pipeline_mode<synchronous>, transform_indices = @transform_4, window_bounds = array<i64: 2, 128, 384>}, {pipeline_mode = #tpu.pipeline_mode<synchronous>, transform_indices = @transform_5, window_bounds = array<i64: 2, 1, 384>}, {pipeline_mode = #tpu.pipeline_mode<synchronous>, transform_indices = @transform_6, window_bounds = array<i64: 2, 1, 384>}, {transform_indices = @transform_7, window_bounds = array<i64: 8, 8, 128>}, {transform_indices = @transform_8, window_bounds = array<i64: 8, 8, 128>}, {pipeline_mode = #tpu.pipeline_mode<synchronous>, transform_indices = @transform_9, window_bounds = array<i64: 2, 8, 128>}]} {
    %c0_i32 = arith.constant 0 : i32
    %0 = arith.cmpi eq, %arg0, %c0_i32 : i32
    %1 = arith.extui %0 : i1 to i32
    %c0_i32_0 = arith.constant 0 : i32
    %2 = arith.cmpi ne, %1, %c0_i32_0 : i32
    scf.if %2 {
      %cst_52 = arith.constant 0.000000e+00 : f32
      %48 = vector.broadcast %cst_52 : f32 to vector<2x8x128xf32>
      %c0_53 = arith.constant 0 : index
      %c0_54 = arith.constant 0 : index
      %c0_55 = arith.constant 0 : index
      %49 = vector.load %arg13[%c0_53, %c0_54, %c0_55] : memref<2x8x128xf32, #tpu.memory_space<vmem>>, vector<2x8x128xf32>
      tpu.vector_store %arg13[%c0_53, %c0_54, %c0_55], %48 {strides = array<i32>} : memref<2x8x128xf32, #tpu.memory_space<vmem>>, vector<2x8x128xf32>,
    } else {
    }
    %c0 = arith.constant 0 : index
    %c0_1 = arith.constant 0 : index
    %c0_2 = arith.constant 0 : index
    %3 = vector.load %arg6[%c0, %c0_1, %c0_2] : memref<2x1x384xf32, #tpu.memory_space<vmem>>, vector<1x1x384xf32>
    %4 = vector.shape_cast %3 : vector<1x1x384xf32> to vector<1x384xf32>
    %c0_3 = arith.constant 0 : index
    %c0_4 = arith.constant 0 : index
    %c0_5 = arith.constant 0 : index
    %5 = vector.load %arg1[%c0_3, %c0_4, %c0_5] : memref<8x8x32xf32, #tpu.memory_space<vmem>>, vector<8x8x32xf32>
    %6 = vector.shape_cast %5 : vector<8x8x32xf32> to vector<64x32xf32>
    %c0_6 = arith.constant 0 : index
    %c0_7 = arith.constant 0 : index
    %c0_8 = arith.constant 0 : index
    %7 = vector.load %arg3[%c0_6, %c0_7, %c0_8] : memref<1x32x384xf32, #tpu.memory_space<vmem>>, vector<1x32x384xf32>
    %8 = vector.shape_cast %7 : vector<1x32x384xf32> to vector<32x384xf32>
    %cst = arith.constant dense<0.000000e+00> : vector<64x384xf32>
    %9 = tpu.matmul %6, %8, %cst {dimension_numbers = #tpu.dot_dimension_numbers<[1], [0], [0], [1], [0, 0, 1, 1], [], []>} : vector<64x32xf32>, vector<32x384xf32>, vector<64x384xf32> -> vector<64x384xf32>
    %10 = vector.broadcast %4 : vector<1x384xf32> to vector<64x384xf32>
    %11 = arith.addf %9, %10 : vector<64x384xf32>
    %12 = vector.shape_cast %11 : vector<64x384xf32> to vector<8x8x384xf32>
    %c0_9 = arith.constant 0 : index
    %c0_10 = arith.constant 0 : index
    %c0_11 = arith.constant 0 : index
    %13 = vector.load %arg11[%c0_9, %c0_10, %c0_11] : memref<8x8x384xf32, #tpu.memory_space<vmem>>, vector<8x8x384xf32>
    tpu.vector_store %arg11[%c0_9, %c0_10, %c0_11], %12 {strides = array<i32>} : memref<8x8x384xf32, #tpu.memory_space<vmem>>, vector<8x8x384xf32>,
    %c1 = arith.constant 1 : index
    %c0_12 = arith.constant 0 : index
    %c0_13 = arith.constant 0 : index
    %14 = vector.load %arg6[%c1, %c0_12, %c0_13] : memref<2x1x384xf32, #tpu.memory_space<vmem>>, vector<1x1x384xf32>
    %15 = vector.shape_cast %14 : vector<1x1x384xf32> to vector<1x384xf32>
    %c0_14 = arith.constant 0 : index
    %c0_15 = arith.constant 0 : index
    %c0_16 = arith.constant 0 : index
    %16 = vector.load %arg2[%c0_14, %c0_15, %c0_16] : memref<8x8x32xf32, #tpu.memory_space<vmem>>, vector<8x8x32xf32>
    %17 = vector.shape_cast %16 : vector<8x8x32xf32> to vector<64x32xf32>
    %c0_17 = arith.constant 0 : index
    %c0_18 = arith.constant 0 : index
    %c0_19 = arith.constant 0 : index
    %18 = vector.load %arg4[%c0_17, %c0_18, %c0_19] : memref<1x32x384xf32, #tpu.memory_space<vmem>>, vector<1x32x384xf32>
    %19 = vector.shape_cast %18 : vector<1x32x384xf32> to vector<32x384xf32>
    %cst_20 = arith.constant dense<0.000000e+00> : vector<64x384xf32>
    %20 = tpu.matmul %17, %19, %cst_20 {dimension_numbers = #tpu.dot_dimension_numbers<[1], [0], [0], [1], [0, 0, 1, 1], [], []>} : vector<64x32xf32>, vector<32x384xf32>, vector<64x384xf32> -> vector<64x384xf32>
    %21 = vector.broadcast %15 : vector<1x384xf32> to vector<64x384xf32>
    %22 = arith.addf %20, %21 : vector<64x384xf32>
    %23 = vector.shape_cast %22 : vector<64x384xf32> to vector<8x8x384xf32>
    %c0_21 = arith.constant 0 : index
    %c0_22 = arith.constant 0 : index
    %c0_23 = arith.constant 0 : index
    %24 = vector.load %arg12[%c0_21, %c0_22, %c0_23] : memref<8x8x384xf32, #tpu.memory_space<vmem>>, vector<8x8x384xf32>
    tpu.vector_store %arg12[%c0_21, %c0_22, %c0_23], %23 {strides = array<i32>} : memref<8x8x384xf32, #tpu.memory_space<vmem>>, vector<8x8x384xf32>,
    %c0_24 = arith.constant 0 : index
    %c0_25 = arith.constant 0 : index
    %c0_26 = arith.constant 0 : index
    %25 = vector.load %arg5[%c0_24, %c0_25, %c0_26] : memref<2x128x384xf32, #tpu.memory_space<vmem>>, vector<1x128x384xf32>
    %26 = vector.shape_cast %25 : vector<1x128x384xf32> to vector<128x384xf32>
    %c1_27 = arith.constant 1 : index
    %c0_28 = arith.constant 0 : index
    %c0_29 = arith.constant 0 : index
    %27 = vector.load %arg5[%c1_27, %c0_28, %c0_29] : memref<2x128x384xf32, #tpu.memory_space<vmem>>, vector<1x128x384xf32>
    %28 = vector.shape_cast %27 : vector<1x128x384xf32> to vector<128x384xf32>
    %c0_30 = arith.constant 0 : index
    %c0_31 = arith.constant 0 : index
    %c0_32 = arith.constant 0 : index
    %29 = vector.load %arg7[%c0_30, %c0_31, %c0_32] : memref<2x1x384xf32, #tpu.memory_space<vmem>>, vector<1x1x384xf32>
    %30 = vector.shape_cast %29 : vector<1x1x384xf32> to vector<1x384xf32>
    %c1_33 = arith.constant 1 : index
    %c0_34 = arith.constant 0 : index
    %c0_35 = arith.constant 0 : index
    %31 = vector.load %arg7[%c1_33, %c0_34, %c0_35] : memref<2x1x384xf32, #tpu.memory_space<vmem>>, vector<1x1x384xf32>
    %32 = vector.shape_cast %31 : vector<1x1x384xf32> to vector<1x384xf32>
    %c0_36 = arith.constant 0 : index
    %c0_37 = arith.constant 0 : index
    %c0_38 = arith.constant 0 : index
    %33 = vector.load %arg13[%c0_36, %c0_37, %c0_38] : memref<2x8x128xf32, #tpu.memory_space<vmem>>, vector<1x8x128xf32>
    %34 = vector.shape_cast %33 : vector<1x8x128xf32> to vector<8x128xf32>
    %c1_39 = arith.constant 1 : index
    %c0_40 = arith.constant 0 : index
    %c0_41 = arith.constant 0 : index
    %35 = vector.load %arg13[%c1_39, %c0_40, %c0_41] : memref<2x8x128xf32, #tpu.memory_space<vmem>>, vector<1x8x128xf32>
    %36 = vector.shape_cast %35 : vector<1x8x128xf32> to vector<8x128xf32>
    %c0_i32_42 = arith.constant 0 : i32
    %c2_i32 = arith.constant 2 : i32
    %37 = arith.addi %c0_i32_42, %c2_i32 : i32
    %c1_i32 = arith.constant 1 : i32
    %38:2 = scf.for %arg14 = %c0_i32_42 to %37 step %c1_i32 iter_args(%arg15 = %34, %arg16 = %36) -> (vector<8x128xf32>, vector<8x128xf32>)  : i32 {
      %c4_i32 = arith.constant 4 : i32
      %48 = arith.muli %arg14, %c4_i32 : i32
      %c0_i32_52 = arith.constant 0 : i32
      %49 = arith.addi %48, %c0_i32_52 : i32
      %c7_i32 = arith.constant 7 : i32
      %50 = arith.subi %c7_i32, %49 : i32
      %51 = arith.index_cast %49 : i32 to index
      %c0_53 = arith.constant 0 : index
      %c0_54 = arith.constant 0 : index
      %52 = vector.load %arg11[%51, %c0_53, %c0_54] : memref<8x8x384xf32, #tpu.memory_space<vmem>>, vector<1x8x384xf32>
      %53 = vector.shape_cast %52 : vector<1x8x384xf32> to vector<8x384xf32>
      %cst_55 = arith.constant dense<0.000000e+00> : vector<8x384xf32>
      %54 = tpu.matmul %arg15, %26, %cst_55 {dimension_numbers = #tpu.dot_dimension_numbers<[1], [0], [0], [1], [0, 0, 1, 1], [], []>} : vector<8x128xf32>, vector<128x384xf32>, vector<8x384xf32> -> vector<8x384xf32>
      %55 = vector.broadcast %30 : vector<1x384xf32> to vector<8x384xf32>
      %56 = arith.addf %54, %55 : vector<8x384xf32>
      %57 = vector.extract_strided_slice %53 {offsets = [0, 0], sizes = [8, 128], strides = [1, 1]} : vector<8x384xf32> to vector<8x128xf32>
      %58 = vector.extract_strided_slice %56 {offsets = [0, 0], sizes = [8, 128], strides = [1, 1]} : vector<8x384xf32> to vector<8x128xf32>
      %59 = arith.addf %57, %58 : vector<8x128xf32>
      %60 = arith.negf %59 : vector<8x128xf32>
      %61 = math.exp %60 : vector<8x128xf32>
      %cst_56 = arith.constant 1.000000e+00 : f32
      %62 = vector.broadcast %cst_56 : f32 to vector<8x128xf32>
      %63 = arith.addf %62, %61 : vector<8x128xf32>
      %64 = arith.divf %62, %63 : vector<8x128xf32>
      %65 = vector.extract_strided_slice %53 {offsets = [0, 128], sizes = [8, 128], strides = [1, 1]} : vector<8x384xf32> to vector<8x128xf32>
      %66 = vector.extract_strided_slice %56 {offsets = [0, 128], sizes = [8, 128], strides = [1, 1]} : vector<8x384xf32> to vector<8x128xf32>
      %67 = arith.addf %65, %66 : vector<8x128xf32>
      %68 = arith.negf %67 : vector<8x128xf32>
      %69 = math.exp %68 : vector<8x128xf32>
      %cst_57 = arith.constant 1.000000e+00 : f32
      %70 = vector.broadcast %cst_57 : f32 to vector<8x128xf32>
      %71 = arith.addf %70, %69 : vector<8x128xf32>
      %72 = arith.divf %70, %71 : vector<8x128xf32>
      %73 = vector.extract_strided_slice %53 {offsets = [0, 256], sizes = [8, 128], strides = [1, 1]} : vector<8x384xf32> to vector<8x128xf32>
      %74 = vector.extract_strided_slice %56 {offsets = [0, 256], sizes = [8, 128], strides = [1, 1]} : vector<8x384xf32> to vector<8x128xf32>
      %75 = arith.mulf %64, %74 : vector<8x128xf32>
      %76 = arith.addf %73, %75 : vector<8x128xf32>
      %77 = math.tanh %76 : vector<8x128xf32>
      %cst_58 = arith.constant 1.000000e+00 : f32
      %78 = vector.broadcast %cst_58 : f32 to vector<8x128xf32>
      %79 = arith.subf %78, %72 : vector<8x128xf32>
      %80 = arith.mulf %79, %77 : vector<8x128xf32>
      %81 = arith.mulf %72, %arg15 : vector<8x128xf32>
      %82 = arith.addf %80, %81 : vector<8x128xf32>
      %83 = arith.index_cast %49 : i32 to index
      %c0_59 = arith.constant 0 : index
      %c0_60 = arith.constant 0 : index
      %84 = vector.load %arg8[%83, %c0_59, %c0_60] : memref<8x8x128xf32, #tpu.memory_space<vmem>>, vector<1x8x128xf32>
      %85 = vector.shape_cast %84 : vector<1x8x128xf32> to vector<8x128xf32>
      %86 = vector.shape_cast %82 : vector<8x128xf32> to vector<1x8x128xf32>
      tpu.vector_store %arg8[%83, %c0_59, %c0_60], %86 {strides = array<i32>} : memref<8x8x128xf32, #tpu.memory_space<vmem>>, vector<1x8x128xf32>,
      %87 = arith.index_cast %50 : i32 to index
      %c0_61 = arith.constant 0 : index
      %c0_62 = arith.constant 0 : index
      %88 = vector.load %arg12[%87, %c0_61, %c0_62] : memref<8x8x384xf32, #tpu.memory_space<vmem>>, vector<1x8x384xf32>
      %89 = vector.shape_cast %88 : vector<1x8x384xf32> to vector<8x384xf32>
      %cst_63 = arith.constant dense<0.000000e+00> : vector<8x384xf32>
      %90 = tpu.matmul %arg16, %28, %cst_63 {dimension_numbers = #tpu.dot_dimension_numbers<[1], [0], [0], [1], [0, 0, 1, 1], [], []>} : vector<8x128xf32>, vector<128x384xf32>, vector<8x384xf32> -> vector<8x384xf32>
      %91 = vector.broadcast %32 : vector<1x384xf32> to vector<8x384xf32>
      %92 = arith.addf %90, %91 : vector<8x384xf32>
      %93 = vector.extract_strided_slice %89 {offsets = [0, 0], sizes = [8, 128], strides = [1, 1]} : vector<8x384xf32> to vector<8x128xf32>
      %94 = vector.extract_strided_slice %92 {offsets = [0, 0], sizes = [8, 128], strides = [1, 1]} : vector<8x384xf32> to vector<8x128xf32>
      %95 = arith.addf %93, %94 : vector<8x128xf32>
      %96 = arith.negf %95 : vector<8x128xf32>
      %97 = math.exp %96 : vector<8x128xf32>
      %cst_64 = arith.constant 1.000000e+00 : f32
      %98 = vector.broadcast %cst_64 : f32 to vector<8x128xf32>
      %99 = arith.addf %98, %97 : vector<8x128xf32>
      %100 = arith.divf %98, %99 : vector<8x128xf32>
      %101 = vector.extract_strided_slice %89 {offsets = [0, 128], sizes = [8, 128], strides = [1, 1]} : vector<8x384xf32> to vector<8x128xf32>
      %102 = vector.extract_strided_slice %92 {offsets = [0, 128], sizes = [8, 128], strides = [1, 1]} : vector<8x384xf32> to vector<8x128xf32>
      %103 = arith.addf %101, %102 : vector<8x128xf32>
      %104 = arith.negf %103 : vector<8x128xf32>
      %105 = math.exp %104 : vector<8x128xf32>
      %cst_65 = arith.constant 1.000000e+00 : f32
      %106 = vector.broadcast %cst_65 : f32 to vector<8x128xf32>
      %107 = arith.addf %106, %105 : vector<8x128xf32>
      %108 = arith.divf %106, %107 : vector<8x128xf32>
      %109 = vector.extract_strided_slice %89 {offsets = [0, 256], sizes = [8, 128], strides = [1, 1]} : vector<8x384xf32> to vector<8x128xf32>
      %110 = vector.extract_strided_slice %92 {offsets = [0, 256], sizes = [8, 128], strides = [1, 1]} : vector<8x384xf32> to vector<8x128xf32>
      %111 = arith.mulf %100, %110 : vector<8x128xf32>
      %112 = arith.addf %109, %111 : vector<8x128xf32>
      %113 = math.tanh %112 : vector<8x128xf32>
      %cst_66 = arith.constant 1.000000e+00 : f32
      %114 = vector.broadcast %cst_66 : f32 to vector<8x128xf32>
      %115 = arith.subf %114, %108 : vector<8x128xf32>
      %116 = arith.mulf %115, %113 : vector<8x128xf32>
      %117 = arith.mulf %108, %arg16 : vector<8x128xf32>
      %118 = arith.addf %116, %117 : vector<8x128xf32>
      %119 = arith.index_cast %50 : i32 to index
      %c0_67 = arith.constant 0 : index
      %c0_68 = arith.constant 0 : index
      %120 = vector.load %arg9[%119, %c0_67, %c0_68] : memref<8x8x128xf32, #tpu.memory_space<vmem>>, vector<1x8x128xf32>
      %121 = vector.shape_cast %120 : vector<1x8x128xf32> to vector<8x128xf32>
      %122 = vector.shape_cast %118 : vector<8x128xf32> to vector<1x8x128xf32>
      tpu.vector_store %arg9[%119, %c0_67, %c0_68], %122 {strides = array<i32>} : memref<8x8x128xf32, #tpu.memory_space<vmem>>, vector<1x8x128xf32>,
      %c4_i32_69 = arith.constant 4 : i32
      %123 = arith.muli %arg14, %c4_i32_69 : i32
      %c1_i32_70 = arith.constant 1 : i32
      %124 = arith.addi %123, %c1_i32_70 : i32
      %c7_i32_71 = arith.constant 7 : i32
      %125 = arith.subi %c7_i32_71, %124 : i32
      %126 = arith.index_cast %124 : i32 to index
      %c0_72 = arith.constant 0 : index
      %c0_73 = arith.constant 0 : index
      %127 = vector.load %arg11[%126, %c0_72, %c0_73] : memref<8x8x384xf32, #tpu.memory_space<vmem>>, vector<1x8x384xf32>
      %128 = vector.shape_cast %127 : vector<1x8x384xf32> to vector<8x384xf32>
      %cst_74 = arith.constant dense<0.000000e+00> : vector<8x384xf32>
      %129 = tpu.matmul %82, %26, %cst_74 {dimension_numbers = #tpu.dot_dimension_numbers<[1], [0], [0], [1], [0, 0, 1, 1], [], []>} : vector<8x128xf32>, vector<128x384xf32>, vector<8x384xf32> -> vector<8x384xf32>
      %130 = vector.broadcast %30 : vector<1x384xf32> to vector<8x384xf32>
      %131 = arith.addf %129, %130 : vector<8x384xf32>
      %132 = vector.extract_strided_slice %128 {offsets = [0, 0], sizes = [8, 128], strides = [1, 1]} : vector<8x384xf32> to vector<8x128xf32>
      %133 = vector.extract_strided_slice %131 {offsets = [0, 0], sizes = [8, 128], strides = [1, 1]} : vector<8x384xf32> to vector<8x128xf32>
      %134 = arith.addf %132, %133 : vector<8x128xf32>
      %135 = arith.negf %134 : vector<8x128xf32>
      %136 = math.exp %135 : vector<8x128xf32>
      %cst_75 = arith.constant 1.000000e+00 : f32
      %137 = vector.broadcast %cst_75 : f32 to vector<8x128xf32>
      %138 = arith.addf %137, %136 : vector<8x128xf32>
      %139 = arith.divf %137, %138 : vector<8x128xf32>
      %140 = vector.extract_strided_slice %128 {offsets = [0, 128], sizes = [8, 128], strides = [1, 1]} : vector<8x384xf32> to vector<8x128xf32>
      %141 = vector.extract_strided_slice %131 {offsets = [0, 128], sizes = [8, 128], strides = [1, 1]} : vector<8x384xf32> to vector<8x128xf32>
      %142 = arith.addf %140, %141 : vector<8x128xf32>
      %143 = arith.negf %142 : vector<8x128xf32>
      %144 = math.exp %143 : vector<8x128xf32>
      %cst_76 = arith.constant 1.000000e+00 : f32
      %145 = vector.broadcast %cst_76 : f32 to vector<8x128xf32>
      %146 = arith.addf %145, %144 : vector<8x128xf32>
      %147 = arith.divf %145, %146 : vector<8x128xf32>
      %148 = vector.extract_strided_slice %128 {offsets = [0, 256], sizes = [8, 128], strides = [1, 1]} : vector<8x384xf32> to vector<8x128xf32>
      %149 = vector.extract_strided_slice %131 {offsets = [0, 256], sizes = [8, 128], strides = [1, 1]} : vector<8x384xf32> to vector<8x128xf32>
      %150 = arith.mulf %139, %149 : vector<8x128xf32>
      %151 = arith.addf %148, %150 : vector<8x128xf32>
      %152 = math.tanh %151 : vector<8x128xf32>
      %cst_77 = arith.constant 1.000000e+00 : f32
      %153 = vector.broadcast %cst_77 : f32 to vector<8x128xf32>
      %154 = arith.subf %153, %147 : vector<8x128xf32>
      %155 = arith.mulf %154, %152 : vector<8x128xf32>
      %156 = arith.mulf %147, %82 : vector<8x128xf32>
      %157 = arith.addf %155, %156 : vector<8x128xf32>
      %158 = arith.index_cast %124 : i32 to index
      %c0_78 = arith.constant 0 : index
      %c0_79 = arith.constant 0 : index
      %159 = vector.load %arg8[%158, %c0_78, %c0_79] : memref<8x8x128xf32, #tpu.memory_space<vmem>>, vector<1x8x128xf32>
      %160 = vector.shape_cast %159 : vector<1x8x128xf32> to vector<8x128xf32>
      %161 = vector.shape_cast %157 : vector<8x128xf32> to vector<1x8x128xf32>
      tpu.vector_store %arg8[%158, %c0_78, %c0_79], %161 {strides = array<i32>} : memref<8x8x128xf32, #tpu.memory_space<vmem>>, vector<1x8x128xf32>,
      %162 = arith.index_cast %125 : i32 to index
      %c0_80 = arith.constant 0 : index
      %c0_81 = arith.constant 0 : index
      %163 = vector.load %arg12[%162, %c0_80, %c0_81] : memref<8x8x384xf32, #tpu.memory_space<vmem>>, vector<1x8x384xf32>
      %164 = vector.shape_cast %163 : vector<1x8x384xf32> to vector<8x384xf32>
      %cst_82 = arith.constant dense<0.000000e+00> : vector<8x384xf32>
      %165 = tpu.matmul %118, %28, %cst_82 {dimension_numbers = #tpu.dot_dimension_numbers<[1], [0], [0], [1], [0, 0, 1, 1], [], []>} : vector<8x128xf32>, vector<128x384xf32>, vector<8x384xf32> -> vector<8x384xf32>
      %166 = vector.broadcast %32 : vector<1x384xf32> to vector<8x384xf32>
      %167 = arith.addf %165, %166 : vector<8x384xf32>
      %168 = vector.extract_strided_slice %164 {offsets = [0, 0], sizes = [8, 128], strides = [1, 1]} : vector<8x384xf32> to vector<8x128xf32>
      %169 = vector.extract_strided_slice %167 {offsets = [0, 0], sizes = [8, 128], strides = [1, 1]} : vector<8x384xf32> to vector<8x128xf32>
      %170 = arith.addf %168, %169 : vector<8x128xf32>
      %171 = arith.negf %170 : vector<8x128xf32>
      %172 = math.exp %171 : vector<8x128xf32>
      %cst_83 = arith.constant 1.000000e+00 : f32
      %173 = vector.broadcast %cst_83 : f32 to vector<8x128xf32>
      %174 = arith.addf %173, %172 : vector<8x128xf32>
      %175 = arith.divf %173, %174 : vector<8x128xf32>
      %176 = vector.extract_strided_slice %164 {offsets = [0, 128], sizes = [8, 128], strides = [1, 1]} : vector<8x384xf32> to vector<8x128xf32>
      %177 = vector.extract_strided_slice %167 {offsets = [0, 128], sizes = [8, 128], strides = [1, 1]} : vector<8x384xf32> to vector<8x128xf32>
      %178 = arith.addf %176, %177 : vector<8x128xf32>
      %179 = arith.negf %178 : vector<8x128xf32>
      %180 = math.exp %179 : vector<8x128xf32>
      %cst_84 = arith.constant 1.000000e+00 : f32
      %181 = vector.broadcast %cst_84 : f32 to vector<8x128xf32>
      %182 = arith.addf %181, %180 : vector<8x128xf32>
      %183 = arith.divf %181, %182 : vector<8x128xf32>
      %184 = vector.extract_strided_slice %164 {offsets = [0, 256], sizes = [8, 128], strides = [1, 1]} : vector<8x384xf32> to vector<8x128xf32>
      %185 = vector.extract_strided_slice %167 {offsets = [0, 256], sizes = [8, 128], strides = [1, 1]} : vector<8x384xf32> to vector<8x128xf32>
      %186 = arith.mulf %175, %185 : vector<8x128xf32>
      %187 = arith.addf %184, %186 : vector<8x128xf32>
      %188 = math.tanh %187 : vector<8x128xf32>
      %cst_85 = arith.constant 1.000000e+00 : f32
      %189 = vector.broadcast %cst_85 : f32 to vector<8x128xf32>
      %190 = arith.subf %189, %183 : vector<8x128xf32>
      %191 = arith.mulf %190, %188 : vector<8x128xf32>
      %192 = arith.mulf %183, %118 : vector<8x128xf32>
      %193 = arith.addf %191, %192 : vector<8x128xf32>
      %194 = arith.index_cast %125 : i32 to index
      %c0_86 = arith.constant 0 : index
      %c0_87 = arith.constant 0 : index
      %195 = vector.load %arg9[%194, %c0_86, %c0_87] : memref<8x8x128xf32, #tpu.memory_space<vmem>>, vector<1x8x128xf32>
      %196 = vector.shape_cast %195 : vector<1x8x128xf32> to vector<8x128xf32>
      %197 = vector.shape_cast %193 : vector<8x128xf32> to vector<1x8x128xf32>
      tpu.vector_store %arg9[%194, %c0_86, %c0_87], %197 {strides = array<i32>} : memref<8x8x128xf32, #tpu.memory_space<vmem>>, vector<1x8x128xf32>,
      %c4_i32_88 = arith.constant 4 : i32
      %198 = arith.muli %arg14, %c4_i32_88 : i32
      %c2_i32_89 = arith.constant 2 : i32
      %199 = arith.addi %198, %c2_i32_89 : i32
      %c7_i32_90 = arith.constant 7 : i32
      %200 = arith.subi %c7_i32_90, %199 : i32
      %201 = arith.index_cast %199 : i32 to index
      %c0_91 = arith.constant 0 : index
      %c0_92 = arith.constant 0 : index
      %202 = vector.load %arg11[%201, %c0_91, %c0_92] : memref<8x8x384xf32, #tpu.memory_space<vmem>>, vector<1x8x384xf32>
      %203 = vector.shape_cast %202 : vector<1x8x384xf32> to vector<8x384xf32>
      %cst_93 = arith.constant dense<0.000000e+00> : vector<8x384xf32>
      %204 = tpu.matmul %157, %26, %cst_93 {dimension_numbers = #tpu.dot_dimension_numbers<[1], [0], [0], [1], [0, 0, 1, 1], [], []>} : vector<8x128xf32>, vector<128x384xf32>, vector<8x384xf32> -> vector<8x384xf32>
      %205 = vector.broadcast %30 : vector<1x384xf32> to vector<8x384xf32>
      %206 = arith.addf %204, %205 : vector<8x384xf32>
      %207 = vector.extract_strided_slice %203 {offsets = [0, 0], sizes = [8, 128], strides = [1, 1]} : vector<8x384xf32> to vector<8x128xf32>
      %208 = vector.extract_strided_slice %206 {offsets = [0, 0], sizes = [8, 128], strides = [1, 1]} : vector<8x384xf32> to vector<8x128xf32>
      %209 = arith.addf %207, %208 : vector<8x128xf32>
      %210 = arith.negf %209 : vector<8x128xf32>
      %211 = math.exp %210 : vector<8x128xf32>
      %cst_94 = arith.constant 1.000000e+00 : f32
      %212 = vector.broadcast %cst_94 : f32 to vector<8x128xf32>
      %213 = arith.addf %212, %211 : vector<8x128xf32>
      %214 = arith.divf %212, %213 : vector<8x128xf32>
      %215 = vector.extract_strided_slice %203 {offsets = [0, 128], sizes = [8, 128], strides = [1, 1]} : vector<8x384xf32> to vector<8x128xf32>
      %216 = vector.extract_strided_slice %206 {offsets = [0, 128], sizes = [8, 128], strides = [1, 1]} : vector<8x384xf32> to vector<8x128xf32>
      %217 = arith.addf %215, %216 : vector<8x128xf32>
      %218 = arith.negf %217 : vector<8x128xf32>
      %219 = math.exp %218 : vector<8x128xf32>
      %cst_95 = arith.constant 1.000000e+00 : f32
      %220 = vector.broadcast %cst_95 : f32 to vector<8x128xf32>
      %221 = arith.addf %220, %219 : vector<8x128xf32>
      %222 = arith.divf %220, %221 : vector<8x128xf32>
      %223 = vector.extract_strided_slice %203 {offsets = [0, 256], sizes = [8, 128], strides = [1, 1]} : vector<8x384xf32> to vector<8x128xf32>
      %224 = vector.extract_strided_slice %206 {offsets = [0, 256], sizes = [8, 128], strides = [1, 1]} : vector<8x384xf32> to vector<8x128xf32>
      %225 = arith.mulf %214, %224 : vector<8x128xf32>
      %226 = arith.addf %223, %225 : vector<8x128xf32>
      %227 = math.tanh %226 : vector<8x128xf32>
      %cst_96 = arith.constant 1.000000e+00 : f32
      %228 = vector.broadcast %cst_96 : f32 to vector<8x128xf32>
      %229 = arith.subf %228, %222 : vector<8x128xf32>
      %230 = arith.mulf %229, %227 : vector<8x128xf32>
      %231 = arith.mulf %222, %157 : vector<8x128xf32>
      %232 = arith.addf %230, %231 : vector<8x128xf32>
      %233 = arith.index_cast %199 : i32 to index
      %c0_97 = arith.constant 0 : index
      %c0_98 = arith.constant 0 : index
      %234 = vector.load %arg8[%233, %c0_97, %c0_98] : memref<8x8x128xf32, #tpu.memory_space<vmem>>, vector<1x8x128xf32>
      %235 = vector.shape_cast %234 : vector<1x8x128xf32> to vector<8x128xf32>
      %236 = vector.shape_cast %232 : vector<8x128xf32> to vector<1x8x128xf32>
      tpu.vector_store %arg8[%233, %c0_97, %c0_98], %236 {strides = array<i32>} : memref<8x8x128xf32, #tpu.memory_space<vmem>>, vector<1x8x128xf32>,
      %237 = arith.index_cast %200 : i32 to index
      %c0_99 = arith.constant 0 : index
      %c0_100 = arith.constant 0 : index
      %238 = vector.load %arg12[%237, %c0_99, %c0_100] : memref<8x8x384xf32, #tpu.memory_space<vmem>>, vector<1x8x384xf32>
      %239 = vector.shape_cast %238 : vector<1x8x384xf32> to vector<8x384xf32>
      %cst_101 = arith.constant dense<0.000000e+00> : vector<8x384xf32>
      %240 = tpu.matmul %193, %28, %cst_101 {dimension_numbers = #tpu.dot_dimension_numbers<[1], [0], [0], [1], [0, 0, 1, 1], [], []>} : vector<8x128xf32>, vector<128x384xf32>, vector<8x384xf32> -> vector<8x384xf32>
      %241 = vector.broadcast %32 : vector<1x384xf32> to vector<8x384xf32>
      %242 = arith.addf %240, %241 : vector<8x384xf32>
      %243 = vector.extract_strided_slice %239 {offsets = [0, 0], sizes = [8, 128], strides = [1, 1]} : vector<8x384xf32> to vector<8x128xf32>
      %244 = vector.extract_strided_slice %242 {offsets = [0, 0], sizes = [8, 128], strides = [1, 1]} : vector<8x384xf32> to vector<8x128xf32>
      %245 = arith.addf %243, %244 : vector<8x128xf32>
      %246 = arith.negf %245 : vector<8x128xf32>
      %247 = math.exp %246 : vector<8x128xf32>
      %cst_102 = arith.constant 1.000000e+00 : f32
      %248 = vector.broadcast %cst_102 : f32 to vector<8x128xf32>
      %249 = arith.addf %248, %247 : vector<8x128xf32>
      %250 = arith.divf %248, %249 : vector<8x128xf32>
      %251 = vector.extract_strided_slice %239 {offsets = [0, 128], sizes = [8, 128], strides = [1, 1]} : vector<8x384xf32> to vector<8x128xf32>
      %252 = vector.extract_strided_slice %242 {offsets = [0, 128], sizes = [8, 128], strides = [1, 1]} : vector<8x384xf32> to vector<8x128xf32>
      %253 = arith.addf %251, %252 : vector<8x128xf32>
      %254 = arith.negf %253 : vector<8x128xf32>
      %255 = math.exp %254 : vector<8x128xf32>
      %cst_103 = arith.constant 1.000000e+00 : f32
      %256 = vector.broadcast %cst_103 : f32 to vector<8x128xf32>
      %257 = arith.addf %256, %255 : vector<8x128xf32>
      %258 = arith.divf %256, %257 : vector<8x128xf32>
      %259 = vector.extract_strided_slice %239 {offsets = [0, 256], sizes = [8, 128], strides = [1, 1]} : vector<8x384xf32> to vector<8x128xf32>
      %260 = vector.extract_strided_slice %242 {offsets = [0, 256], sizes = [8, 128], strides = [1, 1]} : vector<8x384xf32> to vector<8x128xf32>
      %261 = arith.mulf %250, %260 : vector<8x128xf32>
      %262 = arith.addf %259, %261 : vector<8x128xf32>
      %263 = math.tanh %262 : vector<8x128xf32>
      %cst_104 = arith.constant 1.000000e+00 : f32
      %264 = vector.broadcast %cst_104 : f32 to vector<8x128xf32>
      %265 = arith.subf %264, %258 : vector<8x128xf32>
      %266 = arith.mulf %265, %263 : vector<8x128xf32>
      %267 = arith.mulf %258, %193 : vector<8x128xf32>
      %268 = arith.addf %266, %267 : vector<8x128xf32>
      %269 = arith.index_cast %200 : i32 to index
      %c0_105 = arith.constant 0 : index
      %c0_106 = arith.constant 0 : index
      %270 = vector.load %arg9[%269, %c0_105, %c0_106] : memref<8x8x128xf32, #tpu.memory_space<vmem>>, vector<1x8x128xf32>
      %271 = vector.shape_cast %270 : vector<1x8x128xf32> to vector<8x128xf32>
      %272 = vector.shape_cast %268 : vector<8x128xf32> to vector<1x8x128xf32>
      tpu.vector_store %arg9[%269, %c0_105, %c0_106], %272 {strides = array<i32>} : memref<8x8x128xf32, #tpu.memory_space<vmem>>, vector<1x8x128xf32>,
      %c4_i32_107 = arith.constant 4 : i32
      %273 = arith.muli %arg14, %c4_i32_107 : i32
      %c3_i32 = arith.constant 3 : i32
      %274 = arith.addi %273, %c3_i32 : i32
      %c7_i32_108 = arith.constant 7 : i32
      %275 = arith.subi %c7_i32_108, %274 : i32
      %276 = arith.index_cast %274 : i32 to index
      %c0_109 = arith.constant 0 : index
      %c0_110 = arith.constant 0 : index
      %277 = vector.load %arg11[%276, %c0_109, %c0_110] : memref<8x8x384xf32, #tpu.memory_space<vmem>>, vector<1x8x384xf32>
      %278 = vector.shape_cast %277 : vector<1x8x384xf32> to vector<8x384xf32>
      %cst_111 = arith.constant dense<0.000000e+00> : vector<8x384xf32>
      %279 = tpu.matmul %232, %26, %cst_111 {dimension_numbers = #tpu.dot_dimension_numbers<[1], [0], [0], [1], [0, 0, 1, 1], [], []>} : vector<8x128xf32>, vector<128x384xf32>, vector<8x384xf32> -> vector<8x384xf32>
      %280 = vector.broadcast %30 : vector<1x384xf32> to vector<8x384xf32>
      %281 = arith.addf %279, %280 : vector<8x384xf32>
      %282 = vector.extract_strided_slice %278 {offsets = [0, 0], sizes = [8, 128], strides = [1, 1]} : vector<8x384xf32> to vector<8x128xf32>
      %283 = vector.extract_strided_slice %281 {offsets = [0, 0], sizes = [8, 128], strides = [1, 1]} : vector<8x384xf32> to vector<8x128xf32>
      %284 = arith.addf %282, %283 : vector<8x128xf32>
      %285 = arith.negf %284 : vector<8x128xf32>
      %286 = math.exp %285 : vector<8x128xf32>
      %cst_112 = arith.constant 1.000000e+00 : f32
      %287 = vector.broadcast %cst_112 : f32 to vector<8x128xf32>
      %288 = arith.addf %287, %286 : vector<8x128xf32>
      %289 = arith.divf %287, %288 : vector<8x128xf32>
      %290 = vector.extract_strided_slice %278 {offsets = [0, 128], sizes = [8, 128], strides = [1, 1]} : vector<8x384xf32> to vector<8x128xf32>
      %291 = vector.extract_strided_slice %281 {offsets = [0, 128], sizes = [8, 128], strides = [1, 1]} : vector<8x384xf32> to vector<8x128xf32>
      %292 = arith.addf %290, %291 : vector<8x128xf32>
      %293 = arith.negf %292 : vector<8x128xf32>
      %294 = math.exp %293 : vector<8x128xf32>
      %cst_113 = arith.constant 1.000000e+00 : f32
      %295 = vector.broadcast %cst_113 : f32 to vector<8x128xf32>
      %296 = arith.addf %295, %294 : vector<8x128xf32>
      %297 = arith.divf %295, %296 : vector<8x128xf32>
      %298 = vector.extract_strided_slice %278 {offsets = [0, 256], sizes = [8, 128], strides = [1, 1]} : vector<8x384xf32> to vector<8x128xf32>
      %299 = vector.extract_strided_slice %281 {offsets = [0, 256], sizes = [8, 128], strides = [1, 1]} : vector<8x384xf32> to vector<8x128xf32>
      %300 = arith.mulf %289, %299 : vector<8x128xf32>
      %301 = arith.addf %298, %300 : vector<8x128xf32>
      %302 = math.tanh %301 : vector<8x128xf32>
      %cst_114 = arith.constant 1.000000e+00 : f32
      %303 = vector.broadcast %cst_114 : f32 to vector<8x128xf32>
      %304 = arith.subf %303, %297 : vector<8x128xf32>
      %305 = arith.mulf %304, %302 : vector<8x128xf32>
      %306 = arith.mulf %297, %232 : vector<8x128xf32>
      %307 = arith.addf %305, %306 : vector<8x128xf32>
      %308 = arith.index_cast %274 : i32 to index
      %c0_115 = arith.constant 0 : index
      %c0_116 = arith.constant 0 : index
      %309 = vector.load %arg8[%308, %c0_115, %c0_116] : memref<8x8x128xf32, #tpu.memory_space<vmem>>, vector<1x8x128xf32>
      %310 = vector.shape_cast %309 : vector<1x8x128xf32> to vector<8x128xf32>
      %311 = vector.shape_cast %307 : vector<8x128xf32> to vector<1x8x128xf32>
      tpu.vector_store %arg8[%308, %c0_115, %c0_116], %311 {strides = array<i32>} : memref<8x8x128xf32, #tpu.memory_space<vmem>>, vector<1x8x128xf32>,
      %312 = arith.index_cast %275 : i32 to index
      %c0_117 = arith.constant 0 : index
      %c0_118 = arith.constant 0 : index
      %313 = vector.load %arg12[%312, %c0_117, %c0_118] : memref<8x8x384xf32, #tpu.memory_space<vmem>>, vector<1x8x384xf32>
      %314 = vector.shape_cast %313 : vector<1x8x384xf32> to vector<8x384xf32>
      %cst_119 = arith.constant dense<0.000000e+00> : vector<8x384xf32>
      %315 = tpu.matmul %268, %28, %cst_119 {dimension_numbers = #tpu.dot_dimension_numbers<[1], [0], [0], [1], [0, 0, 1, 1], [], []>} : vector<8x128xf32>, vector<128x384xf32>, vector<8x384xf32> -> vector<8x384xf32>
      %316 = vector.broadcast %32 : vector<1x384xf32> to vector<8x384xf32>
      %317 = arith.addf %315, %316 : vector<8x384xf32>
      %318 = vector.extract_strided_slice %314 {offsets = [0, 0], sizes = [8, 128], strides = [1, 1]} : vector<8x384xf32> to vector<8x128xf32>
      %319 = vector.extract_strided_slice %317 {offsets = [0, 0], sizes = [8, 128], strides = [1, 1]} : vector<8x384xf32> to vector<8x128xf32>
      %320 = arith.addf %318, %319 : vector<8x128xf32>
      %321 = arith.negf %320 : vector<8x128xf32>
      %322 = math.exp %321 : vector<8x128xf32>
      %cst_120 = arith.constant 1.000000e+00 : f32
      %323 = vector.broadcast %cst_120 : f32 to vector<8x128xf32>
      %324 = arith.addf %323, %322 : vector<8x128xf32>
      %325 = arith.divf %323, %324 : vector<8x128xf32>
      %326 = vector.extract_strided_slice %314 {offsets = [0, 128], sizes = [8, 128], strides = [1, 1]} : vector<8x384xf32> to vector<8x128xf32>
      %327 = vector.extract_strided_slice %317 {offsets = [0, 128], sizes = [8, 128], strides = [1, 1]} : vector<8x384xf32> to vector<8x128xf32>
      %328 = arith.addf %326, %327 : vector<8x128xf32>
      %329 = arith.negf %328 : vector<8x128xf32>
      %330 = math.exp %329 : vector<8x128xf32>
      %cst_121 = arith.constant 1.000000e+00 : f32
      %331 = vector.broadcast %cst_121 : f32 to vector<8x128xf32>
      %332 = arith.addf %331, %330 : vector<8x128xf32>
      %333 = arith.divf %331, %332 : vector<8x128xf32>
      %334 = vector.extract_strided_slice %314 {offsets = [0, 256], sizes = [8, 128], strides = [1, 1]} : vector<8x384xf32> to vector<8x128xf32>
      %335 = vector.extract_strided_slice %317 {offsets = [0, 256], sizes = [8, 128], strides = [1, 1]} : vector<8x384xf32> to vector<8x128xf32>
      %336 = arith.mulf %325, %335 : vector<8x128xf32>
      %337 = arith.addf %334, %336 : vector<8x128xf32>
      %338 = math.tanh %337 : vector<8x128xf32>
      %cst_122 = arith.constant 1.000000e+00 : f32
      %339 = vector.broadcast %cst_122 : f32 to vector<8x128xf32>
      %340 = arith.subf %339, %333 : vector<8x128xf32>
      %341 = arith.mulf %340, %338 : vector<8x128xf32>
      %342 = arith.mulf %333, %268 : vector<8x128xf32>
      %343 = arith.addf %341, %342 : vector<8x128xf32>
      %344 = arith.index_cast %275 : i32 to index
      %c0_123 = arith.constant 0 : index
      %c0_124 = arith.constant 0 : index
      %345 = vector.load %arg9[%344, %c0_123, %c0_124] : memref<8x8x128xf32, #tpu.memory_space<vmem>>, vector<1x8x128xf32>
      %346 = vector.shape_cast %345 : vector<1x8x128xf32> to vector<8x128xf32>
      %347 = vector.shape_cast %343 : vector<8x128xf32> to vector<1x8x128xf32>
      tpu.vector_store %arg9[%344, %c0_123, %c0_124], %347 {strides = array<i32>} : memref<8x8x128xf32, #tpu.memory_space<vmem>>, vector<1x8x128xf32>,
      scf.yield %307, %343 : vector<8x128xf32>, vector<8x128xf32>
    }
    %c2_i32_43 = arith.constant 2 : i32
    %c0_44 = arith.constant 0 : index
    %c0_45 = arith.constant 0 : index
    %c0_46 = arith.constant 0 : index
    %39 = vector.load %arg13[%c0_44, %c0_45, %c0_46] : memref<2x8x128xf32, #tpu.memory_space<vmem>>, vector<1x8x128xf32>
    %40 = vector.shape_cast %39 : vector<1x8x128xf32> to vector<8x128xf32>
    %41 = vector.shape_cast %38#0 : vector<8x128xf32> to vector<1x8x128xf32>
    tpu.vector_store %arg13[%c0_44, %c0_45, %c0_46], %41 {strides = array<i32>} : memref<2x8x128xf32, #tpu.memory_space<vmem>>, vector<1x8x128xf32>,
    %c1_47 = arith.constant 1 : index
    %c0_48 = arith.constant 0 : index
    %c0_49 = arith.constant 0 : index
    %42 = vector.load %arg13[%c1_47, %c0_48, %c0_49] : memref<2x8x128xf32, #tpu.memory_space<vmem>>, vector<1x8x128xf32>
    %43 = vector.shape_cast %42 : vector<1x8x128xf32> to vector<8x128xf32>
    %44 = vector.shape_cast %38#1 : vector<8x128xf32> to vector<1x8x128xf32>
    tpu.vector_store %arg13[%c1_47, %c0_48, %c0_49], %44 {strides = array<i32>} : memref<2x8x128xf32, #tpu.memory_space<vmem>>, vector<1x8x128xf32>,
    %c0_i32_50 = arith.constant 0 : i32
    %45 = arith.cmpi eq, %arg0, %c0_i32_50 : i32
    %46 = arith.extui %45 : i1 to i32
    %c0_i32_51 = arith.constant 0 : i32
    %47 = arith.cmpi ne, %46, %c0_i32_51 : i32
    scf.if %47 {
      %c0_52 = arith.constant 0 : index
      %c0_53 = arith.constant 0 : index
      %c0_54 = arith.constant 0 : index
      %48 = vector.load %arg13[%c0_52, %c0_53, %c0_54] : memref<2x8x128xf32, #tpu.memory_space<vmem>>, vector<2x8x128xf32>
      %c0_55 = arith.constant 0 : index
      %c0_56 = arith.constant 0 : index
      %c0_57 = arith.constant 0 : index
      %49 = vector.load %arg10[%c0_55, %c0_56, %c0_57] : memref<2x8x128xf32, #tpu.memory_space<vmem>>, vector<2x8x128xf32>
      tpu.vector_store %arg10[%c0_55, %c0_56, %c0_57], %48 {strides = array<i32>} : memref<2x8x128xf32, #tpu.memory_space<vmem>>, vector<2x8x128xf32>,
    } else {
    }
    return
  }
  func.func @transform_0(%arg0: i32) -> (i32, i32, i32) {
    %c0_i32 = arith.constant 0 : i32
    %c0_i32_0 = arith.constant 0 : i32
    %c0_i32_1 = arith.constant 0 : i32
    return %arg0, %c0_i32, %c0_i32_0 : i32, i32, i32
  }
  func.func @transform_1(%arg0: i32) -> (i32, i32, i32) {
    %c0_i32 = arith.constant 0 : i32
    %0 = arith.subi %c0_i32, %arg0 : i32
    %c0_i32_0 = arith.constant 0 : i32
    %c0_i32_1 = arith.constant 0 : i32
    %c0_i32_2 = arith.constant 0 : i32
    return %0, %c0_i32_0, %c0_i32_1 : i32, i32, i32
  }
  func.func @transform_2(%arg0: i32) -> (i32, i32, i32) {
    %c0_i32 = arith.constant 0 : i32
    %c0_i32_0 = arith.constant 0 : i32
    %c0_i32_1 = arith.constant 0 : i32
    %c0_i32_2 = arith.constant 0 : i32
    return %c0_i32, %c0_i32_0, %c0_i32_1 : i32, i32, i32
  }
  func.func @transform_3(%arg0: i32) -> (i32, i32, i32) {
    %c0_i32 = arith.constant 0 : i32
    %c0_i32_0 = arith.constant 0 : i32
    %c0_i32_1 = arith.constant 0 : i32
    %c0_i32_2 = arith.constant 0 : i32
    return %c0_i32, %c0_i32_0, %c0_i32_1 : i32, i32, i32
  }
  func.func @transform_4(%arg0: i32) -> (i32, i32, i32) {
    %c0_i32 = arith.constant 0 : i32
    %c0_i32_0 = arith.constant 0 : i32
    %c0_i32_1 = arith.constant 0 : i32
    %c0_i32_2 = arith.constant 0 : i32
    return %c0_i32, %c0_i32_0, %c0_i32_1 : i32, i32, i32
  }
  func.func @transform_5(%arg0: i32) -> (i32, i32, i32) {
    %c0_i32 = arith.constant 0 : i32
    %c0_i32_0 = arith.constant 0 : i32
    %c0_i32_1 = arith.constant 0 : i32
    %c0_i32_2 = arith.constant 0 : i32
    return %c0_i32, %c0_i32_0, %c0_i32_1 : i32, i32, i32
  }
  func.func @transform_6(%arg0: i32) -> (i32, i32, i32) {
    %c0_i32 = arith.constant 0 : i32
    %c0_i32_0 = arith.constant 0 : i32
    %c0_i32_1 = arith.constant 0 : i32
    %c0_i32_2 = arith.constant 0 : i32
    return %c0_i32, %c0_i32_0, %c0_i32_1 : i32, i32, i32
  }
  func.func @transform_7(%arg0: i32) -> (i32, i32, i32) {
    %c0_i32 = arith.constant 0 : i32
    %c0_i32_0 = arith.constant 0 : i32
    %c0_i32_1 = arith.constant 0 : i32
    return %arg0, %c0_i32, %c0_i32_0 : i32, i32, i32
  }
  func.func @transform_8(%arg0: i32) -> (i32, i32, i32) {
    %c0_i32 = arith.constant 0 : i32
    %0 = arith.subi %c0_i32, %arg0 : i32
    %c0_i32_0 = arith.constant 0 : i32
    %c0_i32_1 = arith.constant 0 : i32
    %c0_i32_2 = arith.constant 0 : i32
    return %0, %c0_i32_0, %c0_i32_1 : i32, i32, i32
  }
  func.func @transform_9(%arg0: i32) -> (i32, i32, i32) {
    %c0_i32 = arith.constant 0 : i32
    %c0_i32_0 = arith.constant 0 : i32
    %c0_i32_1 = arith.constant 0 : i32
    %c0_i32_2 = arith.constant 0 : i32
    return %c0_i32, %c0_i32_0, %c0_i32_1 : i32, i32, i32
  }
}

module attributes {stable_mosaic.version = 11 : i64} {
  func.func @_bigru_layer_kernel(%arg0: i32, %arg1: memref<8x8x128xf32, #tpu.memory_space<vmem>>, %arg2: memref<8x8x128xf32, #tpu.memory_space<vmem>>, %arg3: memref<8x8x128xf32, #tpu.memory_space<vmem>>, %arg4: memref<8x8x128xf32, #tpu.memory_space<vmem>>, %arg5: memref<2x128x384xf32, #tpu.memory_space<vmem>>, %arg6: memref<2x128x384xf32, #tpu.memory_space<vmem>>, %arg7: memref<2x128x384xf32, #tpu.memory_space<vmem>>, %arg8: memref<2x1x384xf32, #tpu.memory_space<vmem>>, %arg9: memref<2x1x384xf32, #tpu.memory_space<vmem>>, %arg10: memref<8x8x128xf32, #tpu.memory_space<vmem>>, %arg11: memref<8x8x128xf32, #tpu.memory_space<vmem>>, %arg12: memref<2x8x128xf32, #tpu.memory_space<vmem>>, %arg13: memref<8x8x384xf32, #tpu.memory_space<vmem>>, %arg14: memref<8x8x384xf32, #tpu.memory_space<vmem>>, %arg15: memref<2x8x128xf32, #tpu.memory_space<vmem>>) attributes {dimension_semantics = [#tpu.dimension_semantics<arbitrary>], iteration_bounds = array<i64: 1>, scalar_prefetch = 0 : i64, scratch_operands = 3 : i64, tpu.core_type = #tpu.core_type<tc>, window_params = [{transform_indices = @transform_0, window_bounds = array<i64: 8, 8, 128>}, {transform_indices = @transform_1, window_bounds = array<i64: 8, 8, 128>}, {transform_indices = @transform_2, window_bounds = array<i64: 8, 8, 128>}, {transform_indices = @transform_3, window_bounds = array<i64: 8, 8, 128>}, {pipeline_mode = #tpu.pipeline_mode<synchronous>, transform_indices = @transform_4, window_bounds = array<i64: 2, 128, 384>}, {pipeline_mode = #tpu.pipeline_mode<synchronous>, transform_indices = @transform_5, window_bounds = array<i64: 2, 128, 384>}, {pipeline_mode = #tpu.pipeline_mode<synchronous>, transform_indices = @transform_6, window_bounds = array<i64: 2, 128, 384>}, {pipeline_mode = #tpu.pipeline_mode<synchronous>, transform_indices = @transform_7, window_bounds = array<i64: 2, 1, 384>}, {pipeline_mode = #tpu.pipeline_mode<synchronous>, transform_indices = @transform_8, window_bounds = array<i64: 2, 1, 384>}, {transform_indices = @transform_9, window_bounds = array<i64: 8, 8, 128>}, {transform_indices = @transform_10, window_bounds = array<i64: 8, 8, 128>}, {pipeline_mode = #tpu.pipeline_mode<synchronous>, transform_indices = @transform_11, window_bounds = array<i64: 2, 8, 128>}]} {
    %c0_i32 = arith.constant 0 : i32
    %0 = arith.cmpi eq, %arg0, %c0_i32 : i32
    %1 = arith.extui %0 : i1 to i32
    %c0_i32_0 = arith.constant 0 : i32
    %2 = arith.cmpi ne, %1, %c0_i32_0 : i32
    scf.if %2 {
      %cst_66 = arith.constant 0.000000e+00 : f32
      %60 = vector.broadcast %cst_66 : f32 to vector<2x8x128xf32>
      %c0_67 = arith.constant 0 : index
      %c0_68 = arith.constant 0 : index
      %c0_69 = arith.constant 0 : index
      %61 = vector.load %arg15[%c0_67, %c0_68, %c0_69] : memref<2x8x128xf32, #tpu.memory_space<vmem>>, vector<2x8x128xf32>
      tpu.vector_store %arg15[%c0_67, %c0_68, %c0_69], %60 {strides = array<i32>} : memref<2x8x128xf32, #tpu.memory_space<vmem>>, vector<2x8x128xf32>,
    } else {
    }
    %c0 = arith.constant 0 : index
    %c0_1 = arith.constant 0 : index
    %c0_2 = arith.constant 0 : index
    %3 = vector.load %arg8[%c0, %c0_1, %c0_2] : memref<2x1x384xf32, #tpu.memory_space<vmem>>, vector<1x1x384xf32>
    %4 = vector.shape_cast %3 : vector<1x1x384xf32> to vector<1x384xf32>
    %c0_3 = arith.constant 0 : index
    %c0_4 = arith.constant 0 : index
    %c0_5 = arith.constant 0 : index
    %5 = vector.load %arg1[%c0_3, %c0_4, %c0_5] : memref<8x8x128xf32, #tpu.memory_space<vmem>>, vector<8x8x128xf32>
    %6 = vector.shape_cast %5 : vector<8x8x128xf32> to vector<64x128xf32>
    %c0_6 = arith.constant 0 : index
    %c0_7 = arith.constant 0 : index
    %c0_8 = arith.constant 0 : index
    %7 = vector.load %arg5[%c0_6, %c0_7, %c0_8] : memref<2x128x384xf32, #tpu.memory_space<vmem>>, vector<1x128x384xf32>
    %8 = vector.shape_cast %7 : vector<1x128x384xf32> to vector<128x384xf32>
    %cst = arith.constant dense<0.000000e+00> : vector<64x384xf32>
    %9 = tpu.matmul %6, %8, %cst {dimension_numbers = #tpu.dot_dimension_numbers<[1], [0], [0], [1], [0, 0, 1, 1], [], []>} : vector<64x128xf32>, vector<128x384xf32>, vector<64x384xf32> -> vector<64x384xf32>
    %c0_9 = arith.constant 0 : index
    %c0_10 = arith.constant 0 : index
    %c0_11 = arith.constant 0 : index
    %10 = vector.load %arg2[%c0_9, %c0_10, %c0_11] : memref<8x8x128xf32, #tpu.memory_space<vmem>>, vector<8x8x128xf32>
    %11 = vector.shape_cast %10 : vector<8x8x128xf32> to vector<64x128xf32>
    %c1 = arith.constant 1 : index
    %c0_12 = arith.constant 0 : index
    %c0_13 = arith.constant 0 : index
    %12 = vector.load %arg5[%c1, %c0_12, %c0_13] : memref<2x128x384xf32, #tpu.memory_space<vmem>>, vector<1x128x384xf32>
    %13 = vector.shape_cast %12 : vector<1x128x384xf32> to vector<128x384xf32>
    %cst_14 = arith.constant dense<0.000000e+00> : vector<64x384xf32>
    %14 = tpu.matmul %11, %13, %cst_14 {dimension_numbers = #tpu.dot_dimension_numbers<[1], [0], [0], [1], [0, 0, 1, 1], [], []>} : vector<64x128xf32>, vector<128x384xf32>, vector<64x384xf32> -> vector<64x384xf32>
    %15 = arith.addf %9, %14 : vector<64x384xf32>
    %16 = vector.broadcast %4 : vector<1x384xf32> to vector<64x384xf32>
    %17 = arith.addf %15, %16 : vector<64x384xf32>
    %18 = vector.shape_cast %17 : vector<64x384xf32> to vector<8x8x384xf32>
    %c0_15 = arith.constant 0 : index
    %c0_16 = arith.constant 0 : index
    %c0_17 = arith.constant 0 : index
    %19 = vector.load %arg13[%c0_15, %c0_16, %c0_17] : memref<8x8x384xf32, #tpu.memory_space<vmem>>, vector<8x8x384xf32>
    tpu.vector_store %arg13[%c0_15, %c0_16, %c0_17], %18 {strides = array<i32>} : memref<8x8x384xf32, #tpu.memory_space<vmem>>, vector<8x8x384xf32>,
    %c1_18 = arith.constant 1 : index
    %c0_19 = arith.constant 0 : index
    %c0_20 = arith.constant 0 : index
    %20 = vector.load %arg8[%c1_18, %c0_19, %c0_20] : memref<2x1x384xf32, #tpu.memory_space<vmem>>, vector<1x1x384xf32>
    %21 = vector.shape_cast %20 : vector<1x1x384xf32> to vector<1x384xf32>
    %c0_21 = arith.constant 0 : index
    %c0_22 = arith.constant 0 : index
    %c0_23 = arith.constant 0 : index
    %22 = vector.load %arg3[%c0_21, %c0_22, %c0_23] : memref<8x8x128xf32, #tpu.memory_space<vmem>>, vector<8x8x128xf32>
    %23 = vector.shape_cast %22 : vector<8x8x128xf32> to vector<64x128xf32>
    %c0_24 = arith.constant 0 : index
    %c0_25 = arith.constant 0 : index
    %c0_26 = arith.constant 0 : index
    %24 = vector.load %arg6[%c0_24, %c0_25, %c0_26] : memref<2x128x384xf32, #tpu.memory_space<vmem>>, vector<1x128x384xf32>
    %25 = vector.shape_cast %24 : vector<1x128x384xf32> to vector<128x384xf32>
    %cst_27 = arith.constant dense<0.000000e+00> : vector<64x384xf32>
    %26 = tpu.matmul %23, %25, %cst_27 {dimension_numbers = #tpu.dot_dimension_numbers<[1], [0], [0], [1], [0, 0, 1, 1], [], []>} : vector<64x128xf32>, vector<128x384xf32>, vector<64x384xf32> -> vector<64x384xf32>
    %c0_28 = arith.constant 0 : index
    %c0_29 = arith.constant 0 : index
    %c0_30 = arith.constant 0 : index
    %27 = vector.load %arg4[%c0_28, %c0_29, %c0_30] : memref<8x8x128xf32, #tpu.memory_space<vmem>>, vector<8x8x128xf32>
    %28 = vector.shape_cast %27 : vector<8x8x128xf32> to vector<64x128xf32>
    %c1_31 = arith.constant 1 : index
    %c0_32 = arith.constant 0 : index
    %c0_33 = arith.constant 0 : index
    %29 = vector.load %arg6[%c1_31, %c0_32, %c0_33] : memref<2x128x384xf32, #tpu.memory_space<vmem>>, vector<1x128x384xf32>
    %30 = vector.shape_cast %29 : vector<1x128x384xf32> to vector<128x384xf32>
    %cst_34 = arith.constant dense<0.000000e+00> : vector<64x384xf32>
    %31 = tpu.matmul %28, %30, %cst_34 {dimension_numbers = #tpu.dot_dimension_numbers<[1], [0], [0], [1], [0, 0, 1, 1], [], []>} : vector<64x128xf32>, vector<128x384xf32>, vector<64x384xf32> -> vector<64x384xf32>
    %32 = arith.addf %26, %31 : vector<64x384xf32>
    %33 = vector.broadcast %21 : vector<1x384xf32> to vector<64x384xf32>
    %34 = arith.addf %32, %33 : vector<64x384xf32>
    %35 = vector.shape_cast %34 : vector<64x384xf32> to vector<8x8x384xf32>
    %c0_35 = arith.constant 0 : index
    %c0_36 = arith.constant 0 : index
    %c0_37 = arith.constant 0 : index
    %36 = vector.load %arg14[%c0_35, %c0_36, %c0_37] : memref<8x8x384xf32, #tpu.memory_space<vmem>>, vector<8x8x384xf32>
    tpu.vector_store %arg14[%c0_35, %c0_36, %c0_37], %35 {strides = array<i32>} : memref<8x8x384xf32, #tpu.memory_space<vmem>>, vector<8x8x384xf32>,
    %c0_38 = arith.constant 0 : index
    %c0_39 = arith.constant 0 : index
    %c0_40 = arith.constant 0 : index
    %37 = vector.load %arg7[%c0_38, %c0_39, %c0_40] : memref<2x128x384xf32, #tpu.memory_space<vmem>>, vector<1x128x384xf32>
    %38 = vector.shape_cast %37 : vector<1x128x384xf32> to vector<128x384xf32>
    %c1_41 = arith.constant 1 : index
    %c0_42 = arith.constant 0 : index
    %c0_43 = arith.constant 0 : index
    %39 = vector.load %arg7[%c1_41, %c0_42, %c0_43] : memref<2x128x384xf32, #tpu.memory_space<vmem>>, vector<1x128x384xf32>
    %40 = vector.shape_cast %39 : vector<1x128x384xf32> to vector<128x384xf32>
    %c0_44 = arith.constant 0 : index
    %c0_45 = arith.constant 0 : index
    %c0_46 = arith.constant 0 : index
    %41 = vector.load %arg9[%c0_44, %c0_45, %c0_46] : memref<2x1x384xf32, #tpu.memory_space<vmem>>, vector<1x1x384xf32>
    %42 = vector.shape_cast %41 : vector<1x1x384xf32> to vector<1x384xf32>
    %c1_47 = arith.constant 1 : index
    %c0_48 = arith.constant 0 : index
    %c0_49 = arith.constant 0 : index
    %43 = vector.load %arg9[%c1_47, %c0_48, %c0_49] : memref<2x1x384xf32, #tpu.memory_space<vmem>>, vector<1x1x384xf32>
    %44 = vector.shape_cast %43 : vector<1x1x384xf32> to vector<1x384xf32>
    %c0_50 = arith.constant 0 : index
    %c0_51 = arith.constant 0 : index
    %c0_52 = arith.constant 0 : index
    %45 = vector.load %arg15[%c0_50, %c0_51, %c0_52] : memref<2x8x128xf32, #tpu.memory_space<vmem>>, vector<1x8x128xf32>
    %46 = vector.shape_cast %45 : vector<1x8x128xf32> to vector<8x128xf32>
    %c1_53 = arith.constant 1 : index
    %c0_54 = arith.constant 0 : index
    %c0_55 = arith.constant 0 : index
    %47 = vector.load %arg15[%c1_53, %c0_54, %c0_55] : memref<2x8x128xf32, #tpu.memory_space<vmem>>, vector<1x8x128xf32>
    %48 = vector.shape_cast %47 : vector<1x8x128xf32> to vector<8x128xf32>
    %c0_i32_56 = arith.constant 0 : i32
    %c2_i32 = arith.constant 2 : i32
    %49 = arith.addi %c0_i32_56, %c2_i32 : i32
    %c1_i32 = arith.constant 1 : i32
    %50:2 = scf.for %arg16 = %c0_i32_56 to %49 step %c1_i32 iter_args(%arg17 = %46, %arg18 = %48) -> (vector<8x128xf32>, vector<8x128xf32>)  : i32 {
      %c4_i32 = arith.constant 4 : i32
      %60 = arith.muli %arg16, %c4_i32 : i32
      %c0_i32_66 = arith.constant 0 : i32
      %61 = arith.addi %60, %c0_i32_66 : i32
      %c7_i32 = arith.constant 7 : i32
      %62 = arith.subi %c7_i32, %61 : i32
      %63 = arith.index_cast %61 : i32 to index
      %c0_67 = arith.constant 0 : index
      %c0_68 = arith.constant 0 : index
      %64 = vector.load %arg13[%63, %c0_67, %c0_68] : memref<8x8x384xf32, #tpu.memory_space<vmem>>, vector<1x8x384xf32>
      %65 = vector.shape_cast %64 : vector<1x8x384xf32> to vector<8x384xf32>
      %cst_69 = arith.constant dense<0.000000e+00> : vector<8x384xf32>
      %66 = tpu.matmul %arg17, %38, %cst_69 {dimension_numbers = #tpu.dot_dimension_numbers<[1], [0], [0], [1], [0, 0, 1, 1], [], []>} : vector<8x128xf32>, vector<128x384xf32>, vector<8x384xf32> -> vector<8x384xf32>
      %67 = vector.broadcast %42 : vector<1x384xf32> to vector<8x384xf32>
      %68 = arith.addf %66, %67 : vector<8x384xf32>
      %69 = vector.extract_strided_slice %65 {offsets = [0, 0], sizes = [8, 128], strides = [1, 1]} : vector<8x384xf32> to vector<8x128xf32>
      %70 = vector.extract_strided_slice %68 {offsets = [0, 0], sizes = [8, 128], strides = [1, 1]} : vector<8x384xf32> to vector<8x128xf32>
      %71 = arith.addf %69, %70 : vector<8x128xf32>
      %72 = arith.negf %71 : vector<8x128xf32>
      %73 = math.exp %72 : vector<8x128xf32>
      %cst_70 = arith.constant 1.000000e+00 : f32
      %74 = vector.broadcast %cst_70 : f32 to vector<8x128xf32>
      %75 = arith.addf %74, %73 : vector<8x128xf32>
      %76 = arith.divf %74, %75 : vector<8x128xf32>
      %77 = vector.extract_strided_slice %65 {offsets = [0, 128], sizes = [8, 128], strides = [1, 1]} : vector<8x384xf32> to vector<8x128xf32>
      %78 = vector.extract_strided_slice %68 {offsets = [0, 128], sizes = [8, 128], strides = [1, 1]} : vector<8x384xf32> to vector<8x128xf32>
      %79 = arith.addf %77, %78 : vector<8x128xf32>
      %80 = arith.negf %79 : vector<8x128xf32>
      %81 = math.exp %80 : vector<8x128xf32>
      %cst_71 = arith.constant 1.000000e+00 : f32
      %82 = vector.broadcast %cst_71 : f32 to vector<8x128xf32>
      %83 = arith.addf %82, %81 : vector<8x128xf32>
      %84 = arith.divf %82, %83 : vector<8x128xf32>
      %85 = vector.extract_strided_slice %65 {offsets = [0, 256], sizes = [8, 128], strides = [1, 1]} : vector<8x384xf32> to vector<8x128xf32>
      %86 = vector.extract_strided_slice %68 {offsets = [0, 256], sizes = [8, 128], strides = [1, 1]} : vector<8x384xf32> to vector<8x128xf32>
      %87 = arith.mulf %76, %86 : vector<8x128xf32>
      %88 = arith.addf %85, %87 : vector<8x128xf32>
      %89 = math.tanh %88 : vector<8x128xf32>
      %cst_72 = arith.constant 1.000000e+00 : f32
      %90 = vector.broadcast %cst_72 : f32 to vector<8x128xf32>
      %91 = arith.subf %90, %84 : vector<8x128xf32>
      %92 = arith.mulf %91, %89 : vector<8x128xf32>
      %93 = arith.mulf %84, %arg17 : vector<8x128xf32>
      %94 = arith.addf %92, %93 : vector<8x128xf32>
      %95 = arith.index_cast %61 : i32 to index
      %c0_73 = arith.constant 0 : index
      %c0_74 = arith.constant 0 : index
      %96 = vector.load %arg10[%95, %c0_73, %c0_74] : memref<8x8x128xf32, #tpu.memory_space<vmem>>, vector<1x8x128xf32>
      %97 = vector.shape_cast %96 : vector<1x8x128xf32> to vector<8x128xf32>
      %98 = vector.shape_cast %94 : vector<8x128xf32> to vector<1x8x128xf32>
      tpu.vector_store %arg10[%95, %c0_73, %c0_74], %98 {strides = array<i32>} : memref<8x8x128xf32, #tpu.memory_space<vmem>>, vector<1x8x128xf32>,
      %99 = arith.index_cast %62 : i32 to index
      %c0_75 = arith.constant 0 : index
      %c0_76 = arith.constant 0 : index
      %100 = vector.load %arg14[%99, %c0_75, %c0_76] : memref<8x8x384xf32, #tpu.memory_space<vmem>>, vector<1x8x384xf32>
      %101 = vector.shape_cast %100 : vector<1x8x384xf32> to vector<8x384xf32>
      %cst_77 = arith.constant dense<0.000000e+00> : vector<8x384xf32>
      %102 = tpu.matmul %arg18, %40, %cst_77 {dimension_numbers = #tpu.dot_dimension_numbers<[1], [0], [0], [1], [0, 0, 1, 1], [], []>} : vector<8x128xf32>, vector<128x384xf32>, vector<8x384xf32> -> vector<8x384xf32>
      %103 = vector.broadcast %44 : vector<1x384xf32> to vector<8x384xf32>
      %104 = arith.addf %102, %103 : vector<8x384xf32>
      %105 = vector.extract_strided_slice %101 {offsets = [0, 0], sizes = [8, 128], strides = [1, 1]} : vector<8x384xf32> to vector<8x128xf32>
      %106 = vector.extract_strided_slice %104 {offsets = [0, 0], sizes = [8, 128], strides = [1, 1]} : vector<8x384xf32> to vector<8x128xf32>
      %107 = arith.addf %105, %106 : vector<8x128xf32>
      %108 = arith.negf %107 : vector<8x128xf32>
      %109 = math.exp %108 : vector<8x128xf32>
      %cst_78 = arith.constant 1.000000e+00 : f32
      %110 = vector.broadcast %cst_78 : f32 to vector<8x128xf32>
      %111 = arith.addf %110, %109 : vector<8x128xf32>
      %112 = arith.divf %110, %111 : vector<8x128xf32>
      %113 = vector.extract_strided_slice %101 {offsets = [0, 128], sizes = [8, 128], strides = [1, 1]} : vector<8x384xf32> to vector<8x128xf32>
      %114 = vector.extract_strided_slice %104 {offsets = [0, 128], sizes = [8, 128], strides = [1, 1]} : vector<8x384xf32> to vector<8x128xf32>
      %115 = arith.addf %113, %114 : vector<8x128xf32>
      %116 = arith.negf %115 : vector<8x128xf32>
      %117 = math.exp %116 : vector<8x128xf32>
      %cst_79 = arith.constant 1.000000e+00 : f32
      %118 = vector.broadcast %cst_79 : f32 to vector<8x128xf32>
      %119 = arith.addf %118, %117 : vector<8x128xf32>
      %120 = arith.divf %118, %119 : vector<8x128xf32>
      %121 = vector.extract_strided_slice %101 {offsets = [0, 256], sizes = [8, 128], strides = [1, 1]} : vector<8x384xf32> to vector<8x128xf32>
      %122 = vector.extract_strided_slice %104 {offsets = [0, 256], sizes = [8, 128], strides = [1, 1]} : vector<8x384xf32> to vector<8x128xf32>
      %123 = arith.mulf %112, %122 : vector<8x128xf32>
      %124 = arith.addf %121, %123 : vector<8x128xf32>
      %125 = math.tanh %124 : vector<8x128xf32>
      %cst_80 = arith.constant 1.000000e+00 : f32
      %126 = vector.broadcast %cst_80 : f32 to vector<8x128xf32>
      %127 = arith.subf %126, %120 : vector<8x128xf32>
      %128 = arith.mulf %127, %125 : vector<8x128xf32>
      %129 = arith.mulf %120, %arg18 : vector<8x128xf32>
      %130 = arith.addf %128, %129 : vector<8x128xf32>
      %131 = arith.index_cast %62 : i32 to index
      %c0_81 = arith.constant 0 : index
      %c0_82 = arith.constant 0 : index
      %132 = vector.load %arg11[%131, %c0_81, %c0_82] : memref<8x8x128xf32, #tpu.memory_space<vmem>>, vector<1x8x128xf32>
      %133 = vector.shape_cast %132 : vector<1x8x128xf32> to vector<8x128xf32>
      %134 = vector.shape_cast %130 : vector<8x128xf32> to vector<1x8x128xf32>
      tpu.vector_store %arg11[%131, %c0_81, %c0_82], %134 {strides = array<i32>} : memref<8x8x128xf32, #tpu.memory_space<vmem>>, vector<1x8x128xf32>,
      %c4_i32_83 = arith.constant 4 : i32
      %135 = arith.muli %arg16, %c4_i32_83 : i32
      %c1_i32_84 = arith.constant 1 : i32
      %136 = arith.addi %135, %c1_i32_84 : i32
      %c7_i32_85 = arith.constant 7 : i32
      %137 = arith.subi %c7_i32_85, %136 : i32
      %138 = arith.index_cast %136 : i32 to index
      %c0_86 = arith.constant 0 : index
      %c0_87 = arith.constant 0 : index
      %139 = vector.load %arg13[%138, %c0_86, %c0_87] : memref<8x8x384xf32, #tpu.memory_space<vmem>>, vector<1x8x384xf32>
      %140 = vector.shape_cast %139 : vector<1x8x384xf32> to vector<8x384xf32>
      %cst_88 = arith.constant dense<0.000000e+00> : vector<8x384xf32>
      %141 = tpu.matmul %94, %38, %cst_88 {dimension_numbers = #tpu.dot_dimension_numbers<[1], [0], [0], [1], [0, 0, 1, 1], [], []>} : vector<8x128xf32>, vector<128x384xf32>, vector<8x384xf32> -> vector<8x384xf32>
      %142 = vector.broadcast %42 : vector<1x384xf32> to vector<8x384xf32>
      %143 = arith.addf %141, %142 : vector<8x384xf32>
      %144 = vector.extract_strided_slice %140 {offsets = [0, 0], sizes = [8, 128], strides = [1, 1]} : vector<8x384xf32> to vector<8x128xf32>
      %145 = vector.extract_strided_slice %143 {offsets = [0, 0], sizes = [8, 128], strides = [1, 1]} : vector<8x384xf32> to vector<8x128xf32>
      %146 = arith.addf %144, %145 : vector<8x128xf32>
      %147 = arith.negf %146 : vector<8x128xf32>
      %148 = math.exp %147 : vector<8x128xf32>
      %cst_89 = arith.constant 1.000000e+00 : f32
      %149 = vector.broadcast %cst_89 : f32 to vector<8x128xf32>
      %150 = arith.addf %149, %148 : vector<8x128xf32>
      %151 = arith.divf %149, %150 : vector<8x128xf32>
      %152 = vector.extract_strided_slice %140 {offsets = [0, 128], sizes = [8, 128], strides = [1, 1]} : vector<8x384xf32> to vector<8x128xf32>
      %153 = vector.extract_strided_slice %143 {offsets = [0, 128], sizes = [8, 128], strides = [1, 1]} : vector<8x384xf32> to vector<8x128xf32>
      %154 = arith.addf %152, %153 : vector<8x128xf32>
      %155 = arith.negf %154 : vector<8x128xf32>
      %156 = math.exp %155 : vector<8x128xf32>
      %cst_90 = arith.constant 1.000000e+00 : f32
      %157 = vector.broadcast %cst_90 : f32 to vector<8x128xf32>
      %158 = arith.addf %157, %156 : vector<8x128xf32>
      %159 = arith.divf %157, %158 : vector<8x128xf32>
      %160 = vector.extract_strided_slice %140 {offsets = [0, 256], sizes = [8, 128], strides = [1, 1]} : vector<8x384xf32> to vector<8x128xf32>
      %161 = vector.extract_strided_slice %143 {offsets = [0, 256], sizes = [8, 128], strides = [1, 1]} : vector<8x384xf32> to vector<8x128xf32>
      %162 = arith.mulf %151, %161 : vector<8x128xf32>
      %163 = arith.addf %160, %162 : vector<8x128xf32>
      %164 = math.tanh %163 : vector<8x128xf32>
      %cst_91 = arith.constant 1.000000e+00 : f32
      %165 = vector.broadcast %cst_91 : f32 to vector<8x128xf32>
      %166 = arith.subf %165, %159 : vector<8x128xf32>
      %167 = arith.mulf %166, %164 : vector<8x128xf32>
      %168 = arith.mulf %159, %94 : vector<8x128xf32>
      %169 = arith.addf %167, %168 : vector<8x128xf32>
      %170 = arith.index_cast %136 : i32 to index
      %c0_92 = arith.constant 0 : index
      %c0_93 = arith.constant 0 : index
      %171 = vector.load %arg10[%170, %c0_92, %c0_93] : memref<8x8x128xf32, #tpu.memory_space<vmem>>, vector<1x8x128xf32>
      %172 = vector.shape_cast %171 : vector<1x8x128xf32> to vector<8x128xf32>
      %173 = vector.shape_cast %169 : vector<8x128xf32> to vector<1x8x128xf32>
      tpu.vector_store %arg10[%170, %c0_92, %c0_93], %173 {strides = array<i32>} : memref<8x8x128xf32, #tpu.memory_space<vmem>>, vector<1x8x128xf32>,
      %174 = arith.index_cast %137 : i32 to index
      %c0_94 = arith.constant 0 : index
      %c0_95 = arith.constant 0 : index
      %175 = vector.load %arg14[%174, %c0_94, %c0_95] : memref<8x8x384xf32, #tpu.memory_space<vmem>>, vector<1x8x384xf32>
      %176 = vector.shape_cast %175 : vector<1x8x384xf32> to vector<8x384xf32>
      %cst_96 = arith.constant dense<0.000000e+00> : vector<8x384xf32>
      %177 = tpu.matmul %130, %40, %cst_96 {dimension_numbers = #tpu.dot_dimension_numbers<[1], [0], [0], [1], [0, 0, 1, 1], [], []>} : vector<8x128xf32>, vector<128x384xf32>, vector<8x384xf32> -> vector<8x384xf32>
      %178 = vector.broadcast %44 : vector<1x384xf32> to vector<8x384xf32>
      %179 = arith.addf %177, %178 : vector<8x384xf32>
      %180 = vector.extract_strided_slice %176 {offsets = [0, 0], sizes = [8, 128], strides = [1, 1]} : vector<8x384xf32> to vector<8x128xf32>
      %181 = vector.extract_strided_slice %179 {offsets = [0, 0], sizes = [8, 128], strides = [1, 1]} : vector<8x384xf32> to vector<8x128xf32>
      %182 = arith.addf %180, %181 : vector<8x128xf32>
      %183 = arith.negf %182 : vector<8x128xf32>
      %184 = math.exp %183 : vector<8x128xf32>
      %cst_97 = arith.constant 1.000000e+00 : f32
      %185 = vector.broadcast %cst_97 : f32 to vector<8x128xf32>
      %186 = arith.addf %185, %184 : vector<8x128xf32>
      %187 = arith.divf %185, %186 : vector<8x128xf32>
      %188 = vector.extract_strided_slice %176 {offsets = [0, 128], sizes = [8, 128], strides = [1, 1]} : vector<8x384xf32> to vector<8x128xf32>
      %189 = vector.extract_strided_slice %179 {offsets = [0, 128], sizes = [8, 128], strides = [1, 1]} : vector<8x384xf32> to vector<8x128xf32>
      %190 = arith.addf %188, %189 : vector<8x128xf32>
      %191 = arith.negf %190 : vector<8x128xf32>
      %192 = math.exp %191 : vector<8x128xf32>
      %cst_98 = arith.constant 1.000000e+00 : f32
      %193 = vector.broadcast %cst_98 : f32 to vector<8x128xf32>
      %194 = arith.addf %193, %192 : vector<8x128xf32>
      %195 = arith.divf %193, %194 : vector<8x128xf32>
      %196 = vector.extract_strided_slice %176 {offsets = [0, 256], sizes = [8, 128], strides = [1, 1]} : vector<8x384xf32> to vector<8x128xf32>
      %197 = vector.extract_strided_slice %179 {offsets = [0, 256], sizes = [8, 128], strides = [1, 1]} : vector<8x384xf32> to vector<8x128xf32>
      %198 = arith.mulf %187, %197 : vector<8x128xf32>
      %199 = arith.addf %196, %198 : vector<8x128xf32>
      %200 = math.tanh %199 : vector<8x128xf32>
      %cst_99 = arith.constant 1.000000e+00 : f32
      %201 = vector.broadcast %cst_99 : f32 to vector<8x128xf32>
      %202 = arith.subf %201, %195 : vector<8x128xf32>
      %203 = arith.mulf %202, %200 : vector<8x128xf32>
      %204 = arith.mulf %195, %130 : vector<8x128xf32>
      %205 = arith.addf %203, %204 : vector<8x128xf32>
      %206 = arith.index_cast %137 : i32 to index
      %c0_100 = arith.constant 0 : index
      %c0_101 = arith.constant 0 : index
      %207 = vector.load %arg11[%206, %c0_100, %c0_101] : memref<8x8x128xf32, #tpu.memory_space<vmem>>, vector<1x8x128xf32>
      %208 = vector.shape_cast %207 : vector<1x8x128xf32> to vector<8x128xf32>
      %209 = vector.shape_cast %205 : vector<8x128xf32> to vector<1x8x128xf32>
      tpu.vector_store %arg11[%206, %c0_100, %c0_101], %209 {strides = array<i32>} : memref<8x8x128xf32, #tpu.memory_space<vmem>>, vector<1x8x128xf32>,
      %c4_i32_102 = arith.constant 4 : i32
      %210 = arith.muli %arg16, %c4_i32_102 : i32
      %c2_i32_103 = arith.constant 2 : i32
      %211 = arith.addi %210, %c2_i32_103 : i32
      %c7_i32_104 = arith.constant 7 : i32
      %212 = arith.subi %c7_i32_104, %211 : i32
      %213 = arith.index_cast %211 : i32 to index
      %c0_105 = arith.constant 0 : index
      %c0_106 = arith.constant 0 : index
      %214 = vector.load %arg13[%213, %c0_105, %c0_106] : memref<8x8x384xf32, #tpu.memory_space<vmem>>, vector<1x8x384xf32>
      %215 = vector.shape_cast %214 : vector<1x8x384xf32> to vector<8x384xf32>
      %cst_107 = arith.constant dense<0.000000e+00> : vector<8x384xf32>
      %216 = tpu.matmul %169, %38, %cst_107 {dimension_numbers = #tpu.dot_dimension_numbers<[1], [0], [0], [1], [0, 0, 1, 1], [], []>} : vector<8x128xf32>, vector<128x384xf32>, vector<8x384xf32> -> vector<8x384xf32>
      %217 = vector.broadcast %42 : vector<1x384xf32> to vector<8x384xf32>
      %218 = arith.addf %216, %217 : vector<8x384xf32>
      %219 = vector.extract_strided_slice %215 {offsets = [0, 0], sizes = [8, 128], strides = [1, 1]} : vector<8x384xf32> to vector<8x128xf32>
      %220 = vector.extract_strided_slice %218 {offsets = [0, 0], sizes = [8, 128], strides = [1, 1]} : vector<8x384xf32> to vector<8x128xf32>
      %221 = arith.addf %219, %220 : vector<8x128xf32>
      %222 = arith.negf %221 : vector<8x128xf32>
      %223 = math.exp %222 : vector<8x128xf32>
      %cst_108 = arith.constant 1.000000e+00 : f32
      %224 = vector.broadcast %cst_108 : f32 to vector<8x128xf32>
      %225 = arith.addf %224, %223 : vector<8x128xf32>
      %226 = arith.divf %224, %225 : vector<8x128xf32>
      %227 = vector.extract_strided_slice %215 {offsets = [0, 128], sizes = [8, 128], strides = [1, 1]} : vector<8x384xf32> to vector<8x128xf32>
      %228 = vector.extract_strided_slice %218 {offsets = [0, 128], sizes = [8, 128], strides = [1, 1]} : vector<8x384xf32> to vector<8x128xf32>
      %229 = arith.addf %227, %228 : vector<8x128xf32>
      %230 = arith.negf %229 : vector<8x128xf32>
      %231 = math.exp %230 : vector<8x128xf32>
      %cst_109 = arith.constant 1.000000e+00 : f32
      %232 = vector.broadcast %cst_109 : f32 to vector<8x128xf32>
      %233 = arith.addf %232, %231 : vector<8x128xf32>
      %234 = arith.divf %232, %233 : vector<8x128xf32>
      %235 = vector.extract_strided_slice %215 {offsets = [0, 256], sizes = [8, 128], strides = [1, 1]} : vector<8x384xf32> to vector<8x128xf32>
      %236 = vector.extract_strided_slice %218 {offsets = [0, 256], sizes = [8, 128], strides = [1, 1]} : vector<8x384xf32> to vector<8x128xf32>
      %237 = arith.mulf %226, %236 : vector<8x128xf32>
      %238 = arith.addf %235, %237 : vector<8x128xf32>
      %239 = math.tanh %238 : vector<8x128xf32>
      %cst_110 = arith.constant 1.000000e+00 : f32
      %240 = vector.broadcast %cst_110 : f32 to vector<8x128xf32>
      %241 = arith.subf %240, %234 : vector<8x128xf32>
      %242 = arith.mulf %241, %239 : vector<8x128xf32>
      %243 = arith.mulf %234, %169 : vector<8x128xf32>
      %244 = arith.addf %242, %243 : vector<8x128xf32>
      %245 = arith.index_cast %211 : i32 to index
      %c0_111 = arith.constant 0 : index
      %c0_112 = arith.constant 0 : index
      %246 = vector.load %arg10[%245, %c0_111, %c0_112] : memref<8x8x128xf32, #tpu.memory_space<vmem>>, vector<1x8x128xf32>
      %247 = vector.shape_cast %246 : vector<1x8x128xf32> to vector<8x128xf32>
      %248 = vector.shape_cast %244 : vector<8x128xf32> to vector<1x8x128xf32>
      tpu.vector_store %arg10[%245, %c0_111, %c0_112], %248 {strides = array<i32>} : memref<8x8x128xf32, #tpu.memory_space<vmem>>, vector<1x8x128xf32>,
      %249 = arith.index_cast %212 : i32 to index
      %c0_113 = arith.constant 0 : index
      %c0_114 = arith.constant 0 : index
      %250 = vector.load %arg14[%249, %c0_113, %c0_114] : memref<8x8x384xf32, #tpu.memory_space<vmem>>, vector<1x8x384xf32>
      %251 = vector.shape_cast %250 : vector<1x8x384xf32> to vector<8x384xf32>
      %cst_115 = arith.constant dense<0.000000e+00> : vector<8x384xf32>
      %252 = tpu.matmul %205, %40, %cst_115 {dimension_numbers = #tpu.dot_dimension_numbers<[1], [0], [0], [1], [0, 0, 1, 1], [], []>} : vector<8x128xf32>, vector<128x384xf32>, vector<8x384xf32> -> vector<8x384xf32>
      %253 = vector.broadcast %44 : vector<1x384xf32> to vector<8x384xf32>
      %254 = arith.addf %252, %253 : vector<8x384xf32>
      %255 = vector.extract_strided_slice %251 {offsets = [0, 0], sizes = [8, 128], strides = [1, 1]} : vector<8x384xf32> to vector<8x128xf32>
      %256 = vector.extract_strided_slice %254 {offsets = [0, 0], sizes = [8, 128], strides = [1, 1]} : vector<8x384xf32> to vector<8x128xf32>
      %257 = arith.addf %255, %256 : vector<8x128xf32>
      %258 = arith.negf %257 : vector<8x128xf32>
      %259 = math.exp %258 : vector<8x128xf32>
      %cst_116 = arith.constant 1.000000e+00 : f32
      %260 = vector.broadcast %cst_116 : f32 to vector<8x128xf32>
      %261 = arith.addf %260, %259 : vector<8x128xf32>
      %262 = arith.divf %260, %261 : vector<8x128xf32>
      %263 = vector.extract_strided_slice %251 {offsets = [0, 128], sizes = [8, 128], strides = [1, 1]} : vector<8x384xf32> to vector<8x128xf32>
      %264 = vector.extract_strided_slice %254 {offsets = [0, 128], sizes = [8, 128], strides = [1, 1]} : vector<8x384xf32> to vector<8x128xf32>
      %265 = arith.addf %263, %264 : vector<8x128xf32>
      %266 = arith.negf %265 : vector<8x128xf32>
      %267 = math.exp %266 : vector<8x128xf32>
      %cst_117 = arith.constant 1.000000e+00 : f32
      %268 = vector.broadcast %cst_117 : f32 to vector<8x128xf32>
      %269 = arith.addf %268, %267 : vector<8x128xf32>
      %270 = arith.divf %268, %269 : vector<8x128xf32>
      %271 = vector.extract_strided_slice %251 {offsets = [0, 256], sizes = [8, 128], strides = [1, 1]} : vector<8x384xf32> to vector<8x128xf32>
      %272 = vector.extract_strided_slice %254 {offsets = [0, 256], sizes = [8, 128], strides = [1, 1]} : vector<8x384xf32> to vector<8x128xf32>
      %273 = arith.mulf %262, %272 : vector<8x128xf32>
      %274 = arith.addf %271, %273 : vector<8x128xf32>
      %275 = math.tanh %274 : vector<8x128xf32>
      %cst_118 = arith.constant 1.000000e+00 : f32
      %276 = vector.broadcast %cst_118 : f32 to vector<8x128xf32>
      %277 = arith.subf %276, %270 : vector<8x128xf32>
      %278 = arith.mulf %277, %275 : vector<8x128xf32>
      %279 = arith.mulf %270, %205 : vector<8x128xf32>
      %280 = arith.addf %278, %279 : vector<8x128xf32>
      %281 = arith.index_cast %212 : i32 to index
      %c0_119 = arith.constant 0 : index
      %c0_120 = arith.constant 0 : index
      %282 = vector.load %arg11[%281, %c0_119, %c0_120] : memref<8x8x128xf32, #tpu.memory_space<vmem>>, vector<1x8x128xf32>
      %283 = vector.shape_cast %282 : vector<1x8x128xf32> to vector<8x128xf32>
      %284 = vector.shape_cast %280 : vector<8x128xf32> to vector<1x8x128xf32>
      tpu.vector_store %arg11[%281, %c0_119, %c0_120], %284 {strides = array<i32>} : memref<8x8x128xf32, #tpu.memory_space<vmem>>, vector<1x8x128xf32>,
      %c4_i32_121 = arith.constant 4 : i32
      %285 = arith.muli %arg16, %c4_i32_121 : i32
      %c3_i32 = arith.constant 3 : i32
      %286 = arith.addi %285, %c3_i32 : i32
      %c7_i32_122 = arith.constant 7 : i32
      %287 = arith.subi %c7_i32_122, %286 : i32
      %288 = arith.index_cast %286 : i32 to index
      %c0_123 = arith.constant 0 : index
      %c0_124 = arith.constant 0 : index
      %289 = vector.load %arg13[%288, %c0_123, %c0_124] : memref<8x8x384xf32, #tpu.memory_space<vmem>>, vector<1x8x384xf32>
      %290 = vector.shape_cast %289 : vector<1x8x384xf32> to vector<8x384xf32>
      %cst_125 = arith.constant dense<0.000000e+00> : vector<8x384xf32>
      %291 = tpu.matmul %244, %38, %cst_125 {dimension_numbers = #tpu.dot_dimension_numbers<[1], [0], [0], [1], [0, 0, 1, 1], [], []>} : vector<8x128xf32>, vector<128x384xf32>, vector<8x384xf32> -> vector<8x384xf32>
      %292 = vector.broadcast %42 : vector<1x384xf32> to vector<8x384xf32>
      %293 = arith.addf %291, %292 : vector<8x384xf32>
      %294 = vector.extract_strided_slice %290 {offsets = [0, 0], sizes = [8, 128], strides = [1, 1]} : vector<8x384xf32> to vector<8x128xf32>
      %295 = vector.extract_strided_slice %293 {offsets = [0, 0], sizes = [8, 128], strides = [1, 1]} : vector<8x384xf32> to vector<8x128xf32>
      %296 = arith.addf %294, %295 : vector<8x128xf32>
      %297 = arith.negf %296 : vector<8x128xf32>
      %298 = math.exp %297 : vector<8x128xf32>
      %cst_126 = arith.constant 1.000000e+00 : f32
      %299 = vector.broadcast %cst_126 : f32 to vector<8x128xf32>
      %300 = arith.addf %299, %298 : vector<8x128xf32>
      %301 = arith.divf %299, %300 : vector<8x128xf32>
      %302 = vector.extract_strided_slice %290 {offsets = [0, 128], sizes = [8, 128], strides = [1, 1]} : vector<8x384xf32> to vector<8x128xf32>
      %303 = vector.extract_strided_slice %293 {offsets = [0, 128], sizes = [8, 128], strides = [1, 1]} : vector<8x384xf32> to vector<8x128xf32>
      %304 = arith.addf %302, %303 : vector<8x128xf32>
      %305 = arith.negf %304 : vector<8x128xf32>
      %306 = math.exp %305 : vector<8x128xf32>
      %cst_127 = arith.constant 1.000000e+00 : f32
      %307 = vector.broadcast %cst_127 : f32 to vector<8x128xf32>
      %308 = arith.addf %307, %306 : vector<8x128xf32>
      %309 = arith.divf %307, %308 : vector<8x128xf32>
      %310 = vector.extract_strided_slice %290 {offsets = [0, 256], sizes = [8, 128], strides = [1, 1]} : vector<8x384xf32> to vector<8x128xf32>
      %311 = vector.extract_strided_slice %293 {offsets = [0, 256], sizes = [8, 128], strides = [1, 1]} : vector<8x384xf32> to vector<8x128xf32>
      %312 = arith.mulf %301, %311 : vector<8x128xf32>
      %313 = arith.addf %310, %312 : vector<8x128xf32>
      %314 = math.tanh %313 : vector<8x128xf32>
      %cst_128 = arith.constant 1.000000e+00 : f32
      %315 = vector.broadcast %cst_128 : f32 to vector<8x128xf32>
      %316 = arith.subf %315, %309 : vector<8x128xf32>
      %317 = arith.mulf %316, %314 : vector<8x128xf32>
      %318 = arith.mulf %309, %244 : vector<8x128xf32>
      %319 = arith.addf %317, %318 : vector<8x128xf32>
      %320 = arith.index_cast %286 : i32 to index
      %c0_129 = arith.constant 0 : index
      %c0_130 = arith.constant 0 : index
      %321 = vector.load %arg10[%320, %c0_129, %c0_130] : memref<8x8x128xf32, #tpu.memory_space<vmem>>, vector<1x8x128xf32>
      %322 = vector.shape_cast %321 : vector<1x8x128xf32> to vector<8x128xf32>
      %323 = vector.shape_cast %319 : vector<8x128xf32> to vector<1x8x128xf32>
      tpu.vector_store %arg10[%320, %c0_129, %c0_130], %323 {strides = array<i32>} : memref<8x8x128xf32, #tpu.memory_space<vmem>>, vector<1x8x128xf32>,
      %324 = arith.index_cast %287 : i32 to index
      %c0_131 = arith.constant 0 : index
      %c0_132 = arith.constant 0 : index
      %325 = vector.load %arg14[%324, %c0_131, %c0_132] : memref<8x8x384xf32, #tpu.memory_space<vmem>>, vector<1x8x384xf32>
      %326 = vector.shape_cast %325 : vector<1x8x384xf32> to vector<8x384xf32>
      %cst_133 = arith.constant dense<0.000000e+00> : vector<8x384xf32>
      %327 = tpu.matmul %280, %40, %cst_133 {dimension_numbers = #tpu.dot_dimension_numbers<[1], [0], [0], [1], [0, 0, 1, 1], [], []>} : vector<8x128xf32>, vector<128x384xf32>, vector<8x384xf32> -> vector<8x384xf32>
      %328 = vector.broadcast %44 : vector<1x384xf32> to vector<8x384xf32>
      %329 = arith.addf %327, %328 : vector<8x384xf32>
      %330 = vector.extract_strided_slice %326 {offsets = [0, 0], sizes = [8, 128], strides = [1, 1]} : vector<8x384xf32> to vector<8x128xf32>
      %331 = vector.extract_strided_slice %329 {offsets = [0, 0], sizes = [8, 128], strides = [1, 1]} : vector<8x384xf32> to vector<8x128xf32>
      %332 = arith.addf %330, %331 : vector<8x128xf32>
      %333 = arith.negf %332 : vector<8x128xf32>
      %334 = math.exp %333 : vector<8x128xf32>
      %cst_134 = arith.constant 1.000000e+00 : f32
      %335 = vector.broadcast %cst_134 : f32 to vector<8x128xf32>
      %336 = arith.addf %335, %334 : vector<8x128xf32>
      %337 = arith.divf %335, %336 : vector<8x128xf32>
      %338 = vector.extract_strided_slice %326 {offsets = [0, 128], sizes = [8, 128], strides = [1, 1]} : vector<8x384xf32> to vector<8x128xf32>
      %339 = vector.extract_strided_slice %329 {offsets = [0, 128], sizes = [8, 128], strides = [1, 1]} : vector<8x384xf32> to vector<8x128xf32>
      %340 = arith.addf %338, %339 : vector<8x128xf32>
      %341 = arith.negf %340 : vector<8x128xf32>
      %342 = math.exp %341 : vector<8x128xf32>
      %cst_135 = arith.constant 1.000000e+00 : f32
      %343 = vector.broadcast %cst_135 : f32 to vector<8x128xf32>
      %344 = arith.addf %343, %342 : vector<8x128xf32>
      %345 = arith.divf %343, %344 : vector<8x128xf32>
      %346 = vector.extract_strided_slice %326 {offsets = [0, 256], sizes = [8, 128], strides = [1, 1]} : vector<8x384xf32> to vector<8x128xf32>
      %347 = vector.extract_strided_slice %329 {offsets = [0, 256], sizes = [8, 128], strides = [1, 1]} : vector<8x384xf32> to vector<8x128xf32>
      %348 = arith.mulf %337, %347 : vector<8x128xf32>
      %349 = arith.addf %346, %348 : vector<8x128xf32>
      %350 = math.tanh %349 : vector<8x128xf32>
      %cst_136 = arith.constant 1.000000e+00 : f32
      %351 = vector.broadcast %cst_136 : f32 to vector<8x128xf32>
      %352 = arith.subf %351, %345 : vector<8x128xf32>
      %353 = arith.mulf %352, %350 : vector<8x128xf32>
      %354 = arith.mulf %345, %280 : vector<8x128xf32>
      %355 = arith.addf %353, %354 : vector<8x128xf32>
      %356 = arith.index_cast %287 : i32 to index
      %c0_137 = arith.constant 0 : index
      %c0_138 = arith.constant 0 : index
      %357 = vector.load %arg11[%356, %c0_137, %c0_138] : memref<8x8x128xf32, #tpu.memory_space<vmem>>, vector<1x8x128xf32>
      %358 = vector.shape_cast %357 : vector<1x8x128xf32> to vector<8x128xf32>
      %359 = vector.shape_cast %355 : vector<8x128xf32> to vector<1x8x128xf32>
      tpu.vector_store %arg11[%356, %c0_137, %c0_138], %359 {strides = array<i32>} : memref<8x8x128xf32, #tpu.memory_space<vmem>>, vector<1x8x128xf32>,
      scf.yield %319, %355 : vector<8x128xf32>, vector<8x128xf32>
    }
    %c2_i32_57 = arith.constant 2 : i32
    %c0_58 = arith.constant 0 : index
    %c0_59 = arith.constant 0 : index
    %c0_60 = arith.constant 0 : index
    %51 = vector.load %arg15[%c0_58, %c0_59, %c0_60] : memref<2x8x128xf32, #tpu.memory_space<vmem>>, vector<1x8x128xf32>
    %52 = vector.shape_cast %51 : vector<1x8x128xf32> to vector<8x128xf32>
    %53 = vector.shape_cast %50#0 : vector<8x128xf32> to vector<1x8x128xf32>
    tpu.vector_store %arg15[%c0_58, %c0_59, %c0_60], %53 {strides = array<i32>} : memref<2x8x128xf32, #tpu.memory_space<vmem>>, vector<1x8x128xf32>,
    %c1_61 = arith.constant 1 : index
    %c0_62 = arith.constant 0 : index
    %c0_63 = arith.constant 0 : index
    %54 = vector.load %arg15[%c1_61, %c0_62, %c0_63] : memref<2x8x128xf32, #tpu.memory_space<vmem>>, vector<1x8x128xf32>
    %55 = vector.shape_cast %54 : vector<1x8x128xf32> to vector<8x128xf32>
    %56 = vector.shape_cast %50#1 : vector<8x128xf32> to vector<1x8x128xf32>
    tpu.vector_store %arg15[%c1_61, %c0_62, %c0_63], %56 {strides = array<i32>} : memref<2x8x128xf32, #tpu.memory_space<vmem>>, vector<1x8x128xf32>,
    %c0_i32_64 = arith.constant 0 : i32
    %57 = arith.cmpi eq, %arg0, %c0_i32_64 : i32
    %58 = arith.extui %57 : i1 to i32
    %c0_i32_65 = arith.constant 0 : i32
    %59 = arith.cmpi ne, %58, %c0_i32_65 : i32
    scf.if %59 {
      %c0_66 = arith.constant 0 : index
      %c0_67 = arith.constant 0 : index
      %c0_68 = arith.constant 0 : index
      %60 = vector.load %arg15[%c0_66, %c0_67, %c0_68] : memref<2x8x128xf32, #tpu.memory_space<vmem>>, vector<2x8x128xf32>
      %c0_69 = arith.constant 0 : index
      %c0_70 = arith.constant 0 : index
      %c0_71 = arith.constant 0 : index
      %61 = vector.load %arg12[%c0_69, %c0_70, %c0_71] : memref<2x8x128xf32, #tpu.memory_space<vmem>>, vector<2x8x128xf32>
      tpu.vector_store %arg12[%c0_69, %c0_70, %c0_71], %60 {strides = array<i32>} : memref<2x8x128xf32, #tpu.memory_space<vmem>>, vector<2x8x128xf32>,
    } else {
    }
    return
  }
  func.func @transform_0(%arg0: i32) -> (i32, i32, i32) {
    %c0_i32 = arith.constant 0 : i32
    %c0_i32_0 = arith.constant 0 : i32
    %c0_i32_1 = arith.constant 0 : i32
    return %arg0, %c0_i32, %c0_i32_0 : i32, i32, i32
  }
  func.func @transform_1(%arg0: i32) -> (i32, i32, i32) {
    %c0_i32 = arith.constant 0 : i32
    %c0_i32_0 = arith.constant 0 : i32
    %c0_i32_1 = arith.constant 0 : i32
    return %arg0, %c0_i32, %c0_i32_0 : i32, i32, i32
  }
  func.func @transform_2(%arg0: i32) -> (i32, i32, i32) {
    %c0_i32 = arith.constant 0 : i32
    %0 = arith.subi %c0_i32, %arg0 : i32
    %c0_i32_0 = arith.constant 0 : i32
    %c0_i32_1 = arith.constant 0 : i32
    %c0_i32_2 = arith.constant 0 : i32
    return %0, %c0_i32_0, %c0_i32_1 : i32, i32, i32
  }
  func.func @transform_3(%arg0: i32) -> (i32, i32, i32) {
    %c0_i32 = arith.constant 0 : i32
    %0 = arith.subi %c0_i32, %arg0 : i32
    %c0_i32_0 = arith.constant 0 : i32
    %c0_i32_1 = arith.constant 0 : i32
    %c0_i32_2 = arith.constant 0 : i32
    return %0, %c0_i32_0, %c0_i32_1 : i32, i32, i32
  }
  func.func @transform_4(%arg0: i32) -> (i32, i32, i32) {
    %c0_i32 = arith.constant 0 : i32
    %c0_i32_0 = arith.constant 0 : i32
    %c0_i32_1 = arith.constant 0 : i32
    %c0_i32_2 = arith.constant 0 : i32
    return %c0_i32, %c0_i32_0, %c0_i32_1 : i32, i32, i32
  }
  func.func @transform_5(%arg0: i32) -> (i32, i32, i32) {
    %c0_i32 = arith.constant 0 : i32
    %c0_i32_0 = arith.constant 0 : i32
    %c0_i32_1 = arith.constant 0 : i32
    %c0_i32_2 = arith.constant 0 : i32
    return %c0_i32, %c0_i32_0, %c0_i32_1 : i32, i32, i32
  }
  func.func @transform_6(%arg0: i32) -> (i32, i32, i32) {
    %c0_i32 = arith.constant 0 : i32
    %c0_i32_0 = arith.constant 0 : i32
    %c0_i32_1 = arith.constant 0 : i32
    %c0_i32_2 = arith.constant 0 : i32
    return %c0_i32, %c0_i32_0, %c0_i32_1 : i32, i32, i32
  }
  func.func @transform_7(%arg0: i32) -> (i32, i32, i32) {
    %c0_i32 = arith.constant 0 : i32
    %c0_i32_0 = arith.constant 0 : i32
    %c0_i32_1 = arith.constant 0 : i32
    %c0_i32_2 = arith.constant 0 : i32
    return %c0_i32, %c0_i32_0, %c0_i32_1 : i32, i32, i32
  }
  func.func @transform_8(%arg0: i32) -> (i32, i32, i32) {
    %c0_i32 = arith.constant 0 : i32
    %c0_i32_0 = arith.constant 0 : i32
    %c0_i32_1 = arith.constant 0 : i32
    %c0_i32_2 = arith.constant 0 : i32
    return %c0_i32, %c0_i32_0, %c0_i32_1 : i32, i32, i32
  }
  func.func @transform_9(%arg0: i32) -> (i32, i32, i32) {
    %c0_i32 = arith.constant 0 : i32
    %c0_i32_0 = arith.constant 0 : i32
    %c0_i32_1 = arith.constant 0 : i32
    return %arg0, %c0_i32, %c0_i32_0 : i32, i32, i32
  }
  func.func @transform_10(%arg0: i32) -> (i32, i32, i32) {
    %c0_i32 = arith.constant 0 : i32
    %0 = arith.subi %c0_i32, %arg0 : i32
    %c0_i32_0 = arith.constant 0 : i32
    %c0_i32_1 = arith.constant 0 : i32
    %c0_i32_2 = arith.constant 0 : i32
    return %0, %c0_i32_0, %c0_i32_1 : i32, i32, i32
  }
  func.func @transform_11(%arg0: i32) -> (i32, i32, i32) {
    %c0_i32 = arith.constant 0 : i32
    %c0_i32_0 = arith.constant 0 : i32
    %c0_i32_1 = arith.constant 0 : i32
    %c0_i32_2 = arith.constant 0 : i32
    return %c0_i32, %c0_i32_0, %c0_i32_1 : i32, i32, i32
  }
}

</mosaic_0001>

<llo_original>
// kernel: encoder_forward.2
$region0: #{encoder_forward.2}
  #allocation0 [shape = 'u32[]', space=smem, size = 0x4, offset = 0x4, fixed_abs, tag = 'smem constant byte address 0x4 - core index']
  #allocation1 [shape = 'u32[144,128]{1,0:T(1,128)}', space=vmem, size = 0x12000, scoped, tag = 'internal scratch']
  #allocation2 [shape = 'f32[8,8,384]{2,1,0:T(8,128)}', space=vmem, size = 0x18000, scoped, tag = 'scratch operand']
  #allocation3 [shape = 'f32[8,8,384]{2,1,0:T(8,128)}', space=vmem, size = 0x18000, scoped, tag = 'scratch operand']
  #allocation4 [shape = 'f32[2,8,128]{2,1,0:T(8,128)}', space=vmem, size = 0x2000, scoped, tag = 'scratch operand']
  %s0 = inlined_call_operand.vmem [shape: f32[8,8,32], index: 0, kind: input, shape index: {}, may-alias: {0,1}]
  %s1 = inlined_call_operand.vmem [shape: f32[8,8,32], index: 1, kind: input, shape index: {}, may-alias: {0,1}]
  %s2 = inlined_call_operand.hbm [shape: f32[1,32,384], index: 2, kind: input, shape index: {}]
  %s3 = inlined_call_operand.hbm [shape: f32[1,32,384], index: 3, kind: input, shape index: {}]
  %s4 = inlined_call_operand.hbm [shape: f32[2,128,384], index: 4, kind: input, shape index: {}]
  %s5 = inlined_call_operand.hbm [shape: f32[2,1,384], index: 5, kind: input, shape index: {}]
  %s6 = inlined_call_operand.hbm [shape: f32[2,1,384], index: 6, kind: input, shape index: {}]
  %s7 = inlined_call_operand.vmem [shape: f32[8,8,128], index: 7, kind: output, shape index: {0}]
  %s8 = inlined_call_operand.vmem [shape: f32[8,8,128], index: 8, kind: output, shape index: {1}]
  %s9 = inlined_call_operand.vmem [shape: f32[2,8,128], index: 9, kind: output, shape index: {2}]
  %10 = xla_tuple %s7, %s8, %s9
  %s11 = sld [smem:[#allocation0]]
  $region89: #{encoder_forward.2} parent=0
    _
  %s13 = ssub.s32 1, %s11
  %s14 = scalar_select 0, %s13, %s11
  $region1: #{encoder_forward.2} parent=0
    #allocation5 [shape = 'u8[49152]{0}', space=vmem, size = 0xc000, scoped, tag = 'input window, operand 2, single buffered']
    #allocation6 [shape = 's32[1]{0}', space=sflag, size = 0x4, scoped, tag = 'scoped memory for encoder_forward.2']
    #allocation7 [shape = 'u8[49152]{0}', space=vmem, size = 0xc000, scoped, tag = 'input window, operand 3, single buffered']
    #allocation8 [shape = 's32[1]{0}', space=sflag, size = 0x4, scoped, tag = 'scoped memory for encoder_forward.2']
    #allocation9 [shape = 'u8[393216]{0}', space=vmem, size = 0x60000, scoped, tag = 'input window, operand 4, single buffered']
    #allocation10 [shape = 'u8[3072]{0}', space=vmem, size = 0xc00, scoped, tag = 'input window, operand 5, single buffered']
    #allocation11 [shape = 's32[1]{0}', space=sflag, size = 0x4, scoped, tag = 'scoped memory for encoder_forward.2']
    #allocation12 [shape = 'u8[3072]{0}', space=vmem, size = 0xc00, scoped, tag = 'input window, operand 6, single buffered']
    %15 = vsyncpa [#allocation6], 0
    %16 = vsyncpa [#allocation8], 0
    %17 = vsyncpa [#allocation11], 0
    // Predicated region
    $region2: #{encoder_forward.2} parent=1 // pred_check
      _
    $region3: #{encoder_forward.2} parent=1 // pred_check_branch
      %19 = sbr.rel (0) target = $region5
    $region4: #{encoder_forward.2} parent=1 // pred_region
      _
    $region5: #{encoder_forward.2} parent=1 // pred_fallthru
      _
    // Predicated region
    $region6: #{encoder_forward.2} parent=1 // pred_check
      _
    $region7: #{encoder_forward.2} parent=1 // pred_check_branch
      %21 = sbr.rel (0) target = $region9
    $region8: #{encoder_forward.2} parent=1 // pred_region
      %s22 = ssub.s32 0, 0
      %s23 = smul.u32 8, %s22
      %p24 = scmp.lt.s32.totalorder %s23, 7
      %s25 = scalar_select %p24, %s23, 7
      %s26 = smul.addr %s25, 8
      %s27 = scalar_lea.vmem %s1, %s26
      %s28 = ssub.s32 0, 0
      %s29 = smul.u32 8, %s28
    $region9: #{encoder_forward.2} parent=1 // pred_fallthru
      _
    // Predicated region
    $region10: #{encoder_forward.2} parent=1 // pred_check
      _
    $region11: #{encoder_forward.2} parent=1 // pred_check_branch
      %31 = sbr.rel (0) target = $region13
    $region12: #{encoder_forward.2} parent=1 // pred_region
      %s33 = ssub.s32 1536, 1536
      %34 = vsyncadd [#allocation6], %s33
      %s35 = sshll.u32 [#allocation5], 4
      %s36 = int_to_ptr.vmem [resolvable:$true] %s35
      %41 = dma.hbm_to_vmem [thread:$0]  %s2, 1536, %s36, [#allocation6], 384, 384, 24
    $region13: #{encoder_forward.2} parent=1 // pred_fallthru
      _
    // Predicated region
    $region14: #{encoder_forward.2} parent=1 // pred_check
      _
    $region15: #{encoder_forward.2} parent=1 // pred_check_branch
      %43 = sbr.rel (0) target = $region17
    $region16: #{encoder_forward.2} parent=1 // pred_region
      %s45 = ssub.s32 1536, 1536
      %46 = vsyncadd [#allocation8], %s45
      %s47 = sshll.u32 [#allocation7], 4
      %s48 = int_to_ptr.vmem [resolvable:$true] %s47
      %53 = dma.hbm_to_vmem [thread:$0]  %s3, 1536, %s48, [#allocation8], 384, 384, 24
    $region17: #{encoder_forward.2} parent=1 // pred_fallthru
      _
    // Predicated region
    $region18: #{encoder_forward.2} parent=1 // pred_check
      _
    $region19: #{encoder_forward.2} parent=1 // pred_check_branch
      %55 = sbr.rel (0) target = $region21
    $region20: #{encoder_forward.2} parent=1 // pred_region
      %s57 = ssub.s32 12288, 12288
      %58 = vsyncadd [#allocation8], %s57
      %s59 = sshll.u32 [#allocation9], 4
      %s60 = int_to_ptr.vmem [resolvable:$true] %s59
      %65 = dma.hbm_to_vmem [thread:$0]  %s4, 12288, %s60, [#allocation8], 384, 384, 24
    $region21: #{encoder_forward.2} parent=1 // pred_fallthru
      _
    // Predicated region
    $region22: #{encoder_forward.2} parent=1 // pred_check
      _
    $region23: #{encoder_forward.2} parent=1 // pred_check_branch
      %67 = sbr.rel (0) target = $region25
    $region24: #{encoder_forward.2} parent=1 // pred_region
      %s69 = ssub.s32 96, 96
      %70 = vsyncadd [#allocation11], %s69
      %s71 = sshll.u32 [#allocation10], 4
      %s72 = int_to_ptr.vmem [resolvable:$true] %s71
      %77 = dma.hbm_to_vmem [thread:$0]  %s5, 96, %s72, [#allocation11], 48, 48, 3
    $region25: #{encoder_forward.2} parent=1 // pred_fallthru
      _
    // Predicated region
    $region26: #{encoder_forward.2} parent=1 // pred_check
      _
    $region27: #{encoder_forward.2} parent=1 // pred_check_branch
      %79 = sbr.rel (0) target = $region29
    $region28: #{encoder_forward.2} parent=1 // pred_region
      %s81 = ssub.s32 96, 96
      %82 = vsyncadd [#allocation11], %s81
      %s83 = sshll.u32 [#allocation12], 4
      %s84 = int_to_ptr.vmem [resolvable:$true] %s83
      %89 = dma.hbm_to_vmem [thread:$0]  %s6, 96, %s84, [#allocation11], 48, 48, 3
    $region29: #{encoder_forward.2} parent=1 // pred_fallthru
      _
    // Predicated region
    $region30: #{encoder_forward.2} parent=1 // pred_check
      _
    $region31: #{encoder_forward.2} parent=1 // pred_check_branch
      %91 = sbr.rel (0) target = $region33
    $region32: #{encoder_forward.2} parent=1 // pred_region
      %92 = dma.done [#allocation6], 1536
    $region33: #{encoder_forward.2} parent=1 // pred_fallthru
      _
    // Predicated region
    $region34: #{encoder_forward.2} parent=1 // pred_check
      _
    $region35: #{encoder_forward.2} parent=1 // pred_check_branch
      %94 = sbr.rel (0) target = $region37
    $region36: #{encoder_forward.2} parent=1 // pred_region
      %95 = dma.done [#allocation8], 1536
    $region37: #{encoder_forward.2} parent=1 // pred_fallthru
      _
    // Predicated region
    $region38: #{encoder_forward.2} parent=1 // pred_check
      _
    $region39: #{encoder_forward.2} parent=1 // pred_check_branch
      %97 = sbr.rel (0) target = $region41
    $region40: #{encoder_forward.2} parent=1 // pred_region
      %98 = dma.done [#allocation8], 12288
    $region41: #{encoder_forward.2} parent=1 // pred_fallthru
      _
    // Predicated region
    $region42: #{encoder_forward.2} parent=1 // pred_check
      _
    $region43: #{encoder_forward.2} parent=1 // pred_check_branch
      %100 = sbr.rel (0) target = $region45
    $region44: #{encoder_forward.2} parent=1 // pred_region
      %101 = dma.done [#allocation11], 96
    $region45: #{encoder_forward.2} parent=1 // pred_fallthru
      _
    // Predicated region
    $region46: #{encoder_forward.2} parent=1 // pred_check
      _
    $region47: #{encoder_forward.2} parent=1 // pred_check_branch
      %103 = sbr.rel (0) target = $region49
    $region48: #{encoder_forward.2} parent=1 // pred_region
      %104 = dma.done [#allocation11], 96
    $region49: #{encoder_forward.2} parent=1 // pred_fallthru
      _
    %s105 = ssub.s32 0, 0
    %s106 = smul.u32 8, %s105
    %p107 = scmp.lt.s32.totalorder %s106, 7
    %s108 = scalar_select %p107, %s106, 7
    %s109 = smul.addr %s108, 8
    %s110 = scalar_lea.vmem %s1, %s109
    %s111 = ssub.s32 0, 0
    %s112 = smul.u32 8, %s111
    %p113 = scmp.lt.s32.totalorder %s112, 7
    %s114 = scalar_select %p113, %s112, 7
    %s115 = smul.addr %s114, 8
    %s116 = scalar_lea.vmem %s8, %s115
    %s117 = ssub.s32 0, 0
    %s118 = smul.u32 8, %s117
    %p119 = scmp.lt.s32.totalorder %s118, 7
    %s120 = scalar_select %p119, %s118, 7
    %s121 = smul.addr %s120, 8
    %s122 = scalar_lea.vmem %s1, %s121
    %s123 = ssub.s32 0, 0
    %s124 = smul.u32 8, %s123
    %s125 = ssub.s32 0, 0
    %s126 = smul.u32 8, %s125
    %p127 = scmp.lt.s32.totalorder %s126, 7
    %s128 = scalar_select %p127, %s126, 7
    %s129 = smul.addr %s128, 8
    %s130 = scalar_lea.vmem %s8, %s129
    %s131 = ssub.s32 0, 0
    %s132 = smul.u32 8, %s131
    %p133 = scmp.eq.s32.totalorder 0, 0
    // Predicated region
    $region50: #{encoder_forward.2} parent=1 // pred_check
      %p134 = pneg %p133
    $region51: #{encoder_forward.2} parent=1 // pred_check_branch
      %136 = sbr.rel (%p134) target = $region53
    $region52: #{encoder_forward.2} parent=1 // pred_region
      %137 = vst [vmem:[#allocation4] sm:$0xff] 0.0
      %138 = vst [vmem:[#allocation4 + $0x8] sm:$0xff] 0.0
    $region53: #{encoder_forward.2} parent=1 // pred_fallthru
      _
    %v139 = vld [vmem:[#allocation10] sm:$0x7]
    %v140 = vld [vmem:[%s0] sm:$0xff]
    %v141 = vld [vmem:[%s0 + $0x8] sm:$0xff]
    %v142 = vld [vmem:[%s0 + $0x10] sm:$0xff]
    %v143 = vld [vmem:[%s0 + $0x18] sm:$0xff]
    %v144 = vld [vmem:[%s0 + $0x20] sm:$0xff]
    %v145 = vld [vmem:[%s0 + $0x28] sm:$0xff]
    %v146 = vld [vmem:[%s0 + $0x30] sm:$0xff]
    %v147 = vld [vmem:[%s0 + $0x38] sm:$0xff]
    %v148 = vld [vmem:[#allocation5] sm:$0xff]
    %v149 = vld [vmem:[#allocation5 + $0x8] sm:$0xff]
    %v150 = vld [vmem:[#allocation5 + $0x10] sm:$0xff]
    %v151 = vld [vmem:[#allocation5 + $0x18] sm:$0xff]
    %v152 = vld [vmem:[#allocation5 + $0x20] sm:$0xff]
    %v153 = vld [vmem:[#allocation5 + $0x28] sm:$0xff]
    %v154 = vld [vmem:[#allocation5 + $0x30] sm:$0xff]
    %v155 = vld [vmem:[#allocation5 + $0x38] sm:$0xff]
    %v156 = vld [vmem:[#allocation5 + $0x40] sm:$0xff]
    %v157 = vld [vmem:[#allocation5 + $0x48] sm:$0xff]
    %v158 = vld [vmem:[#allocation5 + $0x50] sm:$0xff]
    %v159 = vld [vmem:[#allocation5 + $0x58] sm:$0xff]
    %v161 = vlaneseq
    %v162 = vshrl.u32 %v161, 7
    %v163 = vsub.s32 0, %v162
    %v164 = vrot.slane %v139, %v163
    %v165 = vlaneseq
    %v166 = vshrl.u32 %v165, 7
    %v167 = vsub.s32 1, %v166
    %v168 = vrot.slane %v139, %v167
    %v169 = vlaneseq
    %v170 = vshrl.u32 %v169, 7
    %v171 = vsub.s32 2, %v170
    %v172 = vrot.slane %v139, %v171
    %vm176 = vcmask 261120
    %v178 = vsel %vm176, %v140, 0
    %v181 = vsel %vm176, %v141, 0
    %v184 = vsel %vm176, %v142, 0
    %v187 = vsel %vm176, %v143, 0
    %v190 = vsel %vm176, %v144, 0
    %v193 = vsel %vm176, %v145, 0
    %v196 = vsel %vm176, %v146, 0
    %v199 = vsel %vm176, %v147, 0
    %201 = vmatprep.subr.mxu0 0.0
    %202 = vmatpush1.msra.mxu0 0.0
    %203 = vmatprep.subr.mxu0 0.0
    %204 = vmatpush1.msra.mxu0 0.0
    %205 = vmatprep.subr.mxu0 0.0
    %206 = vmatpush1.msra.mxu0 0.0
    %207 = vmatprep.subr.mxu0 0.0
    %208 = vmatpush1.msra.mxu0 0.0
    %209 = vmatprep.subr.mxu0 0.0
    %210 = vmatpush1.msra.mxu0 0.0
    %211 = vmatprep.subr.mxu0 0.0
    %212 = vmatpush1.msra.mxu0 0.0
    %213 = vmatprep.subr.mxu0 0.0
    %214 = vmatpush1.msra.mxu0 0.0
    %215 = vmatprep.subr.mxu0 0.0
    %216 = vmatpush1.msra.mxu0 0.0
    %217 = vmatprep.subr.mxu0 0.0
    %218 = vmatpush1.msra.mxu0 0.0
    %219 = vmatprep.subr.mxu0 0.0
    %220 = vmatpush1.msra.mxu0 0.0
    %221 = vmatprep.subr.mxu0 0.0
    %222 = vmatpush1.msra.mxu0 0.0
    %223 = vmatprep.subr.mxu0 0.0
    %224 = vmatpush1.msra.mxu0 0.0
    %225 = vmatprep.subr.mxu0 %v158
    %226 = vmatpush1.msra.mxu0 %v157
    %227 = vmatprep.subr.mxu0 %v155
    %228 = vmatpush1.msra.mxu0 %v154
    %229 = vmatprep.subr.mxu0 %v152
    %230 = vmatpush1.msra.mxu0 %v151
    %231 = vmatprep.subr.mxu0 %v149
    %232 = vmatpush1.msra.mxu0 %v148
    %233 = vmatprep.subr.mxu0 0.0
    %234 = vmatpush2.msra.mxu0 0.0
    %235 = vmatprep.subr.mxu0 0.0
    %236 = vmatpush2.msra.mxu0 0.0
    %237 = vmatprep.subr.mxu0 0.0
    %238 = vmatpush2.msra.mxu0 0.0
    %239 = vmatprep.subr.mxu0 0.0
    %240 = vmatpush2.msra.mxu0 0.0
    %241 = vmatprep.subr.mxu0 0.0
    %242 = vmatpush2.msra.mxu0 0.0
    %243 = vmatprep.subr.mxu0 0.0
    %244 = vmatpush2.msra.mxu0 0.0
    %245 = vmatprep.subr.mxu0 0.0
    %246 = vmatpush2.msra.mxu0 0.0
    %247 = vmatprep.subr.mxu0 0.0
    %248 = vmatpush2.msra.mxu0 0.0
    %249 = vmatprep.subr.mxu0 0.0
    %250 = vmatpush2.msra.mxu0 0.0
    %251 = vmatprep.subr.mxu0 0.0
    %252 = vmatpush2.msra.mxu0 0.0
    %253 = vmatprep.subr.mxu0 0.0
    %254 = vmatpush2.msra.mxu0 0.0
    %255 = vmatprep.subr.mxu0 0.0
    %256 = vmatpush2.msra.mxu0 0.0
    %257 = vmatprep.subr.mxu0 0.0
    %258 = vmatpush2.msra.mxu0 0.0
    %259 = vmatprep.subr.mxu0 0.0
    %260 = vmatpush2.msra.mxu0 0.0
    %261 = vmatprep.subr.mxu0 0.0
    %262 = vmatpush2.msra.mxu0 0.0
    %263 = vmatprep.subr.mxu0 0.0
    %264 = vmatpush2.msra.mxu0 0.0
    %265 = vmatprep.mubr.f32.mxu0 0.0
    %266 = vmatmul.mubr.f32.gmra.mxu0 %v178
    %v267 = vpop.f32.mrf.mxu0
    %v268 = vadd.f32 %v164, %v267
    %v269 = vpop.f32.mrf.mxu0
    %v270 = vadd.f32 %v168, %v269
    %271 = vmatprep.mubr.f32.mxu0 0.0
    %272 = vmatmul.mubr.f32.gmra.mxu0 %v181
    %v273 = vpop.f32.mrf.mxu0
    %v274 = vadd.f32 %v164, %v273
    %v275 = vpop.f32.mrf.mxu0
    %v276 = vadd.f32 %v168, %v275
    %277 = vmatprep.mubr.f32.mxu0 0.0
    %278 = vmatmul.mubr.f32.gmra.mxu0 %v184
    %v279 = vpop.f32.mrf.mxu0
    %v280 = vadd.f32 %v164, %v279
    %v281 = vpop.f32.mrf.mxu0
    %v282 = vadd.f32 %v168, %v281
    %283 = vmatprep.mubr.f32.mxu0 0.0
    %284 = vmatmul.mubr.f32.gmra.mxu0 %v187
    %v285 = vpop.f32.mrf.mxu0
    %v286 = vadd.f32 %v164, %v285
    %v287 = vpop.f32.mrf.mxu0
    %v288 = vadd.f32 %v168, %v287
    %289 = vmatprep.mubr.f32.mxu0 0.0
    %290 = vmatmul.mubr.f32.gmra.mxu0 %v190
    %v291 = vpop.f32.mrf.mxu0
    %v292 = vadd.f32 %v164, %v291
    %v293 = vpop.f32.mrf.mxu0
    %v294 = vadd.f32 %v168, %v293
    %295 = vmatprep.mubr.f32.mxu0 0.0
    %296 = vmatmul.mubr.f32.gmra.mxu0 %v193
    %v297 = vpop.f32.mrf.mxu0
    %v298 = vadd.f32 %v164, %v297
    %v299 = vpop.f32.mrf.mxu0
    %v300 = vadd.f32 %v168, %v299
    %301 = vmatprep.mubr.f32.mxu0 0.0
    %302 = vmatmul.mubr.f32.gmra.mxu0 %v196
    %v303 = vpop.f32.mrf.mxu0
    %v304 = vadd.f32 %v164, %v303
    %v305 = vpop.f32.mrf.mxu0
    %v306 = vadd.f32 %v168, %v305
    %307 = vmatprep.mubr.f32.mxu0 0.0
    %308 = vmatmul.mubr.f32.gmra.mxu0 %v199
    %v309 = vpop.f32.mrf.mxu0
    %v310 = vadd.f32 %v164, %v309
    %v311 = vpop.f32.mrf.mxu0
    %v312 = vadd.f32 %v168, %v311
    %313 = vdwg.mxu0
    %314 = vmatprep.subr.mxu0 0.0
    %315 = vmatpush1.msra.mxu0 0.0
    %316 = vmatprep.subr.mxu0 0.0
    %317 = vmatpush1.msra.mxu0 0.0
    %318 = vmatprep.subr.mxu0 0.0
    %319 = vmatpush1.msra.mxu0 0.0
    %320 = vmatprep.subr.mxu0 0.0
    %321 = vmatpush1.msra.mxu0 0.0
    %322 = vmatprep.subr.mxu0 0.0
    %323 = vmatpush1.msra.mxu0 0.0
    %324 = vmatprep.subr.mxu0 0.0
    %325 = vmatpush1.msra.mxu0 0.0
    %326 = vmatprep.subr.mxu0 0.0
    %327 = vmatpush1.msra.mxu0 0.0
    %328 = vmatprep.subr.mxu0 0.0
    %329 = vmatpush1.msra.mxu0 0.0
    %330 = vmatprep.subr.mxu0 0.0
    %331 = vmatpush1.msra.mxu0 0.0
    %332 = vmatprep.subr.mxu0 0.0
    %333 = vmatpush1.msra.mxu0 0.0
    %334 = vmatprep.subr.mxu0 0.0
    %335 = vmatpush1.msra.mxu0 0.0
    %336 = vmatprep.subr.mxu0 0.0
    %337 = vmatpush1.msra.mxu0 0.0
    %338 = vmatprep.subr.mxu0 0.0
    %339 = vmatpush1.msra.mxu0 %v159
    %340 = vmatprep.subr.mxu0 0.0
    %341 = vmatpush1.msra.mxu0 %v156
    %342 = vmatprep.subr.mxu0 0.0
    %343 = vmatpush1.msra.mxu0 %v153
    %344 = vmatprep.subr.mxu0 0.0
    %345 = vmatpush1.msra.mxu0 %v150
    %346 = vmatprep.subr.mxu0 0.0
    %347 = vmatpush2.msra.mxu0 0.0
    %348 = vmatprep.subr.mxu0 0.0
    %349 = vmatpush2.msra.mxu0 0.0
    %350 = vmatprep.subr.mxu0 0.0
    %351 = vmatpush2.msra.mxu0 0.0
    %352 = vmatprep.subr.mxu0 0.0
    %353 = vmatpush2.msra.mxu0 0.0
    %354 = vmatprep.subr.mxu0 0.0
    %355 = vmatpush2.msra.mxu0 0.0
    %356 = vmatprep.subr.mxu0 0.0
    %357 = vmatpush2.msra.mxu0 0.0
    %358 = vmatprep.subr.mxu0 0.0
    %359 = vmatpush2.msra.mxu0 0.0
    %360 = vmatprep.subr.mxu0 0.0
    %361 = vmatpush2.msra.mxu0 0.0
    %362 = vmatprep.subr.mxu0 0.0
    %363 = vmatpush2.msra.mxu0 0.0
    %364 = vmatprep.subr.mxu0 0.0
    %365 = vmatpush2.msra.mxu0 0.0
    %366 = vmatprep.subr.mxu0 0.0
    %367 = vmatpush2.msra.mxu0 0.0
    %368 = vmatprep.subr.mxu0 0.0
    %369 = vmatpush2.msra.mxu0 0.0
    %370 = vmatprep.subr.mxu0 0.0
    %371 = vmatpush2.msra.mxu0 0.0
    %372 = vmatprep.subr.mxu0 0.0
    %373 = vmatpush2.msra.mxu0 0.0
    %374 = vmatprep.subr.mxu0 0.0
    %375 = vmatpush2.msra.mxu0 0.0
    %376 = vmatprep.subr.mxu0 0.0
    %377 = vmatpush2.msra.mxu0 0.0
    %378 = vmatprep.mubr.f32.mxu0 0.0
    %379 = vmatmul.mubr.f32.gmra.mxu0 %v178
    %v380 = vpop.f32.mrf.mxu0
    %v381 = vadd.f32 %v172, %v380
    %v382 = vpop.f32.mrf.mxu0
    %383 = vmatprep.mubr.f32.mxu0 0.0
    %384 = vmatmul.mubr.f32.gmra.mxu0 %v181
    %v385 = vpop.f32.mrf.mxu0
    %v386 = vadd.f32 %v172, %v385
    %v387 = vpop.f32.mrf.mxu0
    %388 = vmatprep.mubr.f32.mxu0 0.0
    %389 = vmatmul.mubr.f32.gmra.mxu0 %v184
    %v390 = vpop.f32.mrf.mxu0
    %v391 = vadd.f32 %v172, %v390
    %v392 = vpop.f32.mrf.mxu0
    %393 = vmatprep.mubr.f32.mxu0 0.0
    %394 = vmatmul.mubr.f32.gmra.mxu0 %v187
    %v395 = vpop.f32.mrf.mxu0
    %v396 = vadd.f32 %v172, %v395
    %v397 = vpop.f32.mrf.mxu0
    %398 = vmatprep.mubr.f32.mxu0 0.0
    %399 = vmatmul.mubr.f32.gmra.mxu0 %v190
    %v400 = vpop.f32.mrf.mxu0
    %v401 = vadd.f32 %v172, %v400
    %v402 = vpop.f32.mrf.mxu0
    %403 = vmatprep.mubr.f32.mxu0 0.0
    %404 = vmatmul.mubr.f32.gmra.mxu0 %v193
    %v405 = vpop.f32.mrf.mxu0
    %v406 = vadd.f32 %v172, %v405
    %v407 = vpop.f32.mrf.mxu0
    %408 = vmatprep.mubr.f32.mxu0 0.0
    %409 = vmatmul.mubr.f32.gmra.mxu0 %v196
    %v410 = vpop.f32.mrf.mxu0
    %v411 = vadd.f32 %v172, %v410
    %v412 = vpop.f32.mrf.mxu0
    %413 = vmatprep.mubr.f32.mxu0 0.0
    %414 = vmatmul.mubr.f32.gmra.mxu0 %v199
    %v415 = vpop.f32.mrf.mxu0
    %v416 = vadd.f32 %v172, %v415
    %v417 = vpop.f32.mrf.mxu0
    %418 = vdwg.mxu0
    %419 = vst [vmem:[#allocation2] sm:$0xff] %v268
    %420 = vst [vmem:[#allocation2 + $0x8] sm:$0xff] %v270
    %421 = vst [vmem:[#allocation2 + $0x10] sm:$0xff] %v381
    %422 = vst [vmem:[#allocation2 + $0x18] sm:$0xff] %v274
    %423 = vst [vmem:[#allocation2 + $0x20] sm:$0xff] %v276
    %424 = vst [vmem:[#allocation2 + $0x28] sm:$0xff] %v386
    %425 = vst [vmem:[#allocation2 + $0x30] sm:$0xff] %v280
    %426 = vst [vmem:[#allocation2 + $0x38] sm:$0xff] %v282
    %427 = vst [vmem:[#allocation2 + $0x40] sm:$0xff] %v391
    %428 = vst [vmem:[#allocation2 + $0x48] sm:$0xff] %v286
    %429 = vst [vmem:[#allocation2 + $0x50] sm:$0xff] %v288
    %430 = vst [vmem:[#allocation2 + $0x58] sm:$0xff] %v396
    %431 = vst [vmem:[#allocation2 + $0x60] sm:$0xff] %v292
    %432 = vst [vmem:[#allocation2 + $0x68] sm:$0xff] %v294
    %433 = vst [vmem:[#allocation2 + $0x70] sm:$0xff] %v401
    %434 = vst [vmem:[#allocation2 + $0x78] sm:$0xff] %v298
    %435 = vst [vmem:[#allocation2 + $0x80] sm:$0xff] %v300
    %436 = vst [vmem:[#allocation2 + $0x88] sm:$0xff] %v406
    %437 = vst [vmem:[#allocation2 + $0x90] sm:$0xff] %v304
    %438 = vst [vmem:[#allocation2 + $0x98] sm:$0xff] %v306
    %439 = vst [vmem:[#allocation2 + $0xa0] sm:$0xff] %v411
    %440 = vst [vmem:[#allocation2 + $0xa8] sm:$0xff] %v310
    %441 = vst [vmem:[#allocation2 + $0xb0] sm:$0xff] %v312
    %442 = vst [vmem:[#allocation2 + $0xb8] sm:$0xff] %v416
    %s443 = scalar_lea.vmem [#allocation10], 3
    %v444 = vld [vmem:[%s443] sm:$0x7]
    %v445 = vld [vmem:[%s122] sm:$0xff]
    %v446 = vld [vmem:[%s122 + $0x8] sm:$0xff]
    %v447 = vld [vmem:[%s122 + $0x10] sm:$0xff]
    %v448 = vld [vmem:[%s122 + $0x18] sm:$0xff]
    %v449 = vld [vmem:[%s122 + $0x20] sm:$0xff]
    %v450 = vld [vmem:[%s122 + $0x28] sm:$0xff]
    %v451 = vld [vmem:[%s122 + $0x30] sm:$0xff]
    %v452 = vld [vmem:[%s122 + $0x38] sm:$0xff]
    %v453 = vld [vmem:[#allocation7] sm:$0xff]
    %v454 = vld [vmem:[#allocation7 + $0x8] sm:$0xff]
    %v455 = vld [vmem:[#allocation7 + $0x10] sm:$0xff]
    %v456 = vld [vmem:[#allocation7 + $0x18] sm:$0xff]
    %v457 = vld [vmem:[#allocation7 + $0x20] sm:$0xff]
    %v458 = vld [vmem:[#allocation7 + $0x28] sm:$0xff]
    %v459 = vld [vmem:[#allocation7 + $0x30] sm:$0xff]
    %v460 = vld [vmem:[#allocation7 + $0x38] sm:$0xff]
    %v461 = vld [vmem:[#allocation7 + $0x40] sm:$0xff]
    %v462 = vld [vmem:[#allocation7 + $0x48] sm:$0xff]
    %v463 = vld [vmem:[#allocation7 + $0x50] sm:$0xff]
    %v464 = vld [vmem:[#allocation7 + $0x58] sm:$0xff]
    %v466 = vlaneseq
    %v467 = vshrl.u32 %v466, 7
    %v468 = vsub.s32 0, %v467
    %v469 = vrot.slane %v444, %v468
    %v470 = vlaneseq
    %v471 = vshrl.u32 %v470, 7
    %v472 = vsub.s32 1, %v471
    %v473 = vrot.slane %v444, %v472
    %v474 = vlaneseq
    %v475 = vshrl.u32 %v474, 7
    %v476 = vsub.s32 2, %v475
    %v477 = vrot.slane %v444, %v476
    %v482 = vsel %vm176, %v445, 0
    %v485 = vsel %vm176, %v446, 0
    %v488 = vsel %vm176, %v447, 0
    %v491 = vsel %vm176, %v448, 0
    %v494 = vsel %vm176, %v449, 0
    %v497 = vsel %vm176, %v450, 0
    %v500 = vsel %vm176, %v451, 0
    %v503 = vsel %vm176, %v452, 0
    %505 = vmatprep.subr.mxu0 0.0
    %506 = vmatpush1.msra.mxu0 0.0
    %507 = vmatprep.subr.mxu0 0.0
    %508 = vmatpush1.msra.mxu0 0.0
    %509 = vmatprep.subr.mxu0 0.0
    %510 = vmatpush1.msra.mxu0 0.0
    %511 = vmatprep.subr.mxu0 0.0
    %512 = vmatpush1.msra.mxu0 0.0
    %513 = vmatprep.subr.mxu0 0.0
    %514 = vmatpush1.msra.mxu0 0.0
    %515 = vmatprep.subr.mxu0 0.0
    %516 = vmatpush1.msra.mxu0 0.0
    %517 = vmatprep.subr.mxu0 0.0
    %518 = vmatpush1.msra.mxu0 0.0
    %519 = vmatprep.subr.mxu0 0.0
    %520 = vmatpush1.msra.mxu0 0.0
    %521 = vmatprep.subr.mxu0 0.0
    %522 = vmatpush1.msra.mxu0 0.0
    %523 = vmatprep.subr.mxu0 0.0
    %524 = vmatpush1.msra.mxu0 0.0
    %525 = vmatprep.subr.mxu0 0.0
    %526 = vmatpush1.msra.mxu0 0.0
    %527 = vmatprep.subr.mxu0 0.0
    %528 = vmatpush1.msra.mxu0 0.0
    %529 = vmatprep.subr.mxu0 %v463
    %530 = vmatpush1.msra.mxu0 %v462
    %531 = vmatprep.subr.mxu0 %v460
    %532 = vmatpush1.msra.mxu0 %v459
    %533 = vmatprep.subr.mxu0 %v457
    %534 = vmatpush1.msra.mxu0 %v456
    %535 = vmatprep.subr.mxu0 %v454
    %536 = vmatpush1.msra.mxu0 %v453
    %537 = vmatprep.subr.mxu0 0.0
    %538 = vmatpush2.msra.mxu0 0.0
    %539 = vmatprep.subr.mxu0 0.0
    %540 = vmatpush2.msra.mxu0 0.0
    %541 = vmatprep.subr.mxu0 0.0
    %542 = vmatpush2.msra.mxu0 0.0
    %543 = vmatprep.subr.mxu0 0.0
    %544 = vmatpush2.msra.mxu0 0.0
    %545 = vmatprep.subr.mxu0 0.0
    %546 = vmatpush2.msra.mxu0 0.0
    %547 = vmatprep.subr.mxu0 0.0
    %548 = vmatpush2.msra.mxu0 0.0
    %549 = vmatprep.subr.mxu0 0.0
    %550 = vmatpush2.msra.mxu0 0.0
    %551 = vmatprep.subr.mxu0 0.0
    %552 = vmatpush2.msra.mxu0 0.0
    %553 = vmatprep.subr.mxu0 0.0
    %554 = vmatpush2.msra.mxu0 0.0
    %555 = vmatprep.subr.mxu0 0.0
    %556 = vmatpush2.msra.mxu0 0.0
    %557 = vmatprep.subr.mxu0 0.0
    %558 = vmatpush2.msra.mxu0 0.0
    %559 = vmatprep.subr.mxu0 0.0
    %560 = vmatpush2.msra.mxu0 0.0
    %561 = vmatprep.subr.mxu0 0.0
    %562 = vmatpush2.msra.mxu0 0.0
    %563 = vmatprep.subr.mxu0 0.0
    %564 = vmatpush2.msra.mxu0 0.0
    %565 = vmatprep.subr.mxu0 0.0
    %566 = vmatpush2.msra.mxu0 0.0
    %567 = vmatprep.subr.mxu0 0.0
    %568 = vmatpush2.msra.mxu0 0.0
    %569 = vmatprep.mubr.f32.mxu0 0.0
    %570 = vmatmul.mubr.f32.gmra.mxu0 %v482
    %v571 = vpop.f32.mrf.mxu0
    %v572 = vadd.f32 %v469, %v571
    %v573 = vpop.f32.mrf.mxu0
    %v574 = vadd.f32 %v473, %v573
    %575 = vmatprep.mubr.f32.mxu0 0.0
    %576 = vmatmul.mubr.f32.gmra.mxu0 %v485
    %v577 = vpop.f32.mrf.mxu0
    %v578 = vadd.f32 %v469, %v577
    %v579 = vpop.f32.mrf.mxu0
    %v580 = vadd.f32 %v473, %v579
    %581 = vmatprep.mubr.f32.mxu0 0.0
    %582 = vmatmul.mubr.f32.gmra.mxu0 %v488
    %v583 = vpop.f32.mrf.mxu0
    %v584 = vadd.f32 %v469, %v583
    %v585 = vpop.f32.mrf.mxu0
    %v586 = vadd.f32 %v473, %v585
    %587 = vmatprep.mubr.f32.mxu0 0.0
    %588 = vmatmul.mubr.f32.gmra.mxu0 %v491
    %v589 = vpop.f32.mrf.mxu0
    %v590 = vadd.f32 %v469, %v589
    %v591 = vpop.f32.mrf.mxu0
    %v592 = vadd.f32 %v473, %v591
    %593 = vmatprep.mubr.f32.mxu0 0.0
    %594 = vmatmul.mubr.f32.gmra.mxu0 %v494
    %v595 = vpop.f32.mrf.mxu0
    %v596 = vadd.f32 %v469, %v595
    %v597 = vpop.f32.mrf.mxu0
    %v598 = vadd.f32 %v473, %v597
    %599 = vmatprep.mubr.f32.mxu0 0.0
    %600 = vmatmul.mubr.f32.gmra.mxu0 %v497
    %v601 = vpop.f32.mrf.mxu0
    %v602 = vadd.f32 %v469, %v601
    %v603 = vpop.f32.mrf.mxu0
    %v604 = vadd.f32 %v473, %v603
    %605 = vmatprep.mubr.f32.mxu0 0.0
    %606 = vmatmul.mubr.f32.gmra.mxu0 %v500
    %v607 = vpop.f32.mrf.mxu0
    %v608 = vadd.f32 %v469, %v607
    %v609 = vpop.f32.mrf.mxu0
    %v610 = vadd.f32 %v473, %v609
    %611 = vmatprep.mubr.f32.mxu0 0.0
    %612 = vmatmul.mubr.f32.gmra.mxu0 %v503
    %v613 = vpop.f32.mrf.mxu0
    %v614 = vadd.f32 %v469, %v613
    %v615 = vpop.f32.mrf.mxu0
    %v616 = vadd.f32 %v473, %v615
    %617 = vdwg.mxu0
    %618 = vmatprep.subr.mxu0 0.0
    %619 = vmatpush1.msra.mxu0 0.0
    %620 = vmatprep.subr.mxu0 0.0
    %621 = vmatpush1.msra.mxu0 0.0
    %622 = vmatprep.subr.mxu0 0.0
    %623 = vmatpush1.msra.mxu0 0.0
    %624 = vmatprep.subr.mxu0 0.0
    %625 = vmatpush1.msra.mxu0 0.0
    %626 = vmatprep.subr.mxu0 0.0
    %627 = vmatpush1.msra.mxu0 0.0
    %628 = vmatprep.subr.mxu0 0.0
    %629 = vmatpush1.msra.mxu0 0.0
    %630 = vmatprep.subr.mxu0 0.0
    %631 = vmatpush1.msra.mxu0 0.0
    %632 = vmatprep.subr.mxu0 0.0
    %633 = vmatpush1.msra.mxu0 0.0
    %634 = vmatprep.subr.mxu0 0.0
    %635 = vmatpush1.msra.mxu0 0.0
    %636 = vmatprep.subr.mxu0 0.0
    %637 = vmatpush1.msra.mxu0 0.0
    %638 = vmatprep.subr.mxu0 0.0
    %639 = vmatpush1.msra.mxu0 0.0
    %640 = vmatprep.subr.mxu0 0.0
    %641 = vmatpush1.msra.mxu0 0.0
    %642 = vmatprep.subr.mxu0 0.0
    %643 = vmatpush1.msra.mxu0 %v464
    %644 = vmatprep.subr.mxu0 0.0
    %645 = vmatpush1.msra.mxu0 %v461
    %646 = vmatprep.subr.mxu0 0.0
    %647 = vmatpush1.msra.mxu0 %v458
    %648 = vmatprep.subr.mxu0 0.0
    %649 = vmatpush1.msra.mxu0 %v455
    %650 = vmatprep.subr.mxu0 0.0
    %651 = vmatpush2.msra.mxu0 0.0
    %652 = vmatprep.subr.mxu0 0.0
    %653 = vmatpush2.msra.mxu0 0.0
    %654 = vmatprep.subr.mxu0 0.0
    %655 = vmatpush2.msra.mxu0 0.0
    %656 = vmatprep.subr.mxu0 0.0
    %657 = vmatpush2.msra.mxu0 0.0
    %658 = vmatprep.subr.mxu0 0.0
    %659 = vmatpush2.msra.mxu0 0.0
    %660 = vmatprep.subr.mxu0 0.0
    %661 = vmatpush2.msra.mxu0 0.0
    %662 = vmatprep.subr.mxu0 0.0
    %663 = vmatpush2.msra.mxu0 0.0
    %664 = vmatprep.subr.mxu0 0.0
    %665 = vmatpush2.msra.mxu0 0.0
    %666 = vmatprep.subr.mxu0 0.0
    %667 = vmatpush2.msra.mxu0 0.0
    %668 = vmatprep.subr.mxu0 0.0
    %669 = vmatpush2.msra.mxu0 0.0
    %670 = vmatprep.subr.mxu0 0.0
    %671 = vmatpush2.msra.mxu0 0.0
    %672 = vmatprep.subr.mxu0 0.0
    %673 = vmatpush2.msra.mxu0 0.0
    %674 = vmatprep.subr.mxu0 0.0
    %675 = vmatpush2.msra.mxu0 0.0
    %676 = vmatprep.subr.mxu0 0.0
    %677 = vmatpush2.msra.mxu0 0.0
    %678 = vmatprep.subr.mxu0 0.0
    %679 = vmatpush2.msra.mxu0 0.0
    %680 = vmatprep.subr.mxu0 0.0
    %681 = vmatpush2.msra.mxu0 0.0
    %682 = vmatprep.mubr.f32.mxu0 0.0
    %683 = vmatmul.mubr.f32.gmra.mxu0 %v482
    %v684 = vpop.f32.mrf.mxu0
    %v685 = vadd.f32 %v477, %v684
    %v686 = vpop.f32.mrf.mxu0
    %687 = vmatprep.mubr.f32.mxu0 0.0
    %688 = vmatmul.mubr.f32.gmra.mxu0 %v485
    %v689 = vpop.f32.mrf.mxu0
    %v690 = vadd.f32 %v477, %v689
    %v691 = vpop.f32.mrf.mxu0
    %692 = vmatprep.mubr.f32.mxu0 0.0
    %693 = vmatmul.mubr.f32.gmra.mxu0 %v488
    %v694 = vpop.f32.mrf.mxu0
    %v695 = vadd.f32 %v477, %v694
    %v696 = vpop.f32.mrf.mxu0
    %697 = vmatprep.mubr.f32.mxu0 0.0
    %698 = vmatmul.mubr.f32.gmra.mxu0 %v491
    %v699 = vpop.f32.mrf.mxu0
    %v700 = vadd.f32 %v477, %v699
    %v701 = vpop.f32.mrf.mxu0
    %702 = vmatprep.mubr.f32.mxu0 0.0
    %703 = vmatmul.mubr.f32.gmra.mxu0 %v494
    %v704 = vpop.f32.mrf.mxu0
    %v705 = vadd.f32 %v477, %v704
    %v706 = vpop.f32.mrf.mxu0
    %707 = vmatprep.mubr.f32.mxu0 0.0
    %708 = vmatmul.mubr.f32.gmra.mxu0 %v497
    %v709 = vpop.f32.mrf.mxu0
    %v710 = vadd.f32 %v477, %v709
    %v711 = vpop.f32.mrf.mxu0
    %712 = vmatprep.mubr.f32.mxu0 0.0
    %713 = vmatmul.mubr.f32.gmra.mxu0 %v500
    %v714 = vpop.f32.mrf.mxu0
    %v715 = vadd.f32 %v477, %v714
    %v716 = vpop.f32.mrf.mxu0
    %717 = vmatprep.mubr.f32.mxu0 0.0
    %718 = vmatmul.mubr.f32.gmra.mxu0 %v503
    %v719 = vpop.f32.mrf.mxu0
    %v720 = vadd.f32 %v477, %v719
    %v721 = vpop.f32.mrf.mxu0
    %722 = vdwg.mxu0
    %723 = vst [vmem:[#allocation3] sm:$0xff] %v572
    %724 = vst [vmem:[#allocation3 + $0x8] sm:$0xff] %v574
    %725 = vst [vmem:[#allocation3 + $0x10] sm:$0xff] %v685
    %726 = vst [vmem:[#allocation3 + $0x18] sm:$0xff] %v578
    %727 = vst [vmem:[#allocation3 + $0x20] sm:$0xff] %v580
    %728 = vst [vmem:[#allocation3 + $0x28] sm:$0xff] %v690
    %729 = vst [vmem:[#allocation3 + $0x30] sm:$0xff] %v584
    %730 = vst [vmem:[#allocation3 + $0x38] sm:$0xff] %v586
    %731 = vst [vmem:[#allocation3 + $0x40] sm:$0xff] %v695
    %732 = vst [vmem:[#allocation3 + $0x48] sm:$0xff] %v590
    %733 = vst [vmem:[#allocation3 + $0x50] sm:$0xff] %v592
    %734 = vst [vmem:[#allocation3 + $0x58] sm:$0xff] %v700
    %735 = vst [vmem:[#allocation3 + $0x60] sm:$0xff] %v596
    %736 = vst [vmem:[#allocation3 + $0x68] sm:$0xff] %v598
    %737 = vst [vmem:[#allocation3 + $0x70] sm:$0xff] %v705
    %738 = vst [vmem:[#allocation3 + $0x78] sm:$0xff] %v602
    %739 = vst [vmem:[#allocation3 + $0x80] sm:$0xff] %v604
    %740 = vst [vmem:[#allocation3 + $0x88] sm:$0xff] %v710
    %741 = vst [vmem:[#allocation3 + $0x90] sm:$0xff] %v608
    %742 = vst [vmem:[#allocation3 + $0x98] sm:$0xff] %v610
    %743 = vst [vmem:[#allocation3 + $0xa0] sm:$0xff] %v715
    %744 = vst [vmem:[#allocation3 + $0xa8] sm:$0xff] %v614
    %745 = vst [vmem:[#allocation3 + $0xb0] sm:$0xff] %v616
    %746 = vst [vmem:[#allocation3 + $0xb8] sm:$0xff] %v720
    %v747 = vld [vmem:[#allocation9] sm:$0xff]
    %v748 = vld [vmem:[#allocation9 + $0x8] sm:$0xff]
    %v749 = vld [vmem:[#allocation9 + $0x10] sm:$0xff]
    %v750 = vld [vmem:[#allocation9 + $0x18] sm:$0xff]
    %v751 = vld [vmem:[#allocation9 + $0x20] sm:$0xff]
    %v752 = vld [vmem:[#allocation9 + $0x28] sm:$0xff]
    %v753 = vld [vmem:[#allocation9 + $0x30] sm:$0xff]
    %v754 = vld [vmem:[#allocation9 + $0x38] sm:$0xff]
    %v755 = vld [vmem:[#allocation9 + $0x40] sm:$0xff]
    %v756 = vld [vmem:[#allocation9 + $0x48] sm:$0xff]
    %v757 = vld [vmem:[#allocation9 + $0x50] sm:$0xff]
    %v758 = vld [vmem:[#allocation9 + $0x58] sm:$0xff]
    %v759 = vld [vmem:[#allocation9 + $0x60] sm:$0xff]
    %v760 = vld [vmem:[#allocation9 + $0x68] sm:$0xff]
    %v761 = vld [vmem:[#allocation9 + $0x70] sm:$0xff]
    %v762 = vld [vmem:[#allocation9 + $0x78] sm:$0xff]
    %v763 = vld [vmem:[#allocation9 + $0x80] sm:$0xff]
    %v764 = vld [vmem:[#allocation9 + $0x88] sm:$0xff]
    %v765 = vld [vmem:[#allocation9 + $0x90] sm:$0xff]
    %v766 = vld [vmem:[#allocation9 + $0x98] sm:$0xff]
    %v767 = vld [vmem:[#allocation9 + $0xa0] sm:$0xff]
    %v768 = vld [vmem:[#allocation9 + $0xa8] sm:$0xff]
    %v769 = vld [vmem:[#allocation9 + $0xb0] sm:$0xff]
    %v770 = vld [vmem:[#allocation9 + $0xb8] sm:$0xff]
    %v771 = vld [vmem:[#allocation9 + $0xc0] sm:$0xff]
    %v772 = vld [vmem:[#allocation9 + $0xc8] sm:$0xff]
    %v773 = vld [vmem:[#allocation9 + $0xd0] sm:$0xff]
    %v774 = vld [vmem:[#allocation9 + $0xd8] sm:$0xff]
    %v775 = vld [vmem:[#allocation9 + $0xe0] sm:$0xff]
    %v776 = vld [vmem:[#allocation9 + $0xe8] sm:$0xff]
    %v777 = vld [vmem:[#allocation9 + $0xf0] sm:$0xff]
    %v778 = vld [vmem:[#allocation9 + $0xf8] sm:$0xff]
    %v779 = vld [vmem:[#allocation9 + $0x100] sm:$0xff]
    %v780 = vld [vmem:[#allocation9 + $0x108] sm:$0xff]
    %v781 = vld [vmem:[#allocation9 + $0x110] sm:$0xff]
    %v782 = vld [vmem:[#allocation9 + $0x118] sm:$0xff]
    %v783 = vld [vmem:[#allocation9 + $0x120] sm:$0xff]
    %v784 = vld [vmem:[#allocation9 + $0x128] sm:$0xff]
    %v785 = vld [vmem:[#allocation9 + $0x130] sm:$0xff]
    %v786 = vld [vmem:[#allocation9 + $0x138] sm:$0xff]
    %v787 = vld [vmem:[#allocation9 + $0x140] sm:$0xff]
    %v788 = vld [vmem:[#allocation9 + $0x148] sm:$0xff]
    %v789 = vld [vmem:[#allocation9 + $0x150] sm:$0xff]
    %v790 = vld [vmem:[#allocation9 + $0x158] sm:$0xff]
    %v791 = vld [vmem:[#allocation9 + $0x160] sm:$0xff]
    %v792 = vld [vmem:[#allocation9 + $0x168] sm:$0xff]
    %v793 = vld [vmem:[#allocation9 + $0x170] sm:$0xff]
    %v794 = vld [vmem:[#allocation9 + $0x178] sm:$0xff]
    %s795 = scalar_lea.vmem [#allocation9], 384
    %v796 = vld [vmem:[%s795] sm:$0xff]
    %v797 = vld [vmem:[%s795 + $0x8] sm:$0xff]
    %v798 = vld [vmem:[%s795 + $0x10] sm:$0xff]
    %v799 = vld [vmem:[%s795 + $0x18] sm:$0xff]
    %v800 = vld [vmem:[%s795 + $0x20] sm:$0xff]
    %v801 = vld [vmem:[%s795 + $0x28] sm:$0xff]
    %v802 = vld [vmem:[%s795 + $0x30] sm:$0xff]
    %v803 = vld [vmem:[%s795 + $0x38] sm:$0xff]
    %v804 = vld [vmem:[%s795 + $0x40] sm:$0xff]
    %v805 = vld [vmem:[%s795 + $0x48] sm:$0xff]
    %v806 = vld [vmem:[%s795 + $0x50] sm:$0xff]
    %v807 = vld [vmem:[%s795 + $0x58] sm:$0xff]
    %v808 = vld [vmem:[%s795 + $0x60] sm:$0xff]
    %v809 = vld [vmem:[%s795 + $0x68] sm:$0xff]
    %v810 = vld [vmem:[%s795 + $0x70] sm:$0xff]
    %v811 = vld [vmem:[%s795 + $0x78] sm:$0xff]
    %v812 = vld [vmem:[%s795 + $0x80] sm:$0xff]
    %v813 = vld [vmem:[%s795 + $0x88] sm:$0xff]
    %v814 = vld [vmem:[%s795 + $0x90] sm:$0xff]
    %v815 = vld [vmem:[%s795 + $0x98] sm:$0xff]
    %v816 = vld [vmem:[%s795 + $0xa0] sm:$0xff]
    %v817 = vld [vmem:[%s795 + $0xa8] sm:$0xff]
    %v818 = vld [vmem:[%s795 + $0xb0] sm:$0xff]
    %v819 = vld [vmem:[%s795 + $0xb8] sm:$0xff]
    %v820 = vld [vmem:[%s795 + $0xc0] sm:$0xff]
    %v821 = vld [vmem:[%s795 + $0xc8] sm:$0xff]
    %v822 = vld [vmem:[%s795 + $0xd0] sm:$0xff]
    %v823 = vld [vmem:[%s795 + $0xd8] sm:$0xff]
    %v824 = vld [vmem:[%s795 + $0xe0] sm:$0xff]
    %v825 = vld [vmem:[%s795 + $0xe8] sm:$0xff]
    %v826 = vld [vmem:[%s795 + $0xf0] sm:$0xff]
    %v827 = vld [vmem:[%s795 + $0xf8] sm:$0xff]
    %v828 = vld [vmem:[%s795 + $0x100] sm:$0xff]
    %v829 = vld [vmem:[%s795 + $0x108] sm:$0xff]
    %v830 = vld [vmem:[%s795 + $0x110] sm:$0xff]
    %v831 = vld [vmem:[%s795 + $0x118] sm:$0xff]
    %v832 = vld [vmem:[%s795 + $0x120] sm:$0xff]
    %v833 = vld [vmem:[%s795 + $0x128] sm:$0xff]
    %v834 = vld [vmem:[%s795 + $0x130] sm:$0xff]
    %v835 = vld [vmem:[%s795 + $0x138] sm:$0xff]
    %v836 = vld [vmem:[%s795 + $0x140] sm:$0xff]
    %v837 = vld [vmem:[%s795 + $0x148] sm:$0xff]
    %v838 = vld [vmem:[%s795 + $0x150] sm:$0xff]
    %v839 = vld [vmem:[%s795 + $0x158] sm:$0xff]
    %v840 = vld [vmem:[%s795 + $0x160] sm:$0xff]
    %v841 = vld [vmem:[%s795 + $0x168] sm:$0xff]
    %v842 = vld [vmem:[%s795 + $0x170] sm:$0xff]
    %v843 = vld [vmem:[%s795 + $0x178] sm:$0xff]
    %v844 = vld [vmem:[#allocation12] sm:$0x7]
    %s845 = scalar_lea.vmem [#allocation12], 3
    %v846 = vld [vmem:[%s845] sm:$0x7]
    %v847 = vld [vmem:[#allocation4] sm:$0xff]
    %s848 = scalar_lea.vmem [#allocation4], 8
    %v849 = vld [vmem:[%s848] sm:$0xff]
    loop: start=0, step=1, limit=2
    $region54: #{encoder_forward.2} parent=1 // loop_pre_header
      _
    $region55: #{encoder_forward.2} parent=1 // loop_header
      %s851 = sphi 0, %s855
      %p852 = scmp.ge.s32.totalorder %s851, 2
      %v856 = vphi %v847, %v2091
      %v857 = vphi %v849, %v2262
    $region56: #{encoder_forward.2} parent=1 // loop_header_branch
      %854 = sbr.rel (%p852) target = $region60
    $region57: #{encoder_forward.2} parent=1 // loop_body
      %s858 = smul.u32 %s851, 4
      %s859 = ssub.s32 7, %s858
      %s860 = smul.u32 %s858, 3
      %s861 = smul.addr %s860, 8
      %s862 = scalar_lea.vmem [#allocation2], %s861
      %v863 = vld [vmem:[%s862] sm:$0xff]
      %v864 = vld [vmem:[%s862 + $0x8] sm:$0xff]
      %v865 = vld [vmem:[%s862 + $0x10] sm:$0xff]
      %v867 = vlaneseq
      %v868 = vshrl.u32 %v867, 7
      %v869 = vsub.s32 0, %v868
      %v870 = vrot.slane %v844, %v869
      %v871 = vlaneseq
      %v872 = vshrl.u32 %v871, 7
      %v873 = vsub.s32 1, %v872
      %v874 = vrot.slane %v844, %v873
      %v875 = vlaneseq
      %v876 = vshrl.u32 %v875, 7
      %v877 = vsub.s32 2, %v876
      %v878 = vrot.slane %v844, %v877
      %882 = vmatprep.subr.mxu0 %v793
      %883 = vmatpush1.msra.mxu0 %v792
      %884 = vmatprep.subr.mxu0 %v790
      %885 = vmatpush1.msra.mxu0 %v789
      %886 = vmatprep.subr.mxu0 %v787
      %887 = vmatpush1.msra.mxu0 %v786
      %888 = vmatprep.subr.mxu0 %v784
      %889 = vmatpush1.msra.mxu0 %v783
      %890 = vmatprep.subr.mxu0 %v781
      %891 = vmatpush1.msra.mxu0 %v780
      %892 = vmatprep.subr.mxu0 %v778
      %893 = vmatpush1.msra.mxu0 %v777
      %894 = vmatprep.subr.mxu0 %v775
      %895 = vmatpush1.msra.mxu0 %v774
      %896 = vmatprep.subr.mxu0 %v772
      %897 = vmatpush1.msra.mxu0 %v771
      %898 = vmatprep.subr.mxu0 %v769
      %899 = vmatpush1.msra.mxu0 %v768
      %900 = vmatprep.subr.mxu0 %v766
      %901 = vmatpush1.msra.mxu0 %v765
      %902 = vmatprep.subr.mxu0 %v763
      %903 = vmatpush1.msra.mxu0 %v762
      %904 = vmatprep.subr.mxu0 %v760
      %905 = vmatpush1.msra.mxu0 %v759
      %906 = vmatprep.subr.mxu0 %v757
      %907 = vmatpush1.msra.mxu0 %v756
      %908 = vmatprep.subr.mxu0 %v754
      %909 = vmatpush1.msra.mxu0 %v753
      %910 = vmatprep.subr.mxu0 %v751
      %911 = vmatpush1.msra.mxu0 %v750
      %912 = vmatprep.subr.mxu0 %v748
      %913 = vmatpush1.msra.mxu0 %v747
      %914 = vmatprep.subr.mxu0 0.0
      %915 = vmatpush2.msra.mxu0 0.0
      %916 = vmatprep.subr.mxu0 0.0
      %917 = vmatpush2.msra.mxu0 0.0
      %918 = vmatprep.subr.mxu0 0.0
      %919 = vmatpush2.msra.mxu0 0.0
      %920 = vmatprep.subr.mxu0 0.0
      %921 = vmatpush2.msra.mxu0 0.0
      %922 = vmatprep.subr.mxu0 0.0
      %923 = vmatpush2.msra.mxu0 0.0
      %924 = vmatprep.subr.mxu0 0.0
      %925 = vmatpush2.msra.mxu0 0.0
      %926 = vmatprep.subr.mxu0 0.0
      %927 = vmatpush2.msra.mxu0 0.0
      %928 = vmatprep.subr.mxu0 0.0
      %929 = vmatpush2.msra.mxu0 0.0
      %930 = vmatprep.subr.mxu0 0.0
      %931 = vmatpush2.msra.mxu0 0.0
      %932 = vmatprep.subr.mxu0 0.0
      %933 = vmatpush2.msra.mxu0 0.0
      %934 = vmatprep.subr.mxu0 0.0
      %935 = vmatpush2.msra.mxu0 0.0
      %936 = vmatprep.subr.mxu0 0.0
      %937 = vmatpush2.msra.mxu0 0.0
      %938 = vmatprep.subr.mxu0 0.0
      %939 = vmatpush2.msra.mxu0 0.0
      %940 = vmatprep.subr.mxu0 0.0
      %941 = vmatpush2.msra.mxu0 0.0
      %942 = vmatprep.subr.mxu0 0.0
      %943 = vmatpush2.msra.mxu0 0.0
      %944 = vmatprep.subr.mxu0 0.0
      %945 = vmatpush2.msra.mxu0 0.0
      %946 = vmatprep.mubr.f32.mxu0 0.0
      %947 = vmatmul.mubr.f32.gmra.mxu0 %v856
      %v948 = vpop.f32.mrf.mxu0
      %v949 = vadd.f32 %v870, %v948
      %v950 = vpop.f32.mrf.mxu0
      %v951 = vadd.f32 %v874, %v950
      %952 = vdwg.mxu0
      %953 = vmatprep.subr.mxu0 0.0
      %954 = vmatpush1.msra.mxu0 %v794
      %955 = vmatprep.subr.mxu0 0.0
      %956 = vmatpush1.msra.mxu0 %v791
      %957 = vmatprep.subr.mxu0 0.0
      %958 = vmatpush1.msra.mxu0 %v788
      %959 = vmatprep.subr.mxu0 0.0
      %960 = vmatpush1.msra.mxu0 %v785
      %961 = vmatprep.subr.mxu0 0.0
      %962 = vmatpush1.msra.mxu0 %v782
      %963 = vmatprep.subr.mxu0 0.0
      %964 = vmatpush1.msra.mxu0 %v779
      %965 = vmatprep.subr.mxu0 0.0
      %966 = vmatpush1.msra.mxu0 %v776
      %967 = vmatprep.subr.mxu0 0.0
      %968 = vmatpush1.msra.mxu0 %v773
      %969 = vmatprep.subr.mxu0 0.0
      %970 = vmatpush1.msra.mxu0 %v770
      %971 = vmatprep.subr.mxu0 0.0
      %972 = vmatpush1.msra.mxu0 %v767
      %973 = vmatprep.subr.mxu0 0.0
      %974 = vmatpush1.msra.mxu0 %v764
      %975 = vmatprep.subr.mxu0 0.0
      %976 = vmatpush1.msra.mxu0 %v761
      %977 = vmatprep.subr.mxu0 0.0
      %978 = vmatpush1.msra.mxu0 %v758
      %979 = vmatprep.subr.mxu0 0.0
      %980 = vmatpush1.msra.mxu0 %v755
      %981 = vmatprep.subr.mxu0 0.0
      %982 = vmatpush1.msra.mxu0 %v752
      %983 = vmatprep.subr.mxu0 0.0
      %984 = vmatpush1.msra.mxu0 %v749
      %985 = vmatprep.subr.mxu0 0.0
      %986 = vmatpush2.msra.mxu0 0.0
      %987 = vmatprep.subr.mxu0 0.0
      %988 = vmatpush2.msra.mxu0 0.0
      %989 = vmatprep.subr.mxu0 0.0
      %990 = vmatpush2.msra.mxu0 0.0
      %991 = vmatprep.subr.mxu0 0.0
      %992 = vmatpush2.msra.mxu0 0.0
      %993 = vmatprep.subr.mxu0 0.0
      %994 = vmatpush2.msra.mxu0 0.0
      %995 = vmatprep.subr.mxu0 0.0
      %996 = vmatpush2.msra.mxu0 0.0
      %997 = vmatprep.subr.mxu0 0.0
      %998 = vmatpush2.msra.mxu0 0.0
      %999 = vmatprep.subr.mxu0 0.0
      %1000 = vmatpush2.msra.mxu0 0.0
      %1001 = vmatprep.subr.mxu0 0.0
      %1002 = vmatpush2.msra.mxu0 0.0
      %1003 = vmatprep.subr.mxu0 0.0
      %1004 = vmatpush2.msra.mxu0 0.0
      %1005 = vmatprep.subr.mxu0 0.0
      %1006 = vmatpush2.msra.mxu0 0.0
      %1007 = vmatprep.subr.mxu0 0.0
      %1008 = vmatpush2.msra.mxu0 0.0
      %1009 = vmatprep.subr.mxu0 0.0
      %1010 = vmatpush2.msra.mxu0 0.0
      %1011 = vmatprep.subr.mxu0 0.0
      %1012 = vmatpush2.msra.mxu0 0.0
      %1013 = vmatprep.subr.mxu0 0.0
      %1014 = vmatpush2.msra.mxu0 0.0
      %1015 = vmatprep.subr.mxu0 0.0
      %1016 = vmatpush2.msra.mxu0 0.0
      %1017 = vmatprep.mubr.f32.mxu0 0.0
      %1018 = vmatmul.mubr.f32.gmra.mxu0 %v856
      %v1019 = vpop.f32.mrf.mxu0
      %v1020 = vadd.f32 %v878, %v1019
      %v1021 = vpop.f32.mrf.mxu0
      %1022 = vdwg.mxu0
      %v1023 = vadd.f32 %v863, %v949
      %v1024 = vxor.u32 %v1023, 2147483648
      %v1025 = vmul.f32 %v1024, 1.442695
      %v1026 = vpow.pop %v1025
      %v1027 = vadd.f32 %v1026, 1.0
      %v1028 = vrcp.pop %v1027
      %v1029 = vmul.f32 1.0, %v1028
      %v1030 = vadd.f32 %v864, %v951
      %v1031 = vxor.u32 %v1030, 2147483648
      %v1032 = vmul.f32 %v1031, 1.442695
      %v1033 = vpow.pop %v1032
      %v1034 = vadd.f32 %v1033, 1.0
      %v1035 = vrcp.pop %v1034
      %v1036 = vmul.f32 1.0, %v1035
      %v1037 = vmul.f32 %v1029, %v1020
      %v1038 = vadd.f32 %v865, %v1037
      %v1039 = vtanh.pop %v1038
      %v1040 = vsub.f32 1.0, %v1036
      %v1041 = vmul.f32 %v1040, %v1039
      %v1042 = vmul.f32 %v1036, %v856
      %v1043 = vadd.f32 %v1041, %v1042
      %s1044 = smul.u32 %s858, 8
      %s1045 = scalar_lea.vmem %s7, %s1044
      %1046 = vst [vmem:[%s1045] sm:$0xff] %v1043
      %s1047 = smul.u32 %s859, 3
      %s1048 = smul.addr %s1047, 8
      %s1049 = scalar_lea.vmem [#allocation3], %s1048
      %v1050 = vld [vmem:[%s1049] sm:$0xff]
      %v1051 = vld [vmem:[%s1049 + $0x8] sm:$0xff]
      %v1052 = vld [vmem:[%s1049 + $0x10] sm:$0xff]
      %v1054 = vlaneseq
      %v1055 = vshrl.u32 %v1054, 7
      %v1056 = vsub.s32 0, %v1055
      %v1057 = vrot.slane %v846, %v1056
      %v1058 = vlaneseq
      %v1059 = vshrl.u32 %v1058, 7
      %v1060 = vsub.s32 1, %v1059
      %v1061 = vrot.slane %v846, %v1060
      %v1062 = vlaneseq
      %v1063 = vshrl.u32 %v1062, 7
      %v1064 = vsub.s32 2, %v1063
      %v1065 = vrot.slane %v846, %v1064
      %1069 = vmatprep.subr.mxu0 %v842
      %1070 = vmatpush1.msra.mxu0 %v841
      %1071 = vmatprep.subr.mxu0 %v839
      %1072 = vmatpush1.msra.mxu0 %v838
      %1073 = vmatprep.subr.mxu0 %v836
      %1074 = vmatpush1.msra.mxu0 %v835
      %1075 = vmatprep.subr.mxu0 %v833
      %1076 = vmatpush1.msra.mxu0 %v832
      %1077 = vmatprep.subr.mxu0 %v830
      %1078 = vmatpush1.msra.mxu0 %v829
      %1079 = vmatprep.subr.mxu0 %v827
      %1080 = vmatpush1.msra.mxu0 %v826
      %1081 = vmatprep.subr.mxu0 %v824
      %1082 = vmatpush1.msra.mxu0 %v823
      %1083 = vmatprep.subr.mxu0 %v821
      %1084 = vmatpush1.msra.mxu0 %v820
      %1085 = vmatprep.subr.mxu0 %v818
      %1086 = vmatpush1.msra.mxu0 %v817
      %1087 = vmatprep.subr.mxu0 %v815
      %1088 = vmatpush1.msra.mxu0 %v814
      %1089 = vmatprep.subr.mxu0 %v812
      %1090 = vmatpush1.msra.mxu0 %v811
      %1091 = vmatprep.subr.mxu0 %v809
      %1092 = vmatpush1.msra.mxu0 %v808
      %1093 = vmatprep.subr.mxu0 %v806
      %1094 = vmatpush1.msra.mxu0 %v805
      %1095 = vmatprep.subr.mxu0 %v803
      %1096 = vmatpush1.msra.mxu0 %v802
      %1097 = vmatprep.subr.mxu0 %v800
      %1098 = vmatpush1.msra.mxu0 %v799
      %1099 = vmatprep.subr.mxu0 %v797
      %1100 = vmatpush1.msra.mxu0 %v796
      %1101 = vmatprep.subr.mxu0 0.0
      %1102 = vmatpush2.msra.mxu0 0.0
      %1103 = vmatprep.subr.mxu0 0.0
      %1104 = vmatpush2.msra.mxu0 0.0
      %1105 = vmatprep.subr.mxu0 0.0
      %1106 = vmatpush2.msra.mxu0 0.0
      %1107 = vmatprep.subr.mxu0 0.0
      %1108 = vmatpush2.msra.mxu0 0.0
      %1109 = vmatprep.subr.mxu0 0.0
      %1110 = vmatpush2.msra.mxu0 0.0
      %1111 = vmatprep.subr.mxu0 0.0
      %1112 = vmatpush2.msra.mxu0 0.0
      %1113 = vmatprep.subr.mxu0 0.0
      %1114 = vmatpush2.msra.mxu0 0.0
      %1115 = vmatprep.subr.mxu0 0.0
      %1116 = vmatpush2.msra.mxu0 0.0
      %1117 = vmatprep.subr.mxu0 0.0
      %1118 = vmatpush2.msra.mxu0 0.0
      %1119 = vmatprep.subr.mxu0 0.0
      %1120 = vmatpush2.msra.mxu0 0.0
      %1121 = vmatprep.subr.mxu0 0.0
      %1122 = vmatpush2.msra.mxu0 0.0
      %1123 = vmatprep.subr.mxu0 0.0
      %1124 = vmatpush2.msra.mxu0 0.0
      %1125 = vmatprep.subr.mxu0 0.0
      %1126 = vmatpush2.msra.mxu0 0.0
      %1127 = vmatprep.subr.mxu0 0.0
      %1128 = vmatpush2.msra.mxu0 0.0
      %1129 = vmatprep.subr.mxu0 0.0
      %1130 = vmatpush2.msra.mxu0 0.0
      %1131 = vmatprep.subr.mxu0 0.0
      %1132 = vmatpush2.msra.mxu0 0.0
      %1133 = vmatprep.mubr.f32.mxu0 0.0
      %1134 = vmatmul.mubr.f32.gmra.mxu0 %v857
      %v1135 = vpop.f32.mrf.mxu0
      %v1136 = vadd.f32 %v1057, %v1135
      %v1137 = vpop.f32.mrf.mxu0
      %v1138 = vadd.f32 %v1061, %v1137
      %1139 = vdwg.mxu0
      %1140 = vmatprep.subr.mxu0 0.0
      %1141 = vmatpush1.msra.mxu0 %v843
      %1142 = vmatprep.subr.mxu0 0.0
      %1143 = vmatpush1.msra.mxu0 %v840
      %1144 = vmatprep.subr.mxu0 0.0
      %1145 = vmatpush1.msra.mxu0 %v837
      %1146 = vmatprep.subr.mxu0 0.0
      %1147 = vmatpush1.msra.mxu0 %v834
      %1148 = vmatprep.subr.mxu0 0.0
      %1149 = vmatpush1.msra.mxu0 %v831
      %1150 = vmatprep.subr.mxu0 0.0
      %1151 = vmatpush1.msra.mxu0 %v828
      %1152 = vmatprep.subr.mxu0 0.0
      %1153 = vmatpush1.msra.mxu0 %v825
      %1154 = vmatprep.subr.mxu0 0.0
      %1155 = vmatpush1.msra.mxu0 %v822
      %1156 = vmatprep.subr.mxu0 0.0
      %1157 = vmatpush1.msra.mxu0 %v819
      %1158 = vmatprep.subr.mxu0 0.0
      %1159 = vmatpush1.msra.mxu0 %v816
      %1160 = vmatprep.subr.mxu0 0.0
      %1161 = vmatpush1.msra.mxu0 %v813
      %1162 = vmatprep.subr.mxu0 0.0
      %1163 = vmatpush1.msra.mxu0 %v810
      %1164 = vmatprep.subr.mxu0 0.0
      %1165 = vmatpush1.msra.mxu0 %v807
      %1166 = vmatprep.subr.mxu0 0.0
      %1167 = vmatpush1.msra.mxu0 %v804
      %1168 = vmatprep.subr.mxu0 0.0
      %1169 = vmatpush1.msra.mxu0 %v801
      %1170 = vmatprep.subr.mxu0 0.0
      %1171 = vmatpush1.msra.mxu0 %v798
      %1172 = vmatprep.subr.mxu0 0.0
      %1173 = vmatpush2.msra.mxu0 0.0
      %1174 = vmatprep.subr.mxu0 0.0
      %1175 = vmatpush2.msra.mxu0 0.0
      %1176 = vmatprep.subr.mxu0 0.0
      %1177 = vmatpush2.msra.mxu0 0.0
      %1178 = vmatprep.subr.mxu0 0.0
      %1179 = vmatpush2.msra.mxu0 0.0
      %1180 = vmatprep.subr.mxu0 0.0
      %1181 = vmatpush2.msra.mxu0 0.0
      %1182 = vmatprep.subr.mxu0 0.0
      %1183 = vmatpush2.msra.mxu0 0.0
      %1184 = vmatprep.subr.mxu0 0.0
      %1185 = vmatpush2.msra.mxu0 0.0
      %1186 = vmatprep.subr.mxu0 0.0
      %1187 = vmatpush2.msra.mxu0 0.0
      %1188 = vmatprep.subr.mxu0 0.0
      %1189 = vmatpush2.msra.mxu0 0.0
      %1190 = vmatprep.subr.mxu0 0.0
      %1191 = vmatpush2.msra.mxu0 0.0
      %1192 = vmatprep.subr.mxu0 0.0
      %1193 = vmatpush2.msra.mxu0 0.0
      %1194 = vmatprep.subr.mxu0 0.0
      %1195 = vmatpush2.msra.mxu0 0.0
      %1196 = vmatprep.subr.mxu0 0.0
      %1197 = vmatpush2.msra.mxu0 0.0
      %1198 = vmatprep.subr.mxu0 0.0
      %1199 = vmatpush2.msra.mxu0 0.0
      %1200 = vmatprep.subr.mxu0 0.0
      %1201 = vmatpush2.msra.mxu0 0.0
      %1202 = vmatprep.subr.mxu0 0.0
      %1203 = vmatpush2.msra.mxu0 0.0
      %1204 = vmatprep.mubr.f32.mxu0 0.0
      %1205 = vmatmul.mubr.f32.gmra.mxu0 %v857
      %v1206 = vpop.f32.mrf.mxu0
      %v1207 = vadd.f32 %v1065, %v1206
      %v1208 = vpop.f32.mrf.mxu0
      %1209 = vdwg.mxu0
      %v1210 = vadd.f32 %v1050, %v1136
      %v1211 = vxor.u32 %v1210, 2147483648
      %v1212 = vmul.f32 %v1211, 1.442695
      %v1213 = vpow.pop %v1212
      %v1214 = vadd.f32 %v1213, 1.0
      %v1215 = vrcp.pop %v1214
      %v1216 = vmul.f32 1.0, %v1215
      %v1217 = vadd.f32 %v1051, %v1138
      %v1218 = vxor.u32 %v1217, 2147483648
      %v1219 = vmul.f32 %v1218, 1.442695
      %v1220 = vpow.pop %v1219
      %v1221 = vadd.f32 %v1220, 1.0
      %v1222 = vrcp.pop %v1221
      %v1223 = vmul.f32 1.0, %v1222
      %v1224 = vmul.f32 %v1216, %v1207
      %v1225 = vadd.f32 %v1052, %v1224
      %v1226 = vtanh.pop %v1225
      %v1227 = vsub.f32 1.0, %v1223
      %v1228 = vmul.f32 %v1227, %v1226
      %v1229 = vmul.f32 %v1223, %v857
      %v1230 = vadd.f32 %v1228, %v1229
      %s1231 = smul.u32 %s859, 8
      %s1232 = scalar_lea.vmem %s130, %s1231
      %1233 = vst [vmem:[%s1232] sm:$0xff] %v1230
      %s1234 = sadd.s32 %s858, 1
      %s1235 = ssub.s32 6, %s858
      %s1236 = smul.u32 %s1234, 3
      %s1237 = smul.addr %s1236, 8
      %s1238 = scalar_lea.vmem [#allocation2], %s1237
      %v1239 = vld [vmem:[%s1238] sm:$0xff]
      %v1240 = vld [vmem:[%s1238 + $0x8] sm:$0xff]
      %v1241 = vld [vmem:[%s1238 + $0x10] sm:$0xff]
      %1242 = vmatprep.subr.mxu0 %v793
      %1243 = vmatpush1.msra.mxu0 %v792
      %1244 = vmatprep.subr.mxu0 %v790
      %1245 = vmatpush1.msra.mxu0 %v789
      %1246 = vmatprep.subr.mxu0 %v787
      %1247 = vmatpush1.msra.mxu0 %v786
      %1248 = vmatprep.subr.mxu0 %v784
      %1249 = vmatpush1.msra.mxu0 %v783
      %1250 = vmatprep.subr.mxu0 %v781
      %1251 = vmatpush1.msra.mxu0 %v780
      %1252 = vmatprep.subr.mxu0 %v778
      %1253 = vmatpush1.msra.mxu0 %v777
      %1254 = vmatprep.subr.mxu0 %v775
      %1255 = vmatpush1.msra.mxu0 %v774
      %1256 = vmatprep.subr.mxu0 %v772
      %1257 = vmatpush1.msra.mxu0 %v771
      %1258 = vmatprep.subr.mxu0 %v769
      %1259 = vmatpush1.msra.mxu0 %v768
      %1260 = vmatprep.subr.mxu0 %v766
      %1261 = vmatpush1.msra.mxu0 %v765
      %1262 = vmatprep.subr.mxu0 %v763
      %1263 = vmatpush1.msra.mxu0 %v762
      %1264 = vmatprep.subr.mxu0 %v760
      %1265 = vmatpush1.msra.mxu0 %v759
      %1266 = vmatprep.subr.mxu0 %v757
      %1267 = vmatpush1.msra.mxu0 %v756
      %1268 = vmatprep.subr.mxu0 %v754
      %1269 = vmatpush1.msra.mxu0 %v753
      %1270 = vmatprep.subr.mxu0 %v751
      %1271 = vmatpush1.msra.mxu0 %v750
      %1272 = vmatprep.subr.mxu0 %v748
      %1273 = vmatpush1.msra.mxu0 %v747
      %1274 = vmatprep.subr.mxu0 0.0
      %1275 = vmatpush2.msra.mxu0 0.0
      %1276 = vmatprep.subr.mxu0 0.0
      %1277 = vmatpush2.msra.mxu0 0.0
      %1278 = vmatprep.subr.mxu0 0.0
      %1279 = vmatpush2.msra.mxu0 0.0
      %1280 = vmatprep.subr.mxu0 0.0
      %1281 = vmatpush2.msra.mxu0 0.0
      %1282 = vmatprep.subr.mxu0 0.0
      %1283 = vmatpush2.msra.mxu0 0.0
      %1284 = vmatprep.subr.mxu0 0.0
      %1285 = vmatpush2.msra.mxu0 0.0
      %1286 = vmatprep.subr.mxu0 0.0
      %1287 = vmatpush2.msra.mxu0 0.0
      %1288 = vmatprep.subr.mxu0 0.0
      %1289 = vmatpush2.msra.mxu0 0.0
      %1290 = vmatprep.subr.mxu0 0.0
      %1291 = vmatpush2.msra.mxu0 0.0
      %1292 = vmatprep.subr.mxu0 0.0
      %1293 = vmatpush2.msra.mxu0 0.0
      %1294 = vmatprep.subr.mxu0 0.0
      %1295 = vmatpush2.msra.mxu0 0.0
      %1296 = vmatprep.subr.mxu0 0.0
      %1297 = vmatpush2.msra.mxu0 0.0
      %1298 = vmatprep.subr.mxu0 0.0
      %1299 = vmatpush2.msra.mxu0 0.0
      %1300 = vmatprep.subr.mxu0 0.0
      %1301 = vmatpush2.msra.mxu0 0.0
      %1302 = vmatprep.subr.mxu0 0.0
      %1303 = vmatpush2.msra.mxu0 0.0
      %1304 = vmatprep.subr.mxu0 0.0
      %1305 = vmatpush2.msra.mxu0 0.0
      %1306 = vmatprep.mubr.f32.mxu0 0.0
      %1307 = vmatmul.mubr.f32.gmra.mxu0 %v1043
      %v1308 = vpop.f32.mrf.mxu0
      %v1309 = vadd.f32 %v870, %v1308
      %v1310 = vpop.f32.mrf.mxu0
      %v1311 = vadd.f32 %v874, %v1310
      %1312 = vdwg.mxu0
      %1313 = vmatprep.subr.mxu0 0.0
      %1314 = vmatpush1.msra.mxu0 %v794
      %1315 = vmatprep.subr.mxu0 0.0
      %1316 = vmatpush1.msra.mxu0 %v791
      %1317 = vmatprep.subr.mxu0 0.0
      %1318 = vmatpush1.msra.mxu0 %v788
      %1319 = vmatprep.subr.mxu0 0.0
      %1320 = vmatpush1.msra.mxu0 %v785
      %1321 = vmatprep.subr.mxu0 0.0
      %1322 = vmatpush1.msra.mxu0 %v782
      %1323 = vmatprep.subr.mxu0 0.0
      %1324 = vmatpush1.msra.mxu0 %v779
      %1325 = vmatprep.subr.mxu0 0.0
      %1326 = vmatpush1.msra.mxu0 %v776
      %1327 = vmatprep.subr.mxu0 0.0
      %1328 = vmatpush1.msra.mxu0 %v773
      %1329 = vmatprep.subr.mxu0 0.0
      %1330 = vmatpush1.msra.mxu0 %v770
      %1331 = vmatprep.subr.mxu0 0.0
      %1332 = vmatpush1.msra.mxu0 %v767
      %1333 = vmatprep.subr.mxu0 0.0
      %1334 = vmatpush1.msra.mxu0 %v764
      %1335 = vmatprep.subr.mxu0 0.0
      %1336 = vmatpush1.msra.mxu0 %v761
      %1337 = vmatprep.subr.mxu0 0.0
      %1338 = vmatpush1.msra.mxu0 %v758
      %1339 = vmatprep.subr.mxu0 0.0
      %1340 = vmatpush1.msra.mxu0 %v755
      %1341 = vmatprep.subr.mxu0 0.0
      %1342 = vmatpush1.msra.mxu0 %v752
      %1343 = vmatprep.subr.mxu0 0.0
      %1344 = vmatpush1.msra.mxu0 %v749
      %1345 = vmatprep.subr.mxu0 0.0
      %1346 = vmatpush2.msra.mxu0 0.0
      %1347 = vmatprep.subr.mxu0 0.0
      %1348 = vmatpush2.msra.mxu0 0.0
      %1349 = vmatprep.subr.mxu0 0.0
      %1350 = vmatpush2.msra.mxu0 0.0
      %1351 = vmatprep.subr.mxu0 0.0
      %1352 = vmatpush2.msra.mxu0 0.0
      %1353 = vmatprep.subr.mxu0 0.0
      %1354 = vmatpush2.msra.mxu0 0.0
      %1355 = vmatprep.subr.mxu0 0.0
      %1356 = vmatpush2.msra.mxu0 0.0
      %1357 = vmatprep.subr.mxu0 0.0
      %1358 = vmatpush2.msra.mxu0 0.0
      %1359 = vmatprep.subr.mxu0 0.0
      %1360 = vmatpush2.msra.mxu0 0.0
      %1361 = vmatprep.subr.mxu0 0.0
      %1362 = vmatpush2.msra.mxu0 0.0
      %1363 = vmatprep.subr.mxu0 0.0
      %1364 = vmatpush2.msra.mxu0 0.0
      %1365 = vmatprep.subr.mxu0 0.0
      %1366 = vmatpush2.msra.mxu0 0.0
      %1367 = vmatprep.subr.mxu0 0.0
      %1368 = vmatpush2.msra.mxu0 0.0
      %1369 = vmatprep.subr.mxu0 0.0
      %1370 = vmatpush2.msra.mxu0 0.0
      %1371 = vmatprep.subr.mxu0 0.0
      %1372 = vmatpush2.msra.mxu0 0.0
      %1373 = vmatprep.subr.mxu0 0.0
      %1374 = vmatpush2.msra.mxu0 0.0
      %1375 = vmatprep.subr.mxu0 0.0
      %1376 = vmatpush2.msra.mxu0 0.0
      %1377 = vmatprep.mubr.f32.mxu0 0.0
      %1378 = vmatmul.mubr.f32.gmra.mxu0 %v1043
      %v1379 = vpop.f32.mrf.mxu0
      %v1380 = vadd.f32 %v878, %v1379
      %v1381 = vpop.f32.mrf.mxu0
      %1382 = vdwg.mxu0
      %v1383 = vadd.f32 %v1239, %v1309
      %v1384 = vxor.u32 %v1383, 2147483648
      %v1385 = vmul.f32 %v1384, 1.442695
      %v1386 = vpow.pop %v1385
      %v1387 = vadd.f32 %v1386, 1.0
      %v1388 = vrcp.pop %v1387
      %v1389 = vmul.f32 1.0, %v1388
      %v1390 = vadd.f32 %v1240, %v1311
      %v1391 = vxor.u32 %v1390, 2147483648
      %v1392 = vmul.f32 %v1391, 1.442695
      %v1393 = vpow.pop %v1392
      %v1394 = vadd.f32 %v1393, 1.0
      %v1395 = vrcp.pop %v1394
      %v1396 = vmul.f32 1.0, %v1395
      %v1397 = vmul.f32 %v1389, %v1380
      %v1398 = vadd.f32 %v1241, %v1397
      %v1399 = vtanh.pop %v1398
      %v1400 = vsub.f32 1.0, %v1396
      %v1401 = vmul.f32 %v1400, %v1399
      %v1402 = vmul.f32 %v1396, %v1043
      %v1403 = vadd.f32 %v1401, %v1402
      %s1404 = smul.u32 %s1234, 8
      %s1405 = scalar_lea.vmem %s7, %s1404
      %1406 = vst [vmem:[%s1405] sm:$0xff] %v1403
      %s1407 = smul.u32 %s1235, 3
      %s1408 = smul.addr %s1407, 8
      %s1409 = scalar_lea.vmem [#allocation3], %s1408
      %v1410 = vld [vmem:[%s1409] sm:$0xff]
      %v1411 = vld [vmem:[%s1409 + $0x8] sm:$0xff]
      %v1412 = vld [vmem:[%s1409 + $0x10] sm:$0xff]
      %1413 = vmatprep.subr.mxu0 %v842
      %1414 = vmatpush1.msra.mxu0 %v841
      %1415 = vmatprep.subr.mxu0 %v839
      %1416 = vmatpush1.msra.mxu0 %v838
      %1417 = vmatprep.subr.mxu0 %v836
      %1418 = vmatpush1.msra.mxu0 %v835
      %1419 = vmatprep.subr.mxu0 %v833
      %1420 = vmatpush1.msra.mxu0 %v832
      %1421 = vmatprep.subr.mxu0 %v830
      %1422 = vmatpush1.msra.mxu0 %v829
      %1423 = vmatprep.subr.mxu0 %v827
      %1424 = vmatpush1.msra.mxu0 %v826
      %1425 = vmatprep.subr.mxu0 %v824
      %1426 = vmatpush1.msra.mxu0 %v823
      %1427 = vmatprep.subr.mxu0 %v821
      %1428 = vmatpush1.msra.mxu0 %v820
      %1429 = vmatprep.subr.mxu0 %v818
      %1430 = vmatpush1.msra.mxu0 %v817
      %1431 = vmatprep.subr.mxu0 %v815
      %1432 = vmatpush1.msra.mxu0 %v814
      %1433 = vmatprep.subr.mxu0 %v812
      %1434 = vmatpush1.msra.mxu0 %v811
      %1435 = vmatprep.subr.mxu0 %v809
      %1436 = vmatpush1.msra.mxu0 %v808
      %1437 = vmatprep.subr.mxu0 %v806
      %1438 = vmatpush1.msra.mxu0 %v805
      %1439 = vmatprep.subr.mxu0 %v803
      %1440 = vmatpush1.msra.mxu0 %v802
      %1441 = vmatprep.subr.mxu0 %v800
      %1442 = vmatpush1.msra.mxu0 %v799
      %1443 = vmatprep.subr.mxu0 %v797
      %1444 = vmatpush1.msra.mxu0 %v796
      %1445 = vmatprep.subr.mxu0 0.0
      %1446 = vmatpush2.msra.mxu0 0.0
      %1447 = vmatprep.subr.mxu0 0.0
      %1448 = vmatpush2.msra.mxu0 0.0
      %1449 = vmatprep.subr.mxu0 0.0
      %1450 = vmatpush2.msra.mxu0 0.0
      %1451 = vmatprep.subr.mxu0 0.0
      %1452 = vmatpush2.msra.mxu0 0.0
      %1453 = vmatprep.subr.mxu0 0.0
      %1454 = vmatpush2.msra.mxu0 0.0
      %1455 = vmatprep.subr.mxu0 0.0
      %1456 = vmatpush2.msra.mxu0 0.0
      %1457 = vmatprep.subr.mxu0 0.0
      %1458 = vmatpush2.msra.mxu0 0.0
      %1459 = vmatprep.subr.mxu0 0.0
      %1460 = vmatpush2.msra.mxu0 0.0
      %1461 = vmatprep.subr.mxu0 0.0
      %1462 = vmatpush2.msra.mxu0 0.0
      %1463 = vmatprep.subr.mxu0 0.0
      %1464 = vmatpush2.msra.mxu0 0.0
      %1465 = vmatprep.subr.mxu0 0.0
      %1466 = vmatpush2.msra.mxu0 0.0
      %1467 = vmatprep.subr.mxu0 0.0
      %1468 = vmatpush2.msra.mxu0 0.0
      %1469 = vmatprep.subr.mxu0 0.0
      %1470 = vmatpush2.msra.mxu0 0.0
      %1471 = vmatprep.subr.mxu0 0.0
      %1472 = vmatpush2.msra.mxu0 0.0
      %1473 = vmatprep.subr.mxu0 0.0
      %1474 = vmatpush2.msra.mxu0 0.0
      %1475 = vmatprep.subr.mxu0 0.0
      %1476 = vmatpush2.msra.mxu0 0.0
      %1477 = vmatprep.mubr.f32.mxu0 0.0
      %1478 = vmatmul.mubr.f32.gmra.mxu0 %v1230
      %v1479 = vpop.f32.mrf.mxu0
      %v1480 = vadd.f32 %v1057, %v1479
      %v1481 = vpop.f32.mrf.mxu0
      %v1482 = vadd.f32 %v1061, %v1481
      %1483 = vdwg.mxu0
      %1484 = vmatprep.subr.mxu0 0.0
      %1485 = vmatpush1.msra.mxu0 %v843
      %1486 = vmatprep.subr.mxu0 0.0
      %1487 = vmatpush1.msra.mxu0 %v840
      %1488 = vmatprep.subr.mxu0 0.0
      %1489 = vmatpush1.msra.mxu0 %v837
      %1490 = vmatprep.subr.mxu0 0.0
      %1491 = vmatpush1.msra.mxu0 %v834
      %1492 = vmatprep.subr.mxu0 0.0
      %1493 = vmatpush1.msra.mxu0 %v831
      %1494 = vmatprep.subr.mxu0 0.0
      %1495 = vmatpush1.msra.mxu0 %v828
      %1496 = vmatprep.subr.mxu0 0.0
      %1497 = vmatpush1.msra.mxu0 %v825
      %1498 = vmatprep.subr.mxu0 0.0
      %1499 = vmatpush1.msra.mxu0 %v822
      %1500 = vmatprep.subr.mxu0 0.0
      %1501 = vmatpush1.msra.mxu0 %v819
      %1502 = vmatprep.subr.mxu0 0.0
      %1503 = vmatpush1.msra.mxu0 %v816
      %1504 = vmatprep.subr.mxu0 0.0
      %1505 = vmatpush1.msra.mxu0 %v813
      %1506 = vmatprep.subr.mxu0 0.0
      %1507 = vmatpush1.msra.mxu0 %v810
      %1508 = vmatprep.subr.mxu0 0.0
      %1509 = vmatpush1.msra.mxu0 %v807
      %1510 = vmatprep.subr.mxu0 0.0
      %1511 = vmatpush1.msra.mxu0 %v804
      %1512 = vmatprep.subr.mxu0 0.0
      %1513 = vmatpush1.msra.mxu0 %v801
      %1514 = vmatprep.subr.mxu0 0.0
      %1515 = vmatpush1.msra.mxu0 %v798
      %1516 = vmatprep.subr.mxu0 0.0
      %1517 = vmatpush2.msra.mxu0 0.0
      %1518 = vmatprep.subr.mxu0 0.0
      %1519 = vmatpush2.msra.mxu0 0.0
      %1520 = vmatprep.subr.mxu0 0.0
      %1521 = vmatpush2.msra.mxu0 0.0
      %1522 = vmatprep.subr.mxu0 0.0
      %1523 = vmatpush2.msra.mxu0 0.0
      %1524 = vmatprep.subr.mxu0 0.0
      %1525 = vmatpush2.msra.mxu0 0.0
      %1526 = vmatprep.subr.mxu0 0.0
      %1527 = vmatpush2.msra.mxu0 0.0
      %1528 = vmatprep.subr.mxu0 0.0
      %1529 = vmatpush2.msra.mxu0 0.0
      %1530 = vmatprep.subr.mxu0 0.0
      %1531 = vmatpush2.msra.mxu0 0.0
      %1532 = vmatprep.subr.mxu0 0.0
      %1533 = vmatpush2.msra.mxu0 0.0
      %1534 = vmatprep.subr.mxu0 0.0
      %1535 = vmatpush2.msra.mxu0 0.0
      %1536 = vmatprep.subr.mxu0 0.0
      %1537 = vmatpush2.msra.mxu0 0.0
      %1538 = vmatprep.subr.mxu0 0.0
      %1539 = vmatpush2.msra.mxu0 0.0
      %1540 = vmatprep.subr.mxu0 0.0
      %1541 = vmatpush2.msra.mxu0 0.0
      %1542 = vmatprep.subr.mxu0 0.0
      %1543 = vmatpush2.msra.mxu0 0.0
      %1544 = vmatprep.subr.mxu0 0.0
      %1545 = vmatpush2.msra.mxu0 0.0
      %1546 = vmatprep.subr.mxu0 0.0
      %1547 = vmatpush2.msra.mxu0 0.0
      %1548 = vmatprep.mubr.f32.mxu0 0.0
      %1549 = vmatmul.mubr.f32.gmra.mxu0 %v1230
      %v1550 = vpop.f32.mrf.mxu0
      %v1551 = vadd.f32 %v1065, %v1550
      %v1552 = vpop.f32.mrf.mxu0
      %1553 = vdwg.mxu0
      %v1554 = vadd.f32 %v1410, %v1480
      %v1555 = vxor.u32 %v1554, 2147483648
      %v1556 = vmul.f32 %v1555, 1.442695
      %v1557 = vpow.pop %v1556
      %v1558 = vadd.f32 %v1557, 1.0
      %v1559 = vrcp.pop %v1558
      %v1560 = vmul.f32 1.0, %v1559
      %v1561 = vadd.f32 %v1411, %v1482
      %v1562 = vxor.u32 %v1561, 2147483648
      %v1563 = vmul.f32 %v1562, 1.442695
      %v1564 = vpow.pop %v1563
      %v1565 = vadd.f32 %v1564, 1.0
      %v1566 = vrcp.pop %v1565
      %v1567 = vmul.f32 1.0, %v1566
      %v1568 = vmul.f32 %v1560, %v1551
      %v1569 = vadd.f32 %v1412, %v1568
      %v1570 = vtanh.pop %v1569
      %v1571 = vsub.f32 1.0, %v1567
      %v1572 = vmul.f32 %v1571, %v1570
      %v1573 = vmul.f32 %v1567, %v1230
      %v1574 = vadd.f32 %v1572, %v1573
      %s1575 = smul.u32 %s1235, 8
      %s1576 = scalar_lea.vmem %s130, %s1575
      %1577 = vst [vmem:[%s1576] sm:$0xff] %v1574
      %s1578 = sadd.s32 %s858, 2
      %s1579 = ssub.s32 5, %s858
      %s1580 = smul.u32 %s1578, 3
      %s1581 = smul.addr %s1580, 8
      %s1582 = scalar_lea.vmem [#allocation2], %s1581
      %v1583 = vld [vmem:[%s1582] sm:$0xff]
      %v1584 = vld [vmem:[%s1582 + $0x8] sm:$0xff]
      %v1585 = vld [vmem:[%s1582 + $0x10] sm:$0xff]
      %1586 = vmatprep.subr.mxu0 %v793
      %1587 = vmatpush1.msra.mxu0 %v792
      %1588 = vmatprep.subr.mxu0 %v790
      %1589 = vmatpush1.msra.mxu0 %v789
      %1590 = vmatprep.subr.mxu0 %v787
      %1591 = vmatpush1.msra.mxu0 %v786
      %1592 = vmatprep.subr.mxu0 %v784
      %1593 = vmatpush1.msra.mxu0 %v783
      %1594 = vmatprep.subr.mxu0 %v781
      %1595 = vmatpush1.msra.mxu0 %v780
      %1596 = vmatprep.subr.mxu0 %v778
      %1597 = vmatpush1.msra.mxu0 %v777
      %1598 = vmatprep.subr.mxu0 %v775
      %1599 = vmatpush1.msra.mxu0 %v774
      %1600 = vmatprep.subr.mxu0 %v772
      %1601 = vmatpush1.msra.mxu0 %v771
      %1602 = vmatprep.subr.mxu0 %v769
      %1603 = vmatpush1.msra.mxu0 %v768
      %1604 = vmatprep.subr.mxu0 %v766
      %1605 = vmatpush1.msra.mxu0 %v765
      %1606 = vmatprep.subr.mxu0 %v763
      %1607 = vmatpush1.msra.mxu0 %v762
      %1608 = vmatprep.subr.mxu0 %v760
      %1609 = vmatpush1.msra.mxu0 %v759
      %1610 = vmatprep.subr.mxu0 %v757
      %1611 = vmatpush1.msra.mxu0 %v756
      %1612 = vmatprep.subr.mxu0 %v754
      %1613 = vmatpush1.msra.mxu0 %v753
      %1614 = vmatprep.subr.mxu0 %v751
      %1615 = vmatpush1.msra.mxu0 %v750
      %1616 = vmatprep.subr.mxu0 %v748
      %1617 = vmatpush1.msra.mxu0 %v747
      %1618 = vmatprep.subr.mxu0 0.0
      %1619 = vmatpush2.msra.mxu0 0.0
      %1620 = vmatprep.subr.mxu0 0.0
      %1621 = vmatpush2.msra.mxu0 0.0
      %1622 = vmatprep.subr.mxu0 0.0
      %1623 = vmatpush2.msra.mxu0 0.0
      %1624 = vmatprep.subr.mxu0 0.0
      %1625 = vmatpush2.msra.mxu0 0.0
      %1626 = vmatprep.subr.mxu0 0.0
      %1627 = vmatpush2.msra.mxu0 0.0
      %1628 = vmatprep.subr.mxu0 0.0
      %1629 = vmatpush2.msra.mxu0 0.0
      %1630 = vmatprep.subr.mxu0 0.0
      %1631 = vmatpush2.msra.mxu0 0.0
      %1632 = vmatprep.subr.mxu0 0.0
      %1633 = vmatpush2.msra.mxu0 0.0
      %1634 = vmatprep.subr.mxu0 0.0
      %1635 = vmatpush2.msra.mxu0 0.0
      %1636 = vmatprep.subr.mxu0 0.0
      %1637 = vmatpush2.msra.mxu0 0.0
      %1638 = vmatprep.subr.mxu0 0.0
      %1639 = vmatpush2.msra.mxu0 0.0
      %1640 = vmatprep.subr.mxu0 0.0
      %1641 = vmatpush2.msra.mxu0 0.0
      %1642 = vmatprep.subr.mxu0 0.0
      %1643 = vmatpush2.msra.mxu0 0.0
      %1644 = vmatprep.subr.mxu0 0.0
      %1645 = vmatpush2.msra.mxu0 0.0
      %1646 = vmatprep.subr.mxu0 0.0
      %1647 = vmatpush2.msra.mxu0 0.0
      %1648 = vmatprep.subr.mxu0 0.0
      %1649 = vmatpush2.msra.mxu0 0.0
      %1650 = vmatprep.mubr.f32.mxu0 0.0
      %1651 = vmatmul.mubr.f32.gmra.mxu0 %v1403
      %v1652 = vpop.f32.mrf.mxu0
      %v1653 = vadd.f32 %v870, %v1652
      %v1654 = vpop.f32.mrf.mxu0
      %v1655 = vadd.f32 %v874, %v1654
      %1656 = vdwg.mxu0
      %1657 = vmatprep.subr.mxu0 0.0
      %1658 = vmatpush1.msra.mxu0 %v794
      %1659 = vmatprep.subr.mxu0 0.0
      %1660 = vmatpush1.msra.mxu0 %v791
      %1661 = vmatprep.subr.mxu0 0.0
      %1662 = vmatpush1.msra.mxu0 %v788
      %1663 = vmatprep.subr.mxu0 0.0
      %1664 = vmatpush1.msra.mxu0 %v785
      %1665 = vmatprep.subr.mxu0 0.0
      %1666 = vmatpush1.msra.mxu0 %v782
      %1667 = vmatprep.subr.mxu0 0.0
      %1668 = vmatpush1.msra.mxu0 %v779
      %1669 = vmatprep.subr.mxu0 0.0
      %1670 = vmatpush1.msra.mxu0 %v776
      %1671 = vmatprep.subr.mxu0 0.0
      %1672 = vmatpush1.msra.mxu0 %v773
      %1673 = vmatprep.subr.mxu0 0.0
      %1674 = vmatpush1.msra.mxu0 %v770
      %1675 = vmatprep.subr.mxu0 0.0
      %1676 = vmatpush1.msra.mxu0 %v767
      %1677 = vmatprep.subr.mxu0 0.0
      %1678 = vmatpush1.msra.mxu0 %v764
      %1679 = vmatprep.subr.mxu0 0.0
      %1680 = vmatpush1.msra.mxu0 %v761
      %1681 = vmatprep.subr.mxu0 0.0
      %1682 = vmatpush1.msra.mxu0 %v758
      %1683 = vmatprep.subr.mxu0 0.0
      %1684 = vmatpush1.msra.mxu0 %v755
      %1685 = vmatprep.subr.mxu0 0.0
      %1686 = vmatpush1.msra.mxu0 %v752
      %1687 = vmatprep.subr.mxu0 0.0
      %1688 = vmatpush1.msra.mxu0 %v749
      %1689 = vmatprep.subr.mxu0 0.0
      %1690 = vmatpush2.msra.mxu0 0.0
      %1691 = vmatprep.subr.mxu0 0.0
      %1692 = vmatpush2.msra.mxu0 0.0
      %1693 = vmatprep.subr.mxu0 0.0
      %1694 = vmatpush2.msra.mxu0 0.0
      %1695 = vmatprep.subr.mxu0 0.0
      %1696 = vmatpush2.msra.mxu0 0.0
      %1697 = vmatprep.subr.mxu0 0.0
      %1698 = vmatpush2.msra.mxu0 0.0
      %1699 = vmatprep.subr.mxu0 0.0
      %1700 = vmatpush2.msra.mxu0 0.0
      %1701 = vmatprep.subr.mxu0 0.0
      %1702 = vmatpush2.msra.mxu0 0.0
      %1703 = vmatprep.subr.mxu0 0.0
      %1704 = vmatpush2.msra.mxu0 0.0
      %1705 = vmatprep.subr.mxu0 0.0
      %1706 = vmatpush2.msra.mxu0 0.0
      %1707 = vmatprep.subr.mxu0 0.0
      %1708 = vmatpush2.msra.mxu0 0.0
      %1709 = vmatprep.subr.mxu0 0.0
      %1710 = vmatpush2.msra.mxu0 0.0
      %1711 = vmatprep.subr.mxu0 0.0
      %1712 = vmatpush2.msra.mxu0 0.0
      %1713 = vmatprep.subr.mxu0 0.0
      %1714 = vmatpush2.msra.mxu0 0.0
      %1715 = vmatprep.subr.mxu0 0.0
      %1716 = vmatpush2.msra.mxu0 0.0
      %1717 = vmatprep.subr.mxu0 0.0
      %1718 = vmatpush2.msra.mxu0 0.0
      %1719 = vmatprep.subr.mxu0 0.0
      %1720 = vmatpush2.msra.mxu0 0.0
      %1721 = vmatprep.mubr.f32.mxu0 0.0
      %1722 = vmatmul.mubr.f32.gmra.mxu0 %v1403
      %v1723 = vpop.f32.mrf.mxu0
      %v1724 = vadd.f32 %v878, %v1723
      %v1725 = vpop.f32.mrf.mxu0
      %1726 = vdwg.mxu0
      %v1727 = vadd.f32 %v1583, %v1653
      %v1728 = vxor.u32 %v1727, 2147483648
      %v1729 = vmul.f32 %v1728, 1.442695
      %v1730 = vpow.pop %v1729
      %v1731 = vadd.f32 %v1730, 1.0
      %v1732 = vrcp.pop %v1731
      %v1733 = vmul.f32 1.0, %v1732
      %v1734 = vadd.f32 %v1584, %v1655
      %v1735 = vxor.u32 %v1734, 2147483648
      %v1736 = vmul.f32 %v1735, 1.442695
      %v1737 = vpow.pop %v1736
      %v1738 = vadd.f32 %v1737, 1.0
      %v1739 = vrcp.pop %v1738
      %v1740 = vmul.f32 1.0, %v1739
      %v1741 = vmul.f32 %v1733, %v1724
      %v1742 = vadd.f32 %v1585, %v1741
      %v1743 = vtanh.pop %v1742
      %v1744 = vsub.f32 1.0, %v1740
      %v1745 = vmul.f32 %v1744, %v1743
      %v1746 = vmul.f32 %v1740, %v1403
      %v1747 = vadd.f32 %v1745, %v1746
      %s1748 = smul.u32 %s1578, 8
      %s1749 = scalar_lea.vmem %s7, %s1748
      %1750 = vst [vmem:[%s1749] sm:$0xff] %v1747
      %s1751 = smul.u32 %s1579, 3
      %s1752 = smul.addr %s1751, 8
      %s1753 = scalar_lea.vmem [#allocation3], %s1752
      %v1754 = vld [vmem:[%s1753] sm:$0xff]
      %v1755 = vld [vmem:[%s1753 + $0x8] sm:$0xff]
      %v1756 = vld [vmem:[%s1753 + $0x10] sm:$0xff]
      %1757 = vmatprep.subr.mxu0 %v842
      %1758 = vmatpush1.msra.mxu0 %v841
      %1759 = vmatprep.subr.mxu0 %v839
      %1760 = vmatpush1.msra.mxu0 %v838
      %1761 = vmatprep.subr.mxu0 %v836
      %1762 = vmatpush1.msra.mxu0 %v835
      %1763 = vmatprep.subr.mxu0 %v833
      %1764 = vmatpush1.msra.mxu0 %v832
      %1765 = vmatprep.subr.mxu0 %v830
      %1766 = vmatpush1.msra.mxu0 %v829
      %1767 = vmatprep.subr.mxu0 %v827
      %1768 = vmatpush1.msra.mxu0 %v826
      %1769 = vmatprep.subr.mxu0 %v824
      %1770 = vmatpush1.msra.mxu0 %v823
      %1771 = vmatprep.subr.mxu0 %v821
      %1772 = vmatpush1.msra.mxu0 %v820
      %1773 = vmatprep.subr.mxu0 %v818
      %1774 = vmatpush1.msra.mxu0 %v817
      %1775 = vmatprep.subr.mxu0 %v815
      %1776 = vmatpush1.msra.mxu0 %v814
      %1777 = vmatprep.subr.mxu0 %v812
      %1778 = vmatpush1.msra.mxu0 %v811
      %1779 = vmatprep.subr.mxu0 %v809
      %1780 = vmatpush1.msra.mxu0 %v808
      %1781 = vmatprep.subr.mxu0 %v806
      %1782 = vmatpush1.msra.mxu0 %v805
      %1783 = vmatprep.subr.mxu0 %v803
      %1784 = vmatpush1.msra.mxu0 %v802
      %1785 = vmatprep.subr.mxu0 %v800
      %1786 = vmatpush1.msra.mxu0 %v799
      %1787 = vmatprep.subr.mxu0 %v797
      %1788 = vmatpush1.msra.mxu0 %v796
      %1789 = vmatprep.subr.mxu0 0.0
      %1790 = vmatpush2.msra.mxu0 0.0
      %1791 = vmatprep.subr.mxu0 0.0
      %1792 = vmatpush2.msra.mxu0 0.0
      %1793 = vmatprep.subr.mxu0 0.0
      %1794 = vmatpush2.msra.mxu0 0.0
      %1795 = vmatprep.subr.mxu0 0.0
      %1796 = vmatpush2.msra.mxu0 0.0
      %1797 = vmatprep.subr.mxu0 0.0
      %1798 = vmatpush2.msra.mxu0 0.0
      %1799 = vmatprep.subr.mxu0 0.0
      %1800 = vmatpush2.msra.mxu0 0.0
      %1801 = vmatprep.subr.mxu0 0.0
      %1802 = vmatpush2.msra.mxu0 0.0
      %1803 = vmatprep.subr.mxu0 0.0
      %1804 = vmatpush2.msra.mxu0 0.0
      %1805 = vmatprep.subr.mxu0 0.0
      %1806 = vmatpush2.msra.mxu0 0.0
      %1807 = vmatprep.subr.mxu0 0.0
      %1808 = vmatpush2.msra.mxu0 0.0
      %1809 = vmatprep.subr.mxu0 0.0
      %1810 = vmatpush2.msra.mxu0 0.0
      %1811 = vmatprep.subr.mxu0 0.0
      %1812 = vmatpush2.msra.mxu0 0.0
      %1813 = vmatprep.subr.mxu0 0.0
      %1814 = vmatpush2.msra.mxu0 0.0
      %1815 = vmatprep.subr.mxu0 0.0
      %1816 = vmatpush2.msra.mxu0 0.0
      %1817 = vmatprep.subr.mxu0 0.0
      %1818 = vmatpush2.msra.mxu0 0.0
      %1819 = vmatprep.subr.mxu0 0.0
      %1820 = vmatpush2.msra.mxu0 0.0
      %1821 = vmatprep.mubr.f32.mxu0 0.0
      %1822 = vmatmul.mubr.f32.gmra.mxu0 %v1574
      %v1823 = vpop.f32.mrf.mxu0
      %v1824 = vadd.f32 %v1057, %v1823
      %v1825 = vpop.f32.mrf.mxu0
      %v1826 = vadd.f32 %v1061, %v1825
      %1827 = vdwg.mxu0
      %1828 = vmatprep.subr.mxu0 0.0
      %1829 = vmatpush1.msra.mxu0 %v843
      %1830 = vmatprep.subr.mxu0 0.0
      %1831 = vmatpush1.msra.mxu0 %v840
      %1832 = vmatprep.subr.mxu0 0.0
      %1833 = vmatpush1.msra.mxu0 %v837
      %1834 = vmatprep.subr.mxu0 0.0
      %1835 = vmatpush1.msra.mxu0 %v834
      %1836 = vmatprep.subr.mxu0 0.0
      %1837 = vmatpush1.msra.mxu0 %v831
      %1838 = vmatprep.subr.mxu0 0.0
      %1839 = vmatpush1.msra.mxu0 %v828
      %1840 = vmatprep.subr.mxu0 0.0
      %1841 = vmatpush1.msra.mxu0 %v825
      %1842 = vmatprep.subr.mxu0 0.0
      %1843 = vmatpush1.msra.mxu0 %v822
      %1844 = vmatprep.subr.mxu0 0.0
      %1845 = vmatpush1.msra.mxu0 %v819
      %1846 = vmatprep.subr.mxu0 0.0
      %1847 = vmatpush1.msra.mxu0 %v816
      %1848 = vmatprep.subr.mxu0 0.0
      %1849 = vmatpush1.msra.mxu0 %v813
      %1850 = vmatprep.subr.mxu0 0.0
      %1851 = vmatpush1.msra.mxu0 %v810
      %1852 = vmatprep.subr.mxu0 0.0
      %1853 = vmatpush1.msra.mxu0 %v807
      %1854 = vmatprep.subr.mxu0 0.0
      %1855 = vmatpush1.msra.mxu0 %v804
      %1856 = vmatprep.subr.mxu0 0.0
      %1857 = vmatpush1.msra.mxu0 %v801
      %1858 = vmatprep.subr.mxu0 0.0
      %1859 = vmatpush1.msra.mxu0 %v798
      %1860 = vmatprep.subr.mxu0 0.0
      %1861 = vmatpush2.msra.mxu0 0.0
      %1862 = vmatprep.subr.mxu0 0.0
      %1863 = vmatpush2.msra.mxu0 0.0
      %1864 = vmatprep.subr.mxu0 0.0
      %1865 = vmatpush2.msra.mxu0 0.0
      %1866 = vmatprep.subr.mxu0 0.0
      %1867 = vmatpush2.msra.mxu0 0.0
      %1868 = vmatprep.subr.mxu0 0.0
      %1869 = vmatpush2.msra.mxu0 0.0
      %1870 = vmatprep.subr.mxu0 0.0
      %1871 = vmatpush2.msra.mxu0 0.0
      %1872 = vmatprep.subr.mxu0 0.0
      %1873 = vmatpush2.msra.mxu0 0.0
      %1874 = vmatprep.subr.mxu0 0.0
      %1875 = vmatpush2.msra.mxu0 0.0
      %1876 = vmatprep.subr.mxu0 0.0
      %1877 = vmatpush2.msra.mxu0 0.0
      %1878 = vmatprep.subr.mxu0 0.0
      %1879 = vmatpush2.msra.mxu0 0.0
      %1880 = vmatprep.subr.mxu0 0.0
      %1881 = vmatpush2.msra.mxu0 0.0
      %1882 = vmatprep.subr.mxu0 0.0
      %1883 = vmatpush2.msra.mxu0 0.0
      %1884 = vmatprep.subr.mxu0 0.0
      %1885 = vmatpush2.msra.mxu0 0.0
      %1886 = vmatprep.subr.mxu0 0.0
      %1887 = vmatpush2.msra.mxu0 0.0
      %1888 = vmatprep.subr.mxu0 0.0
      %1889 = vmatpush2.msra.mxu0 0.0
      %1890 = vmatprep.subr.mxu0 0.0
      %1891 = vmatpush2.msra.mxu0 0.0
      %1892 = vmatprep.mubr.f32.mxu0 0.0
      %1893 = vmatmul.mubr.f32.gmra.mxu0 %v1574
      %v1894 = vpop.f32.mrf.mxu0
      %v1895 = vadd.f32 %v1065, %v1894
      %v1896 = vpop.f32.mrf.mxu0
      %1897 = vdwg.mxu0
      %v1898 = vadd.f32 %v1754, %v1824
      %v1899 = vxor.u32 %v1898, 2147483648
      %v1900 = vmul.f32 %v1899, 1.442695
      %v1901 = vpow.pop %v1900
      %v1902 = vadd.f32 %v1901, 1.0
      %v1903 = vrcp.pop %v1902
      %v1904 = vmul.f32 1.0, %v1903
      %v1905 = vadd.f32 %v1755, %v1826
      %v1906 = vxor.u32 %v1905, 2147483648
      %v1907 = vmul.f32 %v1906, 1.442695
      %v1908 = vpow.pop %v1907
      %v1909 = vadd.f32 %v1908, 1.0
      %v1910 = vrcp.pop %v1909
      %v1911 = vmul.f32 1.0, %v1910
      %v1912 = vmul.f32 %v1904, %v1895
      %v1913 = vadd.f32 %v1756, %v1912
      %v1914 = vtanh.pop %v1913
      %v1915 = vsub.f32 1.0, %v1911
      %v1916 = vmul.f32 %v1915, %v1914
      %v1917 = vmul.f32 %v1911, %v1574
      %v1918 = vadd.f32 %v1916, %v1917
      %s1919 = smul.u32 %s1579, 8
      %s1920 = scalar_lea.vmem %s130, %s1919
      %1921 = vst [vmem:[%s1920] sm:$0xff] %v1918
      %s1922 = sadd.s32 %s858, 3
      %s1923 = ssub.s32 4, %s858
      %s1924 = smul.u32 %s1922, 3
      %s1925 = smul.addr %s1924, 8
      %s1926 = scalar_lea.vmem [#allocation2], %s1925
      %v1927 = vld [vmem:[%s1926] sm:$0xff]
      %v1928 = vld [vmem:[%s1926 + $0x8] sm:$0xff]
      %v1929 = vld [vmem:[%s1926 + $0x10] sm:$0xff]
      %1930 = vmatprep.subr.mxu0 %v793
      %1931 = vmatpush1.msra.mxu0 %v792
      %1932 = vmatprep.subr.mxu0 %v790
      %1933 = vmatpush1.msra.mxu0 %v789
      %1934 = vmatprep.subr.mxu0 %v787
      %1935 = vmatpush1.msra.mxu0 %v786
      %1936 = vmatprep.subr.mxu0 %v784
      %1937 = vmatpush1.msra.mxu0 %v783
      %1938 = vmatprep.subr.mxu0 %v781
      %1939 = vmatpush1.msra.mxu0 %v780
      %1940 = vmatprep.subr.mxu0 %v778
      %1941 = vmatpush1.msra.mxu0 %v777
      %1942 = vmatprep.subr.mxu0 %v775
      %1943 = vmatpush1.msra.mxu0 %v774
      %1944 = vmatprep.subr.mxu0 %v772
      %1945 = vmatpush1.msra.mxu0 %v771
      %1946 = vmatprep.subr.mxu0 %v769
      %1947 = vmatpush1.msra.mxu0 %v768
      %1948 = vmatprep.subr.mxu0 %v766
      %1949 = vmatpush1.msra.mxu0 %v765
      %1950 = vmatprep.subr.mxu0 %v763
      %1951 = vmatpush1.msra.mxu0 %v762
      %1952 = vmatprep.subr.mxu0 %v760
      %1953 = vmatpush1.msra.mxu0 %v759
      %1954 = vmatprep.subr.mxu0 %v757
      %1955 = vmatpush1.msra.mxu0 %v756
      %1956 = vmatprep.subr.mxu0 %v754
      %1957 = vmatpush1.msra.mxu0 %v753
      %1958 = vmatprep.subr.mxu0 %v751
      %1959 = vmatpush1.msra.mxu0 %v750
      %1960 = vmatprep.subr.mxu0 %v748
      %1961 = vmatpush1.msra.mxu0 %v747
      %1962 = vmatprep.subr.mxu0 0.0
      %1963 = vmatpush2.msra.mxu0 0.0
      %1964 = vmatprep.subr.mxu0 0.0
      %1965 = vmatpush2.msra.mxu0 0.0
      %1966 = vmatprep.subr.mxu0 0.0
      %1967 = vmatpush2.msra.mxu0 0.0
      %1968 = vmatprep.subr.mxu0 0.0
      %1969 = vmatpush2.msra.mxu0 0.0
      %1970 = vmatprep.subr.mxu0 0.0
      %1971 = vmatpush2.msra.mxu0 0.0
      %1972 = vmatprep.subr.mxu0 0.0
      %1973 = vmatpush2.msra.mxu0 0.0
      %1974 = vmatprep.subr.mxu0 0.0
      %1975 = vmatpush2.msra.mxu0 0.0
      %1976 = vmatprep.subr.mxu0 0.0
      %1977 = vmatpush2.msra.mxu0 0.0
      %1978 = vmatprep.subr.mxu0 0.0
      %1979 = vmatpush2.msra.mxu0 0.0
      %1980 = vmatprep.subr.mxu0 0.0
      %1981 = vmatpush2.msra.mxu0 0.0
      %1982 = vmatprep.subr.mxu0 0.0
      %1983 = vmatpush2.msra.mxu0 0.0
      %1984 = vmatprep.subr.mxu0 0.0
      %1985 = vmatpush2.msra.mxu0 0.0
      %1986 = vmatprep.subr.mxu0 0.0
      %1987 = vmatpush2.msra.mxu0 0.0
      %1988 = vmatprep.subr.mxu0 0.0
      %1989 = vmatpush2.msra.mxu0 0.0
      %1990 = vmatprep.subr.mxu0 0.0
      %1991 = vmatpush2.msra.mxu0 0.0
      %1992 = vmatprep.subr.mxu0 0.0
      %1993 = vmatpush2.msra.mxu0 0.0
      %1994 = vmatprep.mubr.f32.mxu0 0.0
      %1995 = vmatmul.mubr.f32.gmra.mxu0 %v1747
      %v1996 = vpop.f32.mrf.mxu0
      %v1997 = vadd.f32 %v870, %v1996
      %v1998 = vpop.f32.mrf.mxu0
      %v1999 = vadd.f32 %v874, %v1998
      %2000 = vdwg.mxu0
      %2001 = vmatprep.subr.mxu0 0.0
      %2002 = vmatpush1.msra.mxu0 %v794
      %2003 = vmatprep.subr.mxu0 0.0
      %2004 = vmatpush1.msra.mxu0 %v791
      %2005 = vmatprep.subr.mxu0 0.0
      %2006 = vmatpush1.msra.mxu0 %v788
      %2007 = vmatprep.subr.mxu0 0.0
      %2008 = vmatpush1.msra.mxu0 %v785
      %2009 = vmatprep.subr.mxu0 0.0
      %2010 = vmatpush1.msra.mxu0 %v782
      %2011 = vmatprep.subr.mxu0 0.0
      %2012 = vmatpush1.msra.mxu0 %v779
      %2013 = vmatprep.subr.mxu0 0.0
      %2014 = vmatpush1.msra.mxu0 %v776
      %2015 = vmatprep.subr.mxu0 0.0
      %2016 = vmatpush1.msra.mxu0 %v773
      %2017 = vmatprep.subr.mxu0 0.0
      %2018 = vmatpush1.msra.mxu0 %v770
      %2019 = vmatprep.subr.mxu0 0.0
      %2020 = vmatpush1.msra.mxu0 %v767
      %2021 = vmatprep.subr.mxu0 0.0
      %2022 = vmatpush1.msra.mxu0 %v764
      %2023 = vmatprep.subr.mxu0 0.0
      %2024 = vmatpush1.msra.mxu0 %v761
      %2025 = vmatprep.subr.mxu0 0.0
      %2026 = vmatpush1.msra.mxu0 %v758
      %2027 = vmatprep.subr.mxu0 0.0
      %2028 = vmatpush1.msra.mxu0 %v755
      %2029 = vmatprep.subr.mxu0 0.0
      %2030 = vmatpush1.msra.mxu0 %v752
      %2031 = vmatprep.subr.mxu0 0.0
      %2032 = vmatpush1.msra.mxu0 %v749
      %2033 = vmatprep.subr.mxu0 0.0
      %2034 = vmatpush2.msra.mxu0 0.0
      %2035 = vmatprep.subr.mxu0 0.0
      %2036 = vmatpush2.msra.mxu0 0.0
      %2037 = vmatprep.subr.mxu0 0.0
      %2038 = vmatpush2.msra.mxu0 0.0
      %2039 = vmatprep.subr.mxu0 0.0
      %2040 = vmatpush2.msra.mxu0 0.0
      %2041 = vmatprep.subr.mxu0 0.0
      %2042 = vmatpush2.msra.mxu0 0.0
      %2043 = vmatprep.subr.mxu0 0.0
      %2044 = vmatpush2.msra.mxu0 0.0
      %2045 = vmatprep.subr.mxu0 0.0
      %2046 = vmatpush2.msra.mxu0 0.0
      %2047 = vmatprep.subr.mxu0 0.0
      %2048 = vmatpush2.msra.mxu0 0.0
      %2049 = vmatprep.subr.mxu0 0.0
      %2050 = vmatpush2.msra.mxu0 0.0
      %2051 = vmatprep.subr.mxu0 0.0
      %2052 = vmatpush2.msra.mxu0 0.0
      %2053 = vmatprep.subr.mxu0 0.0
      %2054 = vmatpush2.msra.mxu0 0.0
      %2055 = vmatprep.subr.mxu0 0.0
      %2056 = vmatpush2.msra.mxu0 0.0
      %2057 = vmatprep.subr.mxu0 0.0
      %2058 = vmatpush2.msra.mxu0 0.0
      %2059 = vmatprep.subr.mxu0 0.0
      %2060 = vmatpush2.msra.mxu0 0.0
      %2061 = vmatprep.subr.mxu0 0.0
      %2062 = vmatpush2.msra.mxu0 0.0
      %2063 = vmatprep.subr.mxu0 0.0
      %2064 = vmatpush2.msra.mxu0 0.0
      %2065 = vmatprep.mubr.f32.mxu0 0.0
      %2066 = vmatmul.mubr.f32.gmra.mxu0 %v1747
      %v2067 = vpop.f32.mrf.mxu0
      %v2068 = vadd.f32 %v878, %v2067
      %v2069 = vpop.f32.mrf.mxu0
      %2070 = vdwg.mxu0
      %v2071 = vadd.f32 %v1927, %v1997
      %v2072 = vxor.u32 %v2071, 2147483648
      %v2073 = vmul.f32 %v2072, 1.442695
      %v2074 = vpow.pop %v2073
      %v2075 = vadd.f32 %v2074, 1.0
      %v2076 = vrcp.pop %v2075
      %v2077 = vmul.f32 1.0, %v2076
      %v2078 = vadd.f32 %v1928, %v1999
      %v2079 = vxor.u32 %v2078, 2147483648
      %v2080 = vmul.f32 %v2079, 1.442695
      %v2081 = vpow.pop %v2080
      %v2082 = vadd.f32 %v2081, 1.0
      %v2083 = vrcp.pop %v2082
      %v2084 = vmul.f32 1.0, %v2083
      %v2085 = vmul.f32 %v2077, %v2068
      %v2086 = vadd.f32 %v1929, %v2085
      %v2087 = vtanh.pop %v2086
      %v2088 = vsub.f32 1.0, %v2084
      %v2089 = vmul.f32 %v2088, %v2087
      %v2090 = vmul.f32 %v2084, %v1747
      %v2091 = vadd.f32 %v2089, %v2090
      %s2092 = smul.u32 %s1922, 8
      %s2093 = scalar_lea.vmem %s7, %s2092
      %2094 = vst [vmem:[%s2093] sm:$0xff] %v2091
      %s2095 = smul.u32 %s1923, 3
      %s2096 = smul.addr %s2095, 8
      %s2097 = scalar_lea.vmem [#allocation3], %s2096
      %v2098 = vld [vmem:[%s2097] sm:$0xff]
      %v2099 = vld [vmem:[%s2097 + $0x8] sm:$0xff]
      %v2100 = vld [vmem:[%s2097 + $0x10] sm:$0xff]
      %2101 = vmatprep.subr.mxu0 %v842
      %2102 = vmatpush1.msra.mxu0 %v841
      %2103 = vmatprep.subr.mxu0 %v839
      %2104 = vmatpush1.msra.mxu0 %v838
      %2105 = vmatprep.subr.mxu0 %v836
      %2106 = vmatpush1.msra.mxu0 %v835
      %2107 = vmatprep.subr.mxu0 %v833
      %2108 = vmatpush1.msra.mxu0 %v832
      %2109 = vmatprep.subr.mxu0 %v830
      %2110 = vmatpush1.msra.mxu0 %v829
      %2111 = vmatprep.subr.mxu0 %v827
      %2112 = vmatpush1.msra.mxu0 %v826
      %2113 = vmatprep.subr.mxu0 %v824
      %2114 = vmatpush1.msra.mxu0 %v823
      %2115 = vmatprep.subr.mxu0 %v821
      %2116 = vmatpush1.msra.mxu0 %v820
      %2117 = vmatprep.subr.mxu0 %v818
      %2118 = vmatpush1.msra.mxu0 %v817
      %2119 = vmatprep.subr.mxu0 %v815
      %2120 = vmatpush1.msra.mxu0 %v814
      %2121 = vmatprep.subr.mxu0 %v812
      %2122 = vmatpush1.msra.mxu0 %v811
      %2123 = vmatprep.subr.mxu0 %v809
      %2124 = vmatpush1.msra.mxu0 %v808
      %2125 = vmatprep.subr.mxu0 %v806
      %2126 = vmatpush1.msra.mxu0 %v805
      %2127 = vmatprep.subr.mxu0 %v803
      %2128 = vmatpush1.msra.mxu0 %v802
      %2129 = vmatprep.subr.mxu0 %v800
      %2130 = vmatpush1.msra.mxu0 %v799
      %2131 = vmatprep.subr.mxu0 %v797
      %2132 = vmatpush1.msra.mxu0 %v796
      %2133 = vmatprep.subr.mxu0 0.0
      %2134 = vmatpush2.msra.mxu0 0.0
      %2135 = vmatprep.subr.mxu0 0.0
      %2136 = vmatpush2.msra.mxu0 0.0
      %2137 = vmatprep.subr.mxu0 0.0
      %2138 = vmatpush2.msra.mxu0 0.0
      %2139 = vmatprep.subr.mxu0 0.0
      %2140 = vmatpush2.msra.mxu0 0.0
      %2141 = vmatprep.subr.mxu0 0.0
      %2142 = vmatpush2.msra.mxu0 0.0
      %2143 = vmatprep.subr.mxu0 0.0
      %2144 = vmatpush2.msra.mxu0 0.0
      %2145 = vmatprep.subr.mxu0 0.0
      %2146 = vmatpush2.msra.mxu0 0.0
      %2147 = vmatprep.subr.mxu0 0.0
      %2148 = vmatpush2.msra.mxu0 0.0
      %2149 = vmatprep.subr.mxu0 0.0
      %2150 = vmatpush2.msra.mxu0 0.0
      %2151 = vmatprep.subr.mxu0 0.0
      %2152 = vmatpush2.msra.mxu0 0.0
      %2153 = vmatprep.subr.mxu0 0.0
      %2154 = vmatpush2.msra.mxu0 0.0
      %2155 = vmatprep.subr.mxu0 0.0
      %2156 = vmatpush2.msra.mxu0 0.0
      %2157 = vmatprep.subr.mxu0 0.0
      %2158 = vmatpush2.msra.mxu0 0.0
      %2159 = vmatprep.subr.mxu0 0.0
      %2160 = vmatpush2.msra.mxu0 0.0
      %2161 = vmatprep.subr.mxu0 0.0
      %2162 = vmatpush2.msra.mxu0 0.0
      %2163 = vmatprep.subr.mxu0 0.0
      %2164 = vmatpush2.msra.mxu0 0.0
      %2165 = vmatprep.mubr.f32.mxu0 0.0
      %2166 = vmatmul.mubr.f32.gmra.mxu0 %v1918
      %v2167 = vpop.f32.mrf.mxu0
      %v2168 = vadd.f32 %v1057, %v2167
      %v2169 = vpop.f32.mrf.mxu0
      %v2170 = vadd.f32 %v1061, %v2169
      %2171 = vdwg.mxu0
      %2172 = vmatprep.subr.mxu0 0.0
      %2173 = vmatpush1.msra.mxu0 %v843
      %2174 = vmatprep.subr.mxu0 0.0
      %2175 = vmatpush1.msra.mxu0 %v840
      %2176 = vmatprep.subr.mxu0 0.0
      %2177 = vmatpush1.msra.mxu0 %v837
      %2178 = vmatprep.subr.mxu0 0.0
      %2179 = vmatpush1.msra.mxu0 %v834
      %2180 = vmatprep.subr.mxu0 0.0
      %2181 = vmatpush1.msra.mxu0 %v831
      %2182 = vmatprep.subr.mxu0 0.0
      %2183 = vmatpush1.msra.mxu0 %v828
      %2184 = vmatprep.subr.mxu0 0.0
      %2185 = vmatpush1.msra.mxu0 %v825
      %2186 = vmatprep.subr.mxu0 0.0
      %2187 = vmatpush1.msra.mxu0 %v822
      %2188 = vmatprep.subr.mxu0 0.0
      %2189 = vmatpush1.msra.mxu0 %v819
      %2190 = vmatprep.subr.mxu0 0.0
      %2191 = vmatpush1.msra.mxu0 %v816
      %2192 = vmatprep.subr.mxu0 0.0
      %2193 = vmatpush1.msra.mxu0 %v813
      %2194 = vmatprep.subr.mxu0 0.0
      %2195 = vmatpush1.msra.mxu0 %v810
      %2196 = vmatprep.subr.mxu0 0.0
      %2197 = vmatpush1.msra.mxu0 %v807
      %2198 = vmatprep.subr.mxu0 0.0
      %2199 = vmatpush1.msra.mxu0 %v804
      %2200 = vmatprep.subr.mxu0 0.0
      %2201 = vmatpush1.msra.mxu0 %v801
      %2202 = vmatprep.subr.mxu0 0.0
      %2203 = vmatpush1.msra.mxu0 %v798
      %2204 = vmatprep.subr.mxu0 0.0
      %2205 = vmatpush2.msra.mxu0 0.0
      %2206 = vmatprep.subr.mxu0 0.0
      %2207 = vmatpush2.msra.mxu0 0.0
      %2208 = vmatprep.subr.mxu0 0.0
      %2209 = vmatpush2.msra.mxu0 0.0
      %2210 = vmatprep.subr.mxu0 0.0
      %2211 = vmatpush2.msra.mxu0 0.0
      %2212 = vmatprep.subr.mxu0 0.0
      %2213 = vmatpush2.msra.mxu0 0.0
      %2214 = vmatprep.subr.mxu0 0.0
      %2215 = vmatpush2.msra.mxu0 0.0
      %2216 = vmatprep.subr.mxu0 0.0
      %2217 = vmatpush2.msra.mxu0 0.0
      %2218 = vmatprep.subr.mxu0 0.0
      %2219 = vmatpush2.msra.mxu0 0.0
      %2220 = vmatprep.subr.mxu0 0.0
      %2221 = vmatpush2.msra.mxu0 0.0
      %2222 = vmatprep.subr.mxu0 0.0
      %2223 = vmatpush2.msra.mxu0 0.0
      %2224 = vmatprep.subr.mxu0 0.0
      %2225 = vmatpush2.msra.mxu0 0.0
      %2226 = vmatprep.subr.mxu0 0.0
      %2227 = vmatpush2.msra.mxu0 0.0
      %2228 = vmatprep.subr.mxu0 0.0
      %2229 = vmatpush2.msra.mxu0 0.0
      %2230 = vmatprep.subr.mxu0 0.0
      %2231 = vmatpush2.msra.mxu0 0.0
      %2232 = vmatprep.subr.mxu0 0.0
      %2233 = vmatpush2.msra.mxu0 0.0
      %2234 = vmatprep.subr.mxu0 0.0
      %2235 = vmatpush2.msra.mxu0 0.0
      %2236 = vmatprep.mubr.f32.mxu0 0.0
      %2237 = vmatmul.mubr.f32.gmra.mxu0 %v1918
      %v2238 = vpop.f32.mrf.mxu0
      %v2239 = vadd.f32 %v1065, %v2238
      %v2240 = vpop.f32.mrf.mxu0
      %2241 = vdwg.mxu0
      %v2242 = vadd.f32 %v2098, %v2168
      %v2243 = vxor.u32 %v2242, 2147483648
      %v2244 = vmul.f32 %v2243, 1.442695
      %v2245 = vpow.pop %v2244
      %v2246 = vadd.f32 %v2245, 1.0
      %v2247 = vrcp.pop %v2246
      %v2248 = vmul.f32 1.0, %v2247
      %v2249 = vadd.f32 %v2099, %v2170
      %v2250 = vxor.u32 %v2249, 2147483648
      %v2251 = vmul.f32 %v2250, 1.442695
      %v2252 = vpow.pop %v2251
      %v2253 = vadd.f32 %v2252, 1.0
      %v2254 = vrcp.pop %v2253
      %v2255 = vmul.f32 1.0, %v2254
      %v2256 = vmul.f32 %v2248, %v2239
      %v2257 = vadd.f32 %v2100, %v2256
      %v2258 = vtanh.pop %v2257
      %v2259 = vsub.f32 1.0, %v2255
      %v2260 = vmul.f32 %v2259, %v2258
      %v2261 = vmul.f32 %v2255, %v1918
      %v2262 = vadd.f32 %v2260, %v2261
      %s2263 = smul.u32 %s1923, 8
      %s2264 = scalar_lea.vmem %s130, %s2263
      %2265 = vst [vmem:[%s2264] sm:$0xff] %v2262
    $region58: #{encoder_forward.2} parent=1 // loop_footer
      %s855 = sadd.s32 1, %s851
    $region59: #{encoder_forward.2} parent=1 // loop_footer_branch
      %850 = sbr.rel target = $region55
    $region60: #{encoder_forward.2} parent=1 // loop_exit
      _
    %2266 = vst [vmem:[#allocation4] sm:$0xff] %v856
    %2267 = vst [vmem:[%s848] sm:$0xff] %v857
    // Predicated region
    $region61: #{encoder_forward.2} parent=1 // pred_check
      %p2268 = pneg %p133
    $region62: #{encoder_forward.2} parent=1 // pred_check_branch
      %2270 = sbr.rel (%p2268) target = $region64
    $region63: #{encoder_forward.2} parent=1 // pred_region
      %v2271 = vld [vmem:[#allocation4] sm:$0xff]
      %v2272 = vld [vmem:[#allocation4 + $0x8] sm:$0xff]
      %2273 = vst [vmem:[%s9] sm:$0xff] %v2271
      %2274 = vst [vmem:[%s9 + $0x8] sm:$0xff] %v2272
    $region64: #{encoder_forward.2} parent=1 // pred_fallthru
      _
    %s2275 = ssub.s32 0, 0
    %s2276 = smul.u32 8, %s2275
    %p2277 = scmp.lt.s32.totalorder %s2276, 7
    %s2278 = scalar_select %p2277, %s2276, 7
    %s2279 = smul.addr %s2278, 8
    %s2280 = scalar_lea.vmem %s8, %s2279
    // Predicated region
    $region65: #{encoder_forward.2} parent=1 // pred_check
      _
    $region66: #{encoder_forward.2} parent=1 // pred_check_branch
      %2282 = sbr.rel (0) target = $region68
    $region67: #{encoder_forward.2} parent=1 // pred_region
      _
    $region68: #{encoder_forward.2} parent=1 // pred_fallthru
      _
    // Predicated region
    $region69: #{encoder_forward.2} parent=1 // pred_check
      _
    $region70: #{encoder_forward.2} parent=1 // pred_check_branch
      %2284 = sbr.rel (0) target = $region72
    $region71: #{encoder_forward.2} parent=1 // pred_region
      %s2285 = ssub.s32 0, 0
      %s2286 = smul.u32 8, %s2285
    $region72: #{encoder_forward.2} parent=1 // pred_fallthru
      _
    // Predicated region
    $region73: #{encoder_forward.2} parent=1 // pred_check
      _
    $region74: #{encoder_forward.2} parent=1 // pred_check_branch
      %2288 = sbr.rel (0) target = $region76
    $region75: #{encoder_forward.2} parent=1 // pred_region
      _
    $region76: #{encoder_forward.2} parent=1 // pred_fallthru
      _
    // Predicated region
    $region77: #{encoder_forward.2} parent=1 // pred_check
      _
    $region78: #{encoder_forward.2} parent=1 // pred_check_branch
      %2290 = sbr.rel (0) target = $region80
    $region79: #{encoder_forward.2} parent=1 // pred_region
      _
    $region80: #{encoder_forward.2} parent=1 // pred_fallthru
      _
    // Predicated region
    $region81: #{encoder_forward.2} parent=1 // pred_check
      _
    $region82: #{encoder_forward.2} parent=1 // pred_check_branch
      %2292 = sbr.rel (0) target = $region84
    $region83: #{encoder_forward.2} parent=1 // pred_region
      %s2293 = ssub.s32 0, 0
      %s2294 = smul.u32 8, %s2293
      %p2295 = scmp.lt.s32.totalorder %s2294, 7
      %s2296 = scalar_select %p2295, %s2294, 7
      %s2297 = smul.addr %s2296, 8
      %s2298 = scalar_lea.vmem %s8, %s2297
    $region84: #{encoder_forward.2} parent=1 // pred_fallthru
      _
    // Predicated region
    $region85: #{encoder_forward.2} parent=1 // pred_check
      _
    $region86: #{encoder_forward.2} parent=1 // pred_check_branch
      %2300 = sbr.rel (0) target = $region88
    $region87: #{encoder_forward.2} parent=1 // pred_region
      _
    $region88: #{encoder_forward.2} parent=1 // pred_fallthru
      _
    %2301 = vsyncpa [#allocation6], 1
    %2302 = vsyncpa [#allocation8], 1
    %2303 = vsyncpa [#allocation11], 1

// kernel: encoder_forward.3
$region0: #{encoder_forward.3}
  #allocation0 [shape = 'u32[]', space=smem, size = 0x4, offset = 0x4, fixed_abs, tag = 'smem constant byte address 0x4 - core index']
  #allocation1 [shape = 'u32[144,128]{1,0:T(1,128)}', space=vmem, size = 0x12000, scoped, tag = 'internal scratch']
  #allocation2 [shape = 'f32[8,8,384]{2,1,0:T(8,128)}', space=vmem, size = 0x18000, scoped, tag = 'scratch operand']
  #allocation3 [shape = 'f32[8,8,384]{2,1,0:T(8,128)}', space=vmem, size = 0x18000, scoped, tag = 'scratch operand']
  #allocation4 [shape = 'f32[2,8,128]{2,1,0:T(8,128)}', space=vmem, size = 0x2000, scoped, tag = 'scratch operand']
  %s0 = inlined_call_operand.vmem [shape: f32[8,8,128], index: 0, kind: input, shape index: {}, may-alias: {0,2}]
  %s1 = inlined_call_operand.vmem [shape: f32[8,8,128], index: 1, kind: input, shape index: {}, may-alias: {1,3}]
  %s2 = inlined_call_operand.vmem [shape: f32[8,8,128], index: 2, kind: input, shape index: {}, may-alias: {0,2}]
  %s3 = inlined_call_operand.vmem [shape: f32[8,8,128], index: 3, kind: input, shape index: {}, may-alias: {1,3}]
  %s4 = inlined_call_operand.vmem [shape: f32[2,128,384], index: 4, kind: input, shape index: {}]
  %s5 = inlined_call_operand.hbm [shape: f32[2,128,384], index: 5, kind: input, shape index: {}]
  %s6 = inlined_call_operand.hbm [shape: f32[2,128,384], index: 6, kind: input, shape index: {}]
  %s7 = inlined_call_operand.vmem [shape: f32[2,1,384], index: 7, kind: input, shape index: {}]
  %s8 = inlined_call_operand.vmem [shape: f32[2,1,384], index: 8, kind: input, shape index: {}]
  %s9 = inlined_call_operand.vmem [shape: f32[8,8,128], index: 9, kind: output, shape index: {0}]
  %s10 = inlined_call_operand.vmem [shape: f32[8,8,128], index: 10, kind: output, shape index: {1}]
  %s11 = inlined_call_operand.vmem [shape: f32[2,8,128], index: 11, kind: output, shape index: {2}]
  %12 = xla_tuple %s9, %s10, %s11
  %s13 = sld [smem:[#allocation0]]
  $region85: #{encoder_forward.3} parent=0
    _
  %s15 = ssub.s32 1, %s13
  %s16 = scalar_select 0, %s15, %s13
  $region1: #{encoder_forward.3} parent=0
    #allocation5 [shape = 'u8[393216]{0}', space=vmem, size = 0x60000, scoped, tag = 'input window, operand 5, single buffered']
    #allocation6 [shape = 's32[1]{0}', space=sflag, size = 0x4, scoped, tag = 'scoped memory for encoder_forward.3']
    #allocation7 [shape = 'u8[393216]{0}', space=vmem, size = 0x60000, scoped, tag = 'input window, operand 6, single buffered']
    #allocation8 [shape = 's32[1]{0}', space=sflag, size = 0x4, scoped, tag = 'scoped memory for encoder_forward.3']
    %17 = vsyncpa [#allocation6], 0
    %18 = vsyncpa [#allocation8], 0
    // Predicated region
    $region2: #{encoder_forward.3} parent=1 // pred_check
      _
    $region3: #{encoder_forward.3} parent=1 // pred_check_branch
      %20 = sbr.rel (0) target = $region5
    $region4: #{encoder_forward.3} parent=1 // pred_region
      _
    $region5: #{encoder_forward.3} parent=1 // pred_fallthru
      _
    // Predicated region
    $region6: #{encoder_forward.3} parent=1 // pred_check
      _
    $region7: #{encoder_forward.3} parent=1 // pred_check_branch
      %22 = sbr.rel (0) target = $region9
    $region8: #{encoder_forward.3} parent=1 // pred_region
      _
    $region9: #{encoder_forward.3} parent=1 // pred_fallthru
      _
    // Predicated region
    $region10: #{encoder_forward.3} parent=1 // pred_check
      _
    $region11: #{encoder_forward.3} parent=1 // pred_check_branch
      %24 = sbr.rel (0) target = $region13
    $region12: #{encoder_forward.3} parent=1 // pred_region
      %s25 = ssub.s32 0, 0
      %s26 = smul.u32 8, %s25
      %p27 = scmp.lt.s32.totalorder %s26, 7
      %s28 = scalar_select %p27, %s26, 7
      %s29 = smul.addr %s28, 8
      %s30 = scalar_lea.vmem %s2, %s29
      %s31 = ssub.s32 0, 0
      %s32 = smul.u32 8, %s31
    $region13: #{encoder_forward.3} parent=1 // pred_fallthru
      _
    // Predicated region
    $region14: #{encoder_forward.3} parent=1 // pred_check
      _
    $region15: #{encoder_forward.3} parent=1 // pred_check_branch
      %34 = sbr.rel (0) target = $region17
    $region16: #{encoder_forward.3} parent=1 // pred_region
      %s35 = ssub.s32 0, 0
      %s36 = smul.u32 8, %s35
      %p37 = scmp.lt.s32.totalorder %s36, 7
      %s38 = scalar_select %p37, %s36, 7
      %s39 = smul.addr %s38, 8
      %s40 = scalar_lea.vmem %s3, %s39
      %s41 = ssub.s32 0, 0
      %s42 = smul.u32 8, %s41
    $region17: #{encoder_forward.3} parent=1 // pred_fallthru
      _
    // Predicated region
    $region18: #{encoder_forward.3} parent=1 // pred_check
      _
    $region19: #{encoder_forward.3} parent=1 // pred_check_branch
      %44 = sbr.rel (0) target = $region21
    $region20: #{encoder_forward.3} parent=1 // pred_region
      _
    $region21: #{encoder_forward.3} parent=1 // pred_fallthru
      _
    // Predicated region
    $region22: #{encoder_forward.3} parent=1 // pred_check
      _
    $region23: #{encoder_forward.3} parent=1 // pred_check_branch
      %46 = sbr.rel (0) target = $region25
    $region24: #{encoder_forward.3} parent=1 // pred_region
      %s48 = ssub.s32 12288, 12288
      %49 = vsyncadd [#allocation6], %s48
      %s50 = sshll.u32 [#allocation5], 4
      %s51 = int_to_ptr.vmem [resolvable:$true] %s50
      %56 = dma.hbm_to_vmem [thread:$0]  %s5, 12288, %s51, [#allocation6], 384, 384, 24
    $region25: #{encoder_forward.3} parent=1 // pred_fallthru
      _
    // Predicated region
    $region26: #{encoder_forward.3} parent=1 // pred_check
      _
    $region27: #{encoder_forward.3} parent=1 // pred_check_branch
      %58 = sbr.rel (0) target = $region29
    $region28: #{encoder_forward.3} parent=1 // pred_region
      %s60 = ssub.s32 12288, 12288
      %61 = vsyncadd [#allocation8], %s60
      %s62 = sshll.u32 [#allocation7], 4
      %s63 = int_to_ptr.vmem [resolvable:$true] %s62
      %68 = dma.hbm_to_vmem [thread:$0]  %s6, 12288, %s63, [#allocation8], 384, 384, 24
    $region29: #{encoder_forward.3} parent=1 // pred_fallthru
      _
    // Predicated region
    $region30: #{encoder_forward.3} parent=1 // pred_check
      _
    $region31: #{encoder_forward.3} parent=1 // pred_check_branch
      %70 = sbr.rel (0) target = $region33
    $region32: #{encoder_forward.3} parent=1 // pred_region
      _
    $region33: #{encoder_forward.3} parent=1 // pred_fallthru
      _
    // Predicated region
    $region34: #{encoder_forward.3} parent=1 // pred_check
      _
    $region35: #{encoder_forward.3} parent=1 // pred_check_branch
      %72 = sbr.rel (0) target = $region37
    $region36: #{encoder_forward.3} parent=1 // pred_region
      _
    $region37: #{encoder_forward.3} parent=1 // pred_fallthru
      _
    // Predicated region
    $region38: #{encoder_forward.3} parent=1 // pred_check
      _
    $region39: #{encoder_forward.3} parent=1 // pred_check_branch
      %74 = sbr.rel (0) target = $region41
    $region40: #{encoder_forward.3} parent=1 // pred_region
      %75 = dma.done [#allocation6], 12288
    $region41: #{encoder_forward.3} parent=1 // pred_fallthru
      _
    // Predicated region
    $region42: #{encoder_forward.3} parent=1 // pred_check
      _
    $region43: #{encoder_forward.3} parent=1 // pred_check_branch
      %77 = sbr.rel (0) target = $region45
    $region44: #{encoder_forward.3} parent=1 // pred_region
      %78 = dma.done [#allocation8], 12288
    $region45: #{encoder_forward.3} parent=1 // pred_fallthru
      _
    %s79 = ssub.s32 0, 0
    %s80 = smul.u32 8, %s79
    %p81 = scmp.lt.s32.totalorder %s80, 7
    %s82 = scalar_select %p81, %s80, 7
    %s83 = smul.addr %s82, 8
    %s84 = scalar_lea.vmem %s2, %s83
    %s85 = ssub.s32 0, 0
    %s86 = smul.u32 8, %s85
    %p87 = scmp.lt.s32.totalorder %s86, 7
    %s88 = scalar_select %p87, %s86, 7
    %s89 = smul.addr %s88, 8
    %s90 = scalar_lea.vmem %s3, %s89
    %s91 = ssub.s32 0, 0
    %s92 = smul.u32 8, %s91
    %p93 = scmp.lt.s32.totalorder %s92, 7
    %s94 = scalar_select %p93, %s92, 7
    %s95 = smul.addr %s94, 8
    %s96 = scalar_lea.vmem %s10, %s95
    %s97 = ssub.s32 0, 0
    %s98 = smul.u32 8, %s97
    %p99 = scmp.lt.s32.totalorder %s98, 7
    %s100 = scalar_select %p99, %s98, 7
    %s101 = smul.addr %s100, 8
    %s102 = scalar_lea.vmem %s2, %s101
    %s103 = ssub.s32 0, 0
    %s104 = smul.u32 8, %s103
    %s105 = ssub.s32 0, 0
    %s106 = smul.u32 8, %s105
    %p107 = scmp.lt.s32.totalorder %s106, 7
    %s108 = scalar_select %p107, %s106, 7
    %s109 = smul.addr %s108, 8
    %s110 = scalar_lea.vmem %s3, %s109
    %s111 = ssub.s32 0, 0
    %s112 = smul.u32 8, %s111
    %s113 = ssub.s32 0, 0
    %s114 = smul.u32 8, %s113
    %p115 = scmp.lt.s32.totalorder %s114, 7
    %s116 = scalar_select %p115, %s114, 7
    %s117 = smul.addr %s116, 8
    %s118 = scalar_lea.vmem %s10, %s117
    %s119 = ssub.s32 0, 0
    %s120 = smul.u32 8, %s119
    %p121 = scmp.eq.s32.totalorder 0, 0
    // Predicated region
    $region46: #{encoder_forward.3} parent=1 // pred_check
      %p122 = pneg %p121
    $region47: #{encoder_forward.3} parent=1 // pred_check_branch
      %124 = sbr.rel (%p122) target = $region49
    $region48: #{encoder_forward.3} parent=1 // pred_region
      %125 = vst [vmem:[#allocation4] sm:$0xff] 0.0
      %126 = vst [vmem:[#allocation4 + $0x8] sm:$0xff] 0.0
    $region49: #{encoder_forward.3} parent=1 // pred_fallthru
      _
    %v127 = vld [vmem:[%s7] sm:$0x7]
    %v128 = vld [vmem:[%s0] sm:$0xff]
    %v129 = vld [vmem:[%s0 + $0x8] sm:$0xff]
    %v130 = vld [vmem:[%s0 + $0x10] sm:$0xff]
    %v131 = vld [vmem:[%s0 + $0x18] sm:$0xff]
    %v132 = vld [vmem:[%s0 + $0x20] sm:$0xff]
    %v133 = vld [vmem:[%s0 + $0x28] sm:$0xff]
    %v134 = vld [vmem:[%s0 + $0x30] sm:$0xff]
    %v135 = vld [vmem:[%s0 + $0x38] sm:$0xff]
    %v136 = vld [vmem:[%s4] sm:$0xff]
    %v137 = vld [vmem:[%s4 + $0x8] sm:$0xff]
    %v138 = vld [vmem:[%s4 + $0x10] sm:$0xff]
    %v139 = vld [vmem:[%s4 + $0x18] sm:$0xff]
    %v140 = vld [vmem:[%s4 + $0x20] sm:$0xff]
    %v141 = vld [vmem:[%s4 + $0x28] sm:$0xff]
    %v142 = vld [vmem:[%s4 + $0x30] sm:$0xff]
    %v143 = vld [vmem:[%s4 + $0x38] sm:$0xff]
    %v144 = vld [vmem:[%s4 + $0x40] sm:$0xff]
    %v145 = vld [vmem:[%s4 + $0x48] sm:$0xff]
    %v146 = vld [vmem:[%s4 + $0x50] sm:$0xff]
    %v147 = vld [vmem:[%s4 + $0x58] sm:$0xff]
    %v148 = vld [vmem:[%s4 + $0x60] sm:$0xff]
    %v149 = vld [vmem:[%s4 + $0x68] sm:$0xff]
    %v150 = vld [vmem:[%s4 + $0x70] sm:$0xff]
    %v151 = vld [vmem:[%s4 + $0x78] sm:$0xff]
    %v152 = vld [vmem:[%s4 + $0x80] sm:$0xff]
    %v153 = vld [vmem:[%s4 + $0x88] sm:$0xff]
    %v154 = vld [vmem:[%s4 + $0x90] sm:$0xff]
    %v155 = vld [vmem:[%s4 + $0x98] sm:$0xff]
    %v156 = vld [vmem:[%s4 + $0xa0] sm:$0xff]
    %v157 = vld [vmem:[%s4 + $0xa8] sm:$0xff]
    %v158 = vld [vmem:[%s4 + $0xb0] sm:$0xff]
    %v159 = vld [vmem:[%s4 + $0xb8] sm:$0xff]
    %v160 = vld [vmem:[%s4 + $0xc0] sm:$0xff]
    %v161 = vld [vmem:[%s4 + $0xc8] sm:$0xff]
    %v162 = vld [vmem:[%s4 + $0xd0] sm:$0xff]
    %v163 = vld [vmem:[%s4 + $0xd8] sm:$0xff]
    %v164 = vld [vmem:[%s4 + $0xe0] sm:$0xff]
    %v165 = vld [vmem:[%s4 + $0xe8] sm:$0xff]
    %v166 = vld [vmem:[%s4 + $0xf0] sm:$0xff]
    %v167 = vld [vmem:[%s4 + $0xf8] sm:$0xff]
    %v168 = vld [vmem:[%s4 + $0x100] sm:$0xff]
    %v169 = vld [vmem:[%s4 + $0x108] sm:$0xff]
    %v170 = vld [vmem:[%s4 + $0x110] sm:$0xff]
    %v171 = vld [vmem:[%s4 + $0x118] sm:$0xff]
    %v172 = vld [vmem:[%s4 + $0x120] sm:$0xff]
    %v173 = vld [vmem:[%s4 + $0x128] sm:$0xff]
    %v174 = vld [vmem:[%s4 + $0x130] sm:$0xff]
    %v175 = vld [vmem:[%s4 + $0x138] sm:$0xff]
    %v176 = vld [vmem:[%s4 + $0x140] sm:$0xff]
    %v177 = vld [vmem:[%s4 + $0x148] sm:$0xff]
    %v178 = vld [vmem:[%s4 + $0x150] sm:$0xff]
    %v179 = vld [vmem:[%s4 + $0x158] sm:$0xff]
    %v180 = vld [vmem:[%s4 + $0x160] sm:$0xff]
    %v181 = vld [vmem:[%s4 + $0x168] sm:$0xff]
    %v182 = vld [vmem:[%s4 + $0x170] sm:$0xff]
    %v183 = vld [vmem:[%s4 + $0x178] sm:$0xff]
    %v184 = vld [vmem:[%s1] sm:$0xff]
    %v185 = vld [vmem:[%s1 + $0x8] sm:$0xff]
    %v186 = vld [vmem:[%s1 + $0x10] sm:$0xff]
    %v187 = vld [vmem:[%s1 + $0x18] sm:$0xff]
    %v188 = vld [vmem:[%s1 + $0x20] sm:$0xff]
    %v189 = vld [vmem:[%s1 + $0x28] sm:$0xff]
    %v190 = vld [vmem:[%s1 + $0x30] sm:$0xff]
    %v191 = vld [vmem:[%s1 + $0x38] sm:$0xff]
    %s192 = scalar_lea.vmem %s4, 384
    %v193 = vld [vmem:[%s192] sm:$0xff]
    %v194 = vld [vmem:[%s192 + $0x8] sm:$0xff]
    %v195 = vld [vmem:[%s192 + $0x10] sm:$0xff]
    %v196 = vld [vmem:[%s192 + $0x18] sm:$0xff]
    %v197 = vld [vmem:[%s192 + $0x20] sm:$0xff]
    %v198 = vld [vmem:[%s192 + $0x28] sm:$0xff]
    %v199 = vld [vmem:[%s192 + $0x30] sm:$0xff]
    %v200 = vld [vmem:[%s192 + $0x38] sm:$0xff]
    %v201 = vld [vmem:[%s192 + $0x40] sm:$0xff]
    %v202 = vld [vmem:[%s192 + $0x48] sm:$0xff]
    %v203 = vld [vmem:[%s192 + $0x50] sm:$0xff]
    %v204 = vld [vmem:[%s192 + $0x58] sm:$0xff]
    %v205 = vld [vmem:[%s192 + $0x60] sm:$0xff]
    %v206 = vld [vmem:[%s192 + $0x68] sm:$0xff]
    %v207 = vld [vmem:[%s192 + $0x70] sm:$0xff]
    %v208 = vld [vmem:[%s192 + $0x78] sm:$0xff]
    %v209 = vld [vmem:[%s192 + $0x80] sm:$0xff]
    %v210 = vld [vmem:[%s192 + $0x88] sm:$0xff]
    %v211 = vld [vmem:[%s192 + $0x90] sm:$0xff]
    %v212 = vld [vmem:[%s192 + $0x98] sm:$0xff]
    %v213 = vld [vmem:[%s192 + $0xa0] sm:$0xff]
    %v214 = vld [vmem:[%s192 + $0xa8] sm:$0xff]
    %v215 = vld [vmem:[%s192 + $0xb0] sm:$0xff]
    %v216 = vld [vmem:[%s192 + $0xb8] sm:$0xff]
    %v217 = vld [vmem:[%s192 + $0xc0] sm:$0xff]
    %v218 = vld [vmem:[%s192 + $0xc8] sm:$0xff]
    %v219 = vld [vmem:[%s192 + $0xd0] sm:$0xff]
    %v220 = vld [vmem:[%s192 + $0xd8] sm:$0xff]
    %v221 = vld [vmem:[%s192 + $0xe0] sm:$0xff]
    %v222 = vld [vmem:[%s192 + $0xe8] sm:$0xff]
    %v223 = vld [vmem:[%s192 + $0xf0] sm:$0xff]
    %v224 = vld [vmem:[%s192 + $0xf8] sm:$0xff]
    %v225 = vld [vmem:[%s192 + $0x100] sm:$0xff]
    %v226 = vld [vmem:[%s192 + $0x108] sm:$0xff]
    %v227 = vld [vmem:[%s192 + $0x110] sm:$0xff]
    %v228 = vld [vmem:[%s192 + $0x118] sm:$0xff]
    %v229 = vld [vmem:[%s192 + $0x120] sm:$0xff]
    %v230 = vld [vmem:[%s192 + $0x128] sm:$0xff]
    %v231 = vld [vmem:[%s192 + $0x130] sm:$0xff]
    %v232 = vld [vmem:[%s192 + $0x138] sm:$0xff]
    %v233 = vld [vmem:[%s192 + $0x140] sm:$0xff]
    %v234 = vld [vmem:[%s192 + $0x148] sm:$0xff]
    %v235 = vld [vmem:[%s192 + $0x150] sm:$0xff]
    %v236 = vld [vmem:[%s192 + $0x158] sm:$0xff]
    %v237 = vld [vmem:[%s192 + $0x160] sm:$0xff]
    %v238 = vld [vmem:[%s192 + $0x168] sm:$0xff]
    %v239 = vld [vmem:[%s192 + $0x170] sm:$0xff]
    %v240 = vld [vmem:[%s192 + $0x178] sm:$0xff]
    %241 = vmatprep.subr.mxu0 %v239
    %242 = vmatpush1.msra.mxu0 %v238
    %243 = vmatprep.subr.mxu0 %v236
    %244 = vmatpush1.msra.mxu0 %v235
    %245 = vmatprep.subr.mxu0 %v233
    %246 = vmatpush1.msra.mxu0 %v232
    %247 = vmatprep.subr.mxu0 %v230
    %248 = vmatpush1.msra.mxu0 %v229
    %249 = vmatprep.subr.mxu0 %v227
    %250 = vmatpush1.msra.mxu0 %v226
    %251 = vmatprep.subr.mxu0 %v224
    %252 = vmatpush1.msra.mxu0 %v223
    %253 = vmatprep.subr.mxu0 %v221
    %254 = vmatpush1.msra.mxu0 %v220
    %255 = vmatprep.subr.mxu0 %v218
    %256 = vmatpush1.msra.mxu0 %v217
    %257 = vmatprep.subr.mxu0 %v215
    %258 = vmatpush1.msra.mxu0 %v214
    %259 = vmatprep.subr.mxu0 %v212
    %260 = vmatpush1.msra.mxu0 %v211
    %261 = vmatprep.subr.mxu0 %v209
    %262 = vmatpush1.msra.mxu0 %v208
    %263 = vmatprep.subr.mxu0 %v206
    %264 = vmatpush1.msra.mxu0 %v205
    %265 = vmatprep.subr.mxu0 %v203
    %266 = vmatpush1.msra.mxu0 %v202
    %267 = vmatprep.subr.mxu0 %v200
    %268 = vmatpush1.msra.mxu0 %v199
    %269 = vmatprep.subr.mxu0 %v197
    %270 = vmatpush1.msra.mxu0 %v196
    %271 = vmatprep.subr.mxu0 %v194
    %272 = vmatpush1.msra.mxu0 %v193
    %273 = vmatprep.subr.mxu0 0.0
    %274 = vmatpush2.msra.mxu0 0.0
    %275 = vmatprep.subr.mxu0 0.0
    %276 = vmatpush2.msra.mxu0 0.0
    %277 = vmatprep.subr.mxu0 0.0
    %278 = vmatpush2.msra.mxu0 0.0
    %279 = vmatprep.subr.mxu0 0.0
    %280 = vmatpush2.msra.mxu0 0.0
    %281 = vmatprep.subr.mxu0 0.0
    %282 = vmatpush2.msra.mxu0 0.0
    %283 = vmatprep.subr.mxu0 0.0
    %284 = vmatpush2.msra.mxu0 0.0
    %285 = vmatprep.subr.mxu0 0.0
    %286 = vmatpush2.msra.mxu0 0.0
    %287 = vmatprep.subr.mxu0 0.0
    %288 = vmatpush2.msra.mxu0 0.0
    %289 = vmatprep.subr.mxu0 0.0
    %290 = vmatpush2.msra.mxu0 0.0
    %291 = vmatprep.subr.mxu0 0.0
    %292 = vmatpush2.msra.mxu0 0.0
    %293 = vmatprep.subr.mxu0 0.0
    %294 = vmatpush2.msra.mxu0 0.0
    %295 = vmatprep.subr.mxu0 0.0
    %296 = vmatpush2.msra.mxu0 0.0
    %297 = vmatprep.subr.mxu0 0.0
    %298 = vmatpush2.msra.mxu0 0.0
    %299 = vmatprep.subr.mxu0 0.0
    %300 = vmatpush2.msra.mxu0 0.0
    %301 = vmatprep.subr.mxu0 0.0
    %302 = vmatpush2.msra.mxu0 0.0
    %303 = vmatprep.subr.mxu0 0.0
    %304 = vmatpush2.msra.mxu0 0.0
    %305 = vmatprep.mubr.f32.mxu0 0.0
    %306 = vmatmul.mubr.f32.gmra.mxu0 %v184
    %v307 = vpop.f32.mrf.mxu0
    %v308 = vadd.f32 0.0, %v307
    %v309 = vpop.f32.mrf.mxu0
    %v310 = vadd.f32 0.0, %v309
    %311 = vmatprep.mubr.f32.mxu0 0.0
    %312 = vmatmul.mubr.f32.gmra.mxu0 %v185
    %v313 = vpop.f32.mrf.mxu0
    %v314 = vadd.f32 0.0, %v313
    %v315 = vpop.f32.mrf.mxu0
    %v316 = vadd.f32 0.0, %v315
    %317 = vmatprep.mubr.f32.mxu0 0.0
    %318 = vmatmul.mubr.f32.gmra.mxu0 %v186
    %v319 = vpop.f32.mrf.mxu0
    %v320 = vadd.f32 0.0, %v319
    %v321 = vpop.f32.mrf.mxu0
    %v322 = vadd.f32 0.0, %v321
    %323 = vmatprep.mubr.f32.mxu0 0.0
    %324 = vmatmul.mubr.f32.gmra.mxu0 %v187
    %v325 = vpop.f32.mrf.mxu0
    %v326 = vadd.f32 0.0, %v325
    %v327 = vpop.f32.mrf.mxu0
    %v328 = vadd.f32 0.0, %v327
    %329 = vmatprep.mubr.f32.mxu0 0.0
    %330 = vmatmul.mubr.f32.gmra.mxu0 %v188
    %v331 = vpop.f32.mrf.mxu0
    %v332 = vadd.f32 0.0, %v331
    %v333 = vpop.f32.mrf.mxu0
    %v334 = vadd.f32 0.0, %v333
    %335 = vmatprep.mubr.f32.mxu0 0.0
    %336 = vmatmul.mubr.f32.gmra.mxu0 %v189
    %v337 = vpop.f32.mrf.mxu0
    %v338 = vadd.f32 0.0, %v337
    %v339 = vpop.f32.mrf.mxu0
    %v340 = vadd.f32 0.0, %v339
    %341 = vmatprep.mubr.f32.mxu0 0.0
    %342 = vmatmul.mubr.f32.gmra.mxu0 %v190
    %v343 = vpop.f32.mrf.mxu0
    %v344 = vadd.f32 0.0, %v343
    %v345 = vpop.f32.mrf.mxu0
    %v346 = vadd.f32 0.0, %v345
    %347 = vmatprep.mubr.f32.mxu0 0.0
    %348 = vmatmul.mubr.f32.gmra.mxu0 %v191
    %v349 = vpop.f32.mrf.mxu0
    %v350 = vadd.f32 0.0, %v349
    %v351 = vpop.f32.mrf.mxu0
    %v352 = vadd.f32 0.0, %v351
    %353 = vdwg.mxu0
    %354 = vmatprep.subr.mxu0 0.0
    %355 = vmatpush1.msra.mxu0 %v240
    %356 = vmatprep.subr.mxu0 0.0
    %357 = vmatpush1.msra.mxu0 %v237
    %358 = vmatprep.subr.mxu0 0.0
    %359 = vmatpush1.msra.mxu0 %v234
    %360 = vmatprep.subr.mxu0 0.0
    %361 = vmatpush1.msra.mxu0 %v231
    %362 = vmatprep.subr.mxu0 0.0
    %363 = vmatpush1.msra.mxu0 %v228
    %364 = vmatprep.subr.mxu0 0.0
    %365 = vmatpush1.msra.mxu0 %v225
    %366 = vmatprep.subr.mxu0 0.0
    %367 = vmatpush1.msra.mxu0 %v222
    %368 = vmatprep.subr.mxu0 0.0
    %369 = vmatpush1.msra.mxu0 %v219
    %370 = vmatprep.subr.mxu0 0.0
    %371 = vmatpush1.msra.mxu0 %v216
    %372 = vmatprep.subr.mxu0 0.0
    %373 = vmatpush1.msra.mxu0 %v213
    %374 = vmatprep.subr.mxu0 0.0
    %375 = vmatpush1.msra.mxu0 %v210
    %376 = vmatprep.subr.mxu0 0.0
    %377 = vmatpush1.msra.mxu0 %v207
    %378 = vmatprep.subr.mxu0 0.0
    %379 = vmatpush1.msra.mxu0 %v204
    %380 = vmatprep.subr.mxu0 0.0
    %381 = vmatpush1.msra.mxu0 %v201
    %382 = vmatprep.subr.mxu0 0.0
    %383 = vmatpush1.msra.mxu0 %v198
    %384 = vmatprep.subr.mxu0 0.0
    %385 = vmatpush1.msra.mxu0 %v195
    %386 = vmatprep.subr.mxu0 0.0
    %387 = vmatpush2.msra.mxu0 0.0
    %388 = vmatprep.subr.mxu0 0.0
    %389 = vmatpush2.msra.mxu0 0.0
    %390 = vmatprep.subr.mxu0 0.0
    %391 = vmatpush2.msra.mxu0 0.0
    %392 = vmatprep.subr.mxu0 0.0
    %393 = vmatpush2.msra.mxu0 0.0
    %394 = vmatprep.subr.mxu0 0.0
    %395 = vmatpush2.msra.mxu0 0.0
    %396 = vmatprep.subr.mxu0 0.0
    %397 = vmatpush2.msra.mxu0 0.0
    %398 = vmatprep.subr.mxu0 0.0
    %399 = vmatpush2.msra.mxu0 0.0
    %400 = vmatprep.subr.mxu0 0.0
    %401 = vmatpush2.msra.mxu0 0.0
    %402 = vmatprep.subr.mxu0 0.0
    %403 = vmatpush2.msra.mxu0 0.0
    %404 = vmatprep.subr.mxu0 0.0
    %405 = vmatpush2.msra.mxu0 0.0
    %406 = vmatprep.subr.mxu0 0.0
    %407 = vmatpush2.msra.mxu0 0.0
    %408 = vmatprep.subr.mxu0 0.0
    %409 = vmatpush2.msra.mxu0 0.0
    %410 = vmatprep.subr.mxu0 0.0
    %411 = vmatpush2.msra.mxu0 0.0
    %412 = vmatprep.subr.mxu0 0.0
    %413 = vmatpush2.msra.mxu0 0.0
    %414 = vmatprep.subr.mxu0 0.0
    %415 = vmatpush2.msra.mxu0 0.0
    %416 = vmatprep.subr.mxu0 0.0
    %417 = vmatpush2.msra.mxu0 0.0
    %418 = vmatprep.mubr.f32.mxu0 0.0
    %419 = vmatmul.mubr.f32.gmra.mxu0 %v184
    %v420 = vpop.f32.mrf.mxu0
    %v421 = vadd.f32 0.0, %v420
    %v422 = vpop.f32.mrf.mxu0
    %423 = vmatprep.mubr.f32.mxu0 0.0
    %424 = vmatmul.mubr.f32.gmra.mxu0 %v185
    %v425 = vpop.f32.mrf.mxu0
    %v426 = vadd.f32 0.0, %v425
    %v427 = vpop.f32.mrf.mxu0
    %428 = vmatprep.mubr.f32.mxu0 0.0
    %429 = vmatmul.mubr.f32.gmra.mxu0 %v186
    %v430 = vpop.f32.mrf.mxu0
    %v431 = vadd.f32 0.0, %v430
    %v432 = vpop.f32.mrf.mxu0
    %433 = vmatprep.mubr.f32.mxu0 0.0
    %434 = vmatmul.mubr.f32.gmra.mxu0 %v187
    %v435 = vpop.f32.mrf.mxu0
    %v436 = vadd.f32 0.0, %v435
    %v437 = vpop.f32.mrf.mxu0
    %438 = vmatprep.mubr.f32.mxu0 0.0
    %439 = vmatmul.mubr.f32.gmra.mxu0 %v188
    %v440 = vpop.f32.mrf.mxu0
    %v441 = vadd.f32 0.0, %v440
    %v442 = vpop.f32.mrf.mxu0
    %443 = vmatprep.mubr.f32.mxu0 0.0
    %444 = vmatmul.mubr.f32.gmra.mxu0 %v189
    %v445 = vpop.f32.mrf.mxu0
    %v446 = vadd.f32 0.0, %v445
    %v447 = vpop.f32.mrf.mxu0
    %448 = vmatprep.mubr.f32.mxu0 0.0
    %449 = vmatmul.mubr.f32.gmra.mxu0 %v190
    %v450 = vpop.f32.mrf.mxu0
    %v451 = vadd.f32 0.0, %v450
    %v452 = vpop.f32.mrf.mxu0
    %453 = vmatprep.mubr.f32.mxu0 0.0
    %454 = vmatmul.mubr.f32.gmra.mxu0 %v191
    %v455 = vpop.f32.mrf.mxu0
    %v456 = vadd.f32 0.0, %v455
    %v457 = vpop.f32.mrf.mxu0
    %458 = vdwg.mxu0
    %459 = vmatprep.subr.mxu0 %v182
    %460 = vmatpush1.msra.mxu0 %v181
    %461 = vmatprep.subr.mxu0 %v179
    %462 = vmatpush1.msra.mxu0 %v178
    %463 = vmatprep.subr.mxu0 %v176
    %464 = vmatpush1.msra.mxu0 %v175
    %465 = vmatprep.subr.mxu0 %v173
    %466 = vmatpush1.msra.mxu0 %v172
    %467 = vmatprep.subr.mxu0 %v170
    %468 = vmatpush1.msra.mxu0 %v169
    %469 = vmatprep.subr.mxu0 %v167
    %470 = vmatpush1.msra.mxu0 %v166
    %471 = vmatprep.subr.mxu0 %v164
    %472 = vmatpush1.msra.mxu0 %v163
    %473 = vmatprep.subr.mxu0 %v161
    %474 = vmatpush1.msra.mxu0 %v160
    %475 = vmatprep.subr.mxu0 %v158
    %476 = vmatpush1.msra.mxu0 %v157
    %477 = vmatprep.subr.mxu0 %v155
    %478 = vmatpush1.msra.mxu0 %v154
    %479 = vmatprep.subr.mxu0 %v152
    %480 = vmatpush1.msra.mxu0 %v151
    %481 = vmatprep.subr.mxu0 %v149
    %482 = vmatpush1.msra.mxu0 %v148
    %483 = vmatprep.subr.mxu0 %v146
    %484 = vmatpush1.msra.mxu0 %v145
    %485 = vmatprep.subr.mxu0 %v143
    %486 = vmatpush1.msra.mxu0 %v142
    %487 = vmatprep.subr.mxu0 %v140
    %488 = vmatpush1.msra.mxu0 %v139
    %489 = vmatprep.subr.mxu0 %v137
    %490 = vmatpush1.msra.mxu0 %v136
    %491 = vmatprep.subr.mxu0 0.0
    %492 = vmatpush2.msra.mxu0 0.0
    %493 = vmatprep.subr.mxu0 0.0
    %494 = vmatpush2.msra.mxu0 0.0
    %495 = vmatprep.subr.mxu0 0.0
    %496 = vmatpush2.msra.mxu0 0.0
    %497 = vmatprep.subr.mxu0 0.0
    %498 = vmatpush2.msra.mxu0 0.0
    %499 = vmatprep.subr.mxu0 0.0
    %500 = vmatpush2.msra.mxu0 0.0
    %501 = vmatprep.subr.mxu0 0.0
    %502 = vmatpush2.msra.mxu0 0.0
    %503 = vmatprep.subr.mxu0 0.0
    %504 = vmatpush2.msra.mxu0 0.0
    %505 = vmatprep.subr.mxu0 0.0
    %506 = vmatpush2.msra.mxu0 0.0
    %507 = vmatprep.subr.mxu0 0.0
    %508 = vmatpush2.msra.mxu0 0.0
    %509 = vmatprep.subr.mxu0 0.0
    %510 = vmatpush2.msra.mxu0 0.0
    %511 = vmatprep.subr.mxu0 0.0
    %512 = vmatpush2.msra.mxu0 0.0
    %513 = vmatprep.subr.mxu0 0.0
    %514 = vmatpush2.msra.mxu0 0.0
    %515 = vmatprep.subr.mxu0 0.0
    %516 = vmatpush2.msra.mxu0 0.0
    %517 = vmatprep.subr.mxu0 0.0
    %518 = vmatpush2.msra.mxu0 0.0
    %519 = vmatprep.subr.mxu0 0.0
    %520 = vmatpush2.msra.mxu0 0.0
    %521 = vmatprep.subr.mxu0 0.0
    %522 = vmatpush2.msra.mxu0 0.0
    %523 = vmatprep.mubr.f32.mxu0 0.0
    %524 = vmatmul.mubr.f32.gmra.mxu0 %v128
    %v525 = vpop.f32.mrf.mxu0
    %v526 = vadd.f32 %v308, %v525
    %v527 = vpop.f32.mrf.mxu0
    %v528 = vadd.f32 %v310, %v527
    %529 = vmatprep.mubr.f32.mxu0 0.0
    %530 = vmatmul.mubr.f32.gmra.mxu0 %v129
    %v531 = vpop.f32.mrf.mxu0
    %v532 = vadd.f32 %v314, %v531
    %v533 = vpop.f32.mrf.mxu0
    %v534 = vadd.f32 %v316, %v533
    %535 = vmatprep.mubr.f32.mxu0 0.0
    %536 = vmatmul.mubr.f32.gmra.mxu0 %v130
    %v537 = vpop.f32.mrf.mxu0
    %v538 = vadd.f32 %v320, %v537
    %v539 = vpop.f32.mrf.mxu0
    %v540 = vadd.f32 %v322, %v539
    %541 = vmatprep.mubr.f32.mxu0 0.0
    %542 = vmatmul.mubr.f32.gmra.mxu0 %v131
    %v543 = vpop.f32.mrf.mxu0
    %v544 = vadd.f32 %v326, %v543
    %v545 = vpop.f32.mrf.mxu0
    %v546 = vadd.f32 %v328, %v545
    %547 = vmatprep.mubr.f32.mxu0 0.0
    %548 = vmatmul.mubr.f32.gmra.mxu0 %v132
    %v549 = vpop.f32.mrf.mxu0
    %v550 = vadd.f32 %v332, %v549
    %v551 = vpop.f32.mrf.mxu0
    %v552 = vadd.f32 %v334, %v551
    %553 = vmatprep.mubr.f32.mxu0 0.0
    %554 = vmatmul.mubr.f32.gmra.mxu0 %v133
    %v555 = vpop.f32.mrf.mxu0
    %v556 = vadd.f32 %v338, %v555
    %v557 = vpop.f32.mrf.mxu0
    %v558 = vadd.f32 %v340, %v557
    %559 = vmatprep.mubr.f32.mxu0 0.0
    %560 = vmatmul.mubr.f32.gmra.mxu0 %v134
    %v561 = vpop.f32.mrf.mxu0
    %v562 = vadd.f32 %v344, %v561
    %v563 = vpop.f32.mrf.mxu0
    %v564 = vadd.f32 %v346, %v563
    %565 = vmatprep.mubr.f32.mxu0 0.0
    %566 = vmatmul.mubr.f32.gmra.mxu0 %v135
    %v567 = vpop.f32.mrf.mxu0
    %v568 = vadd.f32 %v350, %v567
    %v569 = vpop.f32.mrf.mxu0
    %v570 = vadd.f32 %v352, %v569
    %571 = vdwg.mxu0
    %572 = vmatprep.subr.mxu0 0.0
    %573 = vmatpush1.msra.mxu0 %v183
    %574 = vmatprep.subr.mxu0 0.0
    %575 = vmatpush1.msra.mxu0 %v180
    %576 = vmatprep.subr.mxu0 0.0
    %577 = vmatpush1.msra.mxu0 %v177
    %578 = vmatprep.subr.mxu0 0.0
    %579 = vmatpush1.msra.mxu0 %v174
    %580 = vmatprep.subr.mxu0 0.0
    %581 = vmatpush1.msra.mxu0 %v171
    %582 = vmatprep.subr.mxu0 0.0
    %583 = vmatpush1.msra.mxu0 %v168
    %584 = vmatprep.subr.mxu0 0.0
    %585 = vmatpush1.msra.mxu0 %v165
    %586 = vmatprep.subr.mxu0 0.0
    %587 = vmatpush1.msra.mxu0 %v162
    %588 = vmatprep.subr.mxu0 0.0
    %589 = vmatpush1.msra.mxu0 %v159
    %590 = vmatprep.subr.mxu0 0.0
    %591 = vmatpush1.msra.mxu0 %v156
    %592 = vmatprep.subr.mxu0 0.0
    %593 = vmatpush1.msra.mxu0 %v153
    %594 = vmatprep.subr.mxu0 0.0
    %595 = vmatpush1.msra.mxu0 %v150
    %596 = vmatprep.subr.mxu0 0.0
    %597 = vmatpush1.msra.mxu0 %v147
    %598 = vmatprep.subr.mxu0 0.0
    %599 = vmatpush1.msra.mxu0 %v144
    %600 = vmatprep.subr.mxu0 0.0
    %601 = vmatpush1.msra.mxu0 %v141
    %602 = vmatprep.subr.mxu0 0.0
    %603 = vmatpush1.msra.mxu0 %v138
    %604 = vmatprep.subr.mxu0 0.0
    %605 = vmatpush2.msra.mxu0 0.0
    %606 = vmatprep.subr.mxu0 0.0
    %607 = vmatpush2.msra.mxu0 0.0
    %608 = vmatprep.subr.mxu0 0.0
    %609 = vmatpush2.msra.mxu0 0.0
    %610 = vmatprep.subr.mxu0 0.0
    %611 = vmatpush2.msra.mxu0 0.0
    %612 = vmatprep.subr.mxu0 0.0
    %613 = vmatpush2.msra.mxu0 0.0
    %614 = vmatprep.subr.mxu0 0.0
    %615 = vmatpush2.msra.mxu0 0.0
    %616 = vmatprep.subr.mxu0 0.0
    %617 = vmatpush2.msra.mxu0 0.0
    %618 = vmatprep.subr.mxu0 0.0
    %619 = vmatpush2.msra.mxu0 0.0
    %620 = vmatprep.subr.mxu0 0.0
    %621 = vmatpush2.msra.mxu0 0.0
    %622 = vmatprep.subr.mxu0 0.0
    %623 = vmatpush2.msra.mxu0 0.0
    %624 = vmatprep.subr.mxu0 0.0
    %625 = vmatpush2.msra.mxu0 0.0
    %626 = vmatprep.subr.mxu0 0.0
    %627 = vmatpush2.msra.mxu0 0.0
    %628 = vmatprep.subr.mxu0 0.0
    %629 = vmatpush2.msra.mxu0 0.0
    %630 = vmatprep.subr.mxu0 0.0
    %631 = vmatpush2.msra.mxu0 0.0
    %632 = vmatprep.subr.mxu0 0.0
    %633 = vmatpush2.msra.mxu0 0.0
    %634 = vmatprep.subr.mxu0 0.0
    %635 = vmatpush2.msra.mxu0 0.0
    %636 = vmatprep.mubr.f32.mxu0 0.0
    %637 = vmatmul.mubr.f32.gmra.mxu0 %v128
    %v638 = vpop.f32.mrf.mxu0
    %v639 = vadd.f32 %v421, %v638
    %v640 = vpop.f32.mrf.mxu0
    %641 = vmatprep.mubr.f32.mxu0 0.0
    %642 = vmatmul.mubr.f32.gmra.mxu0 %v129
    %v643 = vpop.f32.mrf.mxu0
    %v644 = vadd.f32 %v426, %v643
    %v645 = vpop.f32.mrf.mxu0
    %646 = vmatprep.mubr.f32.mxu0 0.0
    %647 = vmatmul.mubr.f32.gmra.mxu0 %v130
    %v648 = vpop.f32.mrf.mxu0
    %v649 = vadd.f32 %v431, %v648
    %v650 = vpop.f32.mrf.mxu0
    %651 = vmatprep.mubr.f32.mxu0 0.0
    %652 = vmatmul.mubr.f32.gmra.mxu0 %v131
    %v653 = vpop.f32.mrf.mxu0
    %v654 = vadd.f32 %v436, %v653
    %v655 = vpop.f32.mrf.mxu0
    %656 = vmatprep.mubr.f32.mxu0 0.0
    %657 = vmatmul.mubr.f32.gmra.mxu0 %v132
    %v658 = vpop.f32.mrf.mxu0
    %v659 = vadd.f32 %v441, %v658
    %v660 = vpop.f32.mrf.mxu0
    %661 = vmatprep.mubr.f32.mxu0 0.0
    %662 = vmatmul.mubr.f32.gmra.mxu0 %v133
    %v663 = vpop.f32.mrf.mxu0
    %v664 = vadd.f32 %v446, %v663
    %v665 = vpop.f32.mrf.mxu0
    %666 = vmatprep.mubr.f32.mxu0 0.0
    %667 = vmatmul.mubr.f32.gmra.mxu0 %v134
    %v668 = vpop.f32.mrf.mxu0
    %v669 = vadd.f32 %v451, %v668
    %v670 = vpop.f32.mrf.mxu0
    %671 = vmatprep.mubr.f32.mxu0 0.0
    %672 = vmatmul.mubr.f32.gmra.mxu0 %v135
    %v673 = vpop.f32.mrf.mxu0
    %v674 = vadd.f32 %v456, %v673
    %v675 = vpop.f32.mrf.mxu0
    %676 = vdwg.mxu0
    %v678 = vlaneseq
    %v679 = vshrl.u32 %v678, 7
    %v680 = vsub.s32 0, %v679
    %v681 = vrot.slane %v127, %v680
    %v682 = vlaneseq
    %v683 = vshrl.u32 %v682, 7
    %v684 = vsub.s32 1, %v683
    %v685 = vrot.slane %v127, %v684
    %v686 = vlaneseq
    %v687 = vshrl.u32 %v686, 7
    %v688 = vsub.s32 2, %v687
    %v689 = vrot.slane %v127, %v688
    %v693 = vadd.f32 %v526, %v681
    %v694 = vadd.f32 %v528, %v685
    %v695 = vadd.f32 %v639, %v689
    %v696 = vadd.f32 %v532, %v681
    %v697 = vadd.f32 %v534, %v685
    %v698 = vadd.f32 %v644, %v689
    %v699 = vadd.f32 %v538, %v681
    %v700 = vadd.f32 %v540, %v685
    %v701 = vadd.f32 %v649, %v689
    %v702 = vadd.f32 %v544, %v681
    %v703 = vadd.f32 %v546, %v685
    %v704 = vadd.f32 %v654, %v689
    %v705 = vadd.f32 %v550, %v681
    %v706 = vadd.f32 %v552, %v685
    %v707 = vadd.f32 %v659, %v689
    %v708 = vadd.f32 %v556, %v681
    %v709 = vadd.f32 %v558, %v685
    %v710 = vadd.f32 %v664, %v689
    %v711 = vadd.f32 %v562, %v681
    %v712 = vadd.f32 %v564, %v685
    %v713 = vadd.f32 %v669, %v689
    %v714 = vadd.f32 %v568, %v681
    %v715 = vadd.f32 %v570, %v685
    %v716 = vadd.f32 %v674, %v689
    %717 = vst [vmem:[#allocation2] sm:$0xff] %v693
    %718 = vst [vmem:[#allocation2 + $0x8] sm:$0xff] %v694
    %719 = vst [vmem:[#allocation2 + $0x10] sm:$0xff] %v695
    %720 = vst [vmem:[#allocation2 + $0x18] sm:$0xff] %v696
    %721 = vst [vmem:[#allocation2 + $0x20] sm:$0xff] %v697
    %722 = vst [vmem:[#allocation2 + $0x28] sm:$0xff] %v698
    %723 = vst [vmem:[#allocation2 + $0x30] sm:$0xff] %v699
    %724 = vst [vmem:[#allocation2 + $0x38] sm:$0xff] %v700
    %725 = vst [vmem:[#allocation2 + $0x40] sm:$0xff] %v701
    %726 = vst [vmem:[#allocation2 + $0x48] sm:$0xff] %v702
    %727 = vst [vmem:[#allocation2 + $0x50] sm:$0xff] %v703
    %728 = vst [vmem:[#allocation2 + $0x58] sm:$0xff] %v704
    %729 = vst [vmem:[#allocation2 + $0x60] sm:$0xff] %v705
    %730 = vst [vmem:[#allocation2 + $0x68] sm:$0xff] %v706
    %731 = vst [vmem:[#allocation2 + $0x70] sm:$0xff] %v707
    %732 = vst [vmem:[#allocation2 + $0x78] sm:$0xff] %v708
    %733 = vst [vmem:[#allocation2 + $0x80] sm:$0xff] %v709
    %734 = vst [vmem:[#allocation2 + $0x88] sm:$0xff] %v710
    %735 = vst [vmem:[#allocation2 + $0x90] sm:$0xff] %v711
    %736 = vst [vmem:[#allocation2 + $0x98] sm:$0xff] %v712
    %737 = vst [vmem:[#allocation2 + $0xa0] sm:$0xff] %v713
    %738 = vst [vmem:[#allocation2 + $0xa8] sm:$0xff] %v714
    %739 = vst [vmem:[#allocation2 + $0xb0] sm:$0xff] %v715
    %740 = vst [vmem:[#allocation2 + $0xb8] sm:$0xff] %v716
    %s741 = scalar_lea.vmem %s7, 3
    %v742 = vld [vmem:[%s741] sm:$0x7]
    %v743 = vld [vmem:[%s102] sm:$0xff]
    %v744 = vld [vmem:[%s102 + $0x8] sm:$0xff]
    %v745 = vld [vmem:[%s102 + $0x10] sm:$0xff]
    %v746 = vld [vmem:[%s102 + $0x18] sm:$0xff]
    %v747 = vld [vmem:[%s102 + $0x20] sm:$0xff]
    %v748 = vld [vmem:[%s102 + $0x28] sm:$0xff]
    %v749 = vld [vmem:[%s102 + $0x30] sm:$0xff]
    %v750 = vld [vmem:[%s102 + $0x38] sm:$0xff]
    %v751 = vld [vmem:[#allocation5] sm:$0xff]
    %v752 = vld [vmem:[#allocation5 + $0x8] sm:$0xff]
    %v753 = vld [vmem:[#allocation5 + $0x10] sm:$0xff]
    %v754 = vld [vmem:[#allocation5 + $0x18] sm:$0xff]
    %v755 = vld [vmem:[#allocation5 + $0x20] sm:$0xff]
    %v756 = vld [vmem:[#allocation5 + $0x28] sm:$0xff]
    %v757 = vld [vmem:[#allocation5 + $0x30] sm:$0xff]
    %v758 = vld [vmem:[#allocation5 + $0x38] sm:$0xff]
    %v759 = vld [vmem:[#allocation5 + $0x40] sm:$0xff]
    %v760 = vld [vmem:[#allocation5 + $0x48] sm:$0xff]
    %v761 = vld [vmem:[#allocation5 + $0x50] sm:$0xff]
    %v762 = vld [vmem:[#allocation5 + $0x58] sm:$0xff]
    %v763 = vld [vmem:[#allocation5 + $0x60] sm:$0xff]
    %v764 = vld [vmem:[#allocation5 + $0x68] sm:$0xff]
    %v765 = vld [vmem:[#allocation5 + $0x70] sm:$0xff]
    %v766 = vld [vmem:[#allocation5 + $0x78] sm:$0xff]
    %v767 = vld [vmem:[#allocation5 + $0x80] sm:$0xff]
    %v768 = vld [vmem:[#allocation5 + $0x88] sm:$0xff]
    %v769 = vld [vmem:[#allocation5 + $0x90] sm:$0xff]
    %v770 = vld [vmem:[#allocation5 + $0x98] sm:$0xff]
    %v771 = vld [vmem:[#allocation5 + $0xa0] sm:$0xff]
    %v772 = vld [vmem:[#allocation5 + $0xa8] sm:$0xff]
    %v773 = vld [vmem:[#allocation5 + $0xb0] sm:$0xff]
    %v774 = vld [vmem:[#allocation5 + $0xb8] sm:$0xff]
    %v775 = vld [vmem:[#allocation5 + $0xc0] sm:$0xff]
    %v776 = vld [vmem:[#allocation5 + $0xc8] sm:$0xff]
    %v777 = vld [vmem:[#allocation5 + $0xd0] sm:$0xff]
    %v778 = vld [vmem:[#allocation5 + $0xd8] sm:$0xff]
    %v779 = vld [vmem:[#allocation5 + $0xe0] sm:$0xff]
    %v780 = vld [vmem:[#allocation5 + $0xe8] sm:$0xff]
    %v781 = vld [vmem:[#allocation5 + $0xf0] sm:$0xff]
    %v782 = vld [vmem:[#allocation5 + $0xf8] sm:$0xff]
    %v783 = vld [vmem:[#allocation5 + $0x100] sm:$0xff]
    %v784 = vld [vmem:[#allocation5 + $0x108] sm:$0xff]
    %v785 = vld [vmem:[#allocation5 + $0x110] sm:$0xff]
    %v786 = vld [vmem:[#allocation5 + $0x118] sm:$0xff]
    %v787 = vld [vmem:[#allocation5 + $0x120] sm:$0xff]
    %v788 = vld [vmem:[#allocation5 + $0x128] sm:$0xff]
    %v789 = vld [vmem:[#allocation5 + $0x130] sm:$0xff]
    %v790 = vld [vmem:[#allocation5 + $0x138] sm:$0xff]
    %v791 = vld [vmem:[#allocation5 + $0x140] sm:$0xff]
    %v792 = vld [vmem:[#allocation5 + $0x148] sm:$0xff]
    %v793 = vld [vmem:[#allocation5 + $0x150] sm:$0xff]
    %v794 = vld [vmem:[#allocation5 + $0x158] sm:$0xff]
    %v795 = vld [vmem:[#allocation5 + $0x160] sm:$0xff]
    %v796 = vld [vmem:[#allocation5 + $0x168] sm:$0xff]
    %v797 = vld [vmem:[#allocation5 + $0x170] sm:$0xff]
    %v798 = vld [vmem:[#allocation5 + $0x178] sm:$0xff]
    %v799 = vld [vmem:[%s110] sm:$0xff]
    %v800 = vld [vmem:[%s110 + $0x8] sm:$0xff]
    %v801 = vld [vmem:[%s110 + $0x10] sm:$0xff]
    %v802 = vld [vmem:[%s110 + $0x18] sm:$0xff]
    %v803 = vld [vmem:[%s110 + $0x20] sm:$0xff]
    %v804 = vld [vmem:[%s110 + $0x28] sm:$0xff]
    %v805 = vld [vmem:[%s110 + $0x30] sm:$0xff]
    %v806 = vld [vmem:[%s110 + $0x38] sm:$0xff]
    %s807 = scalar_lea.vmem [#allocation5], 384
    %v808 = vld [vmem:[%s807] sm:$0xff]
    %v809 = vld [vmem:[%s807 + $0x8] sm:$0xff]
    %v810 = vld [vmem:[%s807 + $0x10] sm:$0xff]
    %v811 = vld [vmem:[%s807 + $0x18] sm:$0xff]
    %v812 = vld [vmem:[%s807 + $0x20] sm:$0xff]
    %v813 = vld [vmem:[%s807 + $0x28] sm:$0xff]
    %v814 = vld [vmem:[%s807 + $0x30] sm:$0xff]
    %v815 = vld [vmem:[%s807 + $0x38] sm:$0xff]
    %v816 = vld [vmem:[%s807 + $0x40] sm:$0xff]
    %v817 = vld [vmem:[%s807 + $0x48] sm:$0xff]
    %v818 = vld [vmem:[%s807 + $0x50] sm:$0xff]
    %v819 = vld [vmem:[%s807 + $0x58] sm:$0xff]
    %v820 = vld [vmem:[%s807 + $0x60] sm:$0xff]
    %v821 = vld [vmem:[%s807 + $0x68] sm:$0xff]
    %v822 = vld [vmem:[%s807 + $0x70] sm:$0xff]
    %v823 = vld [vmem:[%s807 + $0x78] sm:$0xff]
    %v824 = vld [vmem:[%s807 + $0x80] sm:$0xff]
    %v825 = vld [vmem:[%s807 + $0x88] sm:$0xff]
    %v826 = vld [vmem:[%s807 + $0x90] sm:$0xff]
    %v827 = vld [vmem:[%s807 + $0x98] sm:$0xff]
    %v828 = vld [vmem:[%s807 + $0xa0] sm:$0xff]
    %v829 = vld [vmem:[%s807 + $0xa8] sm:$0xff]
    %v830 = vld [vmem:[%s807 + $0xb0] sm:$0xff]
    %v831 = vld [vmem:[%s807 + $0xb8] sm:$0xff]
    %v832 = vld [vmem:[%s807 + $0xc0] sm:$0xff]
    %v833 = vld [vmem:[%s807 + $0xc8] sm:$0xff]
    %v834 = vld [vmem:[%s807 + $0xd0] sm:$0xff]
    %v835 = vld [vmem:[%s807 + $0xd8] sm:$0xff]
    %v836 = vld [vmem:[%s807 + $0xe0] sm:$0xff]
    %v837 = vld [vmem:[%s807 + $0xe8] sm:$0xff]
    %v838 = vld [vmem:[%s807 + $0xf0] sm:$0xff]
    %v839 = vld [vmem:[%s807 + $0xf8] sm:$0xff]
    %v840 = vld [vmem:[%s807 + $0x100] sm:$0xff]
    %v841 = vld [vmem:[%s807 + $0x108] sm:$0xff]
    %v842 = vld [vmem:[%s807 + $0x110] sm:$0xff]
    %v843 = vld [vmem:[%s807 + $0x118] sm:$0xff]
    %v844 = vld [vmem:[%s807 + $0x120] sm:$0xff]
    %v845 = vld [vmem:[%s807 + $0x128] sm:$0xff]
    %v846 = vld [vmem:[%s807 + $0x130] sm:$0xff]
    %v847 = vld [vmem:[%s807 + $0x138] sm:$0xff]
    %v848 = vld [vmem:[%s807 + $0x140] sm:$0xff]
    %v849 = vld [vmem:[%s807 + $0x148] sm:$0xff]
    %v850 = vld [vmem:[%s807 + $0x150] sm:$0xff]
    %v851 = vld [vmem:[%s807 + $0x158] sm:$0xff]
    %v852 = vld [vmem:[%s807 + $0x160] sm:$0xff]
    %v853 = vld [vmem:[%s807 + $0x168] sm:$0xff]
    %v854 = vld [vmem:[%s807 + $0x170] sm:$0xff]
    %v855 = vld [vmem:[%s807 + $0x178] sm:$0xff]
    %856 = vmatprep.subr.mxu0 %v854
    %857 = vmatpush1.msra.mxu0 %v853
    %858 = vmatprep.subr.mxu0 %v851
    %859 = vmatpush1.msra.mxu0 %v850
    %860 = vmatprep.subr.mxu0 %v848
    %861 = vmatpush1.msra.mxu0 %v847
    %862 = vmatprep.subr.mxu0 %v845
    %863 = vmatpush1.msra.mxu0 %v844
    %864 = vmatprep.subr.mxu0 %v842
    %865 = vmatpush1.msra.mxu0 %v841
    %866 = vmatprep.subr.mxu0 %v839
    %867 = vmatpush1.msra.mxu0 %v838
    %868 = vmatprep.subr.mxu0 %v836
    %869 = vmatpush1.msra.mxu0 %v835
    %870 = vmatprep.subr.mxu0 %v833
    %871 = vmatpush1.msra.mxu0 %v832
    %872 = vmatprep.subr.mxu0 %v830
    %873 = vmatpush1.msra.mxu0 %v829
    %874 = vmatprep.subr.mxu0 %v827
    %875 = vmatpush1.msra.mxu0 %v826
    %876 = vmatprep.subr.mxu0 %v824
    %877 = vmatpush1.msra.mxu0 %v823
    %878 = vmatprep.subr.mxu0 %v821
    %879 = vmatpush1.msra.mxu0 %v820
    %880 = vmatprep.subr.mxu0 %v818
    %881 = vmatpush1.msra.mxu0 %v817
    %882 = vmatprep.subr.mxu0 %v815
    %883 = vmatpush1.msra.mxu0 %v814
    %884 = vmatprep.subr.mxu0 %v812
    %885 = vmatpush1.msra.mxu0 %v811
    %886 = vmatprep.subr.mxu0 %v809
    %887 = vmatpush1.msra.mxu0 %v808
    %888 = vmatprep.subr.mxu0 0.0
    %889 = vmatpush2.msra.mxu0 0.0
    %890 = vmatprep.subr.mxu0 0.0
    %891 = vmatpush2.msra.mxu0 0.0
    %892 = vmatprep.subr.mxu0 0.0
    %893 = vmatpush2.msra.mxu0 0.0
    %894 = vmatprep.subr.mxu0 0.0
    %895 = vmatpush2.msra.mxu0 0.0
    %896 = vmatprep.subr.mxu0 0.0
    %897 = vmatpush2.msra.mxu0 0.0
    %898 = vmatprep.subr.mxu0 0.0
    %899 = vmatpush2.msra.mxu0 0.0
    %900 = vmatprep.subr.mxu0 0.0
    %901 = vmatpush2.msra.mxu0 0.0
    %902 = vmatprep.subr.mxu0 0.0
    %903 = vmatpush2.msra.mxu0 0.0
    %904 = vmatprep.subr.mxu0 0.0
    %905 = vmatpush2.msra.mxu0 0.0
    %906 = vmatprep.subr.mxu0 0.0
    %907 = vmatpush2.msra.mxu0 0.0
    %908 = vmatprep.subr.mxu0 0.0
    %909 = vmatpush2.msra.mxu0 0.0
    %910 = vmatprep.subr.mxu0 0.0
    %911 = vmatpush2.msra.mxu0 0.0
    %912 = vmatprep.subr.mxu0 0.0
    %913 = vmatpush2.msra.mxu0 0.0
    %914 = vmatprep.subr.mxu0 0.0
    %915 = vmatpush2.msra.mxu0 0.0
    %916 = vmatprep.subr.mxu0 0.0
    %917 = vmatpush2.msra.mxu0 0.0
    %918 = vmatprep.subr.mxu0 0.0
    %919 = vmatpush2.msra.mxu0 0.0
    %920 = vmatprep.mubr.f32.mxu0 0.0
    %921 = vmatmul.mubr.f32.gmra.mxu0 %v799
    %v922 = vpop.f32.mrf.mxu0
    %v923 = vadd.f32 0.0, %v922
    %v924 = vpop.f32.mrf.mxu0
    %v925 = vadd.f32 0.0, %v924
    %926 = vmatprep.mubr.f32.mxu0 0.0
    %927 = vmatmul.mubr.f32.gmra.mxu0 %v800
    %v928 = vpop.f32.mrf.mxu0
    %v929 = vadd.f32 0.0, %v928
    %v930 = vpop.f32.mrf.mxu0
    %v931 = vadd.f32 0.0, %v930
    %932 = vmatprep.mubr.f32.mxu0 0.0
    %933 = vmatmul.mubr.f32.gmra.mxu0 %v801
    %v934 = vpop.f32.mrf.mxu0
    %v935 = vadd.f32 0.0, %v934
    %v936 = vpop.f32.mrf.mxu0
    %v937 = vadd.f32 0.0, %v936
    %938 = vmatprep.mubr.f32.mxu0 0.0
    %939 = vmatmul.mubr.f32.gmra.mxu0 %v802
    %v940 = vpop.f32.mrf.mxu0
    %v941 = vadd.f32 0.0, %v940
    %v942 = vpop.f32.mrf.mxu0
    %v943 = vadd.f32 0.0, %v942
    %944 = vmatprep.mubr.f32.mxu0 0.0
    %945 = vmatmul.mubr.f32.gmra.mxu0 %v803
    %v946 = vpop.f32.mrf.mxu0
    %v947 = vadd.f32 0.0, %v946
    %v948 = vpop.f32.mrf.mxu0
    %v949 = vadd.f32 0.0, %v948
    %950 = vmatprep.mubr.f32.mxu0 0.0
    %951 = vmatmul.mubr.f32.gmra.mxu0 %v804
    %v952 = vpop.f32.mrf.mxu0
    %v953 = vadd.f32 0.0, %v952
    %v954 = vpop.f32.mrf.mxu0
    %v955 = vadd.f32 0.0, %v954
    %956 = vmatprep.mubr.f32.mxu0 0.0
    %957 = vmatmul.mubr.f32.gmra.mxu0 %v805
    %v958 = vpop.f32.mrf.mxu0
    %v959 = vadd.f32 0.0, %v958
    %v960 = vpop.f32.mrf.mxu0
    %v961 = vadd.f32 0.0, %v960
    %962 = vmatprep.mubr.f32.mxu0 0.0
    %963 = vmatmul.mubr.f32.gmra.mxu0 %v806
    %v964 = vpop.f32.mrf.mxu0
    %v965 = vadd.f32 0.0, %v964
    %v966 = vpop.f32.mrf.mxu0
    %v967 = vadd.f32 0.0, %v966
    %968 = vdwg.mxu0
    %969 = vmatprep.subr.mxu0 0.0
    %970 = vmatpush1.msra.mxu0 %v855
    %971 = vmatprep.subr.mxu0 0.0
    %972 = vmatpush1.msra.mxu0 %v852
    %973 = vmatprep.subr.mxu0 0.0
    %974 = vmatpush1.msra.mxu0 %v849
    %975 = vmatprep.subr.mxu0 0.0
    %976 = vmatpush1.msra.mxu0 %v846
    %977 = vmatprep.subr.mxu0 0.0
    %978 = vmatpush1.msra.mxu0 %v843
    %979 = vmatprep.subr.mxu0 0.0
    %980 = vmatpush1.msra.mxu0 %v840
    %981 = vmatprep.subr.mxu0 0.0
    %982 = vmatpush1.msra.mxu0 %v837
    %983 = vmatprep.subr.mxu0 0.0
    %984 = vmatpush1.msra.mxu0 %v834
    %985 = vmatprep.subr.mxu0 0.0
    %986 = vmatpush1.msra.mxu0 %v831
    %987 = vmatprep.subr.mxu0 0.0
    %988 = vmatpush1.msra.mxu0 %v828
    %989 = vmatprep.subr.mxu0 0.0
    %990 = vmatpush1.msra.mxu0 %v825
    %991 = vmatprep.subr.mxu0 0.0
    %992 = vmatpush1.msra.mxu0 %v822
    %993 = vmatprep.subr.mxu0 0.0
    %994 = vmatpush1.msra.mxu0 %v819
    %995 = vmatprep.subr.mxu0 0.0
    %996 = vmatpush1.msra.mxu0 %v816
    %997 = vmatprep.subr.mxu0 0.0
    %998 = vmatpush1.msra.mxu0 %v813
    %999 = vmatprep.subr.mxu0 0.0
    %1000 = vmatpush1.msra.mxu0 %v810
    %1001 = vmatprep.subr.mxu0 0.0
    %1002 = vmatpush2.msra.mxu0 0.0
    %1003 = vmatprep.subr.mxu0 0.0
    %1004 = vmatpush2.msra.mxu0 0.0
    %1005 = vmatprep.subr.mxu0 0.0
    %1006 = vmatpush2.msra.mxu0 0.0
    %1007 = vmatprep.subr.mxu0 0.0
    %1008 = vmatpush2.msra.mxu0 0.0
    %1009 = vmatprep.subr.mxu0 0.0
    %1010 = vmatpush2.msra.mxu0 0.0
    %1011 = vmatprep.subr.mxu0 0.0
    %1012 = vmatpush2.msra.mxu0 0.0
    %1013 = vmatprep.subr.mxu0 0.0
    %1014 = vmatpush2.msra.mxu0 0.0
    %1015 = vmatprep.subr.mxu0 0.0
    %1016 = vmatpush2.msra.mxu0 0.0
    %1017 = vmatprep.subr.mxu0 0.0
    %1018 = vmatpush2.msra.mxu0 0.0
    %1019 = vmatprep.subr.mxu0 0.0
    %1020 = vmatpush2.msra.mxu0 0.0
    %1021 = vmatprep.subr.mxu0 0.0
    %1022 = vmatpush2.msra.mxu0 0.0
    %1023 = vmatprep.subr.mxu0 0.0
    %1024 = vmatpush2.msra.mxu0 0.0
    %1025 = vmatprep.subr.mxu0 0.0
    %1026 = vmatpush2.msra.mxu0 0.0
    %1027 = vmatprep.subr.mxu0 0.0
    %1028 = vmatpush2.msra.mxu0 0.0
    %1029 = vmatprep.subr.mxu0 0.0
    %1030 = vmatpush2.msra.mxu0 0.0
    %1031 = vmatprep.subr.mxu0 0.0
    %1032 = vmatpush2.msra.mxu0 0.0
    %1033 = vmatprep.mubr.f32.mxu0 0.0
    %1034 = vmatmul.mubr.f32.gmra.mxu0 %v799
    %v1035 = vpop.f32.mrf.mxu0
    %v1036 = vadd.f32 0.0, %v1035
    %v1037 = vpop.f32.mrf.mxu0
    %1038 = vmatprep.mubr.f32.mxu0 0.0
    %1039 = vmatmul.mubr.f32.gmra.mxu0 %v800
    %v1040 = vpop.f32.mrf.mxu0
    %v1041 = vadd.f32 0.0, %v1040
    %v1042 = vpop.f32.mrf.mxu0
    %1043 = vmatprep.mubr.f32.mxu0 0.0
    %1044 = vmatmul.mubr.f32.gmra.mxu0 %v801
    %v1045 = vpop.f32.mrf.mxu0
    %v1046 = vadd.f32 0.0, %v1045
    %v1047 = vpop.f32.mrf.mxu0
    %1048 = vmatprep.mubr.f32.mxu0 0.0
    %1049 = vmatmul.mubr.f32.gmra.mxu0 %v802
    %v1050 = vpop.f32.mrf.mxu0
    %v1051 = vadd.f32 0.0, %v1050
    %v1052 = vpop.f32.mrf.mxu0
    %1053 = vmatprep.mubr.f32.mxu0 0.0
    %1054 = vmatmul.mubr.f32.gmra.mxu0 %v803
    %v1055 = vpop.f32.mrf.mxu0
    %v1056 = vadd.f32 0.0, %v1055
    %v1057 = vpop.f32.mrf.mxu0
    %1058 = vmatprep.mubr.f32.mxu0 0.0
    %1059 = vmatmul.mubr.f32.gmra.mxu0 %v804
    %v1060 = vpop.f32.mrf.mxu0
    %v1061 = vadd.f32 0.0, %v1060
    %v1062 = vpop.f32.mrf.mxu0
    %1063 = vmatprep.mubr.f32.mxu0 0.0
    %1064 = vmatmul.mubr.f32.gmra.mxu0 %v805
    %v1065 = vpop.f32.mrf.mxu0
    %v1066 = vadd.f32 0.0, %v1065
    %v1067 = vpop.f32.mrf.mxu0
    %1068 = vmatprep.mubr.f32.mxu0 0.0
    %1069 = vmatmul.mubr.f32.gmra.mxu0 %v806
    %v1070 = vpop.f32.mrf.mxu0
    %v1071 = vadd.f32 0.0, %v1070
    %v1072 = vpop.f32.mrf.mxu0
    %1073 = vdwg.mxu0
    %1074 = vmatprep.subr.mxu0 %v797
    %1075 = vmatpush1.msra.mxu0 %v796
    %1076 = vmatprep.subr.mxu0 %v794
    %1077 = vmatpush1.msra.mxu0 %v793
    %1078 = vmatprep.subr.mxu0 %v791
    %1079 = vmatpush1.msra.mxu0 %v790
    %1080 = vmatprep.subr.mxu0 %v788
    %1081 = vmatpush1.msra.mxu0 %v787
    %1082 = vmatprep.subr.mxu0 %v785
    %1083 = vmatpush1.msra.mxu0 %v784
    %1084 = vmatprep.subr.mxu0 %v782
    %1085 = vmatpush1.msra.mxu0 %v781
    %1086 = vmatprep.subr.mxu0 %v779
    %1087 = vmatpush1.msra.mxu0 %v778
    %1088 = vmatprep.subr.mxu0 %v776
    %1089 = vmatpush1.msra.mxu0 %v775
    %1090 = vmatprep.subr.mxu0 %v773
    %1091 = vmatpush1.msra.mxu0 %v772
    %1092 = vmatprep.subr.mxu0 %v770
    %1093 = vmatpush1.msra.mxu0 %v769
    %1094 = vmatprep.subr.mxu0 %v767
    %1095 = vmatpush1.msra.mxu0 %v766
    %1096 = vmatprep.subr.mxu0 %v764
    %1097 = vmatpush1.msra.mxu0 %v763
    %1098 = vmatprep.subr.mxu0 %v761
    %1099 = vmatpush1.msra.mxu0 %v760
    %1100 = vmatprep.subr.mxu0 %v758
    %1101 = vmatpush1.msra.mxu0 %v757
    %1102 = vmatprep.subr.mxu0 %v755
    %1103 = vmatpush1.msra.mxu0 %v754
    %1104 = vmatprep.subr.mxu0 %v752
    %1105 = vmatpush1.msra.mxu0 %v751
    %1106 = vmatprep.subr.mxu0 0.0
    %1107 = vmatpush2.msra.mxu0 0.0
    %1108 = vmatprep.subr.mxu0 0.0
    %1109 = vmatpush2.msra.mxu0 0.0
    %1110 = vmatprep.subr.mxu0 0.0
    %1111 = vmatpush2.msra.mxu0 0.0
    %1112 = vmatprep.subr.mxu0 0.0
    %1113 = vmatpush2.msra.mxu0 0.0
    %1114 = vmatprep.subr.mxu0 0.0
    %1115 = vmatpush2.msra.mxu0 0.0
    %1116 = vmatprep.subr.mxu0 0.0
    %1117 = vmatpush2.msra.mxu0 0.0
    %1118 = vmatprep.subr.mxu0 0.0
    %1119 = vmatpush2.msra.mxu0 0.0
    %1120 = vmatprep.subr.mxu0 0.0
    %1121 = vmatpush2.msra.mxu0 0.0
    %1122 = vmatprep.subr.mxu0 0.0
    %1123 = vmatpush2.msra.mxu0 0.0
    %1124 = vmatprep.subr.mxu0 0.0
    %1125 = vmatpush2.msra.mxu0 0.0
    %1126 = vmatprep.subr.mxu0 0.0
    %1127 = vmatpush2.msra.mxu0 0.0
    %1128 = vmatprep.subr.mxu0 0.0
    %1129 = vmatpush2.msra.mxu0 0.0
    %1130 = vmatprep.subr.mxu0 0.0
    %1131 = vmatpush2.msra.mxu0 0.0
    %1132 = vmatprep.subr.mxu0 0.0
    %1133 = vmatpush2.msra.mxu0 0.0
    %1134 = vmatprep.subr.mxu0 0.0
    %1135 = vmatpush2.msra.mxu0 0.0
    %1136 = vmatprep.subr.mxu0 0.0
    %1137 = vmatpush2.msra.mxu0 0.0
    %1138 = vmatprep.mubr.f32.mxu0 0.0
    %1139 = vmatmul.mubr.f32.gmra.mxu0 %v743
    %v1140 = vpop.f32.mrf.mxu0
    %v1141 = vadd.f32 %v923, %v1140
    %v1142 = vpop.f32.mrf.mxu0
    %v1143 = vadd.f32 %v925, %v1142
    %1144 = vmatprep.mubr.f32.mxu0 0.0
    %1145 = vmatmul.mubr.f32.gmra.mxu0 %v744
    %v1146 = vpop.f32.mrf.mxu0
    %v1147 = vadd.f32 %v929, %v1146
    %v1148 = vpop.f32.mrf.mxu0
    %v1149 = vadd.f32 %v931, %v1148
    %1150 = vmatprep.mubr.f32.mxu0 0.0
    %1151 = vmatmul.mubr.f32.gmra.mxu0 %v745
    %v1152 = vpop.f32.mrf.mxu0
    %v1153 = vadd.f32 %v935, %v1152
    %v1154 = vpop.f32.mrf.mxu0
    %v1155 = vadd.f32 %v937, %v1154
    %1156 = vmatprep.mubr.f32.mxu0 0.0
    %1157 = vmatmul.mubr.f32.gmra.mxu0 %v746
    %v1158 = vpop.f32.mrf.mxu0
    %v1159 = vadd.f32 %v941, %v1158
    %v1160 = vpop.f32.mrf.mxu0
    %v1161 = vadd.f32 %v943, %v1160
    %1162 = vmatprep.mubr.f32.mxu0 0.0
    %1163 = vmatmul.mubr.f32.gmra.mxu0 %v747
    %v1164 = vpop.f32.mrf.mxu0
    %v1165 = vadd.f32 %v947, %v1164
    %v1166 = vpop.f32.mrf.mxu0
    %v1167 = vadd.f32 %v949, %v1166
    %1168 = vmatprep.mubr.f32.mxu0 0.0
    %1169 = vmatmul.mubr.f32.gmra.mxu0 %v748
    %v1170 = vpop.f32.mrf.mxu0
    %v1171 = vadd.f32 %v953, %v1170
    %v1172 = vpop.f32.mrf.mxu0
    %v1173 = vadd.f32 %v955, %v1172
    %1174 = vmatprep.mubr.f32.mxu0 0.0
    %1175 = vmatmul.mubr.f32.gmra.mxu0 %v749
    %v1176 = vpop.f32.mrf.mxu0
    %v1177 = vadd.f32 %v959, %v1176
    %v1178 = vpop.f32.mrf.mxu0
    %v1179 = vadd.f32 %v961, %v1178
    %1180 = vmatprep.mubr.f32.mxu0 0.0
    %1181 = vmatmul.mubr.f32.gmra.mxu0 %v750
    %v1182 = vpop.f32.mrf.mxu0
    %v1183 = vadd.f32 %v965, %v1182
    %v1184 = vpop.f32.mrf.mxu0
    %v1185 = vadd.f32 %v967, %v1184
    %1186 = vdwg.mxu0
    %1187 = vmatprep.subr.mxu0 0.0
    %1188 = vmatpush1.msra.mxu0 %v798
    %1189 = vmatprep.subr.mxu0 0.0
    %1190 = vmatpush1.msra.mxu0 %v795
    %1191 = vmatprep.subr.mxu0 0.0
    %1192 = vmatpush1.msra.mxu0 %v792
    %1193 = vmatprep.subr.mxu0 0.0
    %1194 = vmatpush1.msra.mxu0 %v789
    %1195 = vmatprep.subr.mxu0 0.0
    %1196 = vmatpush1.msra.mxu0 %v786
    %1197 = vmatprep.subr.mxu0 0.0
    %1198 = vmatpush1.msra.mxu0 %v783
    %1199 = vmatprep.subr.mxu0 0.0
    %1200 = vmatpush1.msra.mxu0 %v780
    %1201 = vmatprep.subr.mxu0 0.0
    %1202 = vmatpush1.msra.mxu0 %v777
    %1203 = vmatprep.subr.mxu0 0.0
    %1204 = vmatpush1.msra.mxu0 %v774
    %1205 = vmatprep.subr.mxu0 0.0
    %1206 = vmatpush1.msra.mxu0 %v771
    %1207 = vmatprep.subr.mxu0 0.0
    %1208 = vmatpush1.msra.mxu0 %v768
    %1209 = vmatprep.subr.mxu0 0.0
    %1210 = vmatpush1.msra.mxu0 %v765
    %1211 = vmatprep.subr.mxu0 0.0
    %1212 = vmatpush1.msra.mxu0 %v762
    %1213 = vmatprep.subr.mxu0 0.0
    %1214 = vmatpush1.msra.mxu0 %v759
    %1215 = vmatprep.subr.mxu0 0.0
    %1216 = vmatpush1.msra.mxu0 %v756
    %1217 = vmatprep.subr.mxu0 0.0
    %1218 = vmatpush1.msra.mxu0 %v753
    %1219 = vmatprep.subr.mxu0 0.0
    %1220 = vmatpush2.msra.mxu0 0.0
    %1221 = vmatprep.subr.mxu0 0.0
    %1222 = vmatpush2.msra.mxu0 0.0
    %1223 = vmatprep.subr.mxu0 0.0
    %1224 = vmatpush2.msra.mxu0 0.0
    %1225 = vmatprep.subr.mxu0 0.0
    %1226 = vmatpush2.msra.mxu0 0.0
    %1227 = vmatprep.subr.mxu0 0.0
    %1228 = vmatpush2.msra.mxu0 0.0
    %1229 = vmatprep.subr.mxu0 0.0
    %1230 = vmatpush2.msra.mxu0 0.0
    %1231 = vmatprep.subr.mxu0 0.0
    %1232 = vmatpush2.msra.mxu0 0.0
    %1233 = vmatprep.subr.mxu0 0.0
    %1234 = vmatpush2.msra.mxu0 0.0
    %1235 = vmatprep.subr.mxu0 0.0
    %1236 = vmatpush2.msra.mxu0 0.0
    %1237 = vmatprep.subr.mxu0 0.0
    %1238 = vmatpush2.msra.mxu0 0.0
    %1239 = vmatprep.subr.mxu0 0.0
    %1240 = vmatpush2.msra.mxu0 0.0
    %1241 = vmatprep.subr.mxu0 0.0
    %1242 = vmatpush2.msra.mxu0 0.0
    %1243 = vmatprep.subr.mxu0 0.0
    %1244 = vmatpush2.msra.mxu0 0.0
    %1245 = vmatprep.subr.mxu0 0.0
    %1246 = vmatpush2.msra.mxu0 0.0
    %1247 = vmatprep.subr.mxu0 0.0
    %1248 = vmatpush2.msra.mxu0 0.0
    %1249 = vmatprep.subr.mxu0 0.0
    %1250 = vmatpush2.msra.mxu0 0.0
    %1251 = vmatprep.mubr.f32.mxu0 0.0
    %1252 = vmatmul.mubr.f32.gmra.mxu0 %v743
    %v1253 = vpop.f32.mrf.mxu0
    %v1254 = vadd.f32 %v1036, %v1253
    %v1255 = vpop.f32.mrf.mxu0
    %1256 = vmatprep.mubr.f32.mxu0 0.0
    %1257 = vmatmul.mubr.f32.gmra.mxu0 %v744
    %v1258 = vpop.f32.mrf.mxu0
    %v1259 = vadd.f32 %v1041, %v1258
    %v1260 = vpop.f32.mrf.mxu0
    %1261 = vmatprep.mubr.f32.mxu0 0.0
    %1262 = vmatmul.mubr.f32.gmra.mxu0 %v745
    %v1263 = vpop.f32.mrf.mxu0
    %v1264 = vadd.f32 %v1046, %v1263
    %v1265 = vpop.f32.mrf.mxu0
    %1266 = vmatprep.mubr.f32.mxu0 0.0
    %1267 = vmatmul.mubr.f32.gmra.mxu0 %v746
    %v1268 = vpop.f32.mrf.mxu0
    %v1269 = vadd.f32 %v1051, %v1268
    %v1270 = vpop.f32.mrf.mxu0
    %1271 = vmatprep.mubr.f32.mxu0 0.0
    %1272 = vmatmul.mubr.f32.gmra.mxu0 %v747
    %v1273 = vpop.f32.mrf.mxu0
    %v1274 = vadd.f32 %v1056, %v1273
    %v1275 = vpop.f32.mrf.mxu0
    %1276 = vmatprep.mubr.f32.mxu0 0.0
    %1277 = vmatmul.mubr.f32.gmra.mxu0 %v748
    %v1278 = vpop.f32.mrf.mxu0
    %v1279 = vadd.f32 %v1061, %v1278
    %v1280 = vpop.f32.mrf.mxu0
    %1281 = vmatprep.mubr.f32.mxu0 0.0
    %1282 = vmatmul.mubr.f32.gmra.mxu0 %v749
    %v1283 = vpop.f32.mrf.mxu0
    %v1284 = vadd.f32 %v1066, %v1283
    %v1285 = vpop.f32.mrf.mxu0
    %1286 = vmatprep.mubr.f32.mxu0 0.0
    %1287 = vmatmul.mubr.f32.gmra.mxu0 %v750
    %v1288 = vpop.f32.mrf.mxu0
    %v1289 = vadd.f32 %v1071, %v1288
    %v1290 = vpop.f32.mrf.mxu0
    %1291 = vdwg.mxu0
    %v1293 = vlaneseq
    %v1294 = vshrl.u32 %v1293, 7
    %v1295 = vsub.s32 0, %v1294
    %v1296 = vrot.slane %v742, %v1295
    %v1297 = vlaneseq
    %v1298 = vshrl.u32 %v1297, 7
    %v1299 = vsub.s32 1, %v1298
    %v1300 = vrot.slane %v742, %v1299
    %v1301 = vlaneseq
    %v1302 = vshrl.u32 %v1301, 7
    %v1303 = vsub.s32 2, %v1302
    %v1304 = vrot.slane %v742, %v1303
    %v1308 = vadd.f32 %v1141, %v1296
    %v1309 = vadd.f32 %v1143, %v1300
    %v1310 = vadd.f32 %v1254, %v1304
    %v1311 = vadd.f32 %v1147, %v1296
    %v1312 = vadd.f32 %v1149, %v1300
    %v1313 = vadd.f32 %v1259, %v1304
    %v1314 = vadd.f32 %v1153, %v1296
    %v1315 = vadd.f32 %v1155, %v1300
    %v1316 = vadd.f32 %v1264, %v1304
    %v1317 = vadd.f32 %v1159, %v1296
    %v1318 = vadd.f32 %v1161, %v1300
    %v1319 = vadd.f32 %v1269, %v1304
    %v1320 = vadd.f32 %v1165, %v1296
    %v1321 = vadd.f32 %v1167, %v1300
    %v1322 = vadd.f32 %v1274, %v1304
    %v1323 = vadd.f32 %v1171, %v1296
    %v1324 = vadd.f32 %v1173, %v1300
    %v1325 = vadd.f32 %v1279, %v1304
    %v1326 = vadd.f32 %v1177, %v1296
    %v1327 = vadd.f32 %v1179, %v1300
    %v1328 = vadd.f32 %v1284, %v1304
    %v1329 = vadd.f32 %v1183, %v1296
    %v1330 = vadd.f32 %v1185, %v1300
    %v1331 = vadd.f32 %v1289, %v1304
    %1332 = vst [vmem:[#allocation3] sm:$0xff] %v1308
    %1333 = vst [vmem:[#allocation3 + $0x8] sm:$0xff] %v1309
    %1334 = vst [vmem:[#allocation3 + $0x10] sm:$0xff] %v1310
    %1335 = vst [vmem:[#allocation3 + $0x18] sm:$0xff] %v1311
    %1336 = vst [vmem:[#allocation3 + $0x20] sm:$0xff] %v1312
    %1337 = vst [vmem:[#allocation3 + $0x28] sm:$0xff] %v1313
    %1338 = vst [vmem:[#allocation3 + $0x30] sm:$0xff] %v1314
    %1339 = vst [vmem:[#allocation3 + $0x38] sm:$0xff] %v1315
    %1340 = vst [vmem:[#allocation3 + $0x40] sm:$0xff] %v1316
    %1341 = vst [vmem:[#allocation3 + $0x48] sm:$0xff] %v1317
    %1342 = vst [vmem:[#allocation3 + $0x50] sm:$0xff] %v1318
    %1343 = vst [vmem:[#allocation3 + $0x58] sm:$0xff] %v1319
    %1344 = vst [vmem:[#allocation3 + $0x60] sm:$0xff] %v1320
    %1345 = vst [vmem:[#allocation3 + $0x68] sm:$0xff] %v1321
    %1346 = vst [vmem:[#allocation3 + $0x70] sm:$0xff] %v1322
    %1347 = vst [vmem:[#allocation3 + $0x78] sm:$0xff] %v1323
    %1348 = vst [vmem:[#allocation3 + $0x80] sm:$0xff] %v1324
    %1349 = vst [vmem:[#allocation3 + $0x88] sm:$0xff] %v1325
    %1350 = vst [vmem:[#allocation3 + $0x90] sm:$0xff] %v1326
    %1351 = vst [vmem:[#allocation3 + $0x98] sm:$0xff] %v1327
    %1352 = vst [vmem:[#allocation3 + $0xa0] sm:$0xff] %v1328
    %1353 = vst [vmem:[#allocation3 + $0xa8] sm:$0xff] %v1329
    %1354 = vst [vmem:[#allocation3 + $0xb0] sm:$0xff] %v1330
    %1355 = vst [vmem:[#allocation3 + $0xb8] sm:$0xff] %v1331
    %v1356 = vld [vmem:[#allocation7] sm:$0xff]
    %v1357 = vld [vmem:[#allocation7 + $0x8] sm:$0xff]
    %v1358 = vld [vmem:[#allocation7 + $0x10] sm:$0xff]
    %v1359 = vld [vmem:[#allocation7 + $0x18] sm:$0xff]
    %v1360 = vld [vmem:[#allocation7 + $0x20] sm:$0xff]
    %v1361 = vld [vmem:[#allocation7 + $0x28] sm:$0xff]
    %v1362 = vld [vmem:[#allocation7 + $0x30] sm:$0xff]
    %v1363 = vld [vmem:[#allocation7 + $0x38] sm:$0xff]
    %v1364 = vld [vmem:[#allocation7 + $0x40] sm:$0xff]
    %v1365 = vld [vmem:[#allocation7 + $0x48] sm:$0xff]
    %v1366 = vld [vmem:[#allocation7 + $0x50] sm:$0xff]
    %v1367 = vld [vmem:[#allocation7 + $0x58] sm:$0xff]
    %v1368 = vld [vmem:[#allocation7 + $0x60] sm:$0xff]
    %v1369 = vld [vmem:[#allocation7 + $0x68] sm:$0xff]
    %v1370 = vld [vmem:[#allocation7 + $0x70] sm:$0xff]
    %v1371 = vld [vmem:[#allocation7 + $0x78] sm:$0xff]
    %v1372 = vld [vmem:[#allocation7 + $0x80] sm:$0xff]
    %v1373 = vld [vmem:[#allocation7 + $0x88] sm:$0xff]
    %v1374 = vld [vmem:[#allocation7 + $0x90] sm:$0xff]
    %v1375 = vld [vmem:[#allocation7 + $0x98] sm:$0xff]
    %v1376 = vld [vmem:[#allocation7 + $0xa0] sm:$0xff]
    %v1377 = vld [vmem:[#allocation7 + $0xa8] sm:$0xff]
    %v1378 = vld [vmem:[#allocation7 + $0xb0] sm:$0xff]
    %v1379 = vld [vmem:[#allocation7 + $0xb8] sm:$0xff]
    %v1380 = vld [vmem:[#allocation7 + $0xc0] sm:$0xff]
    %v1381 = vld [vmem:[#allocation7 + $0xc8] sm:$0xff]
    %v1382 = vld [vmem:[#allocation7 + $0xd0] sm:$0xff]
    %v1383 = vld [vmem:[#allocation7 + $0xd8] sm:$0xff]
    %v1384 = vld [vmem:[#allocation7 + $0xe0] sm:$0xff]
    %v1385 = vld [vmem:[#allocation7 + $0xe8] sm:$0xff]
    %v1386 = vld [vmem:[#allocation7 + $0xf0] sm:$0xff]
    %v1387 = vld [vmem:[#allocation7 + $0xf8] sm:$0xff]
    %v1388 = vld [vmem:[#allocation7 + $0x100] sm:$0xff]
    %v1389 = vld [vmem:[#allocation7 + $0x108] sm:$0xff]
    %v1390 = vld [vmem:[#allocation7 + $0x110] sm:$0xff]
    %v1391 = vld [vmem:[#allocation7 + $0x118] sm:$0xff]
    %v1392 = vld [vmem:[#allocation7 + $0x120] sm:$0xff]
    %v1393 = vld [vmem:[#allocation7 + $0x128] sm:$0xff]
    %v1394 = vld [vmem:[#allocation7 + $0x130] sm:$0xff]
    %v1395 = vld [vmem:[#allocation7 + $0x138] sm:$0xff]
    %v1396 = vld [vmem:[#allocation7 + $0x140] sm:$0xff]
    %v1397 = vld [vmem:[#allocation7 + $0x148] sm:$0xff]
    %v1398 = vld [vmem:[#allocation7 + $0x150] sm:$0xff]
    %v1399 = vld [vmem:[#allocation7 + $0x158] sm:$0xff]
    %v1400 = vld [vmem:[#allocation7 + $0x160] sm:$0xff]
    %v1401 = vld [vmem:[#allocation7 + $0x168] sm:$0xff]
    %v1402 = vld [vmem:[#allocation7 + $0x170] sm:$0xff]
    %v1403 = vld [vmem:[#allocation7 + $0x178] sm:$0xff]
    %s1404 = scalar_lea.vmem [#allocation7], 384
    %v1405 = vld [vmem:[%s1404] sm:$0xff]
    %v1406 = vld [vmem:[%s1404 + $0x8] sm:$0xff]
    %v1407 = vld [vmem:[%s1404 + $0x10] sm:$0xff]
    %v1408 = vld [vmem:[%s1404 + $0x18] sm:$0xff]
    %v1409 = vld [vmem:[%s1404 + $0x20] sm:$0xff]
    %v1410 = vld [vmem:[%s1404 + $0x28] sm:$0xff]
    %v1411 = vld [vmem:[%s1404 + $0x30] sm:$0xff]
    %v1412 = vld [vmem:[%s1404 + $0x38] sm:$0xff]
    %v1413 = vld [vmem:[%s1404 + $0x40] sm:$0xff]
    %v1414 = vld [vmem:[%s1404 + $0x48] sm:$0xff]
    %v1415 = vld [vmem:[%s1404 + $0x50] sm:$0xff]
    %v1416 = vld [vmem:[%s1404 + $0x58] sm:$0xff]
    %v1417 = vld [vmem:[%s1404 + $0x60] sm:$0xff]
    %v1418 = vld [vmem:[%s1404 + $0x68] sm:$0xff]
    %v1419 = vld [vmem:[%s1404 + $0x70] sm:$0xff]
    %v1420 = vld [vmem:[%s1404 + $0x78] sm:$0xff]
    %v1421 = vld [vmem:[%s1404 + $0x80] sm:$0xff]
    %v1422 = vld [vmem:[%s1404 + $0x88] sm:$0xff]
    %v1423 = vld [vmem:[%s1404 + $0x90] sm:$0xff]
    %v1424 = vld [vmem:[%s1404 + $0x98] sm:$0xff]
    %v1425 = vld [vmem:[%s1404 + $0xa0] sm:$0xff]
    %v1426 = vld [vmem:[%s1404 + $0xa8] sm:$0xff]
    %v1427 = vld [vmem:[%s1404 + $0xb0] sm:$0xff]
    %v1428 = vld [vmem:[%s1404 + $0xb8] sm:$0xff]
    %v1429 = vld [vmem:[%s1404 + $0xc0] sm:$0xff]
    %v1430 = vld [vmem:[%s1404 + $0xc8] sm:$0xff]
    %v1431 = vld [vmem:[%s1404 + $0xd0] sm:$0xff]
    %v1432 = vld [vmem:[%s1404 + $0xd8] sm:$0xff]
    %v1433 = vld [vmem:[%s1404 + $0xe0] sm:$0xff]
    %v1434 = vld [vmem:[%s1404 + $0xe8] sm:$0xff]
    %v1435 = vld [vmem:[%s1404 + $0xf0] sm:$0xff]
    %v1436 = vld [vmem:[%s1404 + $0xf8] sm:$0xff]
    %v1437 = vld [vmem:[%s1404 + $0x100] sm:$0xff]
    %v1438 = vld [vmem:[%s1404 + $0x108] sm:$0xff]
    %v1439 = vld [vmem:[%s1404 + $0x110] sm:$0xff]
    %v1440 = vld [vmem:[%s1404 + $0x118] sm:$0xff]
    %v1441 = vld [vmem:[%s1404 + $0x120] sm:$0xff]
    %v1442 = vld [vmem:[%s1404 + $0x128] sm:$0xff]
    %v1443 = vld [vmem:[%s1404 + $0x130] sm:$0xff]
    %v1444 = vld [vmem:[%s1404 + $0x138] sm:$0xff]
    %v1445 = vld [vmem:[%s1404 + $0x140] sm:$0xff]
    %v1446 = vld [vmem:[%s1404 + $0x148] sm:$0xff]
    %v1447 = vld [vmem:[%s1404 + $0x150] sm:$0xff]
    %v1448 = vld [vmem:[%s1404 + $0x158] sm:$0xff]
    %v1449 = vld [vmem:[%s1404 + $0x160] sm:$0xff]
    %v1450 = vld [vmem:[%s1404 + $0x168] sm:$0xff]
    %v1451 = vld [vmem:[%s1404 + $0x170] sm:$0xff]
    %v1452 = vld [vmem:[%s1404 + $0x178] sm:$0xff]
    %v1453 = vld [vmem:[%s8] sm:$0x7]
    %s1454 = scalar_lea.vmem %s8, 3
    %v1455 = vld [vmem:[%s1454] sm:$0x7]
    %v1456 = vld [vmem:[#allocation4] sm:$0xff]
    %s1457 = scalar_lea.vmem [#allocation4], 8
    %v1458 = vld [vmem:[%s1457] sm:$0xff]
    loop: start=0, step=1, limit=2
    $region50: #{encoder_forward.3} parent=1 // loop_pre_header
      _
    $region51: #{encoder_forward.3} parent=1 // loop_header
      %s1460 = sphi 0, %s1464
      %p1461 = scmp.ge.s32.totalorder %s1460, 2
      %v1465 = vphi %v1456, %v2700
      %v1466 = vphi %v1458, %v2871
    $region52: #{encoder_forward.3} parent=1 // loop_header_branch
      %1463 = sbr.rel (%p1461) target = $region56
    $region53: #{encoder_forward.3} parent=1 // loop_body
      %s1467 = smul.u32 %s1460, 4
      %s1468 = ssub.s32 7, %s1467
      %s1469 = smul.u32 %s1467, 3
      %s1470 = smul.addr %s1469, 8
      %s1471 = scalar_lea.vmem [#allocation2], %s1470
      %v1472 = vld [vmem:[%s1471] sm:$0xff]
      %v1473 = vld [vmem:[%s1471 + $0x8] sm:$0xff]
      %v1474 = vld [vmem:[%s1471 + $0x10] sm:$0xff]
      %v1476 = vlaneseq
      %v1477 = vshrl.u32 %v1476, 7
      %v1478 = vsub.s32 0, %v1477
      %v1479 = vrot.slane %v1453, %v1478
      %v1480 = vlaneseq
      %v1481 = vshrl.u32 %v1480, 7
      %v1482 = vsub.s32 1, %v1481
      %v1483 = vrot.slane %v1453, %v1482
      %v1484 = vlaneseq
      %v1485 = vshrl.u32 %v1484, 7
      %v1486 = vsub.s32 2, %v1485
      %v1487 = vrot.slane %v1453, %v1486
      %1491 = vmatprep.subr.mxu0 %v1402
      %1492 = vmatpush1.msra.mxu0 %v1401
      %1493 = vmatprep.subr.mxu0 %v1399
      %1494 = vmatpush1.msra.mxu0 %v1398
      %1495 = vmatprep.subr.mxu0 %v1396
      %1496 = vmatpush1.msra.mxu0 %v1395
      %1497 = vmatprep.subr.mxu0 %v1393
      %1498 = vmatpush1.msra.mxu0 %v1392
      %1499 = vmatprep.subr.mxu0 %v1390
      %1500 = vmatpush1.msra.mxu0 %v1389
      %1501 = vmatprep.subr.mxu0 %v1387
      %1502 = vmatpush1.msra.mxu0 %v1386
      %1503 = vmatprep.subr.mxu0 %v1384
      %1504 = vmatpush1.msra.mxu0 %v1383
      %1505 = vmatprep.subr.mxu0 %v1381
      %1506 = vmatpush1.msra.mxu0 %v1380
      %1507 = vmatprep.subr.mxu0 %v1378
      %1508 = vmatpush1.msra.mxu0 %v1377
      %1509 = vmatprep.subr.mxu0 %v1375
      %1510 = vmatpush1.msra.mxu0 %v1374
      %1511 = vmatprep.subr.mxu0 %v1372
      %1512 = vmatpush1.msra.mxu0 %v1371
      %1513 = vmatprep.subr.mxu0 %v1369
      %1514 = vmatpush1.msra.mxu0 %v1368
      %1515 = vmatprep.subr.mxu0 %v1366
      %1516 = vmatpush1.msra.mxu0 %v1365
      %1517 = vmatprep.subr.mxu0 %v1363
      %1518 = vmatpush1.msra.mxu0 %v1362
      %1519 = vmatprep.subr.mxu0 %v1360
      %1520 = vmatpush1.msra.mxu0 %v1359
      %1521 = vmatprep.subr.mxu0 %v1357
      %1522 = vmatpush1.msra.mxu0 %v1356
      %1523 = vmatprep.subr.mxu0 0.0
      %1524 = vmatpush2.msra.mxu0 0.0
      %1525 = vmatprep.subr.mxu0 0.0
      %1526 = vmatpush2.msra.mxu0 0.0
      %1527 = vmatprep.subr.mxu0 0.0
      %1528 = vmatpush2.msra.mxu0 0.0
      %1529 = vmatprep.subr.mxu0 0.0
      %1530 = vmatpush2.msra.mxu0 0.0
      %1531 = vmatprep.subr.mxu0 0.0
      %1532 = vmatpush2.msra.mxu0 0.0
      %1533 = vmatprep.subr.mxu0 0.0
      %1534 = vmatpush2.msra.mxu0 0.0
      %1535 = vmatprep.subr.mxu0 0.0
      %1536 = vmatpush2.msra.mxu0 0.0
      %1537 = vmatprep.subr.mxu0 0.0
      %1538 = vmatpush2.msra.mxu0 0.0
      %1539 = vmatprep.subr.mxu0 0.0
      %1540 = vmatpush2.msra.mxu0 0.0
      %1541 = vmatprep.subr.mxu0 0.0
      %1542 = vmatpush2.msra.mxu0 0.0
      %1543 = vmatprep.subr.mxu0 0.0
      %1544 = vmatpush2.msra.mxu0 0.0
      %1545 = vmatprep.subr.mxu0 0.0
      %1546 = vmatpush2.msra.mxu0 0.0
      %1547 = vmatprep.subr.mxu0 0.0
      %1548 = vmatpush2.msra.mxu0 0.0
      %1549 = vmatprep.subr.mxu0 0.0
      %1550 = vmatpush2.msra.mxu0 0.0
      %1551 = vmatprep.subr.mxu0 0.0
      %1552 = vmatpush2.msra.mxu0 0.0
      %1553 = vmatprep.subr.mxu0 0.0
      %1554 = vmatpush2.msra.mxu0 0.0
      %1555 = vmatprep.mubr.f32.mxu0 0.0
      %1556 = vmatmul.mubr.f32.gmra.mxu0 %v1465
      %v1557 = vpop.f32.mrf.mxu0
      %v1558 = vadd.f32 %v1479, %v1557
      %v1559 = vpop.f32.mrf.mxu0
      %v1560 = vadd.f32 %v1483, %v1559
      %1561 = vdwg.mxu0
      %1562 = vmatprep.subr.mxu0 0.0
      %1563 = vmatpush1.msra.mxu0 %v1403
      %1564 = vmatprep.subr.mxu0 0.0
      %1565 = vmatpush1.msra.mxu0 %v1400
      %1566 = vmatprep.subr.mxu0 0.0
      %1567 = vmatpush1.msra.mxu0 %v1397
      %1568 = vmatprep.subr.mxu0 0.0
      %1569 = vmatpush1.msra.mxu0 %v1394
      %1570 = vmatprep.subr.mxu0 0.0
      %1571 = vmatpush1.msra.mxu0 %v1391
      %1572 = vmatprep.subr.mxu0 0.0
      %1573 = vmatpush1.msra.mxu0 %v1388
      %1574 = vmatprep.subr.mxu0 0.0
      %1575 = vmatpush1.msra.mxu0 %v1385
      %1576 = vmatprep.subr.mxu0 0.0
      %1577 = vmatpush1.msra.mxu0 %v1382
      %1578 = vmatprep.subr.mxu0 0.0
      %1579 = vmatpush1.msra.mxu0 %v1379
      %1580 = vmatprep.subr.mxu0 0.0
      %1581 = vmatpush1.msra.mxu0 %v1376
      %1582 = vmatprep.subr.mxu0 0.0
      %1583 = vmatpush1.msra.mxu0 %v1373
      %1584 = vmatprep.subr.mxu0 0.0
      %1585 = vmatpush1.msra.mxu0 %v1370
      %1586 = vmatprep.subr.mxu0 0.0
      %1587 = vmatpush1.msra.mxu0 %v1367
      %1588 = vmatprep.subr.mxu0 0.0
      %1589 = vmatpush1.msra.mxu0 %v1364
      %1590 = vmatprep.subr.mxu0 0.0
      %1591 = vmatpush1.msra.mxu0 %v1361
      %1592 = vmatprep.subr.mxu0 0.0
      %1593 = vmatpush1.msra.mxu0 %v1358
      %1594 = vmatprep.subr.mxu0 0.0
      %1595 = vmatpush2.msra.mxu0 0.0
      %1596 = vmatprep.subr.mxu0 0.0
      %1597 = vmatpush2.msra.mxu0 0.0
      %1598 = vmatprep.subr.mxu0 0.0
      %1599 = vmatpush2.msra.mxu0 0.0
      %1600 = vmatprep.subr.mxu0 0.0
      %1601 = vmatpush2.msra.mxu0 0.0
      %1602 = vmatprep.subr.mxu0 0.0
      %1603 = vmatpush2.msra.mxu0 0.0
      %1604 = vmatprep.subr.mxu0 0.0
      %1605 = vmatpush2.msra.mxu0 0.0
      %1606 = vmatprep.subr.mxu0 0.0
      %1607 = vmatpush2.msra.mxu0 0.0
      %1608 = vmatprep.subr.mxu0 0.0
      %1609 = vmatpush2.msra.mxu0 0.0
      %1610 = vmatprep.subr.mxu0 0.0
      %1611 = vmatpush2.msra.mxu0 0.0
      %1612 = vmatprep.subr.mxu0 0.0
      %1613 = vmatpush2.msra.mxu0 0.0
      %1614 = vmatprep.subr.mxu0 0.0
      %1615 = vmatpush2.msra.mxu0 0.0
      %1616 = vmatprep.subr.mxu0 0.0
      %1617 = vmatpush2.msra.mxu0 0.0
      %1618 = vmatprep.subr.mxu0 0.0
      %1619 = vmatpush2.msra.mxu0 0.0
      %1620 = vmatprep.subr.mxu0 0.0
      %1621 = vmatpush2.msra.mxu0 0.0
      %1622 = vmatprep.subr.mxu0 0.0
      %1623 = vmatpush2.msra.mxu0 0.0
      %1624 = vmatprep.subr.mxu0 0.0
      %1625 = vmatpush2.msra.mxu0 0.0
      %1626 = vmatprep.mubr.f32.mxu0 0.0
      %1627 = vmatmul.mubr.f32.gmra.mxu0 %v1465
      %v1628 = vpop.f32.mrf.mxu0
      %v1629 = vadd.f32 %v1487, %v1628
      %v1630 = vpop.f32.mrf.mxu0
      %1631 = vdwg.mxu0
      %v1632 = vadd.f32 %v1472, %v1558
      %v1633 = vxor.u32 %v1632, 2147483648
      %v1634 = vmul.f32 %v1633, 1.442695
      %v1635 = vpow.pop %v1634
      %v1636 = vadd.f32 %v1635, 1.0
      %v1637 = vrcp.pop %v1636
      %v1638 = vmul.f32 1.0, %v1637
      %v1639 = vadd.f32 %v1473, %v1560
      %v1640 = vxor.u32 %v1639, 2147483648
      %v1641 = vmul.f32 %v1640, 1.442695
      %v1642 = vpow.pop %v1641
      %v1643 = vadd.f32 %v1642, 1.0
      %v1644 = vrcp.pop %v1643
      %v1645 = vmul.f32 1.0, %v1644
      %v1646 = vmul.f32 %v1638, %v1629
      %v1647 = vadd.f32 %v1474, %v1646
      %v1648 = vtanh.pop %v1647
      %v1649 = vsub.f32 1.0, %v1645
      %v1650 = vmul.f32 %v1649, %v1648
      %v1651 = vmul.f32 %v1645, %v1465
      %v1652 = vadd.f32 %v1650, %v1651
      %s1653 = smul.u32 %s1467, 8
      %s1654 = scalar_lea.vmem %s9, %s1653
      %1655 = vst [vmem:[%s1654] sm:$0xff] %v1652
      %s1656 = smul.u32 %s1468, 3
      %s1657 = smul.addr %s1656, 8
      %s1658 = scalar_lea.vmem [#allocation3], %s1657
      %v1659 = vld [vmem:[%s1658] sm:$0xff]
      %v1660 = vld [vmem:[%s1658 + $0x8] sm:$0xff]
      %v1661 = vld [vmem:[%s1658 + $0x10] sm:$0xff]
      %v1663 = vlaneseq
      %v1664 = vshrl.u32 %v1663, 7
      %v1665 = vsub.s32 0, %v1664
      %v1666 = vrot.slane %v1455, %v1665
      %v1667 = vlaneseq
      %v1668 = vshrl.u32 %v1667, 7
      %v1669 = vsub.s32 1, %v1668
      %v1670 = vrot.slane %v1455, %v1669
      %v1671 = vlaneseq
      %v1672 = vshrl.u32 %v1671, 7
      %v1673 = vsub.s32 2, %v1672
      %v1674 = vrot.slane %v1455, %v1673
      %1678 = vmatprep.subr.mxu0 %v1451
      %1679 = vmatpush1.msra.mxu0 %v1450
      %1680 = vmatprep.subr.mxu0 %v1448
      %1681 = vmatpush1.msra.mxu0 %v1447
      %1682 = vmatprep.subr.mxu0 %v1445
      %1683 = vmatpush1.msra.mxu0 %v1444
      %1684 = vmatprep.subr.mxu0 %v1442
      %1685 = vmatpush1.msra.mxu0 %v1441
      %1686 = vmatprep.subr.mxu0 %v1439
      %1687 = vmatpush1.msra.mxu0 %v1438
      %1688 = vmatprep.subr.mxu0 %v1436
      %1689 = vmatpush1.msra.mxu0 %v1435
      %1690 = vmatprep.subr.mxu0 %v1433
      %1691 = vmatpush1.msra.mxu0 %v1432
      %1692 = vmatprep.subr.mxu0 %v1430
      %1693 = vmatpush1.msra.mxu0 %v1429
      %1694 = vmatprep.subr.mxu0 %v1427
      %1695 = vmatpush1.msra.mxu0 %v1426
      %1696 = vmatprep.subr.mxu0 %v1424
      %1697 = vmatpush1.msra.mxu0 %v1423
      %1698 = vmatprep.subr.mxu0 %v1421
      %1699 = vmatpush1.msra.mxu0 %v1420
      %1700 = vmatprep.subr.mxu0 %v1418
      %1701 = vmatpush1.msra.mxu0 %v1417
      %1702 = vmatprep.subr.mxu0 %v1415
      %1703 = vmatpush1.msra.mxu0 %v1414
      %1704 = vmatprep.subr.mxu0 %v1412
      %1705 = vmatpush1.msra.mxu0 %v1411
      %1706 = vmatprep.subr.mxu0 %v1409
      %1707 = vmatpush1.msra.mxu0 %v1408
      %1708 = vmatprep.subr.mxu0 %v1406
      %1709 = vmatpush1.msra.mxu0 %v1405
      %1710 = vmatprep.subr.mxu0 0.0
      %1711 = vmatpush2.msra.mxu0 0.0
      %1712 = vmatprep.subr.mxu0 0.0
      %1713 = vmatpush2.msra.mxu0 0.0
      %1714 = vmatprep.subr.mxu0 0.0
      %1715 = vmatpush2.msra.mxu0 0.0
      %1716 = vmatprep.subr.mxu0 0.0
      %1717 = vmatpush2.msra.mxu0 0.0
      %1718 = vmatprep.subr.mxu0 0.0
      %1719 = vmatpush2.msra.mxu0 0.0
      %1720 = vmatprep.subr.mxu0 0.0
      %1721 = vmatpush2.msra.mxu0 0.0
      %1722 = vmatprep.subr.mxu0 0.0
      %1723 = vmatpush2.msra.mxu0 0.0
      %1724 = vmatprep.subr.mxu0 0.0
      %1725 = vmatpush2.msra.mxu0 0.0
      %1726 = vmatprep.subr.mxu0 0.0
      %1727 = vmatpush2.msra.mxu0 0.0
      %1728 = vmatprep.subr.mxu0 0.0
      %1729 = vmatpush2.msra.mxu0 0.0
      %1730 = vmatprep.subr.mxu0 0.0
      %1731 = vmatpush2.msra.mxu0 0.0
      %1732 = vmatprep.subr.mxu0 0.0
      %1733 = vmatpush2.msra.mxu0 0.0
      %1734 = vmatprep.subr.mxu0 0.0
      %1735 = vmatpush2.msra.mxu0 0.0
      %1736 = vmatprep.subr.mxu0 0.0
      %1737 = vmatpush2.msra.mxu0 0.0
      %1738 = vmatprep.subr.mxu0 0.0
      %1739 = vmatpush2.msra.mxu0 0.0
      %1740 = vmatprep.subr.mxu0 0.0
      %1741 = vmatpush2.msra.mxu0 0.0
      %1742 = vmatprep.mubr.f32.mxu0 0.0
      %1743 = vmatmul.mubr.f32.gmra.mxu0 %v1466
      %v1744 = vpop.f32.mrf.mxu0
      %v1745 = vadd.f32 %v1666, %v1744
      %v1746 = vpop.f32.mrf.mxu0
      %v1747 = vadd.f32 %v1670, %v1746
      %1748 = vdwg.mxu0
      %1749 = vmatprep.subr.mxu0 0.0
      %1750 = vmatpush1.msra.mxu0 %v1452
      %1751 = vmatprep.subr.mxu0 0.0
      %1752 = vmatpush1.msra.mxu0 %v1449
      %1753 = vmatprep.subr.mxu0 0.0
      %1754 = vmatpush1.msra.mxu0 %v1446
      %1755 = vmatprep.subr.mxu0 0.0
      %1756 = vmatpush1.msra.mxu0 %v1443
      %1757 = vmatprep.subr.mxu0 0.0
      %1758 = vmatpush1.msra.mxu0 %v1440
      %1759 = vmatprep.subr.mxu0 0.0
      %1760 = vmatpush1.msra.mxu0 %v1437
      %1761 = vmatprep.subr.mxu0 0.0
      %1762 = vmatpush1.msra.mxu0 %v1434
      %1763 = vmatprep.subr.mxu0 0.0
      %1764 = vmatpush1.msra.mxu0 %v1431
      %1765 = vmatprep.subr.mxu0 0.0
      %1766 = vmatpush1.msra.mxu0 %v1428
      %1767 = vmatprep.subr.mxu0 0.0
      %1768 = vmatpush1.msra.mxu0 %v1425
      %1769 = vmatprep.subr.mxu0 0.0
      %1770 = vmatpush1.msra.mxu0 %v1422
      %1771 = vmatprep.subr.mxu0 0.0
      %1772 = vmatpush1.msra.mxu0 %v1419
      %1773 = vmatprep.subr.mxu0 0.0
      %1774 = vmatpush1.msra.mxu0 %v1416
      %1775 = vmatprep.subr.mxu0 0.0
      %1776 = vmatpush1.msra.mxu0 %v1413
      %1777 = vmatprep.subr.mxu0 0.0
      %1778 = vmatpush1.msra.mxu0 %v1410
      %1779 = vmatprep.subr.mxu0 0.0
      %1780 = vmatpush1.msra.mxu0 %v1407
      %1781 = vmatprep.subr.mxu0 0.0
      %1782 = vmatpush2.msra.mxu0 0.0
      %1783 = vmatprep.subr.mxu0 0.0
      %1784 = vmatpush2.msra.mxu0 0.0
      %1785 = vmatprep.subr.mxu0 0.0
      %1786 = vmatpush2.msra.mxu0 0.0
      %1787 = vmatprep.subr.mxu0 0.0
      %1788 = vmatpush2.msra.mxu0 0.0
      %1789 = vmatprep.subr.mxu0 0.0
      %1790 = vmatpush2.msra.mxu0 0.0
      %1791 = vmatprep.subr.mxu0 0.0
      %1792 = vmatpush2.msra.mxu0 0.0
      %1793 = vmatprep.subr.mxu0 0.0
      %1794 = vmatpush2.msra.mxu0 0.0
      %1795 = vmatprep.subr.mxu0 0.0
      %1796 = vmatpush2.msra.mxu0 0.0
      %1797 = vmatprep.subr.mxu0 0.0
      %1798 = vmatpush2.msra.mxu0 0.0
      %1799 = vmatprep.subr.mxu0 0.0
      %1800 = vmatpush2.msra.mxu0 0.0
      %1801 = vmatprep.subr.mxu0 0.0
      %1802 = vmatpush2.msra.mxu0 0.0
      %1803 = vmatprep.subr.mxu0 0.0
      %1804 = vmatpush2.msra.mxu0 0.0
      %1805 = vmatprep.subr.mxu0 0.0
      %1806 = vmatpush2.msra.mxu0 0.0
      %1807 = vmatprep.subr.mxu0 0.0
      %1808 = vmatpush2.msra.mxu0 0.0
      %1809 = vmatprep.subr.mxu0 0.0
      %1810 = vmatpush2.msra.mxu0 0.0
      %1811 = vmatprep.subr.mxu0 0.0
      %1812 = vmatpush2.msra.mxu0 0.0
      %1813 = vmatprep.mubr.f32.mxu0 0.0
      %1814 = vmatmul.mubr.f32.gmra.mxu0 %v1466
      %v1815 = vpop.f32.mrf.mxu0
      %v1816 = vadd.f32 %v1674, %v1815
      %v1817 = vpop.f32.mrf.mxu0
      %1818 = vdwg.mxu0
      %v1819 = vadd.f32 %v1659, %v1745
      %v1820 = vxor.u32 %v1819, 2147483648
      %v1821 = vmul.f32 %v1820, 1.442695
      %v1822 = vpow.pop %v1821
      %v1823 = vadd.f32 %v1822, 1.0
      %v1824 = vrcp.pop %v1823
      %v1825 = vmul.f32 1.0, %v1824
      %v1826 = vadd.f32 %v1660, %v1747
      %v1827 = vxor.u32 %v1826, 2147483648
      %v1828 = vmul.f32 %v1827, 1.442695
      %v1829 = vpow.pop %v1828
      %v1830 = vadd.f32 %v1829, 1.0
      %v1831 = vrcp.pop %v1830
      %v1832 = vmul.f32 1.0, %v1831
      %v1833 = vmul.f32 %v1825, %v1816
      %v1834 = vadd.f32 %v1661, %v1833
      %v1835 = vtanh.pop %v1834
      %v1836 = vsub.f32 1.0, %v1832
      %v1837 = vmul.f32 %v1836, %v1835
      %v1838 = vmul.f32 %v1832, %v1466
      %v1839 = vadd.f32 %v1837, %v1838
      %s1840 = smul.u32 %s1468, 8
      %s1841 = scalar_lea.vmem %s118, %s1840
      %1842 = vst [vmem:[%s1841] sm:$0xff] %v1839
      %s1843 = sadd.s32 %s1467, 1
      %s1844 = ssub.s32 6, %s1467
      %s1845 = smul.u32 %s1843, 3
      %s1846 = smul.addr %s1845, 8
      %s1847 = scalar_lea.vmem [#allocation2], %s1846
      %v1848 = vld [vmem:[%s1847] sm:$0xff]
      %v1849 = vld [vmem:[%s1847 + $0x8] sm:$0xff]
      %v1850 = vld [vmem:[%s1847 + $0x10] sm:$0xff]
      %1851 = vmatprep.subr.mxu0 %v1402
      %1852 = vmatpush1.msra.mxu0 %v1401
      %1853 = vmatprep.subr.mxu0 %v1399
      %1854 = vmatpush1.msra.mxu0 %v1398
      %1855 = vmatprep.subr.mxu0 %v1396
      %1856 = vmatpush1.msra.mxu0 %v1395
      %1857 = vmatprep.subr.mxu0 %v1393
      %1858 = vmatpush1.msra.mxu0 %v1392
      %1859 = vmatprep.subr.mxu0 %v1390
      %1860 = vmatpush1.msra.mxu0 %v1389
      %1861 = vmatprep.subr.mxu0 %v1387
      %1862 = vmatpush1.msra.mxu0 %v1386
      %1863 = vmatprep.subr.mxu0 %v1384
      %1864 = vmatpush1.msra.mxu0 %v1383
      %1865 = vmatprep.subr.mxu0 %v1381
      %1866 = vmatpush1.msra.mxu0 %v1380
      %1867 = vmatprep.subr.mxu0 %v1378
      %1868 = vmatpush1.msra.mxu0 %v1377
      %1869 = vmatprep.subr.mxu0 %v1375
      %1870 = vmatpush1.msra.mxu0 %v1374
      %1871 = vmatprep.subr.mxu0 %v1372
      %1872 = vmatpush1.msra.mxu0 %v1371
      %1873 = vmatprep.subr.mxu0 %v1369
      %1874 = vmatpush1.msra.mxu0 %v1368
      %1875 = vmatprep.subr.mxu0 %v1366
      %1876 = vmatpush1.msra.mxu0 %v1365
      %1877 = vmatprep.subr.mxu0 %v1363
      %1878 = vmatpush1.msra.mxu0 %v1362
      %1879 = vmatprep.subr.mxu0 %v1360
      %1880 = vmatpush1.msra.mxu0 %v1359
      %1881 = vmatprep.subr.mxu0 %v1357
      %1882 = vmatpush1.msra.mxu0 %v1356
      %1883 = vmatprep.subr.mxu0 0.0
      %1884 = vmatpush2.msra.mxu0 0.0
      %1885 = vmatprep.subr.mxu0 0.0
      %1886 = vmatpush2.msra.mxu0 0.0
      %1887 = vmatprep.subr.mxu0 0.0
      %1888 = vmatpush2.msra.mxu0 0.0
      %1889 = vmatprep.subr.mxu0 0.0
      %1890 = vmatpush2.msra.mxu0 0.0
      %1891 = vmatprep.subr.mxu0 0.0
      %1892 = vmatpush2.msra.mxu0 0.0
      %1893 = vmatprep.subr.mxu0 0.0
      %1894 = vmatpush2.msra.mxu0 0.0
      %1895 = vmatprep.subr.mxu0 0.0
      %1896 = vmatpush2.msra.mxu0 0.0
      %1897 = vmatprep.subr.mxu0 0.0
      %1898 = vmatpush2.msra.mxu0 0.0
      %1899 = vmatprep.subr.mxu0 0.0
      %1900 = vmatpush2.msra.mxu0 0.0
      %1901 = vmatprep.subr.mxu0 0.0
      %1902 = vmatpush2.msra.mxu0 0.0
      %1903 = vmatprep.subr.mxu0 0.0
      %1904 = vmatpush2.msra.mxu0 0.0
      %1905 = vmatprep.subr.mxu0 0.0
      %1906 = vmatpush2.msra.mxu0 0.0
      %1907 = vmatprep.subr.mxu0 0.0
      %1908 = vmatpush2.msra.mxu0 0.0
      %1909 = vmatprep.subr.mxu0 0.0
      %1910 = vmatpush2.msra.mxu0 0.0
      %1911 = vmatprep.subr.mxu0 0.0
      %1912 = vmatpush2.msra.mxu0 0.0
      %1913 = vmatprep.subr.mxu0 0.0
      %1914 = vmatpush2.msra.mxu0 0.0
      %1915 = vmatprep.mubr.f32.mxu0 0.0
      %1916 = vmatmul.mubr.f32.gmra.mxu0 %v1652
      %v1917 = vpop.f32.mrf.mxu0
      %v1918 = vadd.f32 %v1479, %v1917
      %v1919 = vpop.f32.mrf.mxu0
      %v1920 = vadd.f32 %v1483, %v1919
      %1921 = vdwg.mxu0
      %1922 = vmatprep.subr.mxu0 0.0
      %1923 = vmatpush1.msra.mxu0 %v1403
      %1924 = vmatprep.subr.mxu0 0.0
      %1925 = vmatpush1.msra.mxu0 %v1400
      %1926 = vmatprep.subr.mxu0 0.0
      %1927 = vmatpush1.msra.mxu0 %v1397
      %1928 = vmatprep.subr.mxu0 0.0
      %1929 = vmatpush1.msra.mxu0 %v1394
      %1930 = vmatprep.subr.mxu0 0.0
      %1931 = vmatpush1.msra.mxu0 %v1391
      %1932 = vmatprep.subr.mxu0 0.0
      %1933 = vmatpush1.msra.mxu0 %v1388
      %1934 = vmatprep.subr.mxu0 0.0
      %1935 = vmatpush1.msra.mxu0 %v1385
      %1936 = vmatprep.subr.mxu0 0.0
      %1937 = vmatpush1.msra.mxu0 %v1382
      %1938 = vmatprep.subr.mxu0 0.0
      %1939 = vmatpush1.msra.mxu0 %v1379
      %1940 = vmatprep.subr.mxu0 0.0
      %1941 = vmatpush1.msra.mxu0 %v1376
      %1942 = vmatprep.subr.mxu0 0.0
      %1943 = vmatpush1.msra.mxu0 %v1373
      %1944 = vmatprep.subr.mxu0 0.0
      %1945 = vmatpush1.msra.mxu0 %v1370
      %1946 = vmatprep.subr.mxu0 0.0
      %1947 = vmatpush1.msra.mxu0 %v1367
      %1948 = vmatprep.subr.mxu0 0.0
      %1949 = vmatpush1.msra.mxu0 %v1364
      %1950 = vmatprep.subr.mxu0 0.0
      %1951 = vmatpush1.msra.mxu0 %v1361
      %1952 = vmatprep.subr.mxu0 0.0
      %1953 = vmatpush1.msra.mxu0 %v1358
      %1954 = vmatprep.subr.mxu0 0.0
      %1955 = vmatpush2.msra.mxu0 0.0
      %1956 = vmatprep.subr.mxu0 0.0
      %1957 = vmatpush2.msra.mxu0 0.0
      %1958 = vmatprep.subr.mxu0 0.0
      %1959 = vmatpush2.msra.mxu0 0.0
      %1960 = vmatprep.subr.mxu0 0.0
      %1961 = vmatpush2.msra.mxu0 0.0
      %1962 = vmatprep.subr.mxu0 0.0
      %1963 = vmatpush2.msra.mxu0 0.0
      %1964 = vmatprep.subr.mxu0 0.0
      %1965 = vmatpush2.msra.mxu0 0.0
      %1966 = vmatprep.subr.mxu0 0.0
      %1967 = vmatpush2.msra.mxu0 0.0
      %1968 = vmatprep.subr.mxu0 0.0
      %1969 = vmatpush2.msra.mxu0 0.0
      %1970 = vmatprep.subr.mxu0 0.0
      %1971 = vmatpush2.msra.mxu0 0.0
      %1972 = vmatprep.subr.mxu0 0.0
      %1973 = vmatpush2.msra.mxu0 0.0
      %1974 = vmatprep.subr.mxu0 0.0
      %1975 = vmatpush2.msra.mxu0 0.0
      %1976 = vmatprep.subr.mxu0 0.0
      %1977 = vmatpush2.msra.mxu0 0.0
      %1978 = vmatprep.subr.mxu0 0.0
      %1979 = vmatpush2.msra.mxu0 0.0
      %1980 = vmatprep.subr.mxu0 0.0
      %1981 = vmatpush2.msra.mxu0 0.0
      %1982 = vmatprep.subr.mxu0 0.0
      %1983 = vmatpush2.msra.mxu0 0.0
      %1984 = vmatprep.subr.mxu0 0.0
      %1985 = vmatpush2.msra.mxu0 0.0
      %1986 = vmatprep.mubr.f32.mxu0 0.0
      %1987 = vmatmul.mubr.f32.gmra.mxu0 %v1652
      %v1988 = vpop.f32.mrf.mxu0
      %v1989 = vadd.f32 %v1487, %v1988
      %v1990 = vpop.f32.mrf.mxu0
      %1991 = vdwg.mxu0
      %v1992 = vadd.f32 %v1848, %v1918
      %v1993 = vxor.u32 %v1992, 2147483648
      %v1994 = vmul.f32 %v1993, 1.442695
      %v1995 = vpow.pop %v1994
      %v1996 = vadd.f32 %v1995, 1.0
      %v1997 = vrcp.pop %v1996
      %v1998 = vmul.f32 1.0, %v1997
      %v1999 = vadd.f32 %v1849, %v1920
      %v2000 = vxor.u32 %v1999, 2147483648
      %v2001 = vmul.f32 %v2000, 1.442695
      %v2002 = vpow.pop %v2001
      %v2003 = vadd.f32 %v2002, 1.0
      %v2004 = vrcp.pop %v2003
      %v2005 = vmul.f32 1.0, %v2004
      %v2006 = vmul.f32 %v1998, %v1989
      %v2007 = vadd.f32 %v1850, %v2006
      %v2008 = vtanh.pop %v2007
      %v2009 = vsub.f32 1.0, %v2005
      %v2010 = vmul.f32 %v2009, %v2008
      %v2011 = vmul.f32 %v2005, %v1652
      %v2012 = vadd.f32 %v2010, %v2011
      %s2013 = smul.u32 %s1843, 8
      %s2014 = scalar_lea.vmem %s9, %s2013
      %2015 = vst [vmem:[%s2014] sm:$0xff] %v2012
      %s2016 = smul.u32 %s1844, 3
      %s2017 = smul.addr %s2016, 8
      %s2018 = scalar_lea.vmem [#allocation3], %s2017
      %v2019 = vld [vmem:[%s2018] sm:$0xff]
      %v2020 = vld [vmem:[%s2018 + $0x8] sm:$0xff]
      %v2021 = vld [vmem:[%s2018 + $0x10] sm:$0xff]
      %2022 = vmatprep.subr.mxu0 %v1451
      %2023 = vmatpush1.msra.mxu0 %v1450
      %2024 = vmatprep.subr.mxu0 %v1448
      %2025 = vmatpush1.msra.mxu0 %v1447
      %2026 = vmatprep.subr.mxu0 %v1445
      %2027 = vmatpush1.msra.mxu0 %v1444
      %2028 = vmatprep.subr.mxu0 %v1442
      %2029 = vmatpush1.msra.mxu0 %v1441
      %2030 = vmatprep.subr.mxu0 %v1439
      %2031 = vmatpush1.msra.mxu0 %v1438
      %2032 = vmatprep.subr.mxu0 %v1436
      %2033 = vmatpush1.msra.mxu0 %v1435
      %2034 = vmatprep.subr.mxu0 %v1433
      %2035 = vmatpush1.msra.mxu0 %v1432
      %2036 = vmatprep.subr.mxu0 %v1430
      %2037 = vmatpush1.msra.mxu0 %v1429
      %2038 = vmatprep.subr.mxu0 %v1427
      %2039 = vmatpush1.msra.mxu0 %v1426
      %2040 = vmatprep.subr.mxu0 %v1424
      %2041 = vmatpush1.msra.mxu0 %v1423
      %2042 = vmatprep.subr.mxu0 %v1421
      %2043 = vmatpush1.msra.mxu0 %v1420
      %2044 = vmatprep.subr.mxu0 %v1418
      %2045 = vmatpush1.msra.mxu0 %v1417
      %2046 = vmatprep.subr.mxu0 %v1415
      %2047 = vmatpush1.msra.mxu0 %v1414
      %2048 = vmatprep.subr.mxu0 %v1412
      %2049 = vmatpush1.msra.mxu0 %v1411
      %2050 = vmatprep.subr.mxu0 %v1409
      %2051 = vmatpush1.msra.mxu0 %v1408
      %2052 = vmatprep.subr.mxu0 %v1406
      %2053 = vmatpush1.msra.mxu0 %v1405
      %2054 = vmatprep.subr.mxu0 0.0
      %2055 = vmatpush2.msra.mxu0 0.0
      %2056 = vmatprep.subr.mxu0 0.0
      %2057 = vmatpush2.msra.mxu0 0.0
      %2058 = vmatprep.subr.mxu0 0.0
      %2059 = vmatpush2.msra.mxu0 0.0
      %2060 = vmatprep.subr.mxu0 0.0
      %2061 = vmatpush2.msra.mxu0 0.0
      %2062 = vmatprep.subr.mxu0 0.0
      %2063 = vmatpush2.msra.mxu0 0.0
      %2064 = vmatprep.subr.mxu0 0.0
      %2065 = vmatpush2.msra.mxu0 0.0
      %2066 = vmatprep.subr.mxu0 0.0
      %2067 = vmatpush2.msra.mxu0 0.0
      %2068 = vmatprep.subr.mxu0 0.0
      %2069 = vmatpush2.msra.mxu0 0.0
      %2070 = vmatprep.subr.mxu0 0.0
      %2071 = vmatpush2.msra.mxu0 0.0
      %2072 = vmatprep.subr.mxu0 0.0
      %2073 = vmatpush2.msra.mxu0 0.0
      %2074 = vmatprep.subr.mxu0 0.0
      %2075 = vmatpush2.msra.mxu0 0.0
      %2076 = vmatprep.subr.mxu0 0.0
      %2077 = vmatpush2.msra.mxu0 0.0
      %2078 = vmatprep.subr.mxu0 0.0
      %2079 = vmatpush2.msra.mxu0 0.0
      %2080 = vmatprep.subr.mxu0 0.0
      %2081 = vmatpush2.msra.mxu0 0.0
      %2082 = vmatprep.subr.mxu0 0.0
      %2083 = vmatpush2.msra.mxu0 0.0
      %2084 = vmatprep.subr.mxu0 0.0
      %2085 = vmatpush2.msra.mxu0 0.0
      %2086 = vmatprep.mubr.f32.mxu0 0.0
      %2087 = vmatmul.mubr.f32.gmra.mxu0 %v1839
      %v2088 = vpop.f32.mrf.mxu0
      %v2089 = vadd.f32 %v1666, %v2088
      %v2090 = vpop.f32.mrf.mxu0
      %v2091 = vadd.f32 %v1670, %v2090
      %2092 = vdwg.mxu0
      %2093 = vmatprep.subr.mxu0 0.0
      %2094 = vmatpush1.msra.mxu0 %v1452
      %2095 = vmatprep.subr.mxu0 0.0
      %2096 = vmatpush1.msra.mxu0 %v1449
      %2097 = vmatprep.subr.mxu0 0.0
      %2098 = vmatpush1.msra.mxu0 %v1446
      %2099 = vmatprep.subr.mxu0 0.0
      %2100 = vmatpush1.msra.mxu0 %v1443
      %2101 = vmatprep.subr.mxu0 0.0
      %2102 = vmatpush1.msra.mxu0 %v1440
      %2103 = vmatprep.subr.mxu0 0.0
      %2104 = vmatpush1.msra.mxu0 %v1437
      %2105 = vmatprep.subr.mxu0 0.0
      %2106 = vmatpush1.msra.mxu0 %v1434
      %2107 = vmatprep.subr.mxu0 0.0
      %2108 = vmatpush1.msra.mxu0 %v1431
      %2109 = vmatprep.subr.mxu0 0.0
      %2110 = vmatpush1.msra.mxu0 %v1428
      %2111 = vmatprep.subr.mxu0 0.0
      %2112 = vmatpush1.msra.mxu0 %v1425
      %2113 = vmatprep.subr.mxu0 0.0
      %2114 = vmatpush1.msra.mxu0 %v1422
      %2115 = vmatprep.subr.mxu0 0.0
      %2116 = vmatpush1.msra.mxu0 %v1419
      %2117 = vmatprep.subr.mxu0 0.0
      %2118 = vmatpush1.msra.mxu0 %v1416
      %2119 = vmatprep.subr.mxu0 0.0
      %2120 = vmatpush1.msra.mxu0 %v1413
      %2121 = vmatprep.subr.mxu0 0.0
      %2122 = vmatpush1.msra.mxu0 %v1410
      %2123 = vmatprep.subr.mxu0 0.0
      %2124 = vmatpush1.msra.mxu0 %v1407
      %2125 = vmatprep.subr.mxu0 0.0
      %2126 = vmatpush2.msra.mxu0 0.0
      %2127 = vmatprep.subr.mxu0 0.0
      %2128 = vmatpush2.msra.mxu0 0.0
      %2129 = vmatprep.subr.mxu0 0.0
      %2130 = vmatpush2.msra.mxu0 0.0
      %2131 = vmatprep.subr.mxu0 0.0
      %2132 = vmatpush2.msra.mxu0 0.0
      %2133 = vmatprep.subr.mxu0 0.0
      %2134 = vmatpush2.msra.mxu0 0.0
      %2135 = vmatprep.subr.mxu0 0.0
      %2136 = vmatpush2.msra.mxu0 0.0
      %2137 = vmatprep.subr.mxu0 0.0
      %2138 = vmatpush2.msra.mxu0 0.0
      %2139 = vmatprep.subr.mxu0 0.0
      %2140 = vmatpush2.msra.mxu0 0.0
      %2141 = vmatprep.subr.mxu0 0.0
      %2142 = vmatpush2.msra.mxu0 0.0
      %2143 = vmatprep.subr.mxu0 0.0
      %2144 = vmatpush2.msra.mxu0 0.0
      %2145 = vmatprep.subr.mxu0 0.0
      %2146 = vmatpush2.msra.mxu0 0.0
      %2147 = vmatprep.subr.mxu0 0.0
      %2148 = vmatpush2.msra.mxu0 0.0
      %2149 = vmatprep.subr.mxu0 0.0
      %2150 = vmatpush2.msra.mxu0 0.0
      %2151 = vmatprep.subr.mxu0 0.0
      %2152 = vmatpush2.msra.mxu0 0.0
      %2153 = vmatprep.subr.mxu0 0.0
      %2154 = vmatpush2.msra.mxu0 0.0
      %2155 = vmatprep.subr.mxu0 0.0
      %2156 = vmatpush2.msra.mxu0 0.0
      %2157 = vmatprep.mubr.f32.mxu0 0.0
      %2158 = vmatmul.mubr.f32.gmra.mxu0 %v1839
      %v2159 = vpop.f32.mrf.mxu0
      %v2160 = vadd.f32 %v1674, %v2159
      %v2161 = vpop.f32.mrf.mxu0
      %2162 = vdwg.mxu0
      %v2163 = vadd.f32 %v2019, %v2089
      %v2164 = vxor.u32 %v2163, 2147483648
      %v2165 = vmul.f32 %v2164, 1.442695
      %v2166 = vpow.pop %v2165
      %v2167 = vadd.f32 %v2166, 1.0
      %v2168 = vrcp.pop %v2167
      %v2169 = vmul.f32 1.0, %v2168
      %v2170 = vadd.f32 %v2020, %v2091
      %v2171 = vxor.u32 %v2170, 2147483648
      %v2172 = vmul.f32 %v2171, 1.442695
      %v2173 = vpow.pop %v2172
      %v2174 = vadd.f32 %v2173, 1.0
      %v2175 = vrcp.pop %v2174
      %v2176 = vmul.f32 1.0, %v2175
      %v2177 = vmul.f32 %v2169, %v2160
      %v2178 = vadd.f32 %v2021, %v2177
      %v2179 = vtanh.pop %v2178
      %v2180 = vsub.f32 1.0, %v2176
      %v2181 = vmul.f32 %v2180, %v2179
      %v2182 = vmul.f32 %v2176, %v1839
      %v2183 = vadd.f32 %v2181, %v2182
      %s2184 = smul.u32 %s1844, 8
      %s2185 = scalar_lea.vmem %s118, %s2184
      %2186 = vst [vmem:[%s2185] sm:$0xff] %v2183
      %s2187 = sadd.s32 %s1467, 2
      %s2188 = ssub.s32 5, %s1467
      %s2189 = smul.u32 %s2187, 3
      %s2190 = smul.addr %s2189, 8
      %s2191 = scalar_lea.vmem [#allocation2], %s2190
      %v2192 = vld [vmem:[%s2191] sm:$0xff]
      %v2193 = vld [vmem:[%s2191 + $0x8] sm:$0xff]
      %v2194 = vld [vmem:[%s2191 + $0x10] sm:$0xff]
      %2195 = vmatprep.subr.mxu0 %v1402
      %2196 = vmatpush1.msra.mxu0 %v1401
      %2197 = vmatprep.subr.mxu0 %v1399
      %2198 = vmatpush1.msra.mxu0 %v1398
      %2199 = vmatprep.subr.mxu0 %v1396
      %2200 = vmatpush1.msra.mxu0 %v1395
      %2201 = vmatprep.subr.mxu0 %v1393
      %2202 = vmatpush1.msra.mxu0 %v1392
      %2203 = vmatprep.subr.mxu0 %v1390
      %2204 = vmatpush1.msra.mxu0 %v1389
      %2205 = vmatprep.subr.mxu0 %v1387
      %2206 = vmatpush1.msra.mxu0 %v1386
      %2207 = vmatprep.subr.mxu0 %v1384
      %2208 = vmatpush1.msra.mxu0 %v1383
      %2209 = vmatprep.subr.mxu0 %v1381
      %2210 = vmatpush1.msra.mxu0 %v1380
      %2211 = vmatprep.subr.mxu0 %v1378
      %2212 = vmatpush1.msra.mxu0 %v1377
      %2213 = vmatprep.subr.mxu0 %v1375
      %2214 = vmatpush1.msra.mxu0 %v1374
      %2215 = vmatprep.subr.mxu0 %v1372
      %2216 = vmatpush1.msra.mxu0 %v1371
      %2217 = vmatprep.subr.mxu0 %v1369
      %2218 = vmatpush1.msra.mxu0 %v1368
      %2219 = vmatprep.subr.mxu0 %v1366
      %2220 = vmatpush1.msra.mxu0 %v1365
      %2221 = vmatprep.subr.mxu0 %v1363
      %2222 = vmatpush1.msra.mxu0 %v1362
      %2223 = vmatprep.subr.mxu0 %v1360
      %2224 = vmatpush1.msra.mxu0 %v1359
      %2225 = vmatprep.subr.mxu0 %v1357
      %2226 = vmatpush1.msra.mxu0 %v1356
      %2227 = vmatprep.subr.mxu0 0.0
      %2228 = vmatpush2.msra.mxu0 0.0
      %2229 = vmatprep.subr.mxu0 0.0
      %2230 = vmatpush2.msra.mxu0 0.0
      %2231 = vmatprep.subr.mxu0 0.0
      %2232 = vmatpush2.msra.mxu0 0.0
      %2233 = vmatprep.subr.mxu0 0.0
      %2234 = vmatpush2.msra.mxu0 0.0
      %2235 = vmatprep.subr.mxu0 0.0
      %2236 = vmatpush2.msra.mxu0 0.0
      %2237 = vmatprep.subr.mxu0 0.0
      %2238 = vmatpush2.msra.mxu0 0.0
      %2239 = vmatprep.subr.mxu0 0.0
      %2240 = vmatpush2.msra.mxu0 0.0
      %2241 = vmatprep.subr.mxu0 0.0
      %2242 = vmatpush2.msra.mxu0 0.0
      %2243 = vmatprep.subr.mxu0 0.0
      %2244 = vmatpush2.msra.mxu0 0.0
      %2245 = vmatprep.subr.mxu0 0.0
      %2246 = vmatpush2.msra.mxu0 0.0
      %2247 = vmatprep.subr.mxu0 0.0
      %2248 = vmatpush2.msra.mxu0 0.0
      %2249 = vmatprep.subr.mxu0 0.0
      %2250 = vmatpush2.msra.mxu0 0.0
      %2251 = vmatprep.subr.mxu0 0.0
      %2252 = vmatpush2.msra.mxu0 0.0
      %2253 = vmatprep.subr.mxu0 0.0
      %2254 = vmatpush2.msra.mxu0 0.0
      %2255 = vmatprep.subr.mxu0 0.0
      %2256 = vmatpush2.msra.mxu0 0.0
      %2257 = vmatprep.subr.mxu0 0.0
      %2258 = vmatpush2.msra.mxu0 0.0
      %2259 = vmatprep.mubr.f32.mxu0 0.0
      %2260 = vmatmul.mubr.f32.gmra.mxu0 %v2012
      %v2261 = vpop.f32.mrf.mxu0
      %v2262 = vadd.f32 %v1479, %v2261
      %v2263 = vpop.f32.mrf.mxu0
      %v2264 = vadd.f32 %v1483, %v2263
      %2265 = vdwg.mxu0
      %2266 = vmatprep.subr.mxu0 0.0
      %2267 = vmatpush1.msra.mxu0 %v1403
      %2268 = vmatprep.subr.mxu0 0.0
      %2269 = vmatpush1.msra.mxu0 %v1400
      %2270 = vmatprep.subr.mxu0 0.0
      %2271 = vmatpush1.msra.mxu0 %v1397
      %2272 = vmatprep.subr.mxu0 0.0
      %2273 = vmatpush1.msra.mxu0 %v1394
      %2274 = vmatprep.subr.mxu0 0.0
      %2275 = vmatpush1.msra.mxu0 %v1391
      %2276 = vmatprep.subr.mxu0 0.0
      %2277 = vmatpush1.msra.mxu0 %v1388
      %2278 = vmatprep.subr.mxu0 0.0
      %2279 = vmatpush1.msra.mxu0 %v1385
      %2280 = vmatprep.subr.mxu0 0.0
      %2281 = vmatpush1.msra.mxu0 %v1382
      %2282 = vmatprep.subr.mxu0 0.0
      %2283 = vmatpush1.msra.mxu0 %v1379
      %2284 = vmatprep.subr.mxu0 0.0
      %2285 = vmatpush1.msra.mxu0 %v1376
      %2286 = vmatprep.subr.mxu0 0.0
      %2287 = vmatpush1.msra.mxu0 %v1373
      %2288 = vmatprep.subr.mxu0 0.0
      %2289 = vmatpush1.msra.mxu0 %v1370
      %2290 = vmatprep.subr.mxu0 0.0
      %2291 = vmatpush1.msra.mxu0 %v1367
      %2292 = vmatprep.subr.mxu0 0.0
      %2293 = vmatpush1.msra.mxu0 %v1364
      %2294 = vmatprep.subr.mxu0 0.0
      %2295 = vmatpush1.msra.mxu0 %v1361
      %2296 = vmatprep.subr.mxu0 0.0
      %2297 = vmatpush1.msra.mxu0 %v1358
      %2298 = vmatprep.subr.mxu0 0.0
      %2299 = vmatpush2.msra.mxu0 0.0
      %2300 = vmatprep.subr.mxu0 0.0
      %2301 = vmatpush2.msra.mxu0 0.0
      %2302 = vmatprep.subr.mxu0 0.0
      %2303 = vmatpush2.msra.mxu0 0.0
      %2304 = vmatprep.subr.mxu0 0.0
      %2305 = vmatpush2.msra.mxu0 0.0
      %2306 = vmatprep.subr.mxu0 0.0
      %2307 = vmatpush2.msra.mxu0 0.0
      %2308 = vmatprep.subr.mxu0 0.0
      %2309 = vmatpush2.msra.mxu0 0.0
      %2310 = vmatprep.subr.mxu0 0.0
      %2311 = vmatpush2.msra.mxu0 0.0
      %2312 = vmatprep.subr.mxu0 0.0
      %2313 = vmatpush2.msra.mxu0 0.0
      %2314 = vmatprep.subr.mxu0 0.0
      %2315 = vmatpush2.msra.mxu0 0.0
      %2316 = vmatprep.subr.mxu0 0.0
      %2317 = vmatpush2.msra.mxu0 0.0
      %2318 = vmatprep.subr.mxu0 0.0
      %2319 = vmatpush2.msra.mxu0 0.0
      %2320 = vmatprep.subr.mxu0 0.0
      %2321 = vmatpush2.msra.mxu0 0.0
      %2322 = vmatprep.subr.mxu0 0.0
      %2323 = vmatpush2.msra.mxu0 0.0
      %2324 = vmatprep.subr.mxu0 0.0
      %2325 = vmatpush2.msra.mxu0 0.0
      %2326 = vmatprep.subr.mxu0 0.0
      %2327 = vmatpush2.msra.mxu0 0.0
      %2328 = vmatprep.subr.mxu0 0.0
      %2329 = vmatpush2.msra.mxu0 0.0
      %2330 = vmatprep.mubr.f32.mxu0 0.0
      %2331 = vmatmul.mubr.f32.gmra.mxu0 %v2012
      %v2332 = vpop.f32.mrf.mxu0
      %v2333 = vadd.f32 %v1487, %v2332
      %v2334 = vpop.f32.mrf.mxu0
      %2335 = vdwg.mxu0
      %v2336 = vadd.f32 %v2192, %v2262
      %v2337 = vxor.u32 %v2336, 2147483648
      %v2338 = vmul.f32 %v2337, 1.442695
      %v2339 = vpow.pop %v2338
      %v2340 = vadd.f32 %v2339, 1.0
      %v2341 = vrcp.pop %v2340
      %v2342 = vmul.f32 1.0, %v2341
      %v2343 = vadd.f32 %v2193, %v2264
      %v2344 = vxor.u32 %v2343, 2147483648
      %v2345 = vmul.f32 %v2344, 1.442695
      %v2346 = vpow.pop %v2345
      %v2347 = vadd.f32 %v2346, 1.0
      %v2348 = vrcp.pop %v2347
      %v2349 = vmul.f32 1.0, %v2348
      %v2350 = vmul.f32 %v2342, %v2333
      %v2351 = vadd.f32 %v2194, %v2350
      %v2352 = vtanh.pop %v2351
      %v2353 = vsub.f32 1.0, %v2349
      %v2354 = vmul.f32 %v2353, %v2352
      %v2355 = vmul.f32 %v2349, %v2012
      %v2356 = vadd.f32 %v2354, %v2355
      %s2357 = smul.u32 %s2187, 8
      %s2358 = scalar_lea.vmem %s9, %s2357
      %2359 = vst [vmem:[%s2358] sm:$0xff] %v2356
      %s2360 = smul.u32 %s2188, 3
      %s2361 = smul.addr %s2360, 8
      %s2362 = scalar_lea.vmem [#allocation3], %s2361
      %v2363 = vld [vmem:[%s2362] sm:$0xff]
      %v2364 = vld [vmem:[%s2362 + $0x8] sm:$0xff]
      %v2365 = vld [vmem:[%s2362 + $0x10] sm:$0xff]
      %2366 = vmatprep.subr.mxu0 %v1451
      %2367 = vmatpush1.msra.mxu0 %v1450
      %2368 = vmatprep.subr.mxu0 %v1448
      %2369 = vmatpush1.msra.mxu0 %v1447
      %2370 = vmatprep.subr.mxu0 %v1445
      %2371 = vmatpush1.msra.mxu0 %v1444
      %2372 = vmatprep.subr.mxu0 %v1442
      %2373 = vmatpush1.msra.mxu0 %v1441
      %2374 = vmatprep.subr.mxu0 %v1439
      %2375 = vmatpush1.msra.mxu0 %v1438
      %2376 = vmatprep.subr.mxu0 %v1436
      %2377 = vmatpush1.msra.mxu0 %v1435
      %2378 = vmatprep.subr.mxu0 %v1433
      %2379 = vmatpush1.msra.mxu0 %v1432
      %2380 = vmatprep.subr.mxu0 %v1430
      %2381 = vmatpush1.msra.mxu0 %v1429
      %2382 = vmatprep.subr.mxu0 %v1427
      %2383 = vmatpush1.msra.mxu0 %v1426
      %2384 = vmatprep.subr.mxu0 %v1424
      %2385 = vmatpush1.msra.mxu0 %v1423
      %2386 = vmatprep.subr.mxu0 %v1421
      %2387 = vmatpush1.msra.mxu0 %v1420
      %2388 = vmatprep.subr.mxu0 %v1418
      %2389 = vmatpush1.msra.mxu0 %v1417
      %2390 = vmatprep.subr.mxu0 %v1415
      %2391 = vmatpush1.msra.mxu0 %v1414
      %2392 = vmatprep.subr.mxu0 %v1412
      %2393 = vmatpush1.msra.mxu0 %v1411
      %2394 = vmatprep.subr.mxu0 %v1409
      %2395 = vmatpush1.msra.mxu0 %v1408
      %2396 = vmatprep.subr.mxu0 %v1406
      %2397 = vmatpush1.msra.mxu0 %v1405
      %2398 = vmatprep.subr.mxu0 0.0
      %2399 = vmatpush2.msra.mxu0 0.0
      %2400 = vmatprep.subr.mxu0 0.0
      %2401 = vmatpush2.msra.mxu0 0.0
      %2402 = vmatprep.subr.mxu0 0.0
      %2403 = vmatpush2.msra.mxu0 0.0
      %2404 = vmatprep.subr.mxu0 0.0
      %2405 = vmatpush2.msra.mxu0 0.0
      %2406 = vmatprep.subr.mxu0 0.0
      %2407 = vmatpush2.msra.mxu0 0.0
      %2408 = vmatprep.subr.mxu0 0.0
      %2409 = vmatpush2.msra.mxu0 0.0
      %2410 = vmatprep.subr.mxu0 0.0
      %2411 = vmatpush2.msra.mxu0 0.0
      %2412 = vmatprep.subr.mxu0 0.0
      %2413 = vmatpush2.msra.mxu0 0.0
      %2414 = vmatprep.subr.mxu0 0.0
      %2415 = vmatpush2.msra.mxu0 0.0
      %2416 = vmatprep.subr.mxu0 0.0
      %2417 = vmatpush2.msra.mxu0 0.0
      %2418 = vmatprep.subr.mxu0 0.0
      %2419 = vmatpush2.msra.mxu0 0.0
      %2420 = vmatprep.subr.mxu0 0.0
      %2421 = vmatpush2.msra.mxu0 0.0
      %2422 = vmatprep.subr.mxu0 0.0
      %2423 = vmatpush2.msra.mxu0 0.0
      %2424 = vmatprep.subr.mxu0 0.0
      %2425 = vmatpush2.msra.mxu0 0.0
      %2426 = vmatprep.subr.mxu0 0.0
      %2427 = vmatpush2.msra.mxu0 0.0
      %2428 = vmatprep.subr.mxu0 0.0
      %2429 = vmatpush2.msra.mxu0 0.0
      %2430 = vmatprep.mubr.f32.mxu0 0.0
      %2431 = vmatmul.mubr.f32.gmra.mxu0 %v2183
      %v2432 = vpop.f32.mrf.mxu0
      %v2433 = vadd.f32 %v1666, %v2432
      %v2434 = vpop.f32.mrf.mxu0
      %v2435 = vadd.f32 %v1670, %v2434
      %2436 = vdwg.mxu0
      %2437 = vmatprep.subr.mxu0 0.0
      %2438 = vmatpush1.msra.mxu0 %v1452
      %2439 = vmatprep.subr.mxu0 0.0
      %2440 = vmatpush1.msra.mxu0 %v1449
      %2441 = vmatprep.subr.mxu0 0.0
      %2442 = vmatpush1.msra.mxu0 %v1446
      %2443 = vmatprep.subr.mxu0 0.0
      %2444 = vmatpush1.msra.mxu0 %v1443
      %2445 = vmatprep.subr.mxu0 0.0
      %2446 = vmatpush1.msra.mxu0 %v1440
      %2447 = vmatprep.subr.mxu0 0.0
      %2448 = vmatpush1.msra.mxu0 %v1437
      %2449 = vmatprep.subr.mxu0 0.0
      %2450 = vmatpush1.msra.mxu0 %v1434
      %2451 = vmatprep.subr.mxu0 0.0
      %2452 = vmatpush1.msra.mxu0 %v1431
      %2453 = vmatprep.subr.mxu0 0.0
      %2454 = vmatpush1.msra.mxu0 %v1428
      %2455 = vmatprep.subr.mxu0 0.0
      %2456 = vmatpush1.msra.mxu0 %v1425
      %2457 = vmatprep.subr.mxu0 0.0
      %2458 = vmatpush1.msra.mxu0 %v1422
      %2459 = vmatprep.subr.mxu0 0.0
      %2460 = vmatpush1.msra.mxu0 %v1419
      %2461 = vmatprep.subr.mxu0 0.0
      %2462 = vmatpush1.msra.mxu0 %v1416
      %2463 = vmatprep.subr.mxu0 0.0
      %2464 = vmatpush1.msra.mxu0 %v1413
      %2465 = vmatprep.subr.mxu0 0.0
      %2466 = vmatpush1.msra.mxu0 %v1410
      %2467 = vmatprep.subr.mxu0 0.0
      %2468 = vmatpush1.msra.mxu0 %v1407
      %2469 = vmatprep.subr.mxu0 0.0
      %2470 = vmatpush2.msra.mxu0 0.0
      %2471 = vmatprep.subr.mxu0 0.0
      %2472 = vmatpush2.msra.mxu0 0.0
      %2473 = vmatprep.subr.mxu0 0.0
      %2474 = vmatpush2.msra.mxu0 0.0
      %2475 = vmatprep.subr.mxu0 0.0
      %2476 = vmatpush2.msra.mxu0 0.0
      %2477 = vmatprep.subr.mxu0 0.0
      %2478 = vmatpush2.msra.mxu0 0.0
      %2479 = vmatprep.subr.mxu0 0.0
      %2480 = vmatpush2.msra.mxu0 0.0
      %2481 = vmatprep.subr.mxu0 0.0
      %2482 = vmatpush2.msra.mxu0 0.0
      %2483 = vmatprep.subr.mxu0 0.0
      %2484 = vmatpush2.msra.mxu0 0.0
      %2485 = vmatprep.subr.mxu0 0.0
      %2486 = vmatpush2.msra.mxu0 0.0
      %2487 = vmatprep.subr.mxu0 0.0
      %2488 = vmatpush2.msra.mxu0 0.0
      %2489 = vmatprep.subr.mxu0 0.0
      %2490 = vmatpush2.msra.mxu0 0.0
      %2491 = vmatprep.subr.mxu0 0.0
      %2492 = vmatpush2.msra.mxu0 0.0
      %2493 = vmatprep.subr.mxu0 0.0
      %2494 = vmatpush2.msra.mxu0 0.0
      %2495 = vmatprep.subr.mxu0 0.0
      %2496 = vmatpush2.msra.mxu0 0.0
      %2497 = vmatprep.subr.mxu0 0.0
      %2498 = vmatpush2.msra.mxu0 0.0
      %2499 = vmatprep.subr.mxu0 0.0
      %2500 = vmatpush2.msra.mxu0 0.0
      %2501 = vmatprep.mubr.f32.mxu0 0.0
      %2502 = vmatmul.mubr.f32.gmra.mxu0 %v2183
      %v2503 = vpop.f32.mrf.mxu0
      %v2504 = vadd.f32 %v1674, %v2503
      %v2505 = vpop.f32.mrf.mxu0
      %2506 = vdwg.mxu0
      %v2507 = vadd.f32 %v2363, %v2433
      %v2508 = vxor.u32 %v2507, 2147483648
      %v2509 = vmul.f32 %v2508, 1.442695
      %v2510 = vpow.pop %v2509
      %v2511 = vadd.f32 %v2510, 1.0
      %v2512 = vrcp.pop %v2511
      %v2513 = vmul.f32 1.0, %v2512
      %v2514 = vadd.f32 %v2364, %v2435
      %v2515 = vxor.u32 %v2514, 2147483648
      %v2516 = vmul.f32 %v2515, 1.442695
      %v2517 = vpow.pop %v2516
      %v2518 = vadd.f32 %v2517, 1.0
      %v2519 = vrcp.pop %v2518
      %v2520 = vmul.f32 1.0, %v2519
      %v2521 = vmul.f32 %v2513, %v2504
      %v2522 = vadd.f32 %v2365, %v2521
      %v2523 = vtanh.pop %v2522
      %v2524 = vsub.f32 1.0, %v2520
      %v2525 = vmul.f32 %v2524, %v2523
      %v2526 = vmul.f32 %v2520, %v2183
      %v2527 = vadd.f32 %v2525, %v2526
      %s2528 = smul.u32 %s2188, 8
      %s2529 = scalar_lea.vmem %s118, %s2528
      %2530 = vst [vmem:[%s2529] sm:$0xff] %v2527
      %s2531 = sadd.s32 %s1467, 3
      %s2532 = ssub.s32 4, %s1467
      %s2533 = smul.u32 %s2531, 3
      %s2534 = smul.addr %s2533, 8
      %s2535 = scalar_lea.vmem [#allocation2], %s2534
      %v2536 = vld [vmem:[%s2535] sm:$0xff]
      %v2537 = vld [vmem:[%s2535 + $0x8] sm:$0xff]
      %v2538 = vld [vmem:[%s2535 + $0x10] sm:$0xff]
      %2539 = vmatprep.subr.mxu0 %v1402
      %2540 = vmatpush1.msra.mxu0 %v1401
      %2541 = vmatprep.subr.mxu0 %v1399
      %2542 = vmatpush1.msra.mxu0 %v1398
      %2543 = vmatprep.subr.mxu0 %v1396
      %2544 = vmatpush1.msra.mxu0 %v1395
      %2545 = vmatprep.subr.mxu0 %v1393
      %2546 = vmatpush1.msra.mxu0 %v1392
      %2547 = vmatprep.subr.mxu0 %v1390
      %2548 = vmatpush1.msra.mxu0 %v1389
      %2549 = vmatprep.subr.mxu0 %v1387
      %2550 = vmatpush1.msra.mxu0 %v1386
      %2551 = vmatprep.subr.mxu0 %v1384
      %2552 = vmatpush1.msra.mxu0 %v1383
      %2553 = vmatprep.subr.mxu0 %v1381
      %2554 = vmatpush1.msra.mxu0 %v1380
      %2555 = vmatprep.subr.mxu0 %v1378
      %2556 = vmatpush1.msra.mxu0 %v1377
      %2557 = vmatprep.subr.mxu0 %v1375
      %2558 = vmatpush1.msra.mxu0 %v1374
      %2559 = vmatprep.subr.mxu0 %v1372
      %2560 = vmatpush1.msra.mxu0 %v1371
      %2561 = vmatprep.subr.mxu0 %v1369
      %2562 = vmatpush1.msra.mxu0 %v1368
      %2563 = vmatprep.subr.mxu0 %v1366
      %2564 = vmatpush1.msra.mxu0 %v1365
      %2565 = vmatprep.subr.mxu0 %v1363
      %2566 = vmatpush1.msra.mxu0 %v1362
      %2567 = vmatprep.subr.mxu0 %v1360
      %2568 = vmatpush1.msra.mxu0 %v1359
      %2569 = vmatprep.subr.mxu0 %v1357
      %2570 = vmatpush1.msra.mxu0 %v1356
      %2571 = vmatprep.subr.mxu0 0.0
      %2572 = vmatpush2.msra.mxu0 0.0
      %2573 = vmatprep.subr.mxu0 0.0
      %2574 = vmatpush2.msra.mxu0 0.0
      %2575 = vmatprep.subr.mxu0 0.0
      %2576 = vmatpush2.msra.mxu0 0.0
      %2577 = vmatprep.subr.mxu0 0.0
      %2578 = vmatpush2.msra.mxu0 0.0
      %2579 = vmatprep.subr.mxu0 0.0
      %2580 = vmatpush2.msra.mxu0 0.0
      %2581 = vmatprep.subr.mxu0 0.0
      %2582 = vmatpush2.msra.mxu0 0.0
      %2583 = vmatprep.subr.mxu0 0.0
      %2584 = vmatpush2.msra.mxu0 0.0
      %2585 = vmatprep.subr.mxu0 0.0
      %2586 = vmatpush2.msra.mxu0 0.0
      %2587 = vmatprep.subr.mxu0 0.0
      %2588 = vmatpush2.msra.mxu0 0.0
      %2589 = vmatprep.subr.mxu0 0.0
      %2590 = vmatpush2.msra.mxu0 0.0
      %2591 = vmatprep.subr.mxu0 0.0
      %2592 = vmatpush2.msra.mxu0 0.0
      %2593 = vmatprep.subr.mxu0 0.0
      %2594 = vmatpush2.msra.mxu0 0.0
      %2595 = vmatprep.subr.mxu0 0.0
      %2596 = vmatpush2.msra.mxu0 0.0
      %2597 = vmatprep.subr.mxu0 0.0
      %2598 = vmatpush2.msra.mxu0 0.0
      %2599 = vmatprep.subr.mxu0 0.0
      %2600 = vmatpush2.msra.mxu0 0.0
      %2601 = vmatprep.subr.mxu0 0.0
      %2602 = vmatpush2.msra.mxu0 0.0
      %2603 = vmatprep.mubr.f32.mxu0 0.0
      %2604 = vmatmul.mubr.f32.gmra.mxu0 %v2356
      %v2605 = vpop.f32.mrf.mxu0
      %v2606 = vadd.f32 %v1479, %v2605
      %v2607 = vpop.f32.mrf.mxu0
      %v2608 = vadd.f32 %v1483, %v2607
      %2609 = vdwg.mxu0
      %2610 = vmatprep.subr.mxu0 0.0
      %2611 = vmatpush1.msra.mxu0 %v1403
      %2612 = vmatprep.subr.mxu0 0.0
      %2613 = vmatpush1.msra.mxu0 %v1400
      %2614 = vmatprep.subr.mxu0 0.0
      %2615 = vmatpush1.msra.mxu0 %v1397
      %2616 = vmatprep.subr.mxu0 0.0
      %2617 = vmatpush1.msra.mxu0 %v1394
      %2618 = vmatprep.subr.mxu0 0.0
      %2619 = vmatpush1.msra.mxu0 %v1391
      %2620 = vmatprep.subr.mxu0 0.0
      %2621 = vmatpush1.msra.mxu0 %v1388
      %2622 = vmatprep.subr.mxu0 0.0
      %2623 = vmatpush1.msra.mxu0 %v1385
      %2624 = vmatprep.subr.mxu0 0.0
      %2625 = vmatpush1.msra.mxu0 %v1382
      %2626 = vmatprep.subr.mxu0 0.0
      %2627 = vmatpush1.msra.mxu0 %v1379
      %2628 = vmatprep.subr.mxu0 0.0
      %2629 = vmatpush1.msra.mxu0 %v1376
      %2630 = vmatprep.subr.mxu0 0.0
      %2631 = vmatpush1.msra.mxu0 %v1373
      %2632 = vmatprep.subr.mxu0 0.0
      %2633 = vmatpush1.msra.mxu0 %v1370
      %2634 = vmatprep.subr.mxu0 0.0
      %2635 = vmatpush1.msra.mxu0 %v1367
      %2636 = vmatprep.subr.mxu0 0.0
      %2637 = vmatpush1.msra.mxu0 %v1364
      %2638 = vmatprep.subr.mxu0 0.0
      %2639 = vmatpush1.msra.mxu0 %v1361
      %2640 = vmatprep.subr.mxu0 0.0
      %2641 = vmatpush1.msra.mxu0 %v1358
      %2642 = vmatprep.subr.mxu0 0.0
      %2643 = vmatpush2.msra.mxu0 0.0
      %2644 = vmatprep.subr.mxu0 0.0
      %2645 = vmatpush2.msra.mxu0 0.0
      %2646 = vmatprep.subr.mxu0 0.0
      %2647 = vmatpush2.msra.mxu0 0.0
      %2648 = vmatprep.subr.mxu0 0.0
      %2649 = vmatpush2.msra.mxu0 0.0
      %2650 = vmatprep.subr.mxu0 0.0
      %2651 = vmatpush2.msra.mxu0 0.0
      %2652 = vmatprep.subr.mxu0 0.0
      %2653 = vmatpush2.msra.mxu0 0.0
      %2654 = vmatprep.subr.mxu0 0.0
      %2655 = vmatpush2.msra.mxu0 0.0
      %2656 = vmatprep.subr.mxu0 0.0
      %2657 = vmatpush2.msra.mxu0 0.0
      %2658 = vmatprep.subr.mxu0 0.0
      %2659 = vmatpush2.msra.mxu0 0.0
      %2660 = vmatprep.subr.mxu0 0.0
      %2661 = vmatpush2.msra.mxu0 0.0
      %2662 = vmatprep.subr.mxu0 0.0
      %2663 = vmatpush2.msra.mxu0 0.0
      %2664 = vmatprep.subr.mxu0 0.0
      %2665 = vmatpush2.msra.mxu0 0.0
      %2666 = vmatprep.subr.mxu0 0.0
      %2667 = vmatpush2.msra.mxu0 0.0
      %2668 = vmatprep.subr.mxu0 0.0
      %2669 = vmatpush2.msra.mxu0 0.0
      %2670 = vmatprep.subr.mxu0 0.0
      %2671 = vmatpush2.msra.mxu0 0.0
      %2672 = vmatprep.subr.mxu0 0.0
      %2673 = vmatpush2.msra.mxu0 0.0
      %2674 = vmatprep.mubr.f32.mxu0 0.0
      %2675 = vmatmul.mubr.f32.gmra.mxu0 %v2356
      %v2676 = vpop.f32.mrf.mxu0
      %v2677 = vadd.f32 %v1487, %v2676
      %v2678 = vpop.f32.mrf.mxu0
      %2679 = vdwg.mxu0
      %v2680 = vadd.f32 %v2536, %v2606
      %v2681 = vxor.u32 %v2680, 2147483648
      %v2682 = vmul.f32 %v2681, 1.442695
      %v2683 = vpow.pop %v2682
      %v2684 = vadd.f32 %v2683, 1.0
      %v2685 = vrcp.pop %v2684
      %v2686 = vmul.f32 1.0, %v2685
      %v2687 = vadd.f32 %v2537, %v2608
      %v2688 = vxor.u32 %v2687, 2147483648
      %v2689 = vmul.f32 %v2688, 1.442695
      %v2690 = vpow.pop %v2689
      %v2691 = vadd.f32 %v2690, 1.0
      %v2692 = vrcp.pop %v2691
      %v2693 = vmul.f32 1.0, %v2692
      %v2694 = vmul.f32 %v2686, %v2677
      %v2695 = vadd.f32 %v2538, %v2694
      %v2696 = vtanh.pop %v2695
      %v2697 = vsub.f32 1.0, %v2693
      %v2698 = vmul.f32 %v2697, %v2696
      %v2699 = vmul.f32 %v2693, %v2356
      %v2700 = vadd.f32 %v2698, %v2699
      %s2701 = smul.u32 %s2531, 8
      %s2702 = scalar_lea.vmem %s9, %s2701
      %2703 = vst [vmem:[%s2702] sm:$0xff] %v2700
      %s2704 = smul.u32 %s2532, 3
      %s2705 = smul.addr %s2704, 8
      %s2706 = scalar_lea.vmem [#allocation3], %s2705
      %v2707 = vld [vmem:[%s2706] sm:$0xff]
      %v2708 = vld [vmem:[%s2706 + $0x8] sm:$0xff]
      %v2709 = vld [vmem:[%s2706 + $0x10] sm:$0xff]
      %2710 = vmatprep.subr.mxu0 %v1451
      %2711 = vmatpush1.msra.mxu0 %v1450
      %2712 = vmatprep.subr.mxu0 %v1448
      %2713 = vmatpush1.msra.mxu0 %v1447
      %2714 = vmatprep.subr.mxu0 %v1445
      %2715 = vmatpush1.msra.mxu0 %v1444
      %2716 = vmatprep.subr.mxu0 %v1442
      %2717 = vmatpush1.msra.mxu0 %v1441
      %2718 = vmatprep.subr.mxu0 %v1439
      %2719 = vmatpush1.msra.mxu0 %v1438
      %2720 = vmatprep.subr.mxu0 %v1436
      %2721 = vmatpush1.msra.mxu0 %v1435
      %2722 = vmatprep.subr.mxu0 %v1433
      %2723 = vmatpush1.msra.mxu0 %v1432
      %2724 = vmatprep.subr.mxu0 %v1430
      %2725 = vmatpush1.msra.mxu0 %v1429
      %2726 = vmatprep.subr.mxu0 %v1427
      %2727 = vmatpush1.msra.mxu0 %v1426
      %2728 = vmatprep.subr.mxu0 %v1424
      %2729 = vmatpush1.msra.mxu0 %v1423
      %2730 = vmatprep.subr.mxu0 %v1421
      %2731 = vmatpush1.msra.mxu0 %v1420
      %2732 = vmatprep.subr.mxu0 %v1418
      %2733 = vmatpush1.msra.mxu0 %v1417
      %2734 = vmatprep.subr.mxu0 %v1415
      %2735 = vmatpush1.msra.mxu0 %v1414
      %2736 = vmatprep.subr.mxu0 %v1412
      %2737 = vmatpush1.msra.mxu0 %v1411
      %2738 = vmatprep.subr.mxu0 %v1409
      %2739 = vmatpush1.msra.mxu0 %v1408
      %2740 = vmatprep.subr.mxu0 %v1406
      %2741 = vmatpush1.msra.mxu0 %v1405
      %2742 = vmatprep.subr.mxu0 0.0
      %2743 = vmatpush2.msra.mxu0 0.0
      %2744 = vmatprep.subr.mxu0 0.0
      %2745 = vmatpush2.msra.mxu0 0.0
      %2746 = vmatprep.subr.mxu0 0.0
      %2747 = vmatpush2.msra.mxu0 0.0
      %2748 = vmatprep.subr.mxu0 0.0
      %2749 = vmatpush2.msra.mxu0 0.0
      %2750 = vmatprep.subr.mxu0 0.0
      %2751 = vmatpush2.msra.mxu0 0.0
      %2752 = vmatprep.subr.mxu0 0.0
      %2753 = vmatpush2.msra.mxu0 0.0
      %2754 = vmatprep.subr.mxu0 0.0
      %2755 = vmatpush2.msra.mxu0 0.0
      %2756 = vmatprep.subr.mxu0 0.0
      %2757 = vmatpush2.msra.mxu0 0.0
      %2758 = vmatprep.subr.mxu0 0.0
      %2759 = vmatpush2.msra.mxu0 0.0
      %2760 = vmatprep.subr.mxu0 0.0
      %2761 = vmatpush2.msra.mxu0 0.0
      %2762 = vmatprep.subr.mxu0 0.0
      %2763 = vmatpush2.msra.mxu0 0.0
      %2764 = vmatprep.subr.mxu0 0.0
      %2765 = vmatpush2.msra.mxu0 0.0
      %2766 = vmatprep.subr.mxu0 0.0
      %2767 = vmatpush2.msra.mxu0 0.0
      %2768 = vmatprep.subr.mxu0 0.0
      %2769 = vmatpush2.msra.mxu0 0.0
      %2770 = vmatprep.subr.mxu0 0.0
      %2771 = vmatpush2.msra.mxu0 0.0
      %2772 = vmatprep.subr.mxu0 0.0
      %2773 = vmatpush2.msra.mxu0 0.0
      %2774 = vmatprep.mubr.f32.mxu0 0.0
      %2775 = vmatmul.mubr.f32.gmra.mxu0 %v2527
      %v2776 = vpop.f32.mrf.mxu0
      %v2777 = vadd.f32 %v1666, %v2776
      %v2778 = vpop.f32.mrf.mxu0
      %v2779 = vadd.f32 %v1670, %v2778
      %2780 = vdwg.mxu0
      %2781 = vmatprep.subr.mxu0 0.0
      %2782 = vmatpush1.msra.mxu0 %v1452
      %2783 = vmatprep.subr.mxu0 0.0
      %2784 = vmatpush1.msra.mxu0 %v1449
      %2785 = vmatprep.subr.mxu0 0.0
      %2786 = vmatpush1.msra.mxu0 %v1446
      %2787 = vmatprep.subr.mxu0 0.0
      %2788 = vmatpush1.msra.mxu0 %v1443
      %2789 = vmatprep.subr.mxu0 0.0
      %2790 = vmatpush1.msra.mxu0 %v1440
      %2791 = vmatprep.subr.mxu0 0.0
      %2792 = vmatpush1.msra.mxu0 %v1437
      %2793 = vmatprep.subr.mxu0 0.0
      %2794 = vmatpush1.msra.mxu0 %v1434
      %2795 = vmatprep.subr.mxu0 0.0
      %2796 = vmatpush1.msra.mxu0 %v1431
      %2797 = vmatprep.subr.mxu0 0.0
      %2798 = vmatpush1.msra.mxu0 %v1428
      %2799 = vmatprep.subr.mxu0 0.0
      %2800 = vmatpush1.msra.mxu0 %v1425
      %2801 = vmatprep.subr.mxu0 0.0
      %2802 = vmatpush1.msra.mxu0 %v1422
      %2803 = vmatprep.subr.mxu0 0.0
      %2804 = vmatpush1.msra.mxu0 %v1419
      %2805 = vmatprep.subr.mxu0 0.0
      %2806 = vmatpush1.msra.mxu0 %v1416
      %2807 = vmatprep.subr.mxu0 0.0
      %2808 = vmatpush1.msra.mxu0 %v1413
      %2809 = vmatprep.subr.mxu0 0.0
      %2810 = vmatpush1.msra.mxu0 %v1410
      %2811 = vmatprep.subr.mxu0 0.0
      %2812 = vmatpush1.msra.mxu0 %v1407
      %2813 = vmatprep.subr.mxu0 0.0
      %2814 = vmatpush2.msra.mxu0 0.0
      %2815 = vmatprep.subr.mxu0 0.0
      %2816 = vmatpush2.msra.mxu0 0.0
      %2817 = vmatprep.subr.mxu0 0.0
      %2818 = vmatpush2.msra.mxu0 0.0
      %2819 = vmatprep.subr.mxu0 0.0
      %2820 = vmatpush2.msra.mxu0 0.0
      %2821 = vmatprep.subr.mxu0 0.0
      %2822 = vmatpush2.msra.mxu0 0.0
      %2823 = vmatprep.subr.mxu0 0.0
      %2824 = vmatpush2.msra.mxu0 0.0
      %2825 = vmatprep.subr.mxu0 0.0
      %2826 = vmatpush2.msra.mxu0 0.0
      %2827 = vmatprep.subr.mxu0 0.0
      %2828 = vmatpush2.msra.mxu0 0.0
      %2829 = vmatprep.subr.mxu0 0.0
      %2830 = vmatpush2.msra.mxu0 0.0
      %2831 = vmatprep.subr.mxu0 0.0
      %2832 = vmatpush2.msra.mxu0 0.0
      %2833 = vmatprep.subr.mxu0 0.0
      %2834 = vmatpush2.msra.mxu0 0.0
      %2835 = vmatprep.subr.mxu0 0.0
      %2836 = vmatpush2.msra.mxu0 0.0
      %2837 = vmatprep.subr.mxu0 0.0
      %2838 = vmatpush2.msra.mxu0 0.0
      %2839 = vmatprep.subr.mxu0 0.0
      %2840 = vmatpush2.msra.mxu0 0.0
      %2841 = vmatprep.subr.mxu0 0.0
      %2842 = vmatpush2.msra.mxu0 0.0
      %2843 = vmatprep.subr.mxu0 0.0
      %2844 = vmatpush2.msra.mxu0 0.0
      %2845 = vmatprep.mubr.f32.mxu0 0.0
      %2846 = vmatmul.mubr.f32.gmra.mxu0 %v2527
      %v2847 = vpop.f32.mrf.mxu0
      %v2848 = vadd.f32 %v1674, %v2847
      %v2849 = vpop.f32.mrf.mxu0
      %2850 = vdwg.mxu0
      %v2851 = vadd.f32 %v2707, %v2777
      %v2852 = vxor.u32 %v2851, 2147483648
      %v2853 = vmul.f32 %v2852, 1.442695
      %v2854 = vpow.pop %v2853
      %v2855 = vadd.f32 %v2854, 1.0
      %v2856 = vrcp.pop %v2855
      %v2857 = vmul.f32 1.0, %v2856
      %v2858 = vadd.f32 %v2708, %v2779
      %v2859 = vxor.u32 %v2858, 2147483648
      %v2860 = vmul.f32 %v2859, 1.442695
      %v2861 = vpow.pop %v2860
      %v2862 = vadd.f32 %v2861, 1.0
      %v2863 = vrcp.pop %v2862
      %v2864 = vmul.f32 1.0, %v2863
      %v2865 = vmul.f32 %v2857, %v2848
      %v2866 = vadd.f32 %v2709, %v2865
      %v2867 = vtanh.pop %v2866
      %v2868 = vsub.f32 1.0, %v2864
      %v2869 = vmul.f32 %v2868, %v2867
      %v2870 = vmul.f32 %v2864, %v2527
      %v2871 = vadd.f32 %v2869, %v2870
      %s2872 = smul.u32 %s2532, 8
      %s2873 = scalar_lea.vmem %s118, %s2872
      %2874 = vst [vmem:[%s2873] sm:$0xff] %v2871
    $region54: #{encoder_forward.3} parent=1 // loop_footer
      %s1464 = sadd.s32 1, %s1460
    $region55: #{encoder_forward.3} parent=1 // loop_footer_branch
      %1459 = sbr.rel target = $region51
    $region56: #{encoder_forward.3} parent=1 // loop_exit
      _
    %2875 = vst [vmem:[#allocation4] sm:$0xff] %v1465
    %2876 = vst [vmem:[%s1457] sm:$0xff] %v1466
    // Predicated region
    $region57: #{encoder_forward.3} parent=1 // pred_check
      %p2877 = pneg %p121
    $region58: #{encoder_forward.3} parent=1 // pred_check_branch
      %2879 = sbr.rel (%p2877) target = $region60
    $region59: #{encoder_forward.3} parent=1 // pred_region
      %v2880 = vld [vmem:[#allocation4] sm:$0xff]
      %v2881 = vld [vmem:[#allocation4 + $0x8] sm:$0xff]
      %2882 = vst [vmem:[%s11] sm:$0xff] %v2880
      %2883 = vst [vmem:[%s11 + $0x8] sm:$0xff] %v2881
    $region60: #{encoder_forward.3} parent=1 // pred_fallthru
      _
    %s2884 = ssub.s32 0, 0
    %s2885 = smul.u32 8, %s2884
    %p2886 = scmp.lt.s32.totalorder %s2885, 7
    %s2887 = scalar_select %p2886, %s2885, 7
    %s2888 = smul.addr %s2887, 8
    %s2889 = scalar_lea.vmem %s10, %s2888
    // Predicated region
    $region61: #{encoder_forward.3} parent=1 // pred_check
      _
    $region62: #{encoder_forward.3} parent=1 // pred_check_branch
      %2891 = sbr.rel (0) target = $region64
    $region63: #{encoder_forward.3} parent=1 // pred_region
      _
    $region64: #{encoder_forward.3} parent=1 // pred_fallthru
      _
    // Predicated region
    $region65: #{encoder_forward.3} parent=1 // pred_check
      _
    $region66: #{encoder_forward.3} parent=1 // pred_check_branch
      %2893 = sbr.rel (0) target = $region68
    $region67: #{encoder_forward.3} parent=1 // pred_region
      %s2894 = ssub.s32 0, 0
      %s2895 = smul.u32 8, %s2894
    $region68: #{encoder_forward.3} parent=1 // pred_fallthru
      _
    // Predicated region
    $region69: #{encoder_forward.3} parent=1 // pred_check
      _
    $region70: #{encoder_forward.3} parent=1 // pred_check_branch
      %2897 = sbr.rel (0) target = $region72
    $region71: #{encoder_forward.3} parent=1 // pred_region
      _
    $region72: #{encoder_forward.3} parent=1 // pred_fallthru
      _
    // Predicated region
    $region73: #{encoder_forward.3} parent=1 // pred_check
      _
    $region74: #{encoder_forward.3} parent=1 // pred_check_branch
      %2899 = sbr.rel (0) target = $region76
    $region75: #{encoder_forward.3} parent=1 // pred_region
      _
    $region76: #{encoder_forward.3} parent=1 // pred_fallthru
      _
    // Predicated region
    $region77: #{encoder_forward.3} parent=1 // pred_check
      _
    $region78: #{encoder_forward.3} parent=1 // pred_check_branch
      %2901 = sbr.rel (0) target = $region80
    $region79: #{encoder_forward.3} parent=1 // pred_region
      %s2902 = ssub.s32 0, 0
      %s2903 = smul.u32 8, %s2902
      %p2904 = scmp.lt.s32.totalorder %s2903, 7
      %s2905 = scalar_select %p2904, %s2903, 7
      %s2906 = smul.addr %s2905, 8
      %s2907 = scalar_lea.vmem %s10, %s2906
    $region80: #{encoder_forward.3} parent=1 // pred_fallthru
      _
    // Predicated region
    $region81: #{encoder_forward.3} parent=1 // pred_check
      _
    $region82: #{encoder_forward.3} parent=1 // pred_check_branch
      %2909 = sbr.rel (0) target = $region84
    $region83: #{encoder_forward.3} parent=1 // pred_region
      _
    $region84: #{encoder_forward.3} parent=1 // pred_fallthru
      _
    %2910 = vsyncpa [#allocation6], 1
    %2911 = vsyncpa [#allocation8], 1

</llo_original>
